<compile_context>
chip_gen: v7x
topology: tpu7x:2x2x1
jax: 0.10.0
libtpu: 0.0.40
codegen_flags: <defaults>
</compile_context>

<pallas_src>
import math

import jax
import jax.numpy as jnp
from jax import lax
from jax.experimental import pallas as pl
from jax.experimental.pallas import tpu as pltpu


# -----------------------------------------------------------------------------
# One LSTM cell step (PyTorch gate order i, f, g, o).
# -----------------------------------------------------------------------------
def _lstm_cell(x_t, h, c, w_ih, w_hh, b, H):
    gates = (jnp.dot(x_t, w_ih, preferred_element_type=jnp.float32)
             + jnp.dot(h, w_hh, preferred_element_type=jnp.float32)
             + b)                                   # (B, 4H)
    i_g = jax.nn.sigmoid(gates[:, 0 * H:1 * H])
    f_g = jax.nn.sigmoid(gates[:, 1 * H:2 * H])
    g_g = jnp.tanh(gates[:, 2 * H:3 * H])
    o_g = jax.nn.sigmoid(gates[:, 3 * H:4 * H])
    c_new = f_g * c + i_g * g_g
    h_new = o_g * jnp.tanh(c_new)
    return h_new, c_new


# -----------------------------------------------------------------------------
# Fused kernel: 2-layer bidirectional LSTM + FC head, everything VMEM-resident.
# -----------------------------------------------------------------------------
def _fused_lstm_fc_kernel(
        x_ref,                                            # (T, B, D_in)
        wih0f_ref, whh0f_ref, b0f_ref,                    # layer 0, fwd dir
        wih0b_ref, whh0b_ref, b0b_ref,                    # layer 0, bwd dir
        wih1f_ref, whh1f_ref, b1f_ref,                    # layer 1, fwd dir
        wih1b_ref, whh1b_ref, b1b_ref,                    # layer 1, bwd dir
        w1_ref, fb1_ref, w2_ref, fb2_ref, w3_ref, fb3_ref,  # FC head
        o_ref,                                            # (B, 1)
        seq0f_scr, seq0b_scr):                            # (T, B, H) VMEM each
    T, B, _ = x_ref.shape
    H = seq0f_scr.shape[-1]
    zeros = jnp.zeros((B, H), jnp.float32)

    # ---- layer 0: both directions advance in one unrolled time loop --------
    wih0f = wih0f_ref[...]; whh0f = whh0f_ref[...]; b0f = b0f_ref[...]
    wih0b = wih0b_ref[...]; whh0b = whh0b_ref[...]; b0b = b0b_ref[...]

    def layer0_body(t, carry):
        h_f, c_f, h_b, c_b = carry
        h_f, c_f = _lstm_cell(x_ref[t], h_f, c_f, wih0f, whh0f, b0f, H)
        h_b, c_b = _lstm_cell(x_ref[T - 1 - t], h_b, c_b, wih0b, whh0b, b0b, H)
        seq0f_scr[t] = h_f              # layer-0 outputs stay in VMEM scratch
        seq0b_scr[T - 1 - t] = h_b
        return h_f, c_f, h_b, c_b

    lax.fori_loop(0, T, layer0_body, (zeros, zeros, zeros, zeros), unroll=True)

    # ---- layer 1 forward: only the final hidden state feeds the head -------
    wih1f = wih1f_ref[...]; whh1f = whh1f_ref[...]; b1f = b1f_ref[...]

    def layer1_fwd_body(t, carry):
        h, c = carry
        x_t = jnp.concatenate([seq0f_scr[t], seq0b_scr[t]], axis=-1)  # (B, 2H)
        return _lstm_cell(x_t, h, c, wih1f, whh1f, b1f, H)

    h_fwd1, _ = lax.fori_loop(0, T, layer1_fwd_body, (zeros, zeros),
                              unroll=True)

    # ---- layer 1 backward: out[:, -1, :]'s backward half is the backward
    #      LSTM's FIRST step (zero initial state, input = layer-0 output at
    #      t = T-1), so a single cell step is exactly equivalent.
    x_last = jnp.concatenate([seq0f_scr[T - 1], seq0b_scr[T - 1]], axis=-1)
    h_bwd1, _ = _lstm_cell(x_last, zeros, zeros,
                           wih1b_ref[...], whh1b_ref[...], b1b_ref[...], H)

    # ---- FC head: Linear(2H,64) -> ReLU -> Linear(64,32) -> ReLU ->
    #               Linear(32,1).  (Dropout is identity in eval.)
    last = jnp.concatenate([h_fwd1, h_bwd1], axis=-1)     # (B, 2H)
    z1 = jnp.maximum(
        jnp.dot(last, w1_ref[...], preferred_element_type=jnp.float32)
        + fb1_ref[...], 0.0)
    z2 = jnp.maximum(
        jnp.dot(z1, w2_ref[...], preferred_element_type=jnp.float32)
        + fb2_ref[...], 0.0)
    o_ref[...] = (jnp.dot(z2, w3_ref[...], preferred_element_type=jnp.float32)
                  + fb3_ref[...])


# -----------------------------------------------------------------------------
# Full forward pass: one pallas_call, no grid.
# -----------------------------------------------------------------------------
def lstm_model_forward(x, params, hidden_size):
    """x: (B, T, input_size) -> (B, 1)."""
    B, T, _ = x.shape
    H = hidden_size
    x_tm = jnp.transpose(x, (1, 0, 2)).astype(jnp.float32)   # time-major (T,B,D)

    l0, l1 = params["lstm"]
    fc = params["fc"]

    return pl.pallas_call(
        _fused_lstm_fc_kernel,
        out_shape=jax.ShapeDtypeStruct((B, 1), jnp.float32),
        scratch_shapes=[
            pltpu.VMEM((T, B, H), jnp.float32),   # layer-0 fwd output sequence
            pltpu.VMEM((T, B, H), jnp.float32),   # layer-0 bwd output sequence
        ],
    )(x_tm,
      l0["fwd"]["w_ih"], l0["fwd"]["w_hh"], l0["fwd"]["b"],
      l0["bwd"]["w_ih"], l0["bwd"]["w_hh"], l0["bwd"]["b"],
      l1["fwd"]["w_ih"], l1["fwd"]["w_hh"], l1["fwd"]["b"],
      l1["bwd"]["w_ih"], l1["bwd"]["w_hh"], l1["bwd"]["b"],
      fc["w1"], fc["b1"], fc["w2"], fc["b2"], fc["w3"], fc["b3"])


# -----------------------------------------------------------------------------
# Parameter construction (deterministic, PyTorch-like uniform init).
# -----------------------------------------------------------------------------
def init_params(key, input_size, hidden_size):
    H = hidden_size

    def uniform(key, shape, bound):
        return jax.random.uniform(key, shape, jnp.float32, -bound, bound)

    keys = iter(jax.random.split(key, 64))
    k_lstm = 1.0 / math.sqrt(H)

    lstm_params = []
    for layer in range(2):
        d_in = input_size if layer == 0 else 2 * H
        layer_p = {}
        for direction in ("fwd", "bwd"):
            w_ih = uniform(next(keys), (4 * H, d_in), k_lstm)   # PyTorch layout
            w_hh = uniform(next(keys), (4 * H, H), k_lstm)
            b_ih = uniform(next(keys), (4 * H,), k_lstm)
            b_hh = uniform(next(keys), (4 * H,), k_lstm)
            layer_p[direction] = {
                "w_ih": jnp.transpose(w_ih),            # (d_in, 4H)
                "w_hh": jnp.transpose(w_hh),            # (H, 4H)
                "b": (b_ih + b_hh)[None, :],            # (1, 4H)
            }
        lstm_params.append(layer_p)

    def linear(key_w, key_b, fan_in, fan_out):
        k = 1.0 / math.sqrt(fan_in)
        w = uniform(key_w, (fan_in, fan_out), k)        # already (in, out)
        b = uniform(key_b, (1, fan_out), k)
        return w, b

    w1, b1 = linear(next(keys), next(keys), 2 * H, 64)
    w2, b2 = linear(next(keys), next(keys), 64, 32)
    w3, b3 = linear(next(keys), next(keys), 32, 1)

    return {"lstm": lstm_params,
            "fc": {"w1": w1, "b1": b1, "w2": w2, "b2": b2, "w3": w3, "b3": b3}}


if __name__ == "__main__":
    B, T, INPUT_SIZE, HIDDEN_SIZE = 2, 8, 4, 32

    key = jax.random.PRNGKey(0)
    key_x, key_p = jax.random.split(key)
    x = jax.random.normal(key_x, (B, T, INPUT_SIZE), dtype=jnp.float32)
    params = init_params(key_p, INPUT_SIZE, HIDDEN_SIZE)

    out = jax.jit(lambda xx: lstm_model_forward(xx, params, HIDDEN_SIZE))(x)
    out = jax.block_until_ready(out)
    assert out.shape == (B, 1), out.shape
    assert jnp.all(jnp.isfinite(out))
    print("KERNEL_OK")
</pallas_src>

<mosaic_0001>
module attributes {stable_mosaic.version = 11 : i64} {
  func.func @_fused_lstm_fc_kernel(%arg0: memref<8x2x4xf32, #tpu.memory_space<vmem>>, %arg1: memref<4x128xf32, #tpu.memory_space<vmem>>, %arg2: memref<32x128xf32, #tpu.memory_space<vmem>>, %arg3: memref<1x128xf32, #tpu.memory_space<vmem>>, %arg4: memref<4x128xf32, #tpu.memory_space<vmem>>, %arg5: memref<32x128xf32, #tpu.memory_space<vmem>>, %arg6: memref<1x128xf32, #tpu.memory_space<vmem>>, %arg7: memref<64x128xf32, #tpu.memory_space<vmem>>, %arg8: memref<32x128xf32, #tpu.memory_space<vmem>>, %arg9: memref<1x128xf32, #tpu.memory_space<vmem>>, %arg10: memref<64x128xf32, #tpu.memory_space<vmem>>, %arg11: memref<32x128xf32, #tpu.memory_space<vmem>>, %arg12: memref<1x128xf32, #tpu.memory_space<vmem>>, %arg13: memref<64x64xf32, #tpu.memory_space<vmem>>, %arg14: memref<1x64xf32, #tpu.memory_space<vmem>>, %arg15: memref<64x32xf32, #tpu.memory_space<vmem>>, %arg16: memref<1x32xf32, #tpu.memory_space<vmem>>, %arg17: memref<32x1xf32, #tpu.memory_space<vmem>>, %arg18: memref<1x1xf32, #tpu.memory_space<vmem>>, %arg19: memref<2x1xf32, #tpu.memory_space<vmem>>, %arg20: memref<8x2x32xf32, #tpu.memory_space<vmem>>, %arg21: memref<8x2x32xf32, #tpu.memory_space<vmem>>) attributes {dimension_semantics = [], scalar_prefetch = 0 : i64, scratch_operands = 2 : i64, tpu.core_type = #tpu.core_type<tc>} {
    %cst = arith.constant 0.000000e+00 : f32
    %0 = vector.broadcast %cst : f32 to vector<2x32xf32>
    %c0 = arith.constant 0 : index
    %c0_0 = arith.constant 0 : index
    %1 = vector.load %arg1[%c0, %c0_0] : memref<4x128xf32, #tpu.memory_space<vmem>>, vector<4x128xf32>
    %c0_1 = arith.constant 0 : index
    %c0_2 = arith.constant 0 : index
    %2 = vector.load %arg2[%c0_1, %c0_2] : memref<32x128xf32, #tpu.memory_space<vmem>>, vector<32x128xf32>
    %c0_3 = arith.constant 0 : index
    %c0_4 = arith.constant 0 : index
    %3 = vector.load %arg3[%c0_3, %c0_4] : memref<1x128xf32, #tpu.memory_space<vmem>>, vector<1x128xf32>
    %c0_5 = arith.constant 0 : index
    %c0_6 = arith.constant 0 : index
    %4 = vector.load %arg4[%c0_5, %c0_6] : memref<4x128xf32, #tpu.memory_space<vmem>>, vector<4x128xf32>
    %c0_7 = arith.constant 0 : index
    %c0_8 = arith.constant 0 : index
    %5 = vector.load %arg5[%c0_7, %c0_8] : memref<32x128xf32, #tpu.memory_space<vmem>>, vector<32x128xf32>
    %c0_9 = arith.constant 0 : index
    %c0_10 = arith.constant 0 : index
    %6 = vector.load %arg6[%c0_9, %c0_10] : memref<1x128xf32, #tpu.memory_space<vmem>>, vector<1x128xf32>
    %c0_i32 = arith.constant 0 : i32
    %7 = arith.index_cast %c0_i32 : i32 to index
    %c0_11 = arith.constant 0 : index
    %c0_12 = arith.constant 0 : index
    %8 = vector.load %arg0[%7, %c0_11, %c0_12] : memref<8x2x4xf32, #tpu.memory_space<vmem>>, vector<1x2x4xf32>
    %9 = vector.shape_cast %8 : vector<1x2x4xf32> to vector<2x4xf32>
    %cst_13 = arith.constant dense<0.000000e+00> : vector<2x128xf32>
    %10 = tpu.matmul %9, %1, %cst_13 {dimension_numbers = #tpu.dot_dimension_numbers<[1], [0], [0], [1], [0, 0, 1, 1], [], []>} : vector<2x4xf32>, vector<4x128xf32>, vector<2x128xf32> -> vector<2x128xf32>
    %cst_14 = arith.constant dense<0.000000e+00> : vector<2x128xf32>
    %11 = tpu.matmul %0, %2, %cst_14 {dimension_numbers = #tpu.dot_dimension_numbers<[1], [0], [0], [1], [0, 0, 1, 1], [], []>} : vector<2x32xf32>, vector<32x128xf32>, vector<2x128xf32> -> vector<2x128xf32>
    %12 = arith.addf %10, %11 : vector<2x128xf32>
    %13 = vector.broadcast %3 : vector<1x128xf32> to vector<2x128xf32>
    %14 = arith.addf %12, %13 : vector<2x128xf32>
    %15 = vector.extract_strided_slice %14 {offsets = [0, 0], sizes = [2, 32], strides = [1, 1]} : vector<2x128xf32> to vector<2x32xf32>
    %16 = arith.negf %15 : vector<2x32xf32>
    %17 = math.exp %16 : vector<2x32xf32>
    %cst_15 = arith.constant 1.000000e+00 : f32
    %18 = vector.broadcast %cst_15 : f32 to vector<2x32xf32>
    %19 = arith.addf %18, %17 : vector<2x32xf32>
    %20 = arith.divf %18, %19 : vector<2x32xf32>
    %21 = vector.extract_strided_slice %14 {offsets = [0, 32], sizes = [2, 32], strides = [1, 1]} : vector<2x128xf32> to vector<2x32xf32>
    %22 = arith.negf %21 : vector<2x32xf32>
    %23 = math.exp %22 : vector<2x32xf32>
    %cst_16 = arith.constant 1.000000e+00 : f32
    %24 = vector.broadcast %cst_16 : f32 to vector<2x32xf32>
    %25 = arith.addf %24, %23 : vector<2x32xf32>
    %26 = arith.divf %24, %25 : vector<2x32xf32>
    %27 = vector.extract_strided_slice %14 {offsets = [0, 64], sizes = [2, 32], strides = [1, 1]} : vector<2x128xf32> to vector<2x32xf32>
    %28 = math.tanh %27 : vector<2x32xf32>
    %29 = vector.extract_strided_slice %14 {offsets = [0, 96], sizes = [2, 32], strides = [1, 1]} : vector<2x128xf32> to vector<2x32xf32>
    %30 = arith.negf %29 : vector<2x32xf32>
    %31 = math.exp %30 : vector<2x32xf32>
    %cst_17 = arith.constant 1.000000e+00 : f32
    %32 = vector.broadcast %cst_17 : f32 to vector<2x32xf32>
    %33 = arith.addf %32, %31 : vector<2x32xf32>
    %34 = arith.divf %32, %33 : vector<2x32xf32>
    %35 = arith.mulf %26, %0 : vector<2x32xf32>
    %36 = arith.mulf %20, %28 : vector<2x32xf32>
    %37 = arith.addf %35, %36 : vector<2x32xf32>
    %38 = math.tanh %37 : vector<2x32xf32>
    %39 = arith.mulf %34, %38 : vector<2x32xf32>
    %c7_i32 = arith.constant 7 : i32
    %40 = arith.subi %c7_i32, %c0_i32 : i32
    %41 = arith.index_cast %40 : i32 to index
    %c0_18 = arith.constant 0 : index
    %c0_19 = arith.constant 0 : index
    %42 = vector.load %arg0[%41, %c0_18, %c0_19] : memref<8x2x4xf32, #tpu.memory_space<vmem>>, vector<1x2x4xf32>
    %43 = vector.shape_cast %42 : vector<1x2x4xf32> to vector<2x4xf32>
    %cst_20 = arith.constant dense<0.000000e+00> : vector<2x128xf32>
    %44 = tpu.matmul %43, %4, %cst_20 {dimension_numbers = #tpu.dot_dimension_numbers<[1], [0], [0], [1], [0, 0, 1, 1], [], []>} : vector<2x4xf32>, vector<4x128xf32>, vector<2x128xf32> -> vector<2x128xf32>
    %cst_21 = arith.constant dense<0.000000e+00> : vector<2x128xf32>
    %45 = tpu.matmul %0, %5, %cst_21 {dimension_numbers = #tpu.dot_dimension_numbers<[1], [0], [0], [1], [0, 0, 1, 1], [], []>} : vector<2x32xf32>, vector<32x128xf32>, vector<2x128xf32> -> vector<2x128xf32>
    %46 = arith.addf %44, %45 : vector<2x128xf32>
    %47 = vector.broadcast %6 : vector<1x128xf32> to vector<2x128xf32>
    %48 = arith.addf %46, %47 : vector<2x128xf32>
    %49 = vector.extract_strided_slice %48 {offsets = [0, 0], sizes = [2, 32], strides = [1, 1]} : vector<2x128xf32> to vector<2x32xf32>
    %50 = arith.negf %49 : vector<2x32xf32>
    %51 = math.exp %50 : vector<2x32xf32>
    %cst_22 = arith.constant 1.000000e+00 : f32
    %52 = vector.broadcast %cst_22 : f32 to vector<2x32xf32>
    %53 = arith.addf %52, %51 : vector<2x32xf32>
    %54 = arith.divf %52, %53 : vector<2x32xf32>
    %55 = vector.extract_strided_slice %48 {offsets = [0, 32], sizes = [2, 32], strides = [1, 1]} : vector<2x128xf32> to vector<2x32xf32>
    %56 = arith.negf %55 : vector<2x32xf32>
    %57 = math.exp %56 : vector<2x32xf32>
    %cst_23 = arith.constant 1.000000e+00 : f32
    %58 = vector.broadcast %cst_23 : f32 to vector<2x32xf32>
    %59 = arith.addf %58, %57 : vector<2x32xf32>
    %60 = arith.divf %58, %59 : vector<2x32xf32>
    %61 = vector.extract_strided_slice %48 {offsets = [0, 64], sizes = [2, 32], strides = [1, 1]} : vector<2x128xf32> to vector<2x32xf32>
    %62 = math.tanh %61 : vector<2x32xf32>
    %63 = vector.extract_strided_slice %48 {offsets = [0, 96], sizes = [2, 32], strides = [1, 1]} : vector<2x128xf32> to vector<2x32xf32>
    %64 = arith.negf %63 : vector<2x32xf32>
    %65 = math.exp %64 : vector<2x32xf32>
    %cst_24 = arith.constant 1.000000e+00 : f32
    %66 = vector.broadcast %cst_24 : f32 to vector<2x32xf32>
    %67 = arith.addf %66, %65 : vector<2x32xf32>
    %68 = arith.divf %66, %67 : vector<2x32xf32>
    %69 = arith.mulf %60, %0 : vector<2x32xf32>
    %70 = arith.mulf %54, %62 : vector<2x32xf32>
    %71 = arith.addf %69, %70 : vector<2x32xf32>
    %72 = math.tanh %71 : vector<2x32xf32>
    %73 = arith.mulf %68, %72 : vector<2x32xf32>
    %74 = arith.index_cast %c0_i32 : i32 to index
    %c0_25 = arith.constant 0 : index
    %c0_26 = arith.constant 0 : index
    %75 = vector.load %arg20[%74, %c0_25, %c0_26] : memref<8x2x32xf32, #tpu.memory_space<vmem>>, vector<1x2x32xf32>
    %76 = vector.shape_cast %75 : vector<1x2x32xf32> to vector<2x32xf32>
    %77 = vector.shape_cast %39 : vector<2x32xf32> to vector<1x2x32xf32>
    tpu.vector_store %arg20[%74, %c0_25, %c0_26], %77 {strides = array<i32>} : memref<8x2x32xf32, #tpu.memory_space<vmem>>, vector<1x2x32xf32>,
    %c7_i32_27 = arith.constant 7 : i32
    %78 = arith.subi %c7_i32_27, %c0_i32 : i32
    %79 = arith.index_cast %78 : i32 to index
    %c0_28 = arith.constant 0 : index
    %c0_29 = arith.constant 0 : index
    %80 = vector.load %arg21[%79, %c0_28, %c0_29] : memref<8x2x32xf32, #tpu.memory_space<vmem>>, vector<1x2x32xf32>
    %81 = vector.shape_cast %80 : vector<1x2x32xf32> to vector<2x32xf32>
    %82 = vector.shape_cast %73 : vector<2x32xf32> to vector<1x2x32xf32>
    tpu.vector_store %arg21[%79, %c0_28, %c0_29], %82 {strides = array<i32>} : memref<8x2x32xf32, #tpu.memory_space<vmem>>, vector<1x2x32xf32>,
    %c1_i32 = arith.constant 1 : i32
    %83 = arith.index_cast %c1_i32 : i32 to index
    %c0_30 = arith.constant 0 : index
    %c0_31 = arith.constant 0 : index
    %84 = vector.load %arg0[%83, %c0_30, %c0_31] : memref<8x2x4xf32, #tpu.memory_space<vmem>>, vector<1x2x4xf32>
    %85 = vector.shape_cast %84 : vector<1x2x4xf32> to vector<2x4xf32>
    %cst_32 = arith.constant dense<0.000000e+00> : vector<2x128xf32>
    %86 = tpu.matmul %85, %1, %cst_32 {dimension_numbers = #tpu.dot_dimension_numbers<[1], [0], [0], [1], [0, 0, 1, 1], [], []>} : vector<2x4xf32>, vector<4x128xf32>, vector<2x128xf32> -> vector<2x128xf32>
    %cst_33 = arith.constant dense<0.000000e+00> : vector<2x128xf32>
    %87 = tpu.matmul %39, %2, %cst_33 {dimension_numbers = #tpu.dot_dimension_numbers<[1], [0], [0], [1], [0, 0, 1, 1], [], []>} : vector<2x32xf32>, vector<32x128xf32>, vector<2x128xf32> -> vector<2x128xf32>
    %88 = arith.addf %86, %87 : vector<2x128xf32>
    %89 = vector.broadcast %3 : vector<1x128xf32> to vector<2x128xf32>
    %90 = arith.addf %88, %89 : vector<2x128xf32>
    %91 = vector.extract_strided_slice %90 {offsets = [0, 0], sizes = [2, 32], strides = [1, 1]} : vector<2x128xf32> to vector<2x32xf32>
    %92 = arith.negf %91 : vector<2x32xf32>
    %93 = math.exp %92 : vector<2x32xf32>
    %cst_34 = arith.constant 1.000000e+00 : f32
    %94 = vector.broadcast %cst_34 : f32 to vector<2x32xf32>
    %95 = arith.addf %94, %93 : vector<2x32xf32>
    %96 = arith.divf %94, %95 : vector<2x32xf32>
    %97 = vector.extract_strided_slice %90 {offsets = [0, 32], sizes = [2, 32], strides = [1, 1]} : vector<2x128xf32> to vector<2x32xf32>
    %98 = arith.negf %97 : vector<2x32xf32>
    %99 = math.exp %98 : vector<2x32xf32>
    %cst_35 = arith.constant 1.000000e+00 : f32
    %100 = vector.broadcast %cst_35 : f32 to vector<2x32xf32>
    %101 = arith.addf %100, %99 : vector<2x32xf32>
    %102 = arith.divf %100, %101 : vector<2x32xf32>
    %103 = vector.extract_strided_slice %90 {offsets = [0, 64], sizes = [2, 32], strides = [1, 1]} : vector<2x128xf32> to vector<2x32xf32>
    %104 = math.tanh %103 : vector<2x32xf32>
    %105 = vector.extract_strided_slice %90 {offsets = [0, 96], sizes = [2, 32], strides = [1, 1]} : vector<2x128xf32> to vector<2x32xf32>
    %106 = arith.negf %105 : vector<2x32xf32>
    %107 = math.exp %106 : vector<2x32xf32>
    %cst_36 = arith.constant 1.000000e+00 : f32
    %108 = vector.broadcast %cst_36 : f32 to vector<2x32xf32>
    %109 = arith.addf %108, %107 : vector<2x32xf32>
    %110 = arith.divf %108, %109 : vector<2x32xf32>
    %111 = arith.mulf %102, %37 : vector<2x32xf32>
    %112 = arith.mulf %96, %104 : vector<2x32xf32>
    %113 = arith.addf %111, %112 : vector<2x32xf32>
    %114 = math.tanh %113 : vector<2x32xf32>
    %115 = arith.mulf %110, %114 : vector<2x32xf32>
    %c7_i32_37 = arith.constant 7 : i32
    %116 = arith.subi %c7_i32_37, %c1_i32 : i32
    %117 = arith.index_cast %116 : i32 to index
    %c0_38 = arith.constant 0 : index
    %c0_39 = arith.constant 0 : index
    %118 = vector.load %arg0[%117, %c0_38, %c0_39] : memref<8x2x4xf32, #tpu.memory_space<vmem>>, vector<1x2x4xf32>
    %119 = vector.shape_cast %118 : vector<1x2x4xf32> to vector<2x4xf32>
    %cst_40 = arith.constant dense<0.000000e+00> : vector<2x128xf32>
    %120 = tpu.matmul %119, %4, %cst_40 {dimension_numbers = #tpu.dot_dimension_numbers<[1], [0], [0], [1], [0, 0, 1, 1], [], []>} : vector<2x4xf32>, vector<4x128xf32>, vector<2x128xf32> -> vector<2x128xf32>
    %cst_41 = arith.constant dense<0.000000e+00> : vector<2x128xf32>
    %121 = tpu.matmul %73, %5, %cst_41 {dimension_numbers = #tpu.dot_dimension_numbers<[1], [0], [0], [1], [0, 0, 1, 1], [], []>} : vector<2x32xf32>, vector<32x128xf32>, vector<2x128xf32> -> vector<2x128xf32>
    %122 = arith.addf %120, %121 : vector<2x128xf32>
    %123 = vector.broadcast %6 : vector<1x128xf32> to vector<2x128xf32>
    %124 = arith.addf %122, %123 : vector<2x128xf32>
    %125 = vector.extract_strided_slice %124 {offsets = [0, 0], sizes = [2, 32], strides = [1, 1]} : vector<2x128xf32> to vector<2x32xf32>
    %126 = arith.negf %125 : vector<2x32xf32>
    %127 = math.exp %126 : vector<2x32xf32>
    %cst_42 = arith.constant 1.000000e+00 : f32
    %128 = vector.broadcast %cst_42 : f32 to vector<2x32xf32>
    %129 = arith.addf %128, %127 : vector<2x32xf32>
    %130 = arith.divf %128, %129 : vector<2x32xf32>
    %131 = vector.extract_strided_slice %124 {offsets = [0, 32], sizes = [2, 32], strides = [1, 1]} : vector<2x128xf32> to vector<2x32xf32>
    %132 = arith.negf %131 : vector<2x32xf32>
    %133 = math.exp %132 : vector<2x32xf32>
    %cst_43 = arith.constant 1.000000e+00 : f32
    %134 = vector.broadcast %cst_43 : f32 to vector<2x32xf32>
    %135 = arith.addf %134, %133 : vector<2x32xf32>
    %136 = arith.divf %134, %135 : vector<2x32xf32>
    %137 = vector.extract_strided_slice %124 {offsets = [0, 64], sizes = [2, 32], strides = [1, 1]} : vector<2x128xf32> to vector<2x32xf32>
    %138 = math.tanh %137 : vector<2x32xf32>
    %139 = vector.extract_strided_slice %124 {offsets = [0, 96], sizes = [2, 32], strides = [1, 1]} : vector<2x128xf32> to vector<2x32xf32>
    %140 = arith.negf %139 : vector<2x32xf32>
    %141 = math.exp %140 : vector<2x32xf32>
    %cst_44 = arith.constant 1.000000e+00 : f32
    %142 = vector.broadcast %cst_44 : f32 to vector<2x32xf32>
    %143 = arith.addf %142, %141 : vector<2x32xf32>
    %144 = arith.divf %142, %143 : vector<2x32xf32>
    %145 = arith.mulf %136, %71 : vector<2x32xf32>
    %146 = arith.mulf %130, %138 : vector<2x32xf32>
    %147 = arith.addf %145, %146 : vector<2x32xf32>
    %148 = math.tanh %147 : vector<2x32xf32>
    %149 = arith.mulf %144, %148 : vector<2x32xf32>
    %150 = arith.index_cast %c1_i32 : i32 to index
    %c0_45 = arith.constant 0 : index
    %c0_46 = arith.constant 0 : index
    %151 = vector.load %arg20[%150, %c0_45, %c0_46] : memref<8x2x32xf32, #tpu.memory_space<vmem>>, vector<1x2x32xf32>
    %152 = vector.shape_cast %151 : vector<1x2x32xf32> to vector<2x32xf32>
    %153 = vector.shape_cast %115 : vector<2x32xf32> to vector<1x2x32xf32>
    tpu.vector_store %arg20[%150, %c0_45, %c0_46], %153 {strides = array<i32>} : memref<8x2x32xf32, #tpu.memory_space<vmem>>, vector<1x2x32xf32>,
    %c7_i32_47 = arith.constant 7 : i32
    %154 = arith.subi %c7_i32_47, %c1_i32 : i32
    %155 = arith.index_cast %154 : i32 to index
    %c0_48 = arith.constant 0 : index
    %c0_49 = arith.constant 0 : index
    %156 = vector.load %arg21[%155, %c0_48, %c0_49] : memref<8x2x32xf32, #tpu.memory_space<vmem>>, vector<1x2x32xf32>
    %157 = vector.shape_cast %156 : vector<1x2x32xf32> to vector<2x32xf32>
    %158 = vector.shape_cast %149 : vector<2x32xf32> to vector<1x2x32xf32>
    tpu.vector_store %arg21[%155, %c0_48, %c0_49], %158 {strides = array<i32>} : memref<8x2x32xf32, #tpu.memory_space<vmem>>, vector<1x2x32xf32>,
    %c2_i32 = arith.constant 2 : i32
    %159 = arith.index_cast %c2_i32 : i32 to index
    %c0_50 = arith.constant 0 : index
    %c0_51 = arith.constant 0 : index
    %160 = vector.load %arg0[%159, %c0_50, %c0_51] : memref<8x2x4xf32, #tpu.memory_space<vmem>>, vector<1x2x4xf32>
    %161 = vector.shape_cast %160 : vector<1x2x4xf32> to vector<2x4xf32>
    %cst_52 = arith.constant dense<0.000000e+00> : vector<2x128xf32>
    %162 = tpu.matmul %161, %1, %cst_52 {dimension_numbers = #tpu.dot_dimension_numbers<[1], [0], [0], [1], [0, 0, 1, 1], [], []>} : vector<2x4xf32>, vector<4x128xf32>, vector<2x128xf32> -> vector<2x128xf32>
    %cst_53 = arith.constant dense<0.000000e+00> : vector<2x128xf32>
    %163 = tpu.matmul %115, %2, %cst_53 {dimension_numbers = #tpu.dot_dimension_numbers<[1], [0], [0], [1], [0, 0, 1, 1], [], []>} : vector<2x32xf32>, vector<32x128xf32>, vector<2x128xf32> -> vector<2x128xf32>
    %164 = arith.addf %162, %163 : vector<2x128xf32>
    %165 = vector.broadcast %3 : vector<1x128xf32> to vector<2x128xf32>
    %166 = arith.addf %164, %165 : vector<2x128xf32>
    %167 = vector.extract_strided_slice %166 {offsets = [0, 0], sizes = [2, 32], strides = [1, 1]} : vector<2x128xf32> to vector<2x32xf32>
    %168 = arith.negf %167 : vector<2x32xf32>
    %169 = math.exp %168 : vector<2x32xf32>
    %cst_54 = arith.constant 1.000000e+00 : f32
    %170 = vector.broadcast %cst_54 : f32 to vector<2x32xf32>
    %171 = arith.addf %170, %169 : vector<2x32xf32>
    %172 = arith.divf %170, %171 : vector<2x32xf32>
    %173 = vector.extract_strided_slice %166 {offsets = [0, 32], sizes = [2, 32], strides = [1, 1]} : vector<2x128xf32> to vector<2x32xf32>
    %174 = arith.negf %173 : vector<2x32xf32>
    %175 = math.exp %174 : vector<2x32xf32>
    %cst_55 = arith.constant 1.000000e+00 : f32
    %176 = vector.broadcast %cst_55 : f32 to vector<2x32xf32>
    %177 = arith.addf %176, %175 : vector<2x32xf32>
    %178 = arith.divf %176, %177 : vector<2x32xf32>
    %179 = vector.extract_strided_slice %166 {offsets = [0, 64], sizes = [2, 32], strides = [1, 1]} : vector<2x128xf32> to vector<2x32xf32>
    %180 = math.tanh %179 : vector<2x32xf32>
    %181 = vector.extract_strided_slice %166 {offsets = [0, 96], sizes = [2, 32], strides = [1, 1]} : vector<2x128xf32> to vector<2x32xf32>
    %182 = arith.negf %181 : vector<2x32xf32>
    %183 = math.exp %182 : vector<2x32xf32>
    %cst_56 = arith.constant 1.000000e+00 : f32
    %184 = vector.broadcast %cst_56 : f32 to vector<2x32xf32>
    %185 = arith.addf %184, %183 : vector<2x32xf32>
    %186 = arith.divf %184, %185 : vector<2x32xf32>
    %187 = arith.mulf %178, %113 : vector<2x32xf32>
    %188 = arith.mulf %172, %180 : vector<2x32xf32>
    %189 = arith.addf %187, %188 : vector<2x32xf32>
    %190 = math.tanh %189 : vector<2x32xf32>
    %191 = arith.mulf %186, %190 : vector<2x32xf32>
    %c7_i32_57 = arith.constant 7 : i32
    %192 = arith.subi %c7_i32_57, %c2_i32 : i32
    %193 = arith.index_cast %192 : i32 to index
    %c0_58 = arith.constant 0 : index
    %c0_59 = arith.constant 0 : index
    %194 = vector.load %arg0[%193, %c0_58, %c0_59] : memref<8x2x4xf32, #tpu.memory_space<vmem>>, vector<1x2x4xf32>
    %195 = vector.shape_cast %194 : vector<1x2x4xf32> to vector<2x4xf32>
    %cst_60 = arith.constant dense<0.000000e+00> : vector<2x128xf32>
    %196 = tpu.matmul %195, %4, %cst_60 {dimension_numbers = #tpu.dot_dimension_numbers<[1], [0], [0], [1], [0, 0, 1, 1], [], []>} : vector<2x4xf32>, vector<4x128xf32>, vector<2x128xf32> -> vector<2x128xf32>
    %cst_61 = arith.constant dense<0.000000e+00> : vector<2x128xf32>
    %197 = tpu.matmul %149, %5, %cst_61 {dimension_numbers = #tpu.dot_dimension_numbers<[1], [0], [0], [1], [0, 0, 1, 1], [], []>} : vector<2x32xf32>, vector<32x128xf32>, vector<2x128xf32> -> vector<2x128xf32>
    %198 = arith.addf %196, %197 : vector<2x128xf32>
    %199 = vector.broadcast %6 : vector<1x128xf32> to vector<2x128xf32>
    %200 = arith.addf %198, %199 : vector<2x128xf32>
    %201 = vector.extract_strided_slice %200 {offsets = [0, 0], sizes = [2, 32], strides = [1, 1]} : vector<2x128xf32> to vector<2x32xf32>
    %202 = arith.negf %201 : vector<2x32xf32>
    %203 = math.exp %202 : vector<2x32xf32>
    %cst_62 = arith.constant 1.000000e+00 : f32
    %204 = vector.broadcast %cst_62 : f32 to vector<2x32xf32>
    %205 = arith.addf %204, %203 : vector<2x32xf32>
    %206 = arith.divf %204, %205 : vector<2x32xf32>
    %207 = vector.extract_strided_slice %200 {offsets = [0, 32], sizes = [2, 32], strides = [1, 1]} : vector<2x128xf32> to vector<2x32xf32>
    %208 = arith.negf %207 : vector<2x32xf32>
    %209 = math.exp %208 : vector<2x32xf32>
    %cst_63 = arith.constant 1.000000e+00 : f32
    %210 = vector.broadcast %cst_63 : f32 to vector<2x32xf32>
    %211 = arith.addf %210, %209 : vector<2x32xf32>
    %212 = arith.divf %210, %211 : vector<2x32xf32>
    %213 = vector.extract_strided_slice %200 {offsets = [0, 64], sizes = [2, 32], strides = [1, 1]} : vector<2x128xf32> to vector<2x32xf32>
    %214 = math.tanh %213 : vector<2x32xf32>
    %215 = vector.extract_strided_slice %200 {offsets = [0, 96], sizes = [2, 32], strides = [1, 1]} : vector<2x128xf32> to vector<2x32xf32>
    %216 = arith.negf %215 : vector<2x32xf32>
    %217 = math.exp %216 : vector<2x32xf32>
    %cst_64 = arith.constant 1.000000e+00 : f32
    %218 = vector.broadcast %cst_64 : f32 to vector<2x32xf32>
    %219 = arith.addf %218, %217 : vector<2x32xf32>
    %220 = arith.divf %218, %219 : vector<2x32xf32>
    %221 = arith.mulf %212, %147 : vector<2x32xf32>
    %222 = arith.mulf %206, %214 : vector<2x32xf32>
    %223 = arith.addf %221, %222 : vector<2x32xf32>
    %224 = math.tanh %223 : vector<2x32xf32>
    %225 = arith.mulf %220, %224 : vector<2x32xf32>
    %226 = arith.index_cast %c2_i32 : i32 to index
    %c0_65 = arith.constant 0 : index
    %c0_66 = arith.constant 0 : index
    %227 = vector.load %arg20[%226, %c0_65, %c0_66] : memref<8x2x32xf32, #tpu.memory_space<vmem>>, vector<1x2x32xf32>
    %228 = vector.shape_cast %227 : vector<1x2x32xf32> to vector<2x32xf32>
    %229 = vector.shape_cast %191 : vector<2x32xf32> to vector<1x2x32xf32>
    tpu.vector_store %arg20[%226, %c0_65, %c0_66], %229 {strides = array<i32>} : memref<8x2x32xf32, #tpu.memory_space<vmem>>, vector<1x2x32xf32>,
    %c7_i32_67 = arith.constant 7 : i32
    %230 = arith.subi %c7_i32_67, %c2_i32 : i32
    %231 = arith.index_cast %230 : i32 to index
    %c0_68 = arith.constant 0 : index
    %c0_69 = arith.constant 0 : index
    %232 = vector.load %arg21[%231, %c0_68, %c0_69] : memref<8x2x32xf32, #tpu.memory_space<vmem>>, vector<1x2x32xf32>
    %233 = vector.shape_cast %232 : vector<1x2x32xf32> to vector<2x32xf32>
    %234 = vector.shape_cast %225 : vector<2x32xf32> to vector<1x2x32xf32>
    tpu.vector_store %arg21[%231, %c0_68, %c0_69], %234 {strides = array<i32>} : memref<8x2x32xf32, #tpu.memory_space<vmem>>, vector<1x2x32xf32>,
    %c3_i32 = arith.constant 3 : i32
    %235 = arith.index_cast %c3_i32 : i32 to index
    %c0_70 = arith.constant 0 : index
    %c0_71 = arith.constant 0 : index
    %236 = vector.load %arg0[%235, %c0_70, %c0_71] : memref<8x2x4xf32, #tpu.memory_space<vmem>>, vector<1x2x4xf32>
    %237 = vector.shape_cast %236 : vector<1x2x4xf32> to vector<2x4xf32>
    %cst_72 = arith.constant dense<0.000000e+00> : vector<2x128xf32>
    %238 = tpu.matmul %237, %1, %cst_72 {dimension_numbers = #tpu.dot_dimension_numbers<[1], [0], [0], [1], [0, 0, 1, 1], [], []>} : vector<2x4xf32>, vector<4x128xf32>, vector<2x128xf32> -> vector<2x128xf32>
    %cst_73 = arith.constant dense<0.000000e+00> : vector<2x128xf32>
    %239 = tpu.matmul %191, %2, %cst_73 {dimension_numbers = #tpu.dot_dimension_numbers<[1], [0], [0], [1], [0, 0, 1, 1], [], []>} : vector<2x32xf32>, vector<32x128xf32>, vector<2x128xf32> -> vector<2x128xf32>
    %240 = arith.addf %238, %239 : vector<2x128xf32>
    %241 = vector.broadcast %3 : vector<1x128xf32> to vector<2x128xf32>
    %242 = arith.addf %240, %241 : vector<2x128xf32>
    %243 = vector.extract_strided_slice %242 {offsets = [0, 0], sizes = [2, 32], strides = [1, 1]} : vector<2x128xf32> to vector<2x32xf32>
    %244 = arith.negf %243 : vector<2x32xf32>
    %245 = math.exp %244 : vector<2x32xf32>
    %cst_74 = arith.constant 1.000000e+00 : f32
    %246 = vector.broadcast %cst_74 : f32 to vector<2x32xf32>
    %247 = arith.addf %246, %245 : vector<2x32xf32>
    %248 = arith.divf %246, %247 : vector<2x32xf32>
    %249 = vector.extract_strided_slice %242 {offsets = [0, 32], sizes = [2, 32], strides = [1, 1]} : vector<2x128xf32> to vector<2x32xf32>
    %250 = arith.negf %249 : vector<2x32xf32>
    %251 = math.exp %250 : vector<2x32xf32>
    %cst_75 = arith.constant 1.000000e+00 : f32
    %252 = vector.broadcast %cst_75 : f32 to vector<2x32xf32>
    %253 = arith.addf %252, %251 : vector<2x32xf32>
    %254 = arith.divf %252, %253 : vector<2x32xf32>
    %255 = vector.extract_strided_slice %242 {offsets = [0, 64], sizes = [2, 32], strides = [1, 1]} : vector<2x128xf32> to vector<2x32xf32>
    %256 = math.tanh %255 : vector<2x32xf32>
    %257 = vector.extract_strided_slice %242 {offsets = [0, 96], sizes = [2, 32], strides = [1, 1]} : vector<2x128xf32> to vector<2x32xf32>
    %258 = arith.negf %257 : vector<2x32xf32>
    %259 = math.exp %258 : vector<2x32xf32>
    %cst_76 = arith.constant 1.000000e+00 : f32
    %260 = vector.broadcast %cst_76 : f32 to vector<2x32xf32>
    %261 = arith.addf %260, %259 : vector<2x32xf32>
    %262 = arith.divf %260, %261 : vector<2x32xf32>
    %263 = arith.mulf %254, %189 : vector<2x32xf32>
    %264 = arith.mulf %248, %256 : vector<2x32xf32>
    %265 = arith.addf %263, %264 : vector<2x32xf32>
    %266 = math.tanh %265 : vector<2x32xf32>
    %267 = arith.mulf %262, %266 : vector<2x32xf32>
    %c7_i32_77 = arith.constant 7 : i32
    %268 = arith.subi %c7_i32_77, %c3_i32 : i32
    %269 = arith.index_cast %268 : i32 to index
    %c0_78 = arith.constant 0 : index
    %c0_79 = arith.constant 0 : index
    %270 = vector.load %arg0[%269, %c0_78, %c0_79] : memref<8x2x4xf32, #tpu.memory_space<vmem>>, vector<1x2x4xf32>
    %271 = vector.shape_cast %270 : vector<1x2x4xf32> to vector<2x4xf32>
    %cst_80 = arith.constant dense<0.000000e+00> : vector<2x128xf32>
    %272 = tpu.matmul %271, %4, %cst_80 {dimension_numbers = #tpu.dot_dimension_numbers<[1], [0], [0], [1], [0, 0, 1, 1], [], []>} : vector<2x4xf32>, vector<4x128xf32>, vector<2x128xf32> -> vector<2x128xf32>
    %cst_81 = arith.constant dense<0.000000e+00> : vector<2x128xf32>
    %273 = tpu.matmul %225, %5, %cst_81 {dimension_numbers = #tpu.dot_dimension_numbers<[1], [0], [0], [1], [0, 0, 1, 1], [], []>} : vector<2x32xf32>, vector<32x128xf32>, vector<2x128xf32> -> vector<2x128xf32>
    %274 = arith.addf %272, %273 : vector<2x128xf32>
    %275 = vector.broadcast %6 : vector<1x128xf32> to vector<2x128xf32>
    %276 = arith.addf %274, %275 : vector<2x128xf32>
    %277 = vector.extract_strided_slice %276 {offsets = [0, 0], sizes = [2, 32], strides = [1, 1]} : vector<2x128xf32> to vector<2x32xf32>
    %278 = arith.negf %277 : vector<2x32xf32>
    %279 = math.exp %278 : vector<2x32xf32>
    %cst_82 = arith.constant 1.000000e+00 : f32
    %280 = vector.broadcast %cst_82 : f32 to vector<2x32xf32>
    %281 = arith.addf %280, %279 : vector<2x32xf32>
    %282 = arith.divf %280, %281 : vector<2x32xf32>
    %283 = vector.extract_strided_slice %276 {offsets = [0, 32], sizes = [2, 32], strides = [1, 1]} : vector<2x128xf32> to vector<2x32xf32>
    %284 = arith.negf %283 : vector<2x32xf32>
    %285 = math.exp %284 : vector<2x32xf32>
    %cst_83 = arith.constant 1.000000e+00 : f32
    %286 = vector.broadcast %cst_83 : f32 to vector<2x32xf32>
    %287 = arith.addf %286, %285 : vector<2x32xf32>
    %288 = arith.divf %286, %287 : vector<2x32xf32>
    %289 = vector.extract_strided_slice %276 {offsets = [0, 64], sizes = [2, 32], strides = [1, 1]} : vector<2x128xf32> to vector<2x32xf32>
    %290 = math.tanh %289 : vector<2x32xf32>
    %291 = vector.extract_strided_slice %276 {offsets = [0, 96], sizes = [2, 32], strides = [1, 1]} : vector<2x128xf32> to vector<2x32xf32>
    %292 = arith.negf %291 : vector<2x32xf32>
    %293 = math.exp %292 : vector<2x32xf32>
    %cst_84 = arith.constant 1.000000e+00 : f32
    %294 = vector.broadcast %cst_84 : f32 to vector<2x32xf32>
    %295 = arith.addf %294, %293 : vector<2x32xf32>
    %296 = arith.divf %294, %295 : vector<2x32xf32>
    %297 = arith.mulf %288, %223 : vector<2x32xf32>
    %298 = arith.mulf %282, %290 : vector<2x32xf32>
    %299 = arith.addf %297, %298 : vector<2x32xf32>
    %300 = math.tanh %299 : vector<2x32xf32>
    %301 = arith.mulf %296, %300 : vector<2x32xf32>
    %302 = arith.index_cast %c3_i32 : i32 to index
    %c0_85 = arith.constant 0 : index
    %c0_86 = arith.constant 0 : index
    %303 = vector.load %arg20[%302, %c0_85, %c0_86] : memref<8x2x32xf32, #tpu.memory_space<vmem>>, vector<1x2x32xf32>
    %304 = vector.shape_cast %303 : vector<1x2x32xf32> to vector<2x32xf32>
    %305 = vector.shape_cast %267 : vector<2x32xf32> to vector<1x2x32xf32>
    tpu.vector_store %arg20[%302, %c0_85, %c0_86], %305 {strides = array<i32>} : memref<8x2x32xf32, #tpu.memory_space<vmem>>, vector<1x2x32xf32>,
    %c7_i32_87 = arith.constant 7 : i32
    %306 = arith.subi %c7_i32_87, %c3_i32 : i32
    %307 = arith.index_cast %306 : i32 to index
    %c0_88 = arith.constant 0 : index
    %c0_89 = arith.constant 0 : index
    %308 = vector.load %arg21[%307, %c0_88, %c0_89] : memref<8x2x32xf32, #tpu.memory_space<vmem>>, vector<1x2x32xf32>
    %309 = vector.shape_cast %308 : vector<1x2x32xf32> to vector<2x32xf32>
    %310 = vector.shape_cast %301 : vector<2x32xf32> to vector<1x2x32xf32>
    tpu.vector_store %arg21[%307, %c0_88, %c0_89], %310 {strides = array<i32>} : memref<8x2x32xf32, #tpu.memory_space<vmem>>, vector<1x2x32xf32>,
    %c4_i32 = arith.constant 4 : i32
    %311 = arith.index_cast %c4_i32 : i32 to index
    %c0_90 = arith.constant 0 : index
    %c0_91 = arith.constant 0 : index
    %312 = vector.load %arg0[%311, %c0_90, %c0_91] : memref<8x2x4xf32, #tpu.memory_space<vmem>>, vector<1x2x4xf32>
    %313 = vector.shape_cast %312 : vector<1x2x4xf32> to vector<2x4xf32>
    %cst_92 = arith.constant dense<0.000000e+00> : vector<2x128xf32>
    %314 = tpu.matmul %313, %1, %cst_92 {dimension_numbers = #tpu.dot_dimension_numbers<[1], [0], [0], [1], [0, 0, 1, 1], [], []>} : vector<2x4xf32>, vector<4x128xf32>, vector<2x128xf32> -> vector<2x128xf32>
    %cst_93 = arith.constant dense<0.000000e+00> : vector<2x128xf32>
    %315 = tpu.matmul %267, %2, %cst_93 {dimension_numbers = #tpu.dot_dimension_numbers<[1], [0], [0], [1], [0, 0, 1, 1], [], []>} : vector<2x32xf32>, vector<32x128xf32>, vector<2x128xf32> -> vector<2x128xf32>
    %316 = arith.addf %314, %315 : vector<2x128xf32>
    %317 = vector.broadcast %3 : vector<1x128xf32> to vector<2x128xf32>
    %318 = arith.addf %316, %317 : vector<2x128xf32>
    %319 = vector.extract_strided_slice %318 {offsets = [0, 0], sizes = [2, 32], strides = [1, 1]} : vector<2x128xf32> to vector<2x32xf32>
    %320 = arith.negf %319 : vector<2x32xf32>
    %321 = math.exp %320 : vector<2x32xf32>
    %cst_94 = arith.constant 1.000000e+00 : f32
    %322 = vector.broadcast %cst_94 : f32 to vector<2x32xf32>
    %323 = arith.addf %322, %321 : vector<2x32xf32>
    %324 = arith.divf %322, %323 : vector<2x32xf32>
    %325 = vector.extract_strided_slice %318 {offsets = [0, 32], sizes = [2, 32], strides = [1, 1]} : vector<2x128xf32> to vector<2x32xf32>
    %326 = arith.negf %325 : vector<2x32xf32>
    %327 = math.exp %326 : vector<2x32xf32>
    %cst_95 = arith.constant 1.000000e+00 : f32
    %328 = vector.broadcast %cst_95 : f32 to vector<2x32xf32>
    %329 = arith.addf %328, %327 : vector<2x32xf32>
    %330 = arith.divf %328, %329 : vector<2x32xf32>
    %331 = vector.extract_strided_slice %318 {offsets = [0, 64], sizes = [2, 32], strides = [1, 1]} : vector<2x128xf32> to vector<2x32xf32>
    %332 = math.tanh %331 : vector<2x32xf32>
    %333 = vector.extract_strided_slice %318 {offsets = [0, 96], sizes = [2, 32], strides = [1, 1]} : vector<2x128xf32> to vector<2x32xf32>
    %334 = arith.negf %333 : vector<2x32xf32>
    %335 = math.exp %334 : vector<2x32xf32>
    %cst_96 = arith.constant 1.000000e+00 : f32
    %336 = vector.broadcast %cst_96 : f32 to vector<2x32xf32>
    %337 = arith.addf %336, %335 : vector<2x32xf32>
    %338 = arith.divf %336, %337 : vector<2x32xf32>
    %339 = arith.mulf %330, %265 : vector<2x32xf32>
    %340 = arith.mulf %324, %332 : vector<2x32xf32>
    %341 = arith.addf %339, %340 : vector<2x32xf32>
    %342 = math.tanh %341 : vector<2x32xf32>
    %343 = arith.mulf %338, %342 : vector<2x32xf32>
    %c7_i32_97 = arith.constant 7 : i32
    %344 = arith.subi %c7_i32_97, %c4_i32 : i32
    %345 = arith.index_cast %344 : i32 to index
    %c0_98 = arith.constant 0 : index
    %c0_99 = arith.constant 0 : index
    %346 = vector.load %arg0[%345, %c0_98, %c0_99] : memref<8x2x4xf32, #tpu.memory_space<vmem>>, vector<1x2x4xf32>
    %347 = vector.shape_cast %346 : vector<1x2x4xf32> to vector<2x4xf32>
    %cst_100 = arith.constant dense<0.000000e+00> : vector<2x128xf32>
    %348 = tpu.matmul %347, %4, %cst_100 {dimension_numbers = #tpu.dot_dimension_numbers<[1], [0], [0], [1], [0, 0, 1, 1], [], []>} : vector<2x4xf32>, vector<4x128xf32>, vector<2x128xf32> -> vector<2x128xf32>
    %cst_101 = arith.constant dense<0.000000e+00> : vector<2x128xf32>
    %349 = tpu.matmul %301, %5, %cst_101 {dimension_numbers = #tpu.dot_dimension_numbers<[1], [0], [0], [1], [0, 0, 1, 1], [], []>} : vector<2x32xf32>, vector<32x128xf32>, vector<2x128xf32> -> vector<2x128xf32>
    %350 = arith.addf %348, %349 : vector<2x128xf32>
    %351 = vector.broadcast %6 : vector<1x128xf32> to vector<2x128xf32>
    %352 = arith.addf %350, %351 : vector<2x128xf32>
    %353 = vector.extract_strided_slice %352 {offsets = [0, 0], sizes = [2, 32], strides = [1, 1]} : vector<2x128xf32> to vector<2x32xf32>
    %354 = arith.negf %353 : vector<2x32xf32>
    %355 = math.exp %354 : vector<2x32xf32>
    %cst_102 = arith.constant 1.000000e+00 : f32
    %356 = vector.broadcast %cst_102 : f32 to vector<2x32xf32>
    %357 = arith.addf %356, %355 : vector<2x32xf32>
    %358 = arith.divf %356, %357 : vector<2x32xf32>
    %359 = vector.extract_strided_slice %352 {offsets = [0, 32], sizes = [2, 32], strides = [1, 1]} : vector<2x128xf32> to vector<2x32xf32>
    %360 = arith.negf %359 : vector<2x32xf32>
    %361 = math.exp %360 : vector<2x32xf32>
    %cst_103 = arith.constant 1.000000e+00 : f32
    %362 = vector.broadcast %cst_103 : f32 to vector<2x32xf32>
    %363 = arith.addf %362, %361 : vector<2x32xf32>
    %364 = arith.divf %362, %363 : vector<2x32xf32>
    %365 = vector.extract_strided_slice %352 {offsets = [0, 64], sizes = [2, 32], strides = [1, 1]} : vector<2x128xf32> to vector<2x32xf32>
    %366 = math.tanh %365 : vector<2x32xf32>
    %367 = vector.extract_strided_slice %352 {offsets = [0, 96], sizes = [2, 32], strides = [1, 1]} : vector<2x128xf32> to vector<2x32xf32>
    %368 = arith.negf %367 : vector<2x32xf32>
    %369 = math.exp %368 : vector<2x32xf32>
    %cst_104 = arith.constant 1.000000e+00 : f32
    %370 = vector.broadcast %cst_104 : f32 to vector<2x32xf32>
    %371 = arith.addf %370, %369 : vector<2x32xf32>
    %372 = arith.divf %370, %371 : vector<2x32xf32>
    %373 = arith.mulf %364, %299 : vector<2x32xf32>
    %374 = arith.mulf %358, %366 : vector<2x32xf32>
    %375 = arith.addf %373, %374 : vector<2x32xf32>
    %376 = math.tanh %375 : vector<2x32xf32>
    %377 = arith.mulf %372, %376 : vector<2x32xf32>
    %378 = arith.index_cast %c4_i32 : i32 to index
    %c0_105 = arith.constant 0 : index
    %c0_106 = arith.constant 0 : index
    %379 = vector.load %arg20[%378, %c0_105, %c0_106] : memref<8x2x32xf32, #tpu.memory_space<vmem>>, vector<1x2x32xf32>
    %380 = vector.shape_cast %379 : vector<1x2x32xf32> to vector<2x32xf32>
    %381 = vector.shape_cast %343 : vector<2x32xf32> to vector<1x2x32xf32>
    tpu.vector_store %arg20[%378, %c0_105, %c0_106], %381 {strides = array<i32>} : memref<8x2x32xf32, #tpu.memory_space<vmem>>, vector<1x2x32xf32>,
    %c7_i32_107 = arith.constant 7 : i32
    %382 = arith.subi %c7_i32_107, %c4_i32 : i32
    %383 = arith.index_cast %382 : i32 to index
    %c0_108 = arith.constant 0 : index
    %c0_109 = arith.constant 0 : index
    %384 = vector.load %arg21[%383, %c0_108, %c0_109] : memref<8x2x32xf32, #tpu.memory_space<vmem>>, vector<1x2x32xf32>
    %385 = vector.shape_cast %384 : vector<1x2x32xf32> to vector<2x32xf32>
    %386 = vector.shape_cast %377 : vector<2x32xf32> to vector<1x2x32xf32>
    tpu.vector_store %arg21[%383, %c0_108, %c0_109], %386 {strides = array<i32>} : memref<8x2x32xf32, #tpu.memory_space<vmem>>, vector<1x2x32xf32>,
    %c5_i32 = arith.constant 5 : i32
    %387 = arith.index_cast %c5_i32 : i32 to index
    %c0_110 = arith.constant 0 : index
    %c0_111 = arith.constant 0 : index
    %388 = vector.load %arg0[%387, %c0_110, %c0_111] : memref<8x2x4xf32, #tpu.memory_space<vmem>>, vector<1x2x4xf32>
    %389 = vector.shape_cast %388 : vector<1x2x4xf32> to vector<2x4xf32>
    %cst_112 = arith.constant dense<0.000000e+00> : vector<2x128xf32>
    %390 = tpu.matmul %389, %1, %cst_112 {dimension_numbers = #tpu.dot_dimension_numbers<[1], [0], [0], [1], [0, 0, 1, 1], [], []>} : vector<2x4xf32>, vector<4x128xf32>, vector<2x128xf32> -> vector<2x128xf32>
    %cst_113 = arith.constant dense<0.000000e+00> : vector<2x128xf32>
    %391 = tpu.matmul %343, %2, %cst_113 {dimension_numbers = #tpu.dot_dimension_numbers<[1], [0], [0], [1], [0, 0, 1, 1], [], []>} : vector<2x32xf32>, vector<32x128xf32>, vector<2x128xf32> -> vector<2x128xf32>
    %392 = arith.addf %390, %391 : vector<2x128xf32>
    %393 = vector.broadcast %3 : vector<1x128xf32> to vector<2x128xf32>
    %394 = arith.addf %392, %393 : vector<2x128xf32>
    %395 = vector.extract_strided_slice %394 {offsets = [0, 0], sizes = [2, 32], strides = [1, 1]} : vector<2x128xf32> to vector<2x32xf32>
    %396 = arith.negf %395 : vector<2x32xf32>
    %397 = math.exp %396 : vector<2x32xf32>
    %cst_114 = arith.constant 1.000000e+00 : f32
    %398 = vector.broadcast %cst_114 : f32 to vector<2x32xf32>
    %399 = arith.addf %398, %397 : vector<2x32xf32>
    %400 = arith.divf %398, %399 : vector<2x32xf32>
    %401 = vector.extract_strided_slice %394 {offsets = [0, 32], sizes = [2, 32], strides = [1, 1]} : vector<2x128xf32> to vector<2x32xf32>
    %402 = arith.negf %401 : vector<2x32xf32>
    %403 = math.exp %402 : vector<2x32xf32>
    %cst_115 = arith.constant 1.000000e+00 : f32
    %404 = vector.broadcast %cst_115 : f32 to vector<2x32xf32>
    %405 = arith.addf %404, %403 : vector<2x32xf32>
    %406 = arith.divf %404, %405 : vector<2x32xf32>
    %407 = vector.extract_strided_slice %394 {offsets = [0, 64], sizes = [2, 32], strides = [1, 1]} : vector<2x128xf32> to vector<2x32xf32>
    %408 = math.tanh %407 : vector<2x32xf32>
    %409 = vector.extract_strided_slice %394 {offsets = [0, 96], sizes = [2, 32], strides = [1, 1]} : vector<2x128xf32> to vector<2x32xf32>
    %410 = arith.negf %409 : vector<2x32xf32>
    %411 = math.exp %410 : vector<2x32xf32>
    %cst_116 = arith.constant 1.000000e+00 : f32
    %412 = vector.broadcast %cst_116 : f32 to vector<2x32xf32>
    %413 = arith.addf %412, %411 : vector<2x32xf32>
    %414 = arith.divf %412, %413 : vector<2x32xf32>
    %415 = arith.mulf %406, %341 : vector<2x32xf32>
    %416 = arith.mulf %400, %408 : vector<2x32xf32>
    %417 = arith.addf %415, %416 : vector<2x32xf32>
    %418 = math.tanh %417 : vector<2x32xf32>
    %419 = arith.mulf %414, %418 : vector<2x32xf32>
    %c7_i32_117 = arith.constant 7 : i32
    %420 = arith.subi %c7_i32_117, %c5_i32 : i32
    %421 = arith.index_cast %420 : i32 to index
    %c0_118 = arith.constant 0 : index
    %c0_119 = arith.constant 0 : index
    %422 = vector.load %arg0[%421, %c0_118, %c0_119] : memref<8x2x4xf32, #tpu.memory_space<vmem>>, vector<1x2x4xf32>
    %423 = vector.shape_cast %422 : vector<1x2x4xf32> to vector<2x4xf32>
    %cst_120 = arith.constant dense<0.000000e+00> : vector<2x128xf32>
    %424 = tpu.matmul %423, %4, %cst_120 {dimension_numbers = #tpu.dot_dimension_numbers<[1], [0], [0], [1], [0, 0, 1, 1], [], []>} : vector<2x4xf32>, vector<4x128xf32>, vector<2x128xf32> -> vector<2x128xf32>
    %cst_121 = arith.constant dense<0.000000e+00> : vector<2x128xf32>
    %425 = tpu.matmul %377, %5, %cst_121 {dimension_numbers = #tpu.dot_dimension_numbers<[1], [0], [0], [1], [0, 0, 1, 1], [], []>} : vector<2x32xf32>, vector<32x128xf32>, vector<2x128xf32> -> vector<2x128xf32>
    %426 = arith.addf %424, %425 : vector<2x128xf32>
    %427 = vector.broadcast %6 : vector<1x128xf32> to vector<2x128xf32>
    %428 = arith.addf %426, %427 : vector<2x128xf32>
    %429 = vector.extract_strided_slice %428 {offsets = [0, 0], sizes = [2, 32], strides = [1, 1]} : vector<2x128xf32> to vector<2x32xf32>
    %430 = arith.negf %429 : vector<2x32xf32>
    %431 = math.exp %430 : vector<2x32xf32>
    %cst_122 = arith.constant 1.000000e+00 : f32
    %432 = vector.broadcast %cst_122 : f32 to vector<2x32xf32>
    %433 = arith.addf %432, %431 : vector<2x32xf32>
    %434 = arith.divf %432, %433 : vector<2x32xf32>
    %435 = vector.extract_strided_slice %428 {offsets = [0, 32], sizes = [2, 32], strides = [1, 1]} : vector<2x128xf32> to vector<2x32xf32>
    %436 = arith.negf %435 : vector<2x32xf32>
    %437 = math.exp %436 : vector<2x32xf32>
    %cst_123 = arith.constant 1.000000e+00 : f32
    %438 = vector.broadcast %cst_123 : f32 to vector<2x32xf32>
    %439 = arith.addf %438, %437 : vector<2x32xf32>
    %440 = arith.divf %438, %439 : vector<2x32xf32>
    %441 = vector.extract_strided_slice %428 {offsets = [0, 64], sizes = [2, 32], strides = [1, 1]} : vector<2x128xf32> to vector<2x32xf32>
    %442 = math.tanh %441 : vector<2x32xf32>
    %443 = vector.extract_strided_slice %428 {offsets = [0, 96], sizes = [2, 32], strides = [1, 1]} : vector<2x128xf32> to vector<2x32xf32>
    %444 = arith.negf %443 : vector<2x32xf32>
    %445 = math.exp %444 : vector<2x32xf32>
    %cst_124 = arith.constant 1.000000e+00 : f32
    %446 = vector.broadcast %cst_124 : f32 to vector<2x32xf32>
    %447 = arith.addf %446, %445 : vector<2x32xf32>
    %448 = arith.divf %446, %447 : vector<2x32xf32>
    %449 = arith.mulf %440, %375 : vector<2x32xf32>
    %450 = arith.mulf %434, %442 : vector<2x32xf32>
    %451 = arith.addf %449, %450 : vector<2x32xf32>
    %452 = math.tanh %451 : vector<2x32xf32>
    %453 = arith.mulf %448, %452 : vector<2x32xf32>
    %454 = arith.index_cast %c5_i32 : i32 to index
    %c0_125 = arith.constant 0 : index
    %c0_126 = arith.constant 0 : index
    %455 = vector.load %arg20[%454, %c0_125, %c0_126] : memref<8x2x32xf32, #tpu.memory_space<vmem>>, vector<1x2x32xf32>
    %456 = vector.shape_cast %455 : vector<1x2x32xf32> to vector<2x32xf32>
    %457 = vector.shape_cast %419 : vector<2x32xf32> to vector<1x2x32xf32>
    tpu.vector_store %arg20[%454, %c0_125, %c0_126], %457 {strides = array<i32>} : memref<8x2x32xf32, #tpu.memory_space<vmem>>, vector<1x2x32xf32>,
    %c7_i32_127 = arith.constant 7 : i32
    %458 = arith.subi %c7_i32_127, %c5_i32 : i32
    %459 = arith.index_cast %458 : i32 to index
    %c0_128 = arith.constant 0 : index
    %c0_129 = arith.constant 0 : index
    %460 = vector.load %arg21[%459, %c0_128, %c0_129] : memref<8x2x32xf32, #tpu.memory_space<vmem>>, vector<1x2x32xf32>
    %461 = vector.shape_cast %460 : vector<1x2x32xf32> to vector<2x32xf32>
    %462 = vector.shape_cast %453 : vector<2x32xf32> to vector<1x2x32xf32>
    tpu.vector_store %arg21[%459, %c0_128, %c0_129], %462 {strides = array<i32>} : memref<8x2x32xf32, #tpu.memory_space<vmem>>, vector<1x2x32xf32>,
    %c6_i32 = arith.constant 6 : i32
    %463 = arith.index_cast %c6_i32 : i32 to index
    %c0_130 = arith.constant 0 : index
    %c0_131 = arith.constant 0 : index
    %464 = vector.load %arg0[%463, %c0_130, %c0_131] : memref<8x2x4xf32, #tpu.memory_space<vmem>>, vector<1x2x4xf32>
    %465 = vector.shape_cast %464 : vector<1x2x4xf32> to vector<2x4xf32>
    %cst_132 = arith.constant dense<0.000000e+00> : vector<2x128xf32>
    %466 = tpu.matmul %465, %1, %cst_132 {dimension_numbers = #tpu.dot_dimension_numbers<[1], [0], [0], [1], [0, 0, 1, 1], [], []>} : vector<2x4xf32>, vector<4x128xf32>, vector<2x128xf32> -> vector<2x128xf32>
    %cst_133 = arith.constant dense<0.000000e+00> : vector<2x128xf32>
    %467 = tpu.matmul %419, %2, %cst_133 {dimension_numbers = #tpu.dot_dimension_numbers<[1], [0], [0], [1], [0, 0, 1, 1], [], []>} : vector<2x32xf32>, vector<32x128xf32>, vector<2x128xf32> -> vector<2x128xf32>
    %468 = arith.addf %466, %467 : vector<2x128xf32>
    %469 = vector.broadcast %3 : vector<1x128xf32> to vector<2x128xf32>
    %470 = arith.addf %468, %469 : vector<2x128xf32>
    %471 = vector.extract_strided_slice %470 {offsets = [0, 0], sizes = [2, 32], strides = [1, 1]} : vector<2x128xf32> to vector<2x32xf32>
    %472 = arith.negf %471 : vector<2x32xf32>
    %473 = math.exp %472 : vector<2x32xf32>
    %cst_134 = arith.constant 1.000000e+00 : f32
    %474 = vector.broadcast %cst_134 : f32 to vector<2x32xf32>
    %475 = arith.addf %474, %473 : vector<2x32xf32>
    %476 = arith.divf %474, %475 : vector<2x32xf32>
    %477 = vector.extract_strided_slice %470 {offsets = [0, 32], sizes = [2, 32], strides = [1, 1]} : vector<2x128xf32> to vector<2x32xf32>
    %478 = arith.negf %477 : vector<2x32xf32>
    %479 = math.exp %478 : vector<2x32xf32>
    %cst_135 = arith.constant 1.000000e+00 : f32
    %480 = vector.broadcast %cst_135 : f32 to vector<2x32xf32>
    %481 = arith.addf %480, %479 : vector<2x32xf32>
    %482 = arith.divf %480, %481 : vector<2x32xf32>
    %483 = vector.extract_strided_slice %470 {offsets = [0, 64], sizes = [2, 32], strides = [1, 1]} : vector<2x128xf32> to vector<2x32xf32>
    %484 = math.tanh %483 : vector<2x32xf32>
    %485 = vector.extract_strided_slice %470 {offsets = [0, 96], sizes = [2, 32], strides = [1, 1]} : vector<2x128xf32> to vector<2x32xf32>
    %486 = arith.negf %485 : vector<2x32xf32>
    %487 = math.exp %486 : vector<2x32xf32>
    %cst_136 = arith.constant 1.000000e+00 : f32
    %488 = vector.broadcast %cst_136 : f32 to vector<2x32xf32>
    %489 = arith.addf %488, %487 : vector<2x32xf32>
    %490 = arith.divf %488, %489 : vector<2x32xf32>
    %491 = arith.mulf %482, %417 : vector<2x32xf32>
    %492 = arith.mulf %476, %484 : vector<2x32xf32>
    %493 = arith.addf %491, %492 : vector<2x32xf32>
    %494 = math.tanh %493 : vector<2x32xf32>
    %495 = arith.mulf %490, %494 : vector<2x32xf32>
    %c7_i32_137 = arith.constant 7 : i32
    %496 = arith.subi %c7_i32_137, %c6_i32 : i32
    %497 = arith.index_cast %496 : i32 to index
    %c0_138 = arith.constant 0 : index
    %c0_139 = arith.constant 0 : index
    %498 = vector.load %arg0[%497, %c0_138, %c0_139] : memref<8x2x4xf32, #tpu.memory_space<vmem>>, vector<1x2x4xf32>
    %499 = vector.shape_cast %498 : vector<1x2x4xf32> to vector<2x4xf32>
    %cst_140 = arith.constant dense<0.000000e+00> : vector<2x128xf32>
    %500 = tpu.matmul %499, %4, %cst_140 {dimension_numbers = #tpu.dot_dimension_numbers<[1], [0], [0], [1], [0, 0, 1, 1], [], []>} : vector<2x4xf32>, vector<4x128xf32>, vector<2x128xf32> -> vector<2x128xf32>
    %cst_141 = arith.constant dense<0.000000e+00> : vector<2x128xf32>
    %501 = tpu.matmul %453, %5, %cst_141 {dimension_numbers = #tpu.dot_dimension_numbers<[1], [0], [0], [1], [0, 0, 1, 1], [], []>} : vector<2x32xf32>, vector<32x128xf32>, vector<2x128xf32> -> vector<2x128xf32>
    %502 = arith.addf %500, %501 : vector<2x128xf32>
    %503 = vector.broadcast %6 : vector<1x128xf32> to vector<2x128xf32>
    %504 = arith.addf %502, %503 : vector<2x128xf32>
    %505 = vector.extract_strided_slice %504 {offsets = [0, 0], sizes = [2, 32], strides = [1, 1]} : vector<2x128xf32> to vector<2x32xf32>
    %506 = arith.negf %505 : vector<2x32xf32>
    %507 = math.exp %506 : vector<2x32xf32>
    %cst_142 = arith.constant 1.000000e+00 : f32
    %508 = vector.broadcast %cst_142 : f32 to vector<2x32xf32>
    %509 = arith.addf %508, %507 : vector<2x32xf32>
    %510 = arith.divf %508, %509 : vector<2x32xf32>
    %511 = vector.extract_strided_slice %504 {offsets = [0, 32], sizes = [2, 32], strides = [1, 1]} : vector<2x128xf32> to vector<2x32xf32>
    %512 = arith.negf %511 : vector<2x32xf32>
    %513 = math.exp %512 : vector<2x32xf32>
    %cst_143 = arith.constant 1.000000e+00 : f32
    %514 = vector.broadcast %cst_143 : f32 to vector<2x32xf32>
    %515 = arith.addf %514, %513 : vector<2x32xf32>
    %516 = arith.divf %514, %515 : vector<2x32xf32>
    %517 = vector.extract_strided_slice %504 {offsets = [0, 64], sizes = [2, 32], strides = [1, 1]} : vector<2x128xf32> to vector<2x32xf32>
    %518 = math.tanh %517 : vector<2x32xf32>
    %519 = vector.extract_strided_slice %504 {offsets = [0, 96], sizes = [2, 32], strides = [1, 1]} : vector<2x128xf32> to vector<2x32xf32>
    %520 = arith.negf %519 : vector<2x32xf32>
    %521 = math.exp %520 : vector<2x32xf32>
    %cst_144 = arith.constant 1.000000e+00 : f32
    %522 = vector.broadcast %cst_144 : f32 to vector<2x32xf32>
    %523 = arith.addf %522, %521 : vector<2x32xf32>
    %524 = arith.divf %522, %523 : vector<2x32xf32>
    %525 = arith.mulf %516, %451 : vector<2x32xf32>
    %526 = arith.mulf %510, %518 : vector<2x32xf32>
    %527 = arith.addf %525, %526 : vector<2x32xf32>
    %528 = math.tanh %527 : vector<2x32xf32>
    %529 = arith.mulf %524, %528 : vector<2x32xf32>
    %530 = arith.index_cast %c6_i32 : i32 to index
    %c0_145 = arith.constant 0 : index
    %c0_146 = arith.constant 0 : index
    %531 = vector.load %arg20[%530, %c0_145, %c0_146] : memref<8x2x32xf32, #tpu.memory_space<vmem>>, vector<1x2x32xf32>
    %532 = vector.shape_cast %531 : vector<1x2x32xf32> to vector<2x32xf32>
    %533 = vector.shape_cast %495 : vector<2x32xf32> to vector<1x2x32xf32>
    tpu.vector_store %arg20[%530, %c0_145, %c0_146], %533 {strides = array<i32>} : memref<8x2x32xf32, #tpu.memory_space<vmem>>, vector<1x2x32xf32>,
    %c7_i32_147 = arith.constant 7 : i32
    %534 = arith.subi %c7_i32_147, %c6_i32 : i32
    %535 = arith.index_cast %534 : i32 to index
    %c0_148 = arith.constant 0 : index
    %c0_149 = arith.constant 0 : index
    %536 = vector.load %arg21[%535, %c0_148, %c0_149] : memref<8x2x32xf32, #tpu.memory_space<vmem>>, vector<1x2x32xf32>
    %537 = vector.shape_cast %536 : vector<1x2x32xf32> to vector<2x32xf32>
    %538 = vector.shape_cast %529 : vector<2x32xf32> to vector<1x2x32xf32>
    tpu.vector_store %arg21[%535, %c0_148, %c0_149], %538 {strides = array<i32>} : memref<8x2x32xf32, #tpu.memory_space<vmem>>, vector<1x2x32xf32>,
    %c7_i32_150 = arith.constant 7 : i32
    %539 = arith.index_cast %c7_i32_150 : i32 to index
    %c0_151 = arith.constant 0 : index
    %c0_152 = arith.constant 0 : index
    %540 = vector.load %arg0[%539, %c0_151, %c0_152] : memref<8x2x4xf32, #tpu.memory_space<vmem>>, vector<1x2x4xf32>
    %541 = vector.shape_cast %540 : vector<1x2x4xf32> to vector<2x4xf32>
    %cst_153 = arith.constant dense<0.000000e+00> : vector<2x128xf32>
    %542 = tpu.matmul %541, %1, %cst_153 {dimension_numbers = #tpu.dot_dimension_numbers<[1], [0], [0], [1], [0, 0, 1, 1], [], []>} : vector<2x4xf32>, vector<4x128xf32>, vector<2x128xf32> -> vector<2x128xf32>
    %cst_154 = arith.constant dense<0.000000e+00> : vector<2x128xf32>
    %543 = tpu.matmul %495, %2, %cst_154 {dimension_numbers = #tpu.dot_dimension_numbers<[1], [0], [0], [1], [0, 0, 1, 1], [], []>} : vector<2x32xf32>, vector<32x128xf32>, vector<2x128xf32> -> vector<2x128xf32>
    %544 = arith.addf %542, %543 : vector<2x128xf32>
    %545 = vector.broadcast %3 : vector<1x128xf32> to vector<2x128xf32>
    %546 = arith.addf %544, %545 : vector<2x128xf32>
    %547 = vector.extract_strided_slice %546 {offsets = [0, 0], sizes = [2, 32], strides = [1, 1]} : vector<2x128xf32> to vector<2x32xf32>
    %548 = arith.negf %547 : vector<2x32xf32>
    %549 = math.exp %548 : vector<2x32xf32>
    %cst_155 = arith.constant 1.000000e+00 : f32
    %550 = vector.broadcast %cst_155 : f32 to vector<2x32xf32>
    %551 = arith.addf %550, %549 : vector<2x32xf32>
    %552 = arith.divf %550, %551 : vector<2x32xf32>
    %553 = vector.extract_strided_slice %546 {offsets = [0, 32], sizes = [2, 32], strides = [1, 1]} : vector<2x128xf32> to vector<2x32xf32>
    %554 = arith.negf %553 : vector<2x32xf32>
    %555 = math.exp %554 : vector<2x32xf32>
    %cst_156 = arith.constant 1.000000e+00 : f32
    %556 = vector.broadcast %cst_156 : f32 to vector<2x32xf32>
    %557 = arith.addf %556, %555 : vector<2x32xf32>
    %558 = arith.divf %556, %557 : vector<2x32xf32>
    %559 = vector.extract_strided_slice %546 {offsets = [0, 64], sizes = [2, 32], strides = [1, 1]} : vector<2x128xf32> to vector<2x32xf32>
    %560 = math.tanh %559 : vector<2x32xf32>
    %561 = vector.extract_strided_slice %546 {offsets = [0, 96], sizes = [2, 32], strides = [1, 1]} : vector<2x128xf32> to vector<2x32xf32>
    %562 = arith.negf %561 : vector<2x32xf32>
    %563 = math.exp %562 : vector<2x32xf32>
    %cst_157 = arith.constant 1.000000e+00 : f32
    %564 = vector.broadcast %cst_157 : f32 to vector<2x32xf32>
    %565 = arith.addf %564, %563 : vector<2x32xf32>
    %566 = arith.divf %564, %565 : vector<2x32xf32>
    %567 = arith.mulf %558, %493 : vector<2x32xf32>
    %568 = arith.mulf %552, %560 : vector<2x32xf32>
    %569 = arith.addf %567, %568 : vector<2x32xf32>
    %570 = math.tanh %569 : vector<2x32xf32>
    %571 = arith.mulf %566, %570 : vector<2x32xf32>
    %c7_i32_158 = arith.constant 7 : i32
    %572 = arith.subi %c7_i32_158, %c7_i32_150 : i32
    %573 = arith.index_cast %572 : i32 to index
    %c0_159 = arith.constant 0 : index
    %c0_160 = arith.constant 0 : index
    %574 = vector.load %arg0[%573, %c0_159, %c0_160] : memref<8x2x4xf32, #tpu.memory_space<vmem>>, vector<1x2x4xf32>
    %575 = vector.shape_cast %574 : vector<1x2x4xf32> to vector<2x4xf32>
    %cst_161 = arith.constant dense<0.000000e+00> : vector<2x128xf32>
    %576 = tpu.matmul %575, %4, %cst_161 {dimension_numbers = #tpu.dot_dimension_numbers<[1], [0], [0], [1], [0, 0, 1, 1], [], []>} : vector<2x4xf32>, vector<4x128xf32>, vector<2x128xf32> -> vector<2x128xf32>
    %cst_162 = arith.constant dense<0.000000e+00> : vector<2x128xf32>
    %577 = tpu.matmul %529, %5, %cst_162 {dimension_numbers = #tpu.dot_dimension_numbers<[1], [0], [0], [1], [0, 0, 1, 1], [], []>} : vector<2x32xf32>, vector<32x128xf32>, vector<2x128xf32> -> vector<2x128xf32>
    %578 = arith.addf %576, %577 : vector<2x128xf32>
    %579 = vector.broadcast %6 : vector<1x128xf32> to vector<2x128xf32>
    %580 = arith.addf %578, %579 : vector<2x128xf32>
    %581 = vector.extract_strided_slice %580 {offsets = [0, 0], sizes = [2, 32], strides = [1, 1]} : vector<2x128xf32> to vector<2x32xf32>
    %582 = arith.negf %581 : vector<2x32xf32>
    %583 = math.exp %582 : vector<2x32xf32>
    %cst_163 = arith.constant 1.000000e+00 : f32
    %584 = vector.broadcast %cst_163 : f32 to vector<2x32xf32>
    %585 = arith.addf %584, %583 : vector<2x32xf32>
    %586 = arith.divf %584, %585 : vector<2x32xf32>
    %587 = vector.extract_strided_slice %580 {offsets = [0, 32], sizes = [2, 32], strides = [1, 1]} : vector<2x128xf32> to vector<2x32xf32>
    %588 = arith.negf %587 : vector<2x32xf32>
    %589 = math.exp %588 : vector<2x32xf32>
    %cst_164 = arith.constant 1.000000e+00 : f32
    %590 = vector.broadcast %cst_164 : f32 to vector<2x32xf32>
    %591 = arith.addf %590, %589 : vector<2x32xf32>
    %592 = arith.divf %590, %591 : vector<2x32xf32>
    %593 = vector.extract_strided_slice %580 {offsets = [0, 64], sizes = [2, 32], strides = [1, 1]} : vector<2x128xf32> to vector<2x32xf32>
    %594 = math.tanh %593 : vector<2x32xf32>
    %595 = vector.extract_strided_slice %580 {offsets = [0, 96], sizes = [2, 32], strides = [1, 1]} : vector<2x128xf32> to vector<2x32xf32>
    %596 = arith.negf %595 : vector<2x32xf32>
    %597 = math.exp %596 : vector<2x32xf32>
    %cst_165 = arith.constant 1.000000e+00 : f32
    %598 = vector.broadcast %cst_165 : f32 to vector<2x32xf32>
    %599 = arith.addf %598, %597 : vector<2x32xf32>
    %600 = arith.divf %598, %599 : vector<2x32xf32>
    %601 = arith.mulf %592, %527 : vector<2x32xf32>
    %602 = arith.mulf %586, %594 : vector<2x32xf32>
    %603 = arith.addf %601, %602 : vector<2x32xf32>
    %604 = math.tanh %603 : vector<2x32xf32>
    %605 = arith.mulf %600, %604 : vector<2x32xf32>
    %606 = arith.index_cast %c7_i32_150 : i32 to index
    %c0_166 = arith.constant 0 : index
    %c0_167 = arith.constant 0 : index
    %607 = vector.load %arg20[%606, %c0_166, %c0_167] : memref<8x2x32xf32, #tpu.memory_space<vmem>>, vector<1x2x32xf32>
    %608 = vector.shape_cast %607 : vector<1x2x32xf32> to vector<2x32xf32>
    %609 = vector.shape_cast %571 : vector<2x32xf32> to vector<1x2x32xf32>
    tpu.vector_store %arg20[%606, %c0_166, %c0_167], %609 {strides = array<i32>} : memref<8x2x32xf32, #tpu.memory_space<vmem>>, vector<1x2x32xf32>,
    %c7_i32_168 = arith.constant 7 : i32
    %610 = arith.subi %c7_i32_168, %c7_i32_150 : i32
    %611 = arith.index_cast %610 : i32 to index
    %c0_169 = arith.constant 0 : index
    %c0_170 = arith.constant 0 : index
    %612 = vector.load %arg21[%611, %c0_169, %c0_170] : memref<8x2x32xf32, #tpu.memory_space<vmem>>, vector<1x2x32xf32>
    %613 = vector.shape_cast %612 : vector<1x2x32xf32> to vector<2x32xf32>
    %614 = vector.shape_cast %605 : vector<2x32xf32> to vector<1x2x32xf32>
    tpu.vector_store %arg21[%611, %c0_169, %c0_170], %614 {strides = array<i32>} : memref<8x2x32xf32, #tpu.memory_space<vmem>>, vector<1x2x32xf32>,
    %c8_i32 = arith.constant 8 : i32
    %c0_171 = arith.constant 0 : index
    %c0_172 = arith.constant 0 : index
    %615 = vector.load %arg7[%c0_171, %c0_172] : memref<64x128xf32, #tpu.memory_space<vmem>>, vector<64x128xf32>
    %c0_173 = arith.constant 0 : index
    %c0_174 = arith.constant 0 : index
    %616 = vector.load %arg8[%c0_173, %c0_174] : memref<32x128xf32, #tpu.memory_space<vmem>>, vector<32x128xf32>
    %c0_175 = arith.constant 0 : index
    %c0_176 = arith.constant 0 : index
    %617 = vector.load %arg9[%c0_175, %c0_176] : memref<1x128xf32, #tpu.memory_space<vmem>>, vector<1x128xf32>
    %c0_i32_177 = arith.constant 0 : i32
    %618 = arith.index_cast %c0_i32_177 : i32 to index
    %c0_178 = arith.constant 0 : index
    %c0_179 = arith.constant 0 : index
    %619 = vector.load %arg20[%618, %c0_178, %c0_179] : memref<8x2x32xf32, #tpu.memory_space<vmem>>, vector<1x2x32xf32>
    %620 = vector.shape_cast %619 : vector<1x2x32xf32> to vector<2x32xf32>
    %621 = arith.index_cast %c0_i32_177 : i32 to index
    %c0_180 = arith.constant 0 : index
    %c0_181 = arith.constant 0 : index
    %622 = vector.load %arg21[%621, %c0_180, %c0_181] : memref<8x2x32xf32, #tpu.memory_space<vmem>>, vector<1x2x32xf32>
    %623 = vector.shape_cast %622 : vector<1x2x32xf32> to vector<2x32xf32>
    %624 = tpu.concatenate %620, %623 in 1 : vector<2x32xf32>, vector<2x32xf32> -> vector<2x64xf32>
    %cst_182 = arith.constant dense<0.000000e+00> : vector<2x128xf32>
    %625 = tpu.matmul %624, %615, %cst_182 {dimension_numbers = #tpu.dot_dimension_numbers<[1], [0], [0], [1], [0, 0, 1, 1], [], []>} : vector<2x64xf32>, vector<64x128xf32>, vector<2x128xf32> -> vector<2x128xf32>
    %cst_183 = arith.constant dense<0.000000e+00> : vector<2x128xf32>
    %626 = tpu.matmul %0, %616, %cst_183 {dimension_numbers = #tpu.dot_dimension_numbers<[1], [0], [0], [1], [0, 0, 1, 1], [], []>} : vector<2x32xf32>, vector<32x128xf32>, vector<2x128xf32> -> vector<2x128xf32>
    %627 = arith.addf %625, %626 : vector<2x128xf32>
    %628 = vector.broadcast %617 : vector<1x128xf32> to vector<2x128xf32>
    %629 = arith.addf %627, %628 : vector<2x128xf32>
    %630 = vector.extract_strided_slice %629 {offsets = [0, 0], sizes = [2, 32], strides = [1, 1]} : vector<2x128xf32> to vector<2x32xf32>
    %631 = arith.negf %630 : vector<2x32xf32>
    %632 = math.exp %631 : vector<2x32xf32>
    %cst_184 = arith.constant 1.000000e+00 : f32
    %633 = vector.broadcast %cst_184 : f32 to vector<2x32xf32>
    %634 = arith.addf %633, %632 : vector<2x32xf32>
    %635 = arith.divf %633, %634 : vector<2x32xf32>
    %636 = vector.extract_strided_slice %629 {offsets = [0, 32], sizes = [2, 32], strides = [1, 1]} : vector<2x128xf32> to vector<2x32xf32>
    %637 = arith.negf %636 : vector<2x32xf32>
    %638 = math.exp %637 : vector<2x32xf32>
    %cst_185 = arith.constant 1.000000e+00 : f32
    %639 = vector.broadcast %cst_185 : f32 to vector<2x32xf32>
    %640 = arith.addf %639, %638 : vector<2x32xf32>
    %641 = arith.divf %639, %640 : vector<2x32xf32>
    %642 = vector.extract_strided_slice %629 {offsets = [0, 64], sizes = [2, 32], strides = [1, 1]} : vector<2x128xf32> to vector<2x32xf32>
    %643 = math.tanh %642 : vector<2x32xf32>
    %644 = vector.extract_strided_slice %629 {offsets = [0, 96], sizes = [2, 32], strides = [1, 1]} : vector<2x128xf32> to vector<2x32xf32>
    %645 = arith.negf %644 : vector<2x32xf32>
    %646 = math.exp %645 : vector<2x32xf32>
    %cst_186 = arith.constant 1.000000e+00 : f32
    %647 = vector.broadcast %cst_186 : f32 to vector<2x32xf32>
    %648 = arith.addf %647, %646 : vector<2x32xf32>
    %649 = arith.divf %647, %648 : vector<2x32xf32>
    %650 = arith.mulf %641, %0 : vector<2x32xf32>
    %651 = arith.mulf %635, %643 : vector<2x32xf32>
    %652 = arith.addf %650, %651 : vector<2x32xf32>
    %653 = math.tanh %652 : vector<2x32xf32>
    %654 = arith.mulf %649, %653 : vector<2x32xf32>
    %c1_i32_187 = arith.constant 1 : i32
    %655 = arith.index_cast %c1_i32_187 : i32 to index
    %c0_188 = arith.constant 0 : index
    %c0_189 = arith.constant 0 : index
    %656 = vector.load %arg20[%655, %c0_188, %c0_189] : memref<8x2x32xf32, #tpu.memory_space<vmem>>, vector<1x2x32xf32>
    %657 = vector.shape_cast %656 : vector<1x2x32xf32> to vector<2x32xf32>
    %658 = arith.index_cast %c1_i32_187 : i32 to index
    %c0_190 = arith.constant 0 : index
    %c0_191 = arith.constant 0 : index
    %659 = vector.load %arg21[%658, %c0_190, %c0_191] : memref<8x2x32xf32, #tpu.memory_space<vmem>>, vector<1x2x32xf32>
    %660 = vector.shape_cast %659 : vector<1x2x32xf32> to vector<2x32xf32>
    %661 = tpu.concatenate %657, %660 in 1 : vector<2x32xf32>, vector<2x32xf32> -> vector<2x64xf32>
    %cst_192 = arith.constant dense<0.000000e+00> : vector<2x128xf32>
    %662 = tpu.matmul %661, %615, %cst_192 {dimension_numbers = #tpu.dot_dimension_numbers<[1], [0], [0], [1], [0, 0, 1, 1], [], []>} : vector<2x64xf32>, vector<64x128xf32>, vector<2x128xf32> -> vector<2x128xf32>
    %cst_193 = arith.constant dense<0.000000e+00> : vector<2x128xf32>
    %663 = tpu.matmul %654, %616, %cst_193 {dimension_numbers = #tpu.dot_dimension_numbers<[1], [0], [0], [1], [0, 0, 1, 1], [], []>} : vector<2x32xf32>, vector<32x128xf32>, vector<2x128xf32> -> vector<2x128xf32>
    %664 = arith.addf %662, %663 : vector<2x128xf32>
    %665 = vector.broadcast %617 : vector<1x128xf32> to vector<2x128xf32>
    %666 = arith.addf %664, %665 : vector<2x128xf32>
    %667 = vector.extract_strided_slice %666 {offsets = [0, 0], sizes = [2, 32], strides = [1, 1]} : vector<2x128xf32> to vector<2x32xf32>
    %668 = arith.negf %667 : vector<2x32xf32>
    %669 = math.exp %668 : vector<2x32xf32>
    %cst_194 = arith.constant 1.000000e+00 : f32
    %670 = vector.broadcast %cst_194 : f32 to vector<2x32xf32>
    %671 = arith.addf %670, %669 : vector<2x32xf32>
    %672 = arith.divf %670, %671 : vector<2x32xf32>
    %673 = vector.extract_strided_slice %666 {offsets = [0, 32], sizes = [2, 32], strides = [1, 1]} : vector<2x128xf32> to vector<2x32xf32>
    %674 = arith.negf %673 : vector<2x32xf32>
    %675 = math.exp %674 : vector<2x32xf32>
    %cst_195 = arith.constant 1.000000e+00 : f32
    %676 = vector.broadcast %cst_195 : f32 to vector<2x32xf32>
    %677 = arith.addf %676, %675 : vector<2x32xf32>
    %678 = arith.divf %676, %677 : vector<2x32xf32>
    %679 = vector.extract_strided_slice %666 {offsets = [0, 64], sizes = [2, 32], strides = [1, 1]} : vector<2x128xf32> to vector<2x32xf32>
    %680 = math.tanh %679 : vector<2x32xf32>
    %681 = vector.extract_strided_slice %666 {offsets = [0, 96], sizes = [2, 32], strides = [1, 1]} : vector<2x128xf32> to vector<2x32xf32>
    %682 = arith.negf %681 : vector<2x32xf32>
    %683 = math.exp %682 : vector<2x32xf32>
    %cst_196 = arith.constant 1.000000e+00 : f32
    %684 = vector.broadcast %cst_196 : f32 to vector<2x32xf32>
    %685 = arith.addf %684, %683 : vector<2x32xf32>
    %686 = arith.divf %684, %685 : vector<2x32xf32>
    %687 = arith.mulf %678, %652 : vector<2x32xf32>
    %688 = arith.mulf %672, %680 : vector<2x32xf32>
    %689 = arith.addf %687, %688 : vector<2x32xf32>
    %690 = math.tanh %689 : vector<2x32xf32>
    %691 = arith.mulf %686, %690 : vector<2x32xf32>
    %c2_i32_197 = arith.constant 2 : i32
    %692 = arith.index_cast %c2_i32_197 : i32 to index
    %c0_198 = arith.constant 0 : index
    %c0_199 = arith.constant 0 : index
    %693 = vector.load %arg20[%692, %c0_198, %c0_199] : memref<8x2x32xf32, #tpu.memory_space<vmem>>, vector<1x2x32xf32>
    %694 = vector.shape_cast %693 : vector<1x2x32xf32> to vector<2x32xf32>
    %695 = arith.index_cast %c2_i32_197 : i32 to index
    %c0_200 = arith.constant 0 : index
    %c0_201 = arith.constant 0 : index
    %696 = vector.load %arg21[%695, %c0_200, %c0_201] : memref<8x2x32xf32, #tpu.memory_space<vmem>>, vector<1x2x32xf32>
    %697 = vector.shape_cast %696 : vector<1x2x32xf32> to vector<2x32xf32>
    %698 = tpu.concatenate %694, %697 in 1 : vector<2x32xf32>, vector<2x32xf32> -> vector<2x64xf32>
    %cst_202 = arith.constant dense<0.000000e+00> : vector<2x128xf32>
    %699 = tpu.matmul %698, %615, %cst_202 {dimension_numbers = #tpu.dot_dimension_numbers<[1], [0], [0], [1], [0, 0, 1, 1], [], []>} : vector<2x64xf32>, vector<64x128xf32>, vector<2x128xf32> -> vector<2x128xf32>
    %cst_203 = arith.constant dense<0.000000e+00> : vector<2x128xf32>
    %700 = tpu.matmul %691, %616, %cst_203 {dimension_numbers = #tpu.dot_dimension_numbers<[1], [0], [0], [1], [0, 0, 1, 1], [], []>} : vector<2x32xf32>, vector<32x128xf32>, vector<2x128xf32> -> vector<2x128xf32>
    %701 = arith.addf %699, %700 : vector<2x128xf32>
    %702 = vector.broadcast %617 : vector<1x128xf32> to vector<2x128xf32>
    %703 = arith.addf %701, %702 : vector<2x128xf32>
    %704 = vector.extract_strided_slice %703 {offsets = [0, 0], sizes = [2, 32], strides = [1, 1]} : vector<2x128xf32> to vector<2x32xf32>
    %705 = arith.negf %704 : vector<2x32xf32>
    %706 = math.exp %705 : vector<2x32xf32>
    %cst_204 = arith.constant 1.000000e+00 : f32
    %707 = vector.broadcast %cst_204 : f32 to vector<2x32xf32>
    %708 = arith.addf %707, %706 : vector<2x32xf32>
    %709 = arith.divf %707, %708 : vector<2x32xf32>
    %710 = vector.extract_strided_slice %703 {offsets = [0, 32], sizes = [2, 32], strides = [1, 1]} : vector<2x128xf32> to vector<2x32xf32>
    %711 = arith.negf %710 : vector<2x32xf32>
    %712 = math.exp %711 : vector<2x32xf32>
    %cst_205 = arith.constant 1.000000e+00 : f32
    %713 = vector.broadcast %cst_205 : f32 to vector<2x32xf32>
    %714 = arith.addf %713, %712 : vector<2x32xf32>
    %715 = arith.divf %713, %714 : vector<2x32xf32>
    %716 = vector.extract_strided_slice %703 {offsets = [0, 64], sizes = [2, 32], strides = [1, 1]} : vector<2x128xf32> to vector<2x32xf32>
    %717 = math.tanh %716 : vector<2x32xf32>
    %718 = vector.extract_strided_slice %703 {offsets = [0, 96], sizes = [2, 32], strides = [1, 1]} : vector<2x128xf32> to vector<2x32xf32>
    %719 = arith.negf %718 : vector<2x32xf32>
    %720 = math.exp %719 : vector<2x32xf32>
    %cst_206 = arith.constant 1.000000e+00 : f32
    %721 = vector.broadcast %cst_206 : f32 to vector<2x32xf32>
    %722 = arith.addf %721, %720 : vector<2x32xf32>
    %723 = arith.divf %721, %722 : vector<2x32xf32>
    %724 = arith.mulf %715, %689 : vector<2x32xf32>
    %725 = arith.mulf %709, %717 : vector<2x32xf32>
    %726 = arith.addf %724, %725 : vector<2x32xf32>
    %727 = math.tanh %726 : vector<2x32xf32>
    %728 = arith.mulf %723, %727 : vector<2x32xf32>
    %c3_i32_207 = arith.constant 3 : i32
    %729 = arith.index_cast %c3_i32_207 : i32 to index
    %c0_208 = arith.constant 0 : index
    %c0_209 = arith.constant 0 : index
    %730 = vector.load %arg20[%729, %c0_208, %c0_209] : memref<8x2x32xf32, #tpu.memory_space<vmem>>, vector<1x2x32xf32>
    %731 = vector.shape_cast %730 : vector<1x2x32xf32> to vector<2x32xf32>
    %732 = arith.index_cast %c3_i32_207 : i32 to index
    %c0_210 = arith.constant 0 : index
    %c0_211 = arith.constant 0 : index
    %733 = vector.load %arg21[%732, %c0_210, %c0_211] : memref<8x2x32xf32, #tpu.memory_space<vmem>>, vector<1x2x32xf32>
    %734 = vector.shape_cast %733 : vector<1x2x32xf32> to vector<2x32xf32>
    %735 = tpu.concatenate %731, %734 in 1 : vector<2x32xf32>, vector<2x32xf32> -> vector<2x64xf32>
    %cst_212 = arith.constant dense<0.000000e+00> : vector<2x128xf32>
    %736 = tpu.matmul %735, %615, %cst_212 {dimension_numbers = #tpu.dot_dimension_numbers<[1], [0], [0], [1], [0, 0, 1, 1], [], []>} : vector<2x64xf32>, vector<64x128xf32>, vector<2x128xf32> -> vector<2x128xf32>
    %cst_213 = arith.constant dense<0.000000e+00> : vector<2x128xf32>
    %737 = tpu.matmul %728, %616, %cst_213 {dimension_numbers = #tpu.dot_dimension_numbers<[1], [0], [0], [1], [0, 0, 1, 1], [], []>} : vector<2x32xf32>, vector<32x128xf32>, vector<2x128xf32> -> vector<2x128xf32>
    %738 = arith.addf %736, %737 : vector<2x128xf32>
    %739 = vector.broadcast %617 : vector<1x128xf32> to vector<2x128xf32>
    %740 = arith.addf %738, %739 : vector<2x128xf32>
    %741 = vector.extract_strided_slice %740 {offsets = [0, 0], sizes = [2, 32], strides = [1, 1]} : vector<2x128xf32> to vector<2x32xf32>
    %742 = arith.negf %741 : vector<2x32xf32>
    %743 = math.exp %742 : vector<2x32xf32>
    %cst_214 = arith.constant 1.000000e+00 : f32
    %744 = vector.broadcast %cst_214 : f32 to vector<2x32xf32>
    %745 = arith.addf %744, %743 : vector<2x32xf32>
    %746 = arith.divf %744, %745 : vector<2x32xf32>
    %747 = vector.extract_strided_slice %740 {offsets = [0, 32], sizes = [2, 32], strides = [1, 1]} : vector<2x128xf32> to vector<2x32xf32>
    %748 = arith.negf %747 : vector<2x32xf32>
    %749 = math.exp %748 : vector<2x32xf32>
    %cst_215 = arith.constant 1.000000e+00 : f32
    %750 = vector.broadcast %cst_215 : f32 to vector<2x32xf32>
    %751 = arith.addf %750, %749 : vector<2x32xf32>
    %752 = arith.divf %750, %751 : vector<2x32xf32>
    %753 = vector.extract_strided_slice %740 {offsets = [0, 64], sizes = [2, 32], strides = [1, 1]} : vector<2x128xf32> to vector<2x32xf32>
    %754 = math.tanh %753 : vector<2x32xf32>
    %755 = vector.extract_strided_slice %740 {offsets = [0, 96], sizes = [2, 32], strides = [1, 1]} : vector<2x128xf32> to vector<2x32xf32>
    %756 = arith.negf %755 : vector<2x32xf32>
    %757 = math.exp %756 : vector<2x32xf32>
    %cst_216 = arith.constant 1.000000e+00 : f32
    %758 = vector.broadcast %cst_216 : f32 to vector<2x32xf32>
    %759 = arith.addf %758, %757 : vector<2x32xf32>
    %760 = arith.divf %758, %759 : vector<2x32xf32>
    %761 = arith.mulf %752, %726 : vector<2x32xf32>
    %762 = arith.mulf %746, %754 : vector<2x32xf32>
    %763 = arith.addf %761, %762 : vector<2x32xf32>
    %764 = math.tanh %763 : vector<2x32xf32>
    %765 = arith.mulf %760, %764 : vector<2x32xf32>
    %c4_i32_217 = arith.constant 4 : i32
    %766 = arith.index_cast %c4_i32_217 : i32 to index
    %c0_218 = arith.constant 0 : index
    %c0_219 = arith.constant 0 : index
    %767 = vector.load %arg20[%766, %c0_218, %c0_219] : memref<8x2x32xf32, #tpu.memory_space<vmem>>, vector<1x2x32xf32>
    %768 = vector.shape_cast %767 : vector<1x2x32xf32> to vector<2x32xf32>
    %769 = arith.index_cast %c4_i32_217 : i32 to index
    %c0_220 = arith.constant 0 : index
    %c0_221 = arith.constant 0 : index
    %770 = vector.load %arg21[%769, %c0_220, %c0_221] : memref<8x2x32xf32, #tpu.memory_space<vmem>>, vector<1x2x32xf32>
    %771 = vector.shape_cast %770 : vector<1x2x32xf32> to vector<2x32xf32>
    %772 = tpu.concatenate %768, %771 in 1 : vector<2x32xf32>, vector<2x32xf32> -> vector<2x64xf32>
    %cst_222 = arith.constant dense<0.000000e+00> : vector<2x128xf32>
    %773 = tpu.matmul %772, %615, %cst_222 {dimension_numbers = #tpu.dot_dimension_numbers<[1], [0], [0], [1], [0, 0, 1, 1], [], []>} : vector<2x64xf32>, vector<64x128xf32>, vector<2x128xf32> -> vector<2x128xf32>
    %cst_223 = arith.constant dense<0.000000e+00> : vector<2x128xf32>
    %774 = tpu.matmul %765, %616, %cst_223 {dimension_numbers = #tpu.dot_dimension_numbers<[1], [0], [0], [1], [0, 0, 1, 1], [], []>} : vector<2x32xf32>, vector<32x128xf32>, vector<2x128xf32> -> vector<2x128xf32>
    %775 = arith.addf %773, %774 : vector<2x128xf32>
    %776 = vector.broadcast %617 : vector<1x128xf32> to vector<2x128xf32>
    %777 = arith.addf %775, %776 : vector<2x128xf32>
    %778 = vector.extract_strided_slice %777 {offsets = [0, 0], sizes = [2, 32], strides = [1, 1]} : vector<2x128xf32> to vector<2x32xf32>
    %779 = arith.negf %778 : vector<2x32xf32>
    %780 = math.exp %779 : vector<2x32xf32>
    %cst_224 = arith.constant 1.000000e+00 : f32
    %781 = vector.broadcast %cst_224 : f32 to vector<2x32xf32>
    %782 = arith.addf %781, %780 : vector<2x32xf32>
    %783 = arith.divf %781, %782 : vector<2x32xf32>
    %784 = vector.extract_strided_slice %777 {offsets = [0, 32], sizes = [2, 32], strides = [1, 1]} : vector<2x128xf32> to vector<2x32xf32>
    %785 = arith.negf %784 : vector<2x32xf32>
    %786 = math.exp %785 : vector<2x32xf32>
    %cst_225 = arith.constant 1.000000e+00 : f32
    %787 = vector.broadcast %cst_225 : f32 to vector<2x32xf32>
    %788 = arith.addf %787, %786 : vector<2x32xf32>
    %789 = arith.divf %787, %788 : vector<2x32xf32>
    %790 = vector.extract_strided_slice %777 {offsets = [0, 64], sizes = [2, 32], strides = [1, 1]} : vector<2x128xf32> to vector<2x32xf32>
    %791 = math.tanh %790 : vector<2x32xf32>
    %792 = vector.extract_strided_slice %777 {offsets = [0, 96], sizes = [2, 32], strides = [1, 1]} : vector<2x128xf32> to vector<2x32xf32>
    %793 = arith.negf %792 : vector<2x32xf32>
    %794 = math.exp %793 : vector<2x32xf32>
    %cst_226 = arith.constant 1.000000e+00 : f32
    %795 = vector.broadcast %cst_226 : f32 to vector<2x32xf32>
    %796 = arith.addf %795, %794 : vector<2x32xf32>
    %797 = arith.divf %795, %796 : vector<2x32xf32>
    %798 = arith.mulf %789, %763 : vector<2x32xf32>
    %799 = arith.mulf %783, %791 : vector<2x32xf32>
    %800 = arith.addf %798, %799 : vector<2x32xf32>
    %801 = math.tanh %800 : vector<2x32xf32>
    %802 = arith.mulf %797, %801 : vector<2x32xf32>
    %c5_i32_227 = arith.constant 5 : i32
    %803 = arith.index_cast %c5_i32_227 : i32 to index
    %c0_228 = arith.constant 0 : index
    %c0_229 = arith.constant 0 : index
    %804 = vector.load %arg20[%803, %c0_228, %c0_229] : memref<8x2x32xf32, #tpu.memory_space<vmem>>, vector<1x2x32xf32>
    %805 = vector.shape_cast %804 : vector<1x2x32xf32> to vector<2x32xf32>
    %806 = arith.index_cast %c5_i32_227 : i32 to index
    %c0_230 = arith.constant 0 : index
    %c0_231 = arith.constant 0 : index
    %807 = vector.load %arg21[%806, %c0_230, %c0_231] : memref<8x2x32xf32, #tpu.memory_space<vmem>>, vector<1x2x32xf32>
    %808 = vector.shape_cast %807 : vector<1x2x32xf32> to vector<2x32xf32>
    %809 = tpu.concatenate %805, %808 in 1 : vector<2x32xf32>, vector<2x32xf32> -> vector<2x64xf32>
    %cst_232 = arith.constant dense<0.000000e+00> : vector<2x128xf32>
    %810 = tpu.matmul %809, %615, %cst_232 {dimension_numbers = #tpu.dot_dimension_numbers<[1], [0], [0], [1], [0, 0, 1, 1], [], []>} : vector<2x64xf32>, vector<64x128xf32>, vector<2x128xf32> -> vector<2x128xf32>
    %cst_233 = arith.constant dense<0.000000e+00> : vector<2x128xf32>
    %811 = tpu.matmul %802, %616, %cst_233 {dimension_numbers = #tpu.dot_dimension_numbers<[1], [0], [0], [1], [0, 0, 1, 1], [], []>} : vector<2x32xf32>, vector<32x128xf32>, vector<2x128xf32> -> vector<2x128xf32>
    %812 = arith.addf %810, %811 : vector<2x128xf32>
    %813 = vector.broadcast %617 : vector<1x128xf32> to vector<2x128xf32>
    %814 = arith.addf %812, %813 : vector<2x128xf32>
    %815 = vector.extract_strided_slice %814 {offsets = [0, 0], sizes = [2, 32], strides = [1, 1]} : vector<2x128xf32> to vector<2x32xf32>
    %816 = arith.negf %815 : vector<2x32xf32>
    %817 = math.exp %816 : vector<2x32xf32>
    %cst_234 = arith.constant 1.000000e+00 : f32
    %818 = vector.broadcast %cst_234 : f32 to vector<2x32xf32>
    %819 = arith.addf %818, %817 : vector<2x32xf32>
    %820 = arith.divf %818, %819 : vector<2x32xf32>
    %821 = vector.extract_strided_slice %814 {offsets = [0, 32], sizes = [2, 32], strides = [1, 1]} : vector<2x128xf32> to vector<2x32xf32>
    %822 = arith.negf %821 : vector<2x32xf32>
    %823 = math.exp %822 : vector<2x32xf32>
    %cst_235 = arith.constant 1.000000e+00 : f32
    %824 = vector.broadcast %cst_235 : f32 to vector<2x32xf32>
    %825 = arith.addf %824, %823 : vector<2x32xf32>
    %826 = arith.divf %824, %825 : vector<2x32xf32>
    %827 = vector.extract_strided_slice %814 {offsets = [0, 64], sizes = [2, 32], strides = [1, 1]} : vector<2x128xf32> to vector<2x32xf32>
    %828 = math.tanh %827 : vector<2x32xf32>
    %829 = vector.extract_strided_slice %814 {offsets = [0, 96], sizes = [2, 32], strides = [1, 1]} : vector<2x128xf32> to vector<2x32xf32>
    %830 = arith.negf %829 : vector<2x32xf32>
    %831 = math.exp %830 : vector<2x32xf32>
    %cst_236 = arith.constant 1.000000e+00 : f32
    %832 = vector.broadcast %cst_236 : f32 to vector<2x32xf32>
    %833 = arith.addf %832, %831 : vector<2x32xf32>
    %834 = arith.divf %832, %833 : vector<2x32xf32>
    %835 = arith.mulf %826, %800 : vector<2x32xf32>
    %836 = arith.mulf %820, %828 : vector<2x32xf32>
    %837 = arith.addf %835, %836 : vector<2x32xf32>
    %838 = math.tanh %837 : vector<2x32xf32>
    %839 = arith.mulf %834, %838 : vector<2x32xf32>
    %c6_i32_237 = arith.constant 6 : i32
    %840 = arith.index_cast %c6_i32_237 : i32 to index
    %c0_238 = arith.constant 0 : index
    %c0_239 = arith.constant 0 : index
    %841 = vector.load %arg20[%840, %c0_238, %c0_239] : memref<8x2x32xf32, #tpu.memory_space<vmem>>, vector<1x2x32xf32>
    %842 = vector.shape_cast %841 : vector<1x2x32xf32> to vector<2x32xf32>
    %843 = arith.index_cast %c6_i32_237 : i32 to index
    %c0_240 = arith.constant 0 : index
    %c0_241 = arith.constant 0 : index
    %844 = vector.load %arg21[%843, %c0_240, %c0_241] : memref<8x2x32xf32, #tpu.memory_space<vmem>>, vector<1x2x32xf32>
    %845 = vector.shape_cast %844 : vector<1x2x32xf32> to vector<2x32xf32>
    %846 = tpu.concatenate %842, %845 in 1 : vector<2x32xf32>, vector<2x32xf32> -> vector<2x64xf32>
    %cst_242 = arith.constant dense<0.000000e+00> : vector<2x128xf32>
    %847 = tpu.matmul %846, %615, %cst_242 {dimension_numbers = #tpu.dot_dimension_numbers<[1], [0], [0], [1], [0, 0, 1, 1], [], []>} : vector<2x64xf32>, vector<64x128xf32>, vector<2x128xf32> -> vector<2x128xf32>
    %cst_243 = arith.constant dense<0.000000e+00> : vector<2x128xf32>
    %848 = tpu.matmul %839, %616, %cst_243 {dimension_numbers = #tpu.dot_dimension_numbers<[1], [0], [0], [1], [0, 0, 1, 1], [], []>} : vector<2x32xf32>, vector<32x128xf32>, vector<2x128xf32> -> vector<2x128xf32>
    %849 = arith.addf %847, %848 : vector<2x128xf32>
    %850 = vector.broadcast %617 : vector<1x128xf32> to vector<2x128xf32>
    %851 = arith.addf %849, %850 : vector<2x128xf32>
    %852 = vector.extract_strided_slice %851 {offsets = [0, 0], sizes = [2, 32], strides = [1, 1]} : vector<2x128xf32> to vector<2x32xf32>
    %853 = arith.negf %852 : vector<2x32xf32>
    %854 = math.exp %853 : vector<2x32xf32>
    %cst_244 = arith.constant 1.000000e+00 : f32
    %855 = vector.broadcast %cst_244 : f32 to vector<2x32xf32>
    %856 = arith.addf %855, %854 : vector<2x32xf32>
    %857 = arith.divf %855, %856 : vector<2x32xf32>
    %858 = vector.extract_strided_slice %851 {offsets = [0, 32], sizes = [2, 32], strides = [1, 1]} : vector<2x128xf32> to vector<2x32xf32>
    %859 = arith.negf %858 : vector<2x32xf32>
    %860 = math.exp %859 : vector<2x32xf32>
    %cst_245 = arith.constant 1.000000e+00 : f32
    %861 = vector.broadcast %cst_245 : f32 to vector<2x32xf32>
    %862 = arith.addf %861, %860 : vector<2x32xf32>
    %863 = arith.divf %861, %862 : vector<2x32xf32>
    %864 = vector.extract_strided_slice %851 {offsets = [0, 64], sizes = [2, 32], strides = [1, 1]} : vector<2x128xf32> to vector<2x32xf32>
    %865 = math.tanh %864 : vector<2x32xf32>
    %866 = vector.extract_strided_slice %851 {offsets = [0, 96], sizes = [2, 32], strides = [1, 1]} : vector<2x128xf32> to vector<2x32xf32>
    %867 = arith.negf %866 : vector<2x32xf32>
    %868 = math.exp %867 : vector<2x32xf32>
    %cst_246 = arith.constant 1.000000e+00 : f32
    %869 = vector.broadcast %cst_246 : f32 to vector<2x32xf32>
    %870 = arith.addf %869, %868 : vector<2x32xf32>
    %871 = arith.divf %869, %870 : vector<2x32xf32>
    %872 = arith.mulf %863, %837 : vector<2x32xf32>
    %873 = arith.mulf %857, %865 : vector<2x32xf32>
    %874 = arith.addf %872, %873 : vector<2x32xf32>
    %875 = math.tanh %874 : vector<2x32xf32>
    %876 = arith.mulf %871, %875 : vector<2x32xf32>
    %c7_i32_247 = arith.constant 7 : i32
    %877 = arith.index_cast %c7_i32_247 : i32 to index
    %c0_248 = arith.constant 0 : index
    %c0_249 = arith.constant 0 : index
    %878 = vector.load %arg20[%877, %c0_248, %c0_249] : memref<8x2x32xf32, #tpu.memory_space<vmem>>, vector<1x2x32xf32>
    %879 = vector.shape_cast %878 : vector<1x2x32xf32> to vector<2x32xf32>
    %880 = arith.index_cast %c7_i32_247 : i32 to index
    %c0_250 = arith.constant 0 : index
    %c0_251 = arith.constant 0 : index
    %881 = vector.load %arg21[%880, %c0_250, %c0_251] : memref<8x2x32xf32, #tpu.memory_space<vmem>>, vector<1x2x32xf32>
    %882 = vector.shape_cast %881 : vector<1x2x32xf32> to vector<2x32xf32>
    %883 = tpu.concatenate %879, %882 in 1 : vector<2x32xf32>, vector<2x32xf32> -> vector<2x64xf32>
    %cst_252 = arith.constant dense<0.000000e+00> : vector<2x128xf32>
    %884 = tpu.matmul %883, %615, %cst_252 {dimension_numbers = #tpu.dot_dimension_numbers<[1], [0], [0], [1], [0, 0, 1, 1], [], []>} : vector<2x64xf32>, vector<64x128xf32>, vector<2x128xf32> -> vector<2x128xf32>
    %cst_253 = arith.constant dense<0.000000e+00> : vector<2x128xf32>
    %885 = tpu.matmul %876, %616, %cst_253 {dimension_numbers = #tpu.dot_dimension_numbers<[1], [0], [0], [1], [0, 0, 1, 1], [], []>} : vector<2x32xf32>, vector<32x128xf32>, vector<2x128xf32> -> vector<2x128xf32>
    %886 = arith.addf %884, %885 : vector<2x128xf32>
    %887 = vector.broadcast %617 : vector<1x128xf32> to vector<2x128xf32>
    %888 = arith.addf %886, %887 : vector<2x128xf32>
    %889 = vector.extract_strided_slice %888 {offsets = [0, 0], sizes = [2, 32], strides = [1, 1]} : vector<2x128xf32> to vector<2x32xf32>
    %890 = arith.negf %889 : vector<2x32xf32>
    %891 = math.exp %890 : vector<2x32xf32>
    %cst_254 = arith.constant 1.000000e+00 : f32
    %892 = vector.broadcast %cst_254 : f32 to vector<2x32xf32>
    %893 = arith.addf %892, %891 : vector<2x32xf32>
    %894 = arith.divf %892, %893 : vector<2x32xf32>
    %895 = vector.extract_strided_slice %888 {offsets = [0, 32], sizes = [2, 32], strides = [1, 1]} : vector<2x128xf32> to vector<2x32xf32>
    %896 = arith.negf %895 : vector<2x32xf32>
    %897 = math.exp %896 : vector<2x32xf32>
    %cst_255 = arith.constant 1.000000e+00 : f32
    %898 = vector.broadcast %cst_255 : f32 to vector<2x32xf32>
    %899 = arith.addf %898, %897 : vector<2x32xf32>
    %900 = arith.divf %898, %899 : vector<2x32xf32>
    %901 = vector.extract_strided_slice %888 {offsets = [0, 64], sizes = [2, 32], strides = [1, 1]} : vector<2x128xf32> to vector<2x32xf32>
    %902 = math.tanh %901 : vector<2x32xf32>
    %903 = vector.extract_strided_slice %888 {offsets = [0, 96], sizes = [2, 32], strides = [1, 1]} : vector<2x128xf32> to vector<2x32xf32>
    %904 = arith.negf %903 : vector<2x32xf32>
    %905 = math.exp %904 : vector<2x32xf32>
    %cst_256 = arith.constant 1.000000e+00 : f32
    %906 = vector.broadcast %cst_256 : f32 to vector<2x32xf32>
    %907 = arith.addf %906, %905 : vector<2x32xf32>
    %908 = arith.divf %906, %907 : vector<2x32xf32>
    %909 = arith.mulf %900, %874 : vector<2x32xf32>
    %910 = arith.mulf %894, %902 : vector<2x32xf32>
    %911 = arith.addf %909, %910 : vector<2x32xf32>
    %912 = math.tanh %911 : vector<2x32xf32>
    %913 = arith.mulf %908, %912 : vector<2x32xf32>
    %c8_i32_257 = arith.constant 8 : i32
    %c7 = arith.constant 7 : index
    %c0_258 = arith.constant 0 : index
    %c0_259 = arith.constant 0 : index
    %914 = vector.load %arg20[%c7, %c0_258, %c0_259] : memref<8x2x32xf32, #tpu.memory_space<vmem>>, vector<1x2x32xf32>
    %915 = vector.shape_cast %914 : vector<1x2x32xf32> to vector<2x32xf32>
    %c7_260 = arith.constant 7 : index
    %c0_261 = arith.constant 0 : index
    %c0_262 = arith.constant 0 : index
    %916 = vector.load %arg21[%c7_260, %c0_261, %c0_262] : memref<8x2x32xf32, #tpu.memory_space<vmem>>, vector<1x2x32xf32>
    %917 = vector.shape_cast %916 : vector<1x2x32xf32> to vector<2x32xf32>
    %918 = tpu.concatenate %915, %917 in 1 : vector<2x32xf32>, vector<2x32xf32> -> vector<2x64xf32>
    %c0_263 = arith.constant 0 : index
    %c0_264 = arith.constant 0 : index
    %919 = vector.load %arg10[%c0_263, %c0_264] : memref<64x128xf32, #tpu.memory_space<vmem>>, vector<64x128xf32>
    %c0_265 = arith.constant 0 : index
    %c0_266 = arith.constant 0 : index
    %920 = vector.load %arg11[%c0_265, %c0_266] : memref<32x128xf32, #tpu.memory_space<vmem>>, vector<32x128xf32>
    %c0_267 = arith.constant 0 : index
    %c0_268 = arith.constant 0 : index
    %921 = vector.load %arg12[%c0_267, %c0_268] : memref<1x128xf32, #tpu.memory_space<vmem>>, vector<1x128xf32>
    %cst_269 = arith.constant dense<0.000000e+00> : vector<2x128xf32>
    %922 = tpu.matmul %918, %919, %cst_269 {dimension_numbers = #tpu.dot_dimension_numbers<[1], [0], [0], [1], [0, 0, 1, 1], [], []>} : vector<2x64xf32>, vector<64x128xf32>, vector<2x128xf32> -> vector<2x128xf32>
    %cst_270 = arith.constant dense<0.000000e+00> : vector<2x128xf32>
    %923 = tpu.matmul %0, %920, %cst_270 {dimension_numbers = #tpu.dot_dimension_numbers<[1], [0], [0], [1], [0, 0, 1, 1], [], []>} : vector<2x32xf32>, vector<32x128xf32>, vector<2x128xf32> -> vector<2x128xf32>
    %924 = arith.addf %922, %923 : vector<2x128xf32>
    %925 = vector.broadcast %921 : vector<1x128xf32> to vector<2x128xf32>
    %926 = arith.addf %924, %925 : vector<2x128xf32>
    %927 = vector.extract_strided_slice %926 {offsets = [0, 0], sizes = [2, 32], strides = [1, 1]} : vector<2x128xf32> to vector<2x32xf32>
    %928 = arith.negf %927 : vector<2x32xf32>
    %929 = math.exp %928 : vector<2x32xf32>
    %cst_271 = arith.constant 1.000000e+00 : f32
    %930 = vector.broadcast %cst_271 : f32 to vector<2x32xf32>
    %931 = arith.addf %930, %929 : vector<2x32xf32>
    %932 = arith.divf %930, %931 : vector<2x32xf32>
    %933 = vector.extract_strided_slice %926 {offsets = [0, 32], sizes = [2, 32], strides = [1, 1]} : vector<2x128xf32> to vector<2x32xf32>
    %934 = arith.negf %933 : vector<2x32xf32>
    %935 = math.exp %934 : vector<2x32xf32>
    %cst_272 = arith.constant 1.000000e+00 : f32
    %936 = vector.broadcast %cst_272 : f32 to vector<2x32xf32>
    %937 = arith.addf %936, %935 : vector<2x32xf32>
    %938 = arith.divf %936, %937 : vector<2x32xf32>
    %939 = vector.extract_strided_slice %926 {offsets = [0, 64], sizes = [2, 32], strides = [1, 1]} : vector<2x128xf32> to vector<2x32xf32>
    %940 = math.tanh %939 : vector<2x32xf32>
    %941 = vector.extract_strided_slice %926 {offsets = [0, 96], sizes = [2, 32], strides = [1, 1]} : vector<2x128xf32> to vector<2x32xf32>
    %942 = arith.negf %941 : vector<2x32xf32>
    %943 = math.exp %942 : vector<2x32xf32>
    %cst_273 = arith.constant 1.000000e+00 : f32
    %944 = vector.broadcast %cst_273 : f32 to vector<2x32xf32>
    %945 = arith.addf %944, %943 : vector<2x32xf32>
    %946 = arith.divf %944, %945 : vector<2x32xf32>
    %947 = arith.mulf %938, %0 : vector<2x32xf32>
    %948 = arith.mulf %932, %940 : vector<2x32xf32>
    %949 = arith.addf %947, %948 : vector<2x32xf32>
    %950 = math.tanh %949 : vector<2x32xf32>
    %951 = arith.mulf %946, %950 : vector<2x32xf32>
    %952 = tpu.concatenate %913, %951 in 1 : vector<2x32xf32>, vector<2x32xf32> -> vector<2x64xf32>
    %c0_274 = arith.constant 0 : index
    %c0_275 = arith.constant 0 : index
    %953 = vector.load %arg13[%c0_274, %c0_275] : memref<64x64xf32, #tpu.memory_space<vmem>>, vector<64x64xf32>
    %cst_276 = arith.constant dense<0.000000e+00> : vector<2x64xf32>
    %954 = tpu.matmul %952, %953, %cst_276 {dimension_numbers = #tpu.dot_dimension_numbers<[1], [0], [0], [1], [0, 0, 1, 1], [], []>} : vector<2x64xf32>, vector<64x64xf32>, vector<2x64xf32> -> vector<2x64xf32>
    %c0_277 = arith.constant 0 : index
    %c0_278 = arith.constant 0 : index
    %955 = vector.load %arg14[%c0_277, %c0_278] : memref<1x64xf32, #tpu.memory_space<vmem>>, vector<1x64xf32>
    %956 = vector.broadcast %955 : vector<1x64xf32> to vector<2x64xf32>
    %957 = arith.addf %954, %956 : vector<2x64xf32>
    %cst_279 = arith.constant 0.000000e+00 : f32
    %958 = vector.broadcast %cst_279 : f32 to vector<2x64xf32>
    %959 = arith.maximumf %957, %958 : vector<2x64xf32>
    %c0_280 = arith.constant 0 : index
    %c0_281 = arith.constant 0 : index
    %960 = vector.load %arg15[%c0_280, %c0_281] : memref<64x32xf32, #tpu.memory_space<vmem>>, vector<64x32xf32>
    %cst_282 = arith.constant dense<0.000000e+00> : vector<2x32xf32>
    %961 = tpu.matmul %959, %960, %cst_282 {dimension_numbers = #tpu.dot_dimension_numbers<[1], [0], [0], [1], [0, 0, 1, 1], [], []>} : vector<2x64xf32>, vector<64x32xf32>, vector<2x32xf32> -> vector<2x32xf32>
    %c0_283 = arith.constant 0 : index
    %c0_284 = arith.constant 0 : index
    %962 = vector.load %arg16[%c0_283, %c0_284] : memref<1x32xf32, #tpu.memory_space<vmem>>, vector<1x32xf32>
    %963 = vector.broadcast %962 : vector<1x32xf32> to vector<2x32xf32>
    %964 = arith.addf %961, %963 : vector<2x32xf32>
    %cst_285 = arith.constant 0.000000e+00 : f32
    %965 = vector.broadcast %cst_285 : f32 to vector<2x32xf32>
    %966 = arith.maximumf %964, %965 : vector<2x32xf32>
    %c0_286 = arith.constant 0 : index
    %c0_287 = arith.constant 0 : index
    %967 = vector.load %arg17[%c0_286, %c0_287] : memref<32x1xf32, #tpu.memory_space<vmem>>, vector<32x1xf32>
    %cst_288 = arith.constant dense<0.000000e+00> : vector<2x1xf32>
    %968 = tpu.matmul %966, %967, %cst_288 {dimension_numbers = #tpu.dot_dimension_numbers<[1], [0], [0], [1], [0, 0, 1, 1], [], []>} : vector<2x32xf32>, vector<32x1xf32>, vector<2x1xf32> -> vector<2x1xf32>
    %c0_289 = arith.constant 0 : index
    %c0_290 = arith.constant 0 : index
    %969 = vector.load %arg18[%c0_289, %c0_290] : memref<1x1xf32, #tpu.memory_space<vmem>>, vector<1x1xf32>
    %970 = vector.broadcast %969 : vector<1x1xf32> to vector<2x1xf32>
    %971 = arith.addf %968, %970 : vector<2x1xf32>
    %c0_291 = arith.constant 0 : index
    %c0_292 = arith.constant 0 : index
    %972 = vector.load %arg19[%c0_291, %c0_292] : memref<2x1xf32, #tpu.memory_space<vmem>>, vector<2x1xf32>
    tpu.vector_store %arg19[%c0_291, %c0_292], %971 {strides = array<i32>} : memref<2x1xf32, #tpu.memory_space<vmem>>, vector<2x1xf32>,
    return
  }
}

</mosaic_0001>

<llo_original>
// kernel: _lambda_.1
$region0: #{_lambda_.1}
  #allocation0 [shape = 'u32[]', space=smem, size = 0x4, offset = 0x4, fixed_abs, tag = 'smem constant byte address 0x4 - core index']
  #allocation1 [shape = 'u32[144,128]{1,0:T(1,128)}', space=vmem, size = 0x12000, scoped, tag = 'internal scratch']
  #allocation2 [shape = 'f32[8,2,32]{2,1,0:T(2,128)}', space=vmem, size = 0x2000, scoped, tag = 'scratch operand']
  #allocation3 [shape = 'f32[8,2,32]{2,1,0:T(2,128)}', space=vmem, size = 0x2000, scoped, tag = 'scratch operand']
  #allocation4 [shape = 'f32[1,1]{1,0:T(1,128)S(1)}', space=vmem, size = 0x200, scoped, tag = 'scoped memory for _lambda_.1']
  %s0 = inlined_call_operand.vmem [shape: f32[8,2,4], index: 0, kind: input, shape index: {}]
  %s1 = inlined_call_operand.vmem [shape: f32[4,128], index: 1, kind: input, shape index: {}]
  %s2 = inlined_call_operand.hbm [shape: f32[32,128], index: 2, kind: input, shape index: {}]
  %s3 = inlined_call_operand.vmem [shape: f32[1,128], index: 3, kind: input, shape index: {}]
  %s4 = inlined_call_operand.vmem [shape: f32[4,128], index: 4, kind: input, shape index: {}]
  %s5 = inlined_call_operand.hbm [shape: f32[32,128], index: 5, kind: input, shape index: {}]
  %s6 = inlined_call_operand.vmem [shape: f32[1,128], index: 6, kind: input, shape index: {}]
  %s7 = inlined_call_operand.hbm [shape: f32[64,128], index: 7, kind: input, shape index: {}]
  %s8 = inlined_call_operand.hbm [shape: f32[32,128], index: 8, kind: input, shape index: {}]
  %s9 = inlined_call_operand.vmem [shape: f32[1,128], index: 9, kind: input, shape index: {}]
  %s10 = inlined_call_operand.hbm [shape: f32[64,128], index: 10, kind: input, shape index: {}]
  %s11 = inlined_call_operand.hbm [shape: f32[32,128], index: 11, kind: input, shape index: {}]
  %s12 = inlined_call_operand.vmem [shape: f32[1,128], index: 12, kind: input, shape index: {}]
  %s13 = inlined_call_operand.hbm [shape: f32[64,64], index: 13, kind: input, shape index: {}]
  %s14 = inlined_call_operand.vmem [shape: f32[1,64], index: 14, kind: input, shape index: {}]
  %s15 = inlined_call_operand.vmem [shape: f32[64,32], index: 15, kind: input, shape index: {}]
  %s16 = inlined_call_operand.vmem [shape: f32[1,32], index: 16, kind: input, shape index: {}]
  %s17 = inlined_call_operand.hbm [shape: f32[32,1], index: 17, kind: input, shape index: {}]
  %s18 = inlined_call_operand.<no memory space> [shape: f32[1,1], index: 18, kind: input, shape index: {}]
  %s19 = inlined_call_operand.vmem [shape: f32[2,1], index: 19, kind: output, shape index: {}]
  %s20 = sld [smem:[#allocation0]]
  $region118: #{_lambda_.1} parent=0
    _
  %s22 = ssub.s32 1, %s20
  %s23 = scalar_select 0, %s22, %s20
  %v24 = vstv %s18
  %25 = vst [vmem:[#allocation4] sm:$0x1] %v24
  $region1: #{_lambda_.1} parent=0
    #allocation5 [shape = 'u8[16384]{0}', space=vmem, size = 0x4000, scoped, tag = 'input window, operand 2, single buffered']
    #allocation6 [shape = 's32[1]{0}', space=sflag, size = 0x4, scoped, tag = 'scoped memory for _lambda_.1']
    #allocation7 [shape = 'u8[16384]{0}', space=vmem, size = 0x4000, scoped, tag = 'input window, operand 5, single buffered']
    #allocation8 [shape = 's32[1]{0}', space=sflag, size = 0x4, scoped, tag = 'scoped memory for _lambda_.1']
    #allocation9 [shape = 'u8[32768]{0}', space=vmem, size = 0x8000, scoped, tag = 'input window, operand 7, single buffered']
    #allocation10 [shape = 'u8[16384]{0}', space=vmem, size = 0x4000, scoped, tag = 'input window, operand 8, single buffered']
    #allocation11 [shape = 's32[1]{0}', space=sflag, size = 0x4, scoped, tag = 'scoped memory for _lambda_.1']
    #allocation12 [shape = 'u8[32768]{0}', space=vmem, size = 0x8000, scoped, tag = 'input window, operand 10, single buffered']
    #allocation13 [shape = 'u8[16384]{0}', space=vmem, size = 0x4000, scoped, tag = 'input window, operand 11, single buffered']
    #allocation14 [shape = 's32[1]{0}', space=sflag, size = 0x4, scoped, tag = 'scoped memory for _lambda_.1']
    #allocation15 [shape = 'u8[32768]{0}', space=vmem, size = 0x8000, scoped, tag = 'input window, operand 13, single buffered']
    #allocation16 [shape = 'u8[16384]{0}', space=vmem, size = 0x4000, scoped, tag = 'input window, operand 17, single buffered']
    #allocation17 [shape = 's32[1]{0}', space=sflag, size = 0x4, scoped, tag = 'scoped memory for _lambda_.1']
    %26 = vsyncpa [#allocation6], 0
    %27 = vsyncpa [#allocation8], 0
    %28 = vsyncpa [#allocation11], 0
    %29 = vsyncpa [#allocation14], 0
    %30 = vsyncpa [#allocation17], 0
    // Predicated region
    $region2: #{_lambda_.1} parent=1 // pred_check
      _
    $region3: #{_lambda_.1} parent=1 // pred_check_branch
      %32 = sbr.rel (0) target = $region5
    $region4: #{_lambda_.1} parent=1 // pred_region
      _
    $region5: #{_lambda_.1} parent=1 // pred_fallthru
      _
    // Predicated region
    $region6: #{_lambda_.1} parent=1 // pred_check
      _
    $region7: #{_lambda_.1} parent=1 // pred_check_branch
      %34 = sbr.rel (0) target = $region9
    $region8: #{_lambda_.1} parent=1 // pred_region
      _
    $region9: #{_lambda_.1} parent=1 // pred_fallthru
      _
    // Predicated region
    $region10: #{_lambda_.1} parent=1 // pred_check
      _
    $region11: #{_lambda_.1} parent=1 // pred_check_branch
      %36 = sbr.rel (0) target = $region13
    $region12: #{_lambda_.1} parent=1 // pred_region
      %s38 = ssub.s32 512, 512
      %39 = vsyncadd [#allocation6], %s38
      %s40 = sshll.u32 [#allocation5], 4
      %s41 = int_to_ptr.vmem [resolvable:$true] %s40
      %46 = dma.hbm_to_vmem [thread:$0]  %s2, 512, %s41, [#allocation6], 128, 128, 8
    $region13: #{_lambda_.1} parent=1 // pred_fallthru
      _
    // Predicated region
    $region14: #{_lambda_.1} parent=1 // pred_check
      _
    $region15: #{_lambda_.1} parent=1 // pred_check_branch
      %48 = sbr.rel (0) target = $region17
    $region16: #{_lambda_.1} parent=1 // pred_region
      _
    $region17: #{_lambda_.1} parent=1 // pred_fallthru
      _
    // Predicated region
    $region18: #{_lambda_.1} parent=1 // pred_check
      _
    $region19: #{_lambda_.1} parent=1 // pred_check_branch
      %50 = sbr.rel (0) target = $region21
    $region20: #{_lambda_.1} parent=1 // pred_region
      _
    $region21: #{_lambda_.1} parent=1 // pred_fallthru
      _
    // Predicated region
    $region22: #{_lambda_.1} parent=1 // pred_check
      _
    $region23: #{_lambda_.1} parent=1 // pred_check_branch
      %52 = sbr.rel (0) target = $region25
    $region24: #{_lambda_.1} parent=1 // pred_region
      %s54 = ssub.s32 512, 512
      %55 = vsyncadd [#allocation8], %s54
      %s56 = sshll.u32 [#allocation7], 4
      %s57 = int_to_ptr.vmem [resolvable:$true] %s56
      %62 = dma.hbm_to_vmem [thread:$0]  %s5, 512, %s57, [#allocation8], 128, 128, 8
    $region25: #{_lambda_.1} parent=1 // pred_fallthru
      _
    // Predicated region
    $region26: #{_lambda_.1} parent=1 // pred_check
      _
    $region27: #{_lambda_.1} parent=1 // pred_check_branch
      %64 = sbr.rel (0) target = $region29
    $region28: #{_lambda_.1} parent=1 // pred_region
      _
    $region29: #{_lambda_.1} parent=1 // pred_fallthru
      _
    // Predicated region
    $region30: #{_lambda_.1} parent=1 // pred_check
      _
    $region31: #{_lambda_.1} parent=1 // pred_check_branch
      %66 = sbr.rel (0) target = $region33
    $region32: #{_lambda_.1} parent=1 // pred_region
      %s68 = ssub.s32 1024, 1024
      %69 = vsyncadd [#allocation8], %s68
      %s70 = sshll.u32 [#allocation9], 4
      %s71 = int_to_ptr.vmem [resolvable:$true] %s70
      %76 = dma.hbm_to_vmem [thread:$0]  %s7, 1024, %s71, [#allocation8], 128, 128, 8
    $region33: #{_lambda_.1} parent=1 // pred_fallthru
      _
    // Predicated region
    $region34: #{_lambda_.1} parent=1 // pred_check
      _
    $region35: #{_lambda_.1} parent=1 // pred_check_branch
      %78 = sbr.rel (0) target = $region37
    $region36: #{_lambda_.1} parent=1 // pred_region
      %s80 = ssub.s32 512, 512
      %81 = vsyncadd [#allocation11], %s80
      %s82 = sshll.u32 [#allocation10], 4
      %s83 = int_to_ptr.vmem [resolvable:$true] %s82
      %88 = dma.hbm_to_vmem [thread:$0]  %s8, 512, %s83, [#allocation11], 128, 128, 8
    $region37: #{_lambda_.1} parent=1 // pred_fallthru
      _
    // Predicated region
    $region38: #{_lambda_.1} parent=1 // pred_check
      _
    $region39: #{_lambda_.1} parent=1 // pred_check_branch
      %90 = sbr.rel (0) target = $region41
    $region40: #{_lambda_.1} parent=1 // pred_region
      _
    $region41: #{_lambda_.1} parent=1 // pred_fallthru
      _
    // Predicated region
    $region42: #{_lambda_.1} parent=1 // pred_check
      _
    $region43: #{_lambda_.1} parent=1 // pred_check_branch
      %92 = sbr.rel (0) target = $region45
    $region44: #{_lambda_.1} parent=1 // pred_region
      %s94 = ssub.s32 1024, 1024
      %95 = vsyncadd [#allocation11], %s94
      %s96 = sshll.u32 [#allocation12], 4
      %s97 = int_to_ptr.vmem [resolvable:$true] %s96
      %102 = dma.hbm_to_vmem [thread:$0]  %s10, 1024, %s97, [#allocation11], 128, 128, 8
    $region45: #{_lambda_.1} parent=1 // pred_fallthru
      _
    // Predicated region
    $region46: #{_lambda_.1} parent=1 // pred_check
      _
    $region47: #{_lambda_.1} parent=1 // pred_check_branch
      %104 = sbr.rel (0) target = $region49
    $region48: #{_lambda_.1} parent=1 // pred_region
      %s106 = ssub.s32 512, 512
      %107 = vsyncadd [#allocation14], %s106
      %s108 = sshll.u32 [#allocation13], 4
      %s109 = int_to_ptr.vmem [resolvable:$true] %s108
      %114 = dma.hbm_to_vmem [thread:$0]  %s11, 512, %s109, [#allocation14], 128, 128, 8
    $region49: #{_lambda_.1} parent=1 // pred_fallthru
      _
    // Predicated region
    $region50: #{_lambda_.1} parent=1 // pred_check
      _
    $region51: #{_lambda_.1} parent=1 // pred_check_branch
      %116 = sbr.rel (0) target = $region53
    $region52: #{_lambda_.1} parent=1 // pred_region
      _
    $region53: #{_lambda_.1} parent=1 // pred_fallthru
      _
    // Predicated region
    $region54: #{_lambda_.1} parent=1 // pred_check
      _
    $region55: #{_lambda_.1} parent=1 // pred_check_branch
      %118 = sbr.rel (0) target = $region57
    $region56: #{_lambda_.1} parent=1 // pred_region
      %s120 = ssub.s32 1024, 1024
      %121 = vsyncadd [#allocation14], %s120
      %s122 = sshll.u32 [#allocation15], 4
      %s123 = int_to_ptr.vmem [resolvable:$true] %s122
      %128 = dma.hbm_to_vmem [thread:$0]  %s13, 1024, %s123, [#allocation14], 128, 128, 8
    $region57: #{_lambda_.1} parent=1 // pred_fallthru
      _
    // Predicated region
    $region58: #{_lambda_.1} parent=1 // pred_check
      _
    $region59: #{_lambda_.1} parent=1 // pred_check_branch
      %130 = sbr.rel (0) target = $region61
    $region60: #{_lambda_.1} parent=1 // pred_region
      _
    $region61: #{_lambda_.1} parent=1 // pred_fallthru
      _
    // Predicated region
    $region62: #{_lambda_.1} parent=1 // pred_check
      _
    $region63: #{_lambda_.1} parent=1 // pred_check_branch
      %132 = sbr.rel (0) target = $region65
    $region64: #{_lambda_.1} parent=1 // pred_region
      _
    $region65: #{_lambda_.1} parent=1 // pred_fallthru
      _
    // Predicated region
    $region66: #{_lambda_.1} parent=1 // pred_check
      _
    $region67: #{_lambda_.1} parent=1 // pred_check_branch
      %134 = sbr.rel (0) target = $region69
    $region68: #{_lambda_.1} parent=1 // pred_region
      _
    $region69: #{_lambda_.1} parent=1 // pred_fallthru
      _
    // Predicated region
    $region70: #{_lambda_.1} parent=1 // pred_check
      _
    $region71: #{_lambda_.1} parent=1 // pred_check_branch
      %136 = sbr.rel (0) target = $region73
    $region72: #{_lambda_.1} parent=1 // pred_region
      %s138 = ssub.s32 512, 512
      %139 = vsyncadd [#allocation17], %s138
      %s140 = sshll.u32 [#allocation16], 4
      %s141 = int_to_ptr.vmem [resolvable:$true] %s140
      %146 = dma.hbm_to_vmem [thread:$0]  %s17, 512, %s141, [#allocation17], 128, 128, 8
    $region73: #{_lambda_.1} parent=1 // pred_fallthru
      _
    // Predicated region
    $region74: #{_lambda_.1} parent=1 // pred_check
      _
    $region75: #{_lambda_.1} parent=1 // pred_check_branch
      %148 = sbr.rel (0) target = $region77
    $region76: #{_lambda_.1} parent=1 // pred_region
      _
    $region77: #{_lambda_.1} parent=1 // pred_fallthru
      _
    // Predicated region
    $region78: #{_lambda_.1} parent=1 // pred_check
      _
    $region79: #{_lambda_.1} parent=1 // pred_check_branch
      %150 = sbr.rel (0) target = $region81
    $region80: #{_lambda_.1} parent=1 // pred_region
      %151 = dma.done [#allocation6], 512
    $region81: #{_lambda_.1} parent=1 // pred_fallthru
      _
    // Predicated region
    $region82: #{_lambda_.1} parent=1 // pred_check
      _
    $region83: #{_lambda_.1} parent=1 // pred_check_branch
      %153 = sbr.rel (0) target = $region85
    $region84: #{_lambda_.1} parent=1 // pred_region
      %154 = dma.done [#allocation8], 512
    $region85: #{_lambda_.1} parent=1 // pred_fallthru
      _
    // Predicated region
    $region86: #{_lambda_.1} parent=1 // pred_check
      _
    $region87: #{_lambda_.1} parent=1 // pred_check_branch
      %156 = sbr.rel (0) target = $region89
    $region88: #{_lambda_.1} parent=1 // pred_region
      %157 = dma.done [#allocation8], 1024
    $region89: #{_lambda_.1} parent=1 // pred_fallthru
      _
    // Predicated region
    $region90: #{_lambda_.1} parent=1 // pred_check
      _
    $region91: #{_lambda_.1} parent=1 // pred_check_branch
      %159 = sbr.rel (0) target = $region93
    $region92: #{_lambda_.1} parent=1 // pred_region
      %160 = dma.done [#allocation11], 512
    $region93: #{_lambda_.1} parent=1 // pred_fallthru
      _
    // Predicated region
    $region94: #{_lambda_.1} parent=1 // pred_check
      _
    $region95: #{_lambda_.1} parent=1 // pred_check_branch
      %162 = sbr.rel (0) target = $region97
    $region96: #{_lambda_.1} parent=1 // pred_region
      %163 = dma.done [#allocation11], 1024
    $region97: #{_lambda_.1} parent=1 // pred_fallthru
      _
    // Predicated region
    $region98: #{_lambda_.1} parent=1 // pred_check
      _
    $region99: #{_lambda_.1} parent=1 // pred_check_branch
      %165 = sbr.rel (0) target = $region101
    $region100: #{_lambda_.1} parent=1 // pred_region
      %166 = dma.done [#allocation14], 512
    $region101: #{_lambda_.1} parent=1 // pred_fallthru
      _
    // Predicated region
    $region102: #{_lambda_.1} parent=1 // pred_check
      _
    $region103: #{_lambda_.1} parent=1 // pred_check_branch
      %168 = sbr.rel (0) target = $region105
    $region104: #{_lambda_.1} parent=1 // pred_region
      %169 = dma.done [#allocation14], 1024
    $region105: #{_lambda_.1} parent=1 // pred_fallthru
      _
    // Predicated region
    $region106: #{_lambda_.1} parent=1 // pred_check
      _
    $region107: #{_lambda_.1} parent=1 // pred_check_branch
      %171 = sbr.rel (0) target = $region109
    $region108: #{_lambda_.1} parent=1 // pred_region
      %172 = dma.done [#allocation17], 512
    $region109: #{_lambda_.1} parent=1 // pred_fallthru
      _
    %v173 = vld [vmem:[%s1] sm:$0xf]
    %v174 = vld [vmem:[#allocation5] sm:$0xff]
    %v175 = vld [vmem:[#allocation5 + $0x8] sm:$0xff]
    %v176 = vld [vmem:[#allocation5 + $0x10] sm:$0xff]
    %v177 = vld [vmem:[#allocation5 + $0x18] sm:$0xff]
    %v178 = vld [vmem:[%s3] sm:$0x1]
    %v179 = vld [vmem:[%s4] sm:$0xf]
    %v180 = vld [vmem:[#allocation7] sm:$0xff]
    %v181 = vld [vmem:[#allocation7 + $0x8] sm:$0xff]
    %v182 = vld [vmem:[#allocation7 + $0x10] sm:$0xff]
    %v183 = vld [vmem:[#allocation7 + $0x18] sm:$0xff]
    %v184 = vld [vmem:[%s6] sm:$0x1]
    %v185 = vld [vmem:[%s0] sm:$0x3]
    %vm186 = vcmask 261120
    %v188 = vsel %vm186, 0.0, 0
    %190 = vmatprep.subr.mxu0 0.0
    %191 = vmatpush1.msra.mxu0 %v174
    %192 = vmatprep.subr.mxu0 0.0
    %193 = vmatpush1.msra.mxu0 %v175
    %194 = vmatprep.subr.mxu0 0.0
    %195 = vmatpush1.msra.mxu0 %v176
    %196 = vmatprep.subr.mxu0 0.0
    %197 = vmatpush1.msra.mxu0 %v177
    %198 = vmatprep.subr.mxu0 0.0
    %199 = vmatpush1.msra.mxu0 0.0
    %200 = vmatprep.subr.mxu0 0.0
    %201 = vmatpush1.msra.mxu0 0.0
    %202 = vmatprep.subr.mxu0 0.0
    %203 = vmatpush1.msra.mxu0 0.0
    %204 = vmatprep.subr.mxu0 0.0
    %205 = vmatpush1.msra.mxu0 0.0
    %206 = vmatprep.subr.mxu0 0.0
    %207 = vmatpush1.msra.mxu0 0.0
    %208 = vmatprep.subr.mxu0 0.0
    %209 = vmatpush1.msra.mxu0 0.0
    %210 = vmatprep.subr.mxu0 0.0
    %211 = vmatpush1.msra.mxu0 0.0
    %212 = vmatprep.subr.mxu0 0.0
    %213 = vmatpush1.msra.mxu0 0.0
    %214 = vmatprep.subr.mxu0 0.0
    %215 = vmatpush1.msra.mxu0 0.0
    %216 = vmatprep.subr.mxu0 0.0
    %217 = vmatpush1.msra.mxu0 0.0
    %218 = vmatprep.subr.mxu0 0.0
    %219 = vmatpush1.msra.mxu0 0.0
    %220 = vmatprep.subr.mxu0 0.0
    %221 = vmatpush1.msra.mxu0 0.0
    %222 = vmatprep.subr.mxu0 0.0
    %223 = vmatpush1.msra.mxu0 0.0
    %224 = vmatprep.subr.mxu0 0.0
    %225 = vmatpush1.msra.mxu0 0.0
    %226 = vmatprep.subr.mxu0 0.0
    %227 = vmatpush1.msra.mxu0 0.0
    %228 = vmatprep.subr.mxu0 0.0
    %229 = vmatpush1.msra.mxu0 0.0
    %230 = vmatprep.subr.mxu0 0.0
    %231 = vmatpush1.msra.mxu0 0.0
    %232 = vmatprep.subr.mxu0 0.0
    %233 = vmatpush1.msra.mxu0 0.0
    %234 = vmatprep.subr.mxu0 0.0
    %235 = vmatpush1.msra.mxu0 0.0
    %236 = vmatprep.subr.mxu0 0.0
    %237 = vmatpush1.msra.mxu0 0.0
    %238 = vmatprep.subr.mxu0 0.0
    %239 = vmatpush1.msra.mxu0 0.0
    %240 = vmatprep.subr.mxu0 0.0
    %241 = vmatpush1.msra.mxu0 0.0
    %242 = vmatprep.subr.mxu0 0.0
    %243 = vmatpush1.msra.mxu0 0.0
    %244 = vmatprep.subr.mxu0 0.0
    %245 = vmatpush1.msra.mxu0 0.0
    %246 = vmatprep.subr.mxu0 0.0
    %247 = vmatpush1.msra.mxu0 0.0
    %248 = vmatprep.subr.mxu0 0.0
    %249 = vmatpush1.msra.mxu0 0.0
    %250 = vmatprep.subr.mxu0 0.0
    %251 = vmatpush1.msra.mxu0 0.0
    %252 = vmatprep.subr.mxu0 0.0
    %253 = vmatpush1.msra.mxu0 0.0
    %254 = vmatprep.mubr.f32.mxu0 0.0
    %255 = vmatmul.mubr.f32.gmra.mrb[0].mxu0 %v188
    %v256 = vpop.f32.mrb[0].mxu0
    %v257 = vadd.f32 0.0, %v256
    %v258 = vpop.f32.mrb[0].mxu0
    %259 = vdwg.mxu0
    %vm260 = vcmask 31744
    %v262 = vsel %vm260, %v185, 0
    %vm264 = vcmask 1043456
    %v266 = vsel %vm264, %v173, 0
    %268 = vmatprep.subr.mxu0 0.0
    %269 = vmatpush1.msra.mxu0 %v266
    %270 = vmatprep.subr.mxu0 0.0
    %271 = vmatpush1.msra.mxu0 0.0
    %272 = vmatprep.subr.mxu0 0.0
    %273 = vmatpush1.msra.mxu0 0.0
    %274 = vmatprep.subr.mxu0 0.0
    %275 = vmatpush1.msra.mxu0 0.0
    %276 = vmatprep.subr.mxu0 0.0
    %277 = vmatpush1.msra.mxu0 0.0
    %278 = vmatprep.subr.mxu0 0.0
    %279 = vmatpush1.msra.mxu0 0.0
    %280 = vmatprep.subr.mxu0 0.0
    %281 = vmatpush1.msra.mxu0 0.0
    %282 = vmatprep.subr.mxu0 0.0
    %283 = vmatpush1.msra.mxu0 0.0
    %284 = vmatprep.subr.mxu0 0.0
    %285 = vmatpush1.msra.mxu0 0.0
    %286 = vmatprep.subr.mxu0 0.0
    %287 = vmatpush1.msra.mxu0 0.0
    %288 = vmatprep.subr.mxu0 0.0
    %289 = vmatpush1.msra.mxu0 0.0
    %290 = vmatprep.subr.mxu0 0.0
    %291 = vmatpush1.msra.mxu0 0.0
    %292 = vmatprep.subr.mxu0 0.0
    %293 = vmatpush1.msra.mxu0 0.0
    %294 = vmatprep.subr.mxu0 0.0
    %295 = vmatpush1.msra.mxu0 0.0
    %296 = vmatprep.subr.mxu0 0.0
    %297 = vmatpush1.msra.mxu0 0.0
    %298 = vmatprep.subr.mxu0 0.0
    %299 = vmatpush1.msra.mxu0 0.0
    %300 = vmatprep.subr.mxu0 0.0
    %301 = vmatpush1.msra.mxu0 0.0
    %302 = vmatprep.subr.mxu0 0.0
    %303 = vmatpush1.msra.mxu0 0.0
    %304 = vmatprep.subr.mxu0 0.0
    %305 = vmatpush1.msra.mxu0 0.0
    %306 = vmatprep.subr.mxu0 0.0
    %307 = vmatpush1.msra.mxu0 0.0
    %308 = vmatprep.subr.mxu0 0.0
    %309 = vmatpush1.msra.mxu0 0.0
    %310 = vmatprep.subr.mxu0 0.0
    %311 = vmatpush1.msra.mxu0 0.0
    %312 = vmatprep.subr.mxu0 0.0
    %313 = vmatpush1.msra.mxu0 0.0
    %314 = vmatprep.subr.mxu0 0.0
    %315 = vmatpush1.msra.mxu0 0.0
    %316 = vmatprep.subr.mxu0 0.0
    %317 = vmatpush1.msra.mxu0 0.0
    %318 = vmatprep.subr.mxu0 0.0
    %319 = vmatpush1.msra.mxu0 0.0
    %320 = vmatprep.subr.mxu0 0.0
    %321 = vmatpush1.msra.mxu0 0.0
    %322 = vmatprep.subr.mxu0 0.0
    %323 = vmatpush1.msra.mxu0 0.0
    %324 = vmatprep.subr.mxu0 0.0
    %325 = vmatpush1.msra.mxu0 0.0
    %326 = vmatprep.subr.mxu0 0.0
    %327 = vmatpush1.msra.mxu0 0.0
    %328 = vmatprep.subr.mxu0 0.0
    %329 = vmatpush1.msra.mxu0 0.0
    %330 = vmatprep.subr.mxu0 0.0
    %331 = vmatpush1.msra.mxu0 0.0
    %332 = vmatprep.mubr.f32.mxu0 0.0
    %333 = vmatmul.mubr.f32.gmra.mrb[0].mxu0 %v262
    %v334 = vpop.f32.mrb[0].mxu0
    %v335 = vadd.f32 %v257, %v334
    %v336 = vpop.f32.mrb[0].mxu0
    %337 = vdwg.mxu0
    %v339 = vlaneseq
    %v340 = vshrl.u32 %v339, 7
    %v341 = vsub.s32 0, %v340
    %v342 = vrot.slane %v178, %v341
    %v344 = vadd.f32 %v335, %v342
    %v345 = vxor.u32 %v344, 2147483648
    %v346 = vmul.f32 %v345, 1.442695
    %v347 = vpow.pop %v346
    %v348 = vadd.f32 %v347, 1.0
    %v349 = vrcp.pop %v348
    %v350 = vmul.f32 1.0, %v349
    %v351 = vtanh.pop %v344
    %v352 = vmul.f32 %v350, 0.0
    %354 = vrot.lane.b32.xlu0 %v351, 64
    %v355 = vpop.permute.xlu0 %354
    %v357 = vmul.f32 %v350, %v355
    %359 = vrot.lane.b32.xlu0 %v357, 32
    %v360 = vpop.permute.xlu0 %359
    %v362 = vadd.f32 %v352, %v360
    %v363 = vtanh.pop %v362
    %365 = vrot.lane.b32.xlu0 %v363, 64
    %v366 = vpop.permute.xlu0 %365
    %v368 = vmul.f32 %v350, %v366
    %s369 = scalar_lea.vmem %s0, 14
    %v370 = vld [vmem:[%s369] sm:$0x3]
    %371 = vmatprep.subr.mxu0 0.0
    %372 = vmatpush1.msra.mxu0 %v180
    %373 = vmatprep.subr.mxu0 0.0
    %374 = vmatpush1.msra.mxu0 %v181
    %375 = vmatprep.subr.mxu0 0.0
    %376 = vmatpush1.msra.mxu0 %v182
    %377 = vmatprep.subr.mxu0 0.0
    %378 = vmatpush1.msra.mxu0 %v183
    %379 = vmatprep.subr.mxu0 0.0
    %380 = vmatpush1.msra.mxu0 0.0
    %381 = vmatprep.subr.mxu0 0.0
    %382 = vmatpush1.msra.mxu0 0.0
    %383 = vmatprep.subr.mxu0 0.0
    %384 = vmatpush1.msra.mxu0 0.0
    %385 = vmatprep.subr.mxu0 0.0
    %386 = vmatpush1.msra.mxu0 0.0
    %387 = vmatprep.subr.mxu0 0.0
    %388 = vmatpush1.msra.mxu0 0.0
    %389 = vmatprep.subr.mxu0 0.0
    %390 = vmatpush1.msra.mxu0 0.0
    %391 = vmatprep.subr.mxu0 0.0
    %392 = vmatpush1.msra.mxu0 0.0
    %393 = vmatprep.subr.mxu0 0.0
    %394 = vmatpush1.msra.mxu0 0.0
    %395 = vmatprep.subr.mxu0 0.0
    %396 = vmatpush1.msra.mxu0 0.0
    %397 = vmatprep.subr.mxu0 0.0
    %398 = vmatpush1.msra.mxu0 0.0
    %399 = vmatprep.subr.mxu0 0.0
    %400 = vmatpush1.msra.mxu0 0.0
    %401 = vmatprep.subr.mxu0 0.0
    %402 = vmatpush1.msra.mxu0 0.0
    %403 = vmatprep.subr.mxu0 0.0
    %404 = vmatpush1.msra.mxu0 0.0
    %405 = vmatprep.subr.mxu0 0.0
    %406 = vmatpush1.msra.mxu0 0.0
    %407 = vmatprep.subr.mxu0 0.0
    %408 = vmatpush1.msra.mxu0 0.0
    %409 = vmatprep.subr.mxu0 0.0
    %410 = vmatpush1.msra.mxu0 0.0
    %411 = vmatprep.subr.mxu0 0.0
    %412 = vmatpush1.msra.mxu0 0.0
    %413 = vmatprep.subr.mxu0 0.0
    %414 = vmatpush1.msra.mxu0 0.0
    %415 = vmatprep.subr.mxu0 0.0
    %416 = vmatpush1.msra.mxu0 0.0
    %417 = vmatprep.subr.mxu0 0.0
    %418 = vmatpush1.msra.mxu0 0.0
    %419 = vmatprep.subr.mxu0 0.0
    %420 = vmatpush1.msra.mxu0 0.0
    %421 = vmatprep.subr.mxu0 0.0
    %422 = vmatpush1.msra.mxu0 0.0
    %423 = vmatprep.subr.mxu0 0.0
    %424 = vmatpush1.msra.mxu0 0.0
    %425 = vmatprep.subr.mxu0 0.0
    %426 = vmatpush1.msra.mxu0 0.0
    %427 = vmatprep.subr.mxu0 0.0
    %428 = vmatpush1.msra.mxu0 0.0
    %429 = vmatprep.subr.mxu0 0.0
    %430 = vmatpush1.msra.mxu0 0.0
    %431 = vmatprep.subr.mxu0 0.0
    %432 = vmatpush1.msra.mxu0 0.0
    %433 = vmatprep.subr.mxu0 0.0
    %434 = vmatpush1.msra.mxu0 0.0
    %435 = vmatprep.mubr.f32.mxu0 0.0
    %436 = vmatmul.mubr.f32.gmra.mrb[0].mxu0 %v188
    %v437 = vpop.f32.mrb[0].mxu0
    %v438 = vadd.f32 0.0, %v437
    %v439 = vpop.f32.mrb[0].mxu0
    %440 = vdwg.mxu0
    %v442 = vsel %vm260, %v370, 0
    %v445 = vsel %vm264, %v179, 0
    %447 = vmatprep.subr.mxu0 0.0
    %448 = vmatpush1.msra.mxu0 %v445
    %449 = vmatprep.subr.mxu0 0.0
    %450 = vmatpush1.msra.mxu0 0.0
    %451 = vmatprep.subr.mxu0 0.0
    %452 = vmatpush1.msra.mxu0 0.0
    %453 = vmatprep.subr.mxu0 0.0
    %454 = vmatpush1.msra.mxu0 0.0
    %455 = vmatprep.subr.mxu0 0.0
    %456 = vmatpush1.msra.mxu0 0.0
    %457 = vmatprep.subr.mxu0 0.0
    %458 = vmatpush1.msra.mxu0 0.0
    %459 = vmatprep.subr.mxu0 0.0
    %460 = vmatpush1.msra.mxu0 0.0
    %461 = vmatprep.subr.mxu0 0.0
    %462 = vmatpush1.msra.mxu0 0.0
    %463 = vmatprep.subr.mxu0 0.0
    %464 = vmatpush1.msra.mxu0 0.0
    %465 = vmatprep.subr.mxu0 0.0
    %466 = vmatpush1.msra.mxu0 0.0
    %467 = vmatprep.subr.mxu0 0.0
    %468 = vmatpush1.msra.mxu0 0.0
    %469 = vmatprep.subr.mxu0 0.0
    %470 = vmatpush1.msra.mxu0 0.0
    %471 = vmatprep.subr.mxu0 0.0
    %472 = vmatpush1.msra.mxu0 0.0
    %473 = vmatprep.subr.mxu0 0.0
    %474 = vmatpush1.msra.mxu0 0.0
    %475 = vmatprep.subr.mxu0 0.0
    %476 = vmatpush1.msra.mxu0 0.0
    %477 = vmatprep.subr.mxu0 0.0
    %478 = vmatpush1.msra.mxu0 0.0
    %479 = vmatprep.subr.mxu0 0.0
    %480 = vmatpush1.msra.mxu0 0.0
    %481 = vmatprep.subr.mxu0 0.0
    %482 = vmatpush1.msra.mxu0 0.0
    %483 = vmatprep.subr.mxu0 0.0
    %484 = vmatpush1.msra.mxu0 0.0
    %485 = vmatprep.subr.mxu0 0.0
    %486 = vmatpush1.msra.mxu0 0.0
    %487 = vmatprep.subr.mxu0 0.0
    %488 = vmatpush1.msra.mxu0 0.0
    %489 = vmatprep.subr.mxu0 0.0
    %490 = vmatpush1.msra.mxu0 0.0
    %491 = vmatprep.subr.mxu0 0.0
    %492 = vmatpush1.msra.mxu0 0.0
    %493 = vmatprep.subr.mxu0 0.0
    %494 = vmatpush1.msra.mxu0 0.0
    %495 = vmatprep.subr.mxu0 0.0
    %496 = vmatpush1.msra.mxu0 0.0
    %497 = vmatprep.subr.mxu0 0.0
    %498 = vmatpush1.msra.mxu0 0.0
    %499 = vmatprep.subr.mxu0 0.0
    %500 = vmatpush1.msra.mxu0 0.0
    %501 = vmatprep.subr.mxu0 0.0
    %502 = vmatpush1.msra.mxu0 0.0
    %503 = vmatprep.subr.mxu0 0.0
    %504 = vmatpush1.msra.mxu0 0.0
    %505 = vmatprep.subr.mxu0 0.0
    %506 = vmatpush1.msra.mxu0 0.0
    %507 = vmatprep.subr.mxu0 0.0
    %508 = vmatpush1.msra.mxu0 0.0
    %509 = vmatprep.subr.mxu0 0.0
    %510 = vmatpush1.msra.mxu0 0.0
    %511 = vmatprep.mubr.f32.mxu0 0.0
    %512 = vmatmul.mubr.f32.gmra.mrb[0].mxu0 %v442
    %v513 = vpop.f32.mrb[0].mxu0
    %v514 = vadd.f32 %v438, %v513
    %v515 = vpop.f32.mrb[0].mxu0
    %516 = vdwg.mxu0
    %v518 = vlaneseq
    %v519 = vshrl.u32 %v518, 7
    %v520 = vsub.s32 0, %v519
    %v521 = vrot.slane %v184, %v520
    %v523 = vadd.f32 %v514, %v521
    %v524 = vxor.u32 %v523, 2147483648
    %v525 = vmul.f32 %v524, 1.442695
    %v526 = vpow.pop %v525
    %v527 = vadd.f32 %v526, 1.0
    %v528 = vrcp.pop %v527
    %v529 = vmul.f32 1.0, %v528
    %v530 = vtanh.pop %v523
    %v531 = vmul.f32 %v529, 0.0
    %533 = vrot.lane.b32.xlu0 %v530, 64
    %v534 = vpop.permute.xlu0 %533
    %v536 = vmul.f32 %v529, %v534
    %538 = vrot.lane.b32.xlu0 %v536, 32
    %v539 = vpop.permute.xlu0 %538
    %v541 = vadd.f32 %v531, %v539
    %v542 = vtanh.pop %v541
    %544 = vrot.lane.b32.xlu0 %v542, 64
    %v545 = vpop.permute.xlu0 %544
    %v547 = vmul.f32 %v529, %v545
    %549 = vrot.lane.b32.xlu0 %v368, 32
    %v550 = vpop.permute.xlu0 %549
    %vm552 = vcmask 254976
    %553 = vst.msk [vmem:[#allocation2] sm:$0x3] %vm552, %v550
    %555 = vrot.lane.b32.xlu0 %v547, 32
    %v556 = vpop.permute.xlu0 %555
    %s558 = scalar_lea.vmem [#allocation3], 14
    %559 = vst.msk [vmem:[%s558] sm:$0x3] %vm552, %v556
    %s560 = scalar_lea.vmem %s0, 2
    %v561 = vld [vmem:[%s560] sm:$0x3]
    %v562 = vsel %vm186, %v550, 0
    %564 = vmatprep.subr.mxu0 0.0
    %565 = vmatpush1.msra.mxu0 %v174
    %566 = vmatprep.subr.mxu0 0.0
    %567 = vmatpush1.msra.mxu0 %v175
    %568 = vmatprep.subr.mxu0 0.0
    %569 = vmatpush1.msra.mxu0 %v176
    %570 = vmatprep.subr.mxu0 0.0
    %571 = vmatpush1.msra.mxu0 %v177
    %572 = vmatprep.subr.mxu0 0.0
    %573 = vmatpush1.msra.mxu0 0.0
    %574 = vmatprep.subr.mxu0 0.0
    %575 = vmatpush1.msra.mxu0 0.0
    %576 = vmatprep.subr.mxu0 0.0
    %577 = vmatpush1.msra.mxu0 0.0
    %578 = vmatprep.subr.mxu0 0.0
    %579 = vmatpush1.msra.mxu0 0.0
    %580 = vmatprep.subr.mxu0 0.0
    %581 = vmatpush1.msra.mxu0 0.0
    %582 = vmatprep.subr.mxu0 0.0
    %583 = vmatpush1.msra.mxu0 0.0
    %584 = vmatprep.subr.mxu0 0.0
    %585 = vmatpush1.msra.mxu0 0.0
    %586 = vmatprep.subr.mxu0 0.0
    %587 = vmatpush1.msra.mxu0 0.0
    %588 = vmatprep.subr.mxu0 0.0
    %589 = vmatpush1.msra.mxu0 0.0
    %590 = vmatprep.subr.mxu0 0.0
    %591 = vmatpush1.msra.mxu0 0.0
    %592 = vmatprep.subr.mxu0 0.0
    %593 = vmatpush1.msra.mxu0 0.0
    %594 = vmatprep.subr.mxu0 0.0
    %595 = vmatpush1.msra.mxu0 0.0
    %596 = vmatprep.subr.mxu0 0.0
    %597 = vmatpush1.msra.mxu0 0.0
    %598 = vmatprep.subr.mxu0 0.0
    %599 = vmatpush1.msra.mxu0 0.0
    %600 = vmatprep.subr.mxu0 0.0
    %601 = vmatpush1.msra.mxu0 0.0
    %602 = vmatprep.subr.mxu0 0.0
    %603 = vmatpush1.msra.mxu0 0.0
    %604 = vmatprep.subr.mxu0 0.0
    %605 = vmatpush1.msra.mxu0 0.0
    %606 = vmatprep.subr.mxu0 0.0
    %607 = vmatpush1.msra.mxu0 0.0
    %608 = vmatprep.subr.mxu0 0.0
    %609 = vmatpush1.msra.mxu0 0.0
    %610 = vmatprep.subr.mxu0 0.0
    %611 = vmatpush1.msra.mxu0 0.0
    %612 = vmatprep.subr.mxu0 0.0
    %613 = vmatpush1.msra.mxu0 0.0
    %614 = vmatprep.subr.mxu0 0.0
    %615 = vmatpush1.msra.mxu0 0.0
    %616 = vmatprep.subr.mxu0 0.0
    %617 = vmatpush1.msra.mxu0 0.0
    %618 = vmatprep.subr.mxu0 0.0
    %619 = vmatpush1.msra.mxu0 0.0
    %620 = vmatprep.subr.mxu0 0.0
    %621 = vmatpush1.msra.mxu0 0.0
    %622 = vmatprep.subr.mxu0 0.0
    %623 = vmatpush1.msra.mxu0 0.0
    %624 = vmatprep.subr.mxu0 0.0
    %625 = vmatpush1.msra.mxu0 0.0
    %626 = vmatprep.subr.mxu0 0.0
    %627 = vmatpush1.msra.mxu0 0.0
    %628 = vmatprep.mubr.f32.mxu0 0.0
    %629 = vmatmul.mubr.f32.gmra.mrb[0].mxu0 %v562
    %v630 = vpop.f32.mrb[0].mxu0
    %v631 = vadd.f32 0.0, %v630
    %v632 = vpop.f32.mrb[0].mxu0
    %633 = vdwg.mxu0
    %v635 = vsel %vm260, %v561, 0
    %637 = vmatprep.subr.mxu0 0.0
    %638 = vmatpush1.msra.mxu0 %v266
    %639 = vmatprep.subr.mxu0 0.0
    %640 = vmatpush1.msra.mxu0 0.0
    %641 = vmatprep.subr.mxu0 0.0
    %642 = vmatpush1.msra.mxu0 0.0
    %643 = vmatprep.subr.mxu0 0.0
    %644 = vmatpush1.msra.mxu0 0.0
    %645 = vmatprep.subr.mxu0 0.0
    %646 = vmatpush1.msra.mxu0 0.0
    %647 = vmatprep.subr.mxu0 0.0
    %648 = vmatpush1.msra.mxu0 0.0
    %649 = vmatprep.subr.mxu0 0.0
    %650 = vmatpush1.msra.mxu0 0.0
    %651 = vmatprep.subr.mxu0 0.0
    %652 = vmatpush1.msra.mxu0 0.0
    %653 = vmatprep.subr.mxu0 0.0
    %654 = vmatpush1.msra.mxu0 0.0
    %655 = vmatprep.subr.mxu0 0.0
    %656 = vmatpush1.msra.mxu0 0.0
    %657 = vmatprep.subr.mxu0 0.0
    %658 = vmatpush1.msra.mxu0 0.0
    %659 = vmatprep.subr.mxu0 0.0
    %660 = vmatpush1.msra.mxu0 0.0
    %661 = vmatprep.subr.mxu0 0.0
    %662 = vmatpush1.msra.mxu0 0.0
    %663 = vmatprep.subr.mxu0 0.0
    %664 = vmatpush1.msra.mxu0 0.0
    %665 = vmatprep.subr.mxu0 0.0
    %666 = vmatpush1.msra.mxu0 0.0
    %667 = vmatprep.subr.mxu0 0.0
    %668 = vmatpush1.msra.mxu0 0.0
    %669 = vmatprep.subr.mxu0 0.0
    %670 = vmatpush1.msra.mxu0 0.0
    %671 = vmatprep.subr.mxu0 0.0
    %672 = vmatpush1.msra.mxu0 0.0
    %673 = vmatprep.subr.mxu0 0.0
    %674 = vmatpush1.msra.mxu0 0.0
    %675 = vmatprep.subr.mxu0 0.0
    %676 = vmatpush1.msra.mxu0 0.0
    %677 = vmatprep.subr.mxu0 0.0
    %678 = vmatpush1.msra.mxu0 0.0
    %679 = vmatprep.subr.mxu0 0.0
    %680 = vmatpush1.msra.mxu0 0.0
    %681 = vmatprep.subr.mxu0 0.0
    %682 = vmatpush1.msra.mxu0 0.0
    %683 = vmatprep.subr.mxu0 0.0
    %684 = vmatpush1.msra.mxu0 0.0
    %685 = vmatprep.subr.mxu0 0.0
    %686 = vmatpush1.msra.mxu0 0.0
    %687 = vmatprep.subr.mxu0 0.0
    %688 = vmatpush1.msra.mxu0 0.0
    %689 = vmatprep.subr.mxu0 0.0
    %690 = vmatpush1.msra.mxu0 0.0
    %691 = vmatprep.subr.mxu0 0.0
    %692 = vmatpush1.msra.mxu0 0.0
    %693 = vmatprep.subr.mxu0 0.0
    %694 = vmatpush1.msra.mxu0 0.0
    %695 = vmatprep.subr.mxu0 0.0
    %696 = vmatpush1.msra.mxu0 0.0
    %697 = vmatprep.subr.mxu0 0.0
    %698 = vmatpush1.msra.mxu0 0.0
    %699 = vmatprep.subr.mxu0 0.0
    %700 = vmatpush1.msra.mxu0 0.0
    %701 = vmatprep.mubr.f32.mxu0 0.0
    %702 = vmatmul.mubr.f32.gmra.mrb[0].mxu0 %v635
    %v703 = vpop.f32.mrb[0].mxu0
    %v704 = vadd.f32 %v631, %v703
    %v705 = vpop.f32.mrb[0].mxu0
    %706 = vdwg.mxu0
    %v707 = vadd.f32 %v704, %v342
    %v708 = vxor.u32 %v707, 2147483648
    %v709 = vmul.f32 %v708, 1.442695
    %v710 = vpow.pop %v709
    %v711 = vadd.f32 %v710, 1.0
    %v712 = vrcp.pop %v711
    %v713 = vmul.f32 1.0, %v712
    %v714 = vtanh.pop %v707
    %v715 = vmul.f32 %v713, %v362
    %717 = vrot.lane.b32.xlu0 %v714, 64
    %v718 = vpop.permute.xlu0 %717
    %v720 = vmul.f32 %v713, %v718
    %722 = vrot.lane.b32.xlu0 %v720, 32
    %v723 = vpop.permute.xlu0 %722
    %v725 = vadd.f32 %v715, %v723
    %v726 = vtanh.pop %v725
    %728 = vrot.lane.b32.xlu0 %v726, 64
    %v729 = vpop.permute.xlu0 %728
    %v731 = vmul.f32 %v713, %v729
    %s732 = scalar_lea.vmem %s0, 12
    %v733 = vld [vmem:[%s732] sm:$0x3]
    %v734 = vsel %vm186, %v556, 0
    %736 = vmatprep.subr.mxu0 0.0
    %737 = vmatpush1.msra.mxu0 %v180
    %738 = vmatprep.subr.mxu0 0.0
    %739 = vmatpush1.msra.mxu0 %v181
    %740 = vmatprep.subr.mxu0 0.0
    %741 = vmatpush1.msra.mxu0 %v182
    %742 = vmatprep.subr.mxu0 0.0
    %743 = vmatpush1.msra.mxu0 %v183
    %744 = vmatprep.subr.mxu0 0.0
    %745 = vmatpush1.msra.mxu0 0.0
    %746 = vmatprep.subr.mxu0 0.0
    %747 = vmatpush1.msra.mxu0 0.0
    %748 = vmatprep.subr.mxu0 0.0
    %749 = vmatpush1.msra.mxu0 0.0
    %750 = vmatprep.subr.mxu0 0.0
    %751 = vmatpush1.msra.mxu0 0.0
    %752 = vmatprep.subr.mxu0 0.0
    %753 = vmatpush1.msra.mxu0 0.0
    %754 = vmatprep.subr.mxu0 0.0
    %755 = vmatpush1.msra.mxu0 0.0
    %756 = vmatprep.subr.mxu0 0.0
    %757 = vmatpush1.msra.mxu0 0.0
    %758 = vmatprep.subr.mxu0 0.0
    %759 = vmatpush1.msra.mxu0 0.0
    %760 = vmatprep.subr.mxu0 0.0
    %761 = vmatpush1.msra.mxu0 0.0
    %762 = vmatprep.subr.mxu0 0.0
    %763 = vmatpush1.msra.mxu0 0.0
    %764 = vmatprep.subr.mxu0 0.0
    %765 = vmatpush1.msra.mxu0 0.0
    %766 = vmatprep.subr.mxu0 0.0
    %767 = vmatpush1.msra.mxu0 0.0
    %768 = vmatprep.subr.mxu0 0.0
    %769 = vmatpush1.msra.mxu0 0.0
    %770 = vmatprep.subr.mxu0 0.0
    %771 = vmatpush1.msra.mxu0 0.0
    %772 = vmatprep.subr.mxu0 0.0
    %773 = vmatpush1.msra.mxu0 0.0
    %774 = vmatprep.subr.mxu0 0.0
    %775 = vmatpush1.msra.mxu0 0.0
    %776 = vmatprep.subr.mxu0 0.0
    %777 = vmatpush1.msra.mxu0 0.0
    %778 = vmatprep.subr.mxu0 0.0
    %779 = vmatpush1.msra.mxu0 0.0
    %780 = vmatprep.subr.mxu0 0.0
    %781 = vmatpush1.msra.mxu0 0.0
    %782 = vmatprep.subr.mxu0 0.0
    %783 = vmatpush1.msra.mxu0 0.0
    %784 = vmatprep.subr.mxu0 0.0
    %785 = vmatpush1.msra.mxu0 0.0
    %786 = vmatprep.subr.mxu0 0.0
    %787 = vmatpush1.msra.mxu0 0.0
    %788 = vmatprep.subr.mxu0 0.0
    %789 = vmatpush1.msra.mxu0 0.0
    %790 = vmatprep.subr.mxu0 0.0
    %791 = vmatpush1.msra.mxu0 0.0
    %792 = vmatprep.subr.mxu0 0.0
    %793 = vmatpush1.msra.mxu0 0.0
    %794 = vmatprep.subr.mxu0 0.0
    %795 = vmatpush1.msra.mxu0 0.0
    %796 = vmatprep.subr.mxu0 0.0
    %797 = vmatpush1.msra.mxu0 0.0
    %798 = vmatprep.subr.mxu0 0.0
    %799 = vmatpush1.msra.mxu0 0.0
    %800 = vmatprep.mubr.f32.mxu0 0.0
    %801 = vmatmul.mubr.f32.gmra.mrb[0].mxu0 %v734
    %v802 = vpop.f32.mrb[0].mxu0
    %v803 = vadd.f32 0.0, %v802
    %v804 = vpop.f32.mrb[0].mxu0
    %805 = vdwg.mxu0
    %v807 = vsel %vm260, %v733, 0
    %809 = vmatprep.subr.mxu0 0.0
    %810 = vmatpush1.msra.mxu0 %v445
    %811 = vmatprep.subr.mxu0 0.0
    %812 = vmatpush1.msra.mxu0 0.0
    %813 = vmatprep.subr.mxu0 0.0
    %814 = vmatpush1.msra.mxu0 0.0
    %815 = vmatprep.subr.mxu0 0.0
    %816 = vmatpush1.msra.mxu0 0.0
    %817 = vmatprep.subr.mxu0 0.0
    %818 = vmatpush1.msra.mxu0 0.0
    %819 = vmatprep.subr.mxu0 0.0
    %820 = vmatpush1.msra.mxu0 0.0
    %821 = vmatprep.subr.mxu0 0.0
    %822 = vmatpush1.msra.mxu0 0.0
    %823 = vmatprep.subr.mxu0 0.0
    %824 = vmatpush1.msra.mxu0 0.0
    %825 = vmatprep.subr.mxu0 0.0
    %826 = vmatpush1.msra.mxu0 0.0
    %827 = vmatprep.subr.mxu0 0.0
    %828 = vmatpush1.msra.mxu0 0.0
    %829 = vmatprep.subr.mxu0 0.0
    %830 = vmatpush1.msra.mxu0 0.0
    %831 = vmatprep.subr.mxu0 0.0
    %832 = vmatpush1.msra.mxu0 0.0
    %833 = vmatprep.subr.mxu0 0.0
    %834 = vmatpush1.msra.mxu0 0.0
    %835 = vmatprep.subr.mxu0 0.0
    %836 = vmatpush1.msra.mxu0 0.0
    %837 = vmatprep.subr.mxu0 0.0
    %838 = vmatpush1.msra.mxu0 0.0
    %839 = vmatprep.subr.mxu0 0.0
    %840 = vmatpush1.msra.mxu0 0.0
    %841 = vmatprep.subr.mxu0 0.0
    %842 = vmatpush1.msra.mxu0 0.0
    %843 = vmatprep.subr.mxu0 0.0
    %844 = vmatpush1.msra.mxu0 0.0
    %845 = vmatprep.subr.mxu0 0.0
    %846 = vmatpush1.msra.mxu0 0.0
    %847 = vmatprep.subr.mxu0 0.0
    %848 = vmatpush1.msra.mxu0 0.0
    %849 = vmatprep.subr.mxu0 0.0
    %850 = vmatpush1.msra.mxu0 0.0
    %851 = vmatprep.subr.mxu0 0.0
    %852 = vmatpush1.msra.mxu0 0.0
    %853 = vmatprep.subr.mxu0 0.0
    %854 = vmatpush1.msra.mxu0 0.0
    %855 = vmatprep.subr.mxu0 0.0
    %856 = vmatpush1.msra.mxu0 0.0
    %857 = vmatprep.subr.mxu0 0.0
    %858 = vmatpush1.msra.mxu0 0.0
    %859 = vmatprep.subr.mxu0 0.0
    %860 = vmatpush1.msra.mxu0 0.0
    %861 = vmatprep.subr.mxu0 0.0
    %862 = vmatpush1.msra.mxu0 0.0
    %863 = vmatprep.subr.mxu0 0.0
    %864 = vmatpush1.msra.mxu0 0.0
    %865 = vmatprep.subr.mxu0 0.0
    %866 = vmatpush1.msra.mxu0 0.0
    %867 = vmatprep.subr.mxu0 0.0
    %868 = vmatpush1.msra.mxu0 0.0
    %869 = vmatprep.subr.mxu0 0.0
    %870 = vmatpush1.msra.mxu0 0.0
    %871 = vmatprep.subr.mxu0 0.0
    %872 = vmatpush1.msra.mxu0 0.0
    %873 = vmatprep.mubr.f32.mxu0 0.0
    %874 = vmatmul.mubr.f32.gmra.mrb[0].mxu0 %v807
    %v875 = vpop.f32.mrb[0].mxu0
    %v876 = vadd.f32 %v803, %v875
    %v877 = vpop.f32.mrb[0].mxu0
    %878 = vdwg.mxu0
    %v879 = vadd.f32 %v876, %v521
    %v880 = vxor.u32 %v879, 2147483648
    %v881 = vmul.f32 %v880, 1.442695
    %v882 = vpow.pop %v881
    %v883 = vadd.f32 %v882, 1.0
    %v884 = vrcp.pop %v883
    %v885 = vmul.f32 1.0, %v884
    %v886 = vtanh.pop %v879
    %v887 = vmul.f32 %v885, %v541
    %889 = vrot.lane.b32.xlu0 %v886, 64
    %v890 = vpop.permute.xlu0 %889
    %v892 = vmul.f32 %v885, %v890
    %894 = vrot.lane.b32.xlu0 %v892, 32
    %v895 = vpop.permute.xlu0 %894
    %v897 = vadd.f32 %v887, %v895
    %v898 = vtanh.pop %v897
    %900 = vrot.lane.b32.xlu0 %v898, 64
    %v901 = vpop.permute.xlu0 %900
    %v903 = vmul.f32 %v885, %v901
    %905 = vrot.lane.b32.xlu0 %v731, 32
    %v906 = vpop.permute.xlu0 %905
    %s908 = scalar_lea.vmem [#allocation2], 2
    %909 = vst.msk [vmem:[%s908] sm:$0x3] %vm552, %v906
    %911 = vrot.lane.b32.xlu0 %v903, 32
    %v912 = vpop.permute.xlu0 %911
    %s914 = scalar_lea.vmem [#allocation3], 12
    %915 = vst.msk [vmem:[%s914] sm:$0x3] %vm552, %v912
    %s916 = scalar_lea.vmem %s0, 4
    %v917 = vld [vmem:[%s916] sm:$0x3]
    %v918 = vsel %vm186, %v906, 0
    %920 = vmatprep.subr.mxu0 0.0
    %921 = vmatpush1.msra.mxu0 %v174
    %922 = vmatprep.subr.mxu0 0.0
    %923 = vmatpush1.msra.mxu0 %v175
    %924 = vmatprep.subr.mxu0 0.0
    %925 = vmatpush1.msra.mxu0 %v176
    %926 = vmatprep.subr.mxu0 0.0
    %927 = vmatpush1.msra.mxu0 %v177
    %928 = vmatprep.subr.mxu0 0.0
    %929 = vmatpush1.msra.mxu0 0.0
    %930 = vmatprep.subr.mxu0 0.0
    %931 = vmatpush1.msra.mxu0 0.0
    %932 = vmatprep.subr.mxu0 0.0
    %933 = vmatpush1.msra.mxu0 0.0
    %934 = vmatprep.subr.mxu0 0.0
    %935 = vmatpush1.msra.mxu0 0.0
    %936 = vmatprep.subr.mxu0 0.0
    %937 = vmatpush1.msra.mxu0 0.0
    %938 = vmatprep.subr.mxu0 0.0
    %939 = vmatpush1.msra.mxu0 0.0
    %940 = vmatprep.subr.mxu0 0.0
    %941 = vmatpush1.msra.mxu0 0.0
    %942 = vmatprep.subr.mxu0 0.0
    %943 = vmatpush1.msra.mxu0 0.0
    %944 = vmatprep.subr.mxu0 0.0
    %945 = vmatpush1.msra.mxu0 0.0
    %946 = vmatprep.subr.mxu0 0.0
    %947 = vmatpush1.msra.mxu0 0.0
    %948 = vmatprep.subr.mxu0 0.0
    %949 = vmatpush1.msra.mxu0 0.0
    %950 = vmatprep.subr.mxu0 0.0
    %951 = vmatpush1.msra.mxu0 0.0
    %952 = vmatprep.subr.mxu0 0.0
    %953 = vmatpush1.msra.mxu0 0.0
    %954 = vmatprep.subr.mxu0 0.0
    %955 = vmatpush1.msra.mxu0 0.0
    %956 = vmatprep.subr.mxu0 0.0
    %957 = vmatpush1.msra.mxu0 0.0
    %958 = vmatprep.subr.mxu0 0.0
    %959 = vmatpush1.msra.mxu0 0.0
    %960 = vmatprep.subr.mxu0 0.0
    %961 = vmatpush1.msra.mxu0 0.0
    %962 = vmatprep.subr.mxu0 0.0
    %963 = vmatpush1.msra.mxu0 0.0
    %964 = vmatprep.subr.mxu0 0.0
    %965 = vmatpush1.msra.mxu0 0.0
    %966 = vmatprep.subr.mxu0 0.0
    %967 = vmatpush1.msra.mxu0 0.0
    %968 = vmatprep.subr.mxu0 0.0
    %969 = vmatpush1.msra.mxu0 0.0
    %970 = vmatprep.subr.mxu0 0.0
    %971 = vmatpush1.msra.mxu0 0.0
    %972 = vmatprep.subr.mxu0 0.0
    %973 = vmatpush1.msra.mxu0 0.0
    %974 = vmatprep.subr.mxu0 0.0
    %975 = vmatpush1.msra.mxu0 0.0
    %976 = vmatprep.subr.mxu0 0.0
    %977 = vmatpush1.msra.mxu0 0.0
    %978 = vmatprep.subr.mxu0 0.0
    %979 = vmatpush1.msra.mxu0 0.0
    %980 = vmatprep.subr.mxu0 0.0
    %981 = vmatpush1.msra.mxu0 0.0
    %982 = vmatprep.subr.mxu0 0.0
    %983 = vmatpush1.msra.mxu0 0.0
    %984 = vmatprep.mubr.f32.mxu0 0.0
    %985 = vmatmul.mubr.f32.gmra.mrb[0].mxu0 %v918
    %v986 = vpop.f32.mrb[0].mxu0
    %v987 = vadd.f32 0.0, %v986
    %v988 = vpop.f32.mrb[0].mxu0
    %989 = vdwg.mxu0
    %v991 = vsel %vm260, %v917, 0
    %993 = vmatprep.subr.mxu0 0.0
    %994 = vmatpush1.msra.mxu0 %v266
    %995 = vmatprep.subr.mxu0 0.0
    %996 = vmatpush1.msra.mxu0 0.0
    %997 = vmatprep.subr.mxu0 0.0
    %998 = vmatpush1.msra.mxu0 0.0
    %999 = vmatprep.subr.mxu0 0.0
    %1000 = vmatpush1.msra.mxu0 0.0
    %1001 = vmatprep.subr.mxu0 0.0
    %1002 = vmatpush1.msra.mxu0 0.0
    %1003 = vmatprep.subr.mxu0 0.0
    %1004 = vmatpush1.msra.mxu0 0.0
    %1005 = vmatprep.subr.mxu0 0.0
    %1006 = vmatpush1.msra.mxu0 0.0
    %1007 = vmatprep.subr.mxu0 0.0
    %1008 = vmatpush1.msra.mxu0 0.0
    %1009 = vmatprep.subr.mxu0 0.0
    %1010 = vmatpush1.msra.mxu0 0.0
    %1011 = vmatprep.subr.mxu0 0.0
    %1012 = vmatpush1.msra.mxu0 0.0
    %1013 = vmatprep.subr.mxu0 0.0
    %1014 = vmatpush1.msra.mxu0 0.0
    %1015 = vmatprep.subr.mxu0 0.0
    %1016 = vmatpush1.msra.mxu0 0.0
    %1017 = vmatprep.subr.mxu0 0.0
    %1018 = vmatpush1.msra.mxu0 0.0
    %1019 = vmatprep.subr.mxu0 0.0
    %1020 = vmatpush1.msra.mxu0 0.0
    %1021 = vmatprep.subr.mxu0 0.0
    %1022 = vmatpush1.msra.mxu0 0.0
    %1023 = vmatprep.subr.mxu0 0.0
    %1024 = vmatpush1.msra.mxu0 0.0
    %1025 = vmatprep.subr.mxu0 0.0
    %1026 = vmatpush1.msra.mxu0 0.0
    %1027 = vmatprep.subr.mxu0 0.0
    %1028 = vmatpush1.msra.mxu0 0.0
    %1029 = vmatprep.subr.mxu0 0.0
    %1030 = vmatpush1.msra.mxu0 0.0
    %1031 = vmatprep.subr.mxu0 0.0
    %1032 = vmatpush1.msra.mxu0 0.0
    %1033 = vmatprep.subr.mxu0 0.0
    %1034 = vmatpush1.msra.mxu0 0.0
    %1035 = vmatprep.subr.mxu0 0.0
    %1036 = vmatpush1.msra.mxu0 0.0
    %1037 = vmatprep.subr.mxu0 0.0
    %1038 = vmatpush1.msra.mxu0 0.0
    %1039 = vmatprep.subr.mxu0 0.0
    %1040 = vmatpush1.msra.mxu0 0.0
    %1041 = vmatprep.subr.mxu0 0.0
    %1042 = vmatpush1.msra.mxu0 0.0
    %1043 = vmatprep.subr.mxu0 0.0
    %1044 = vmatpush1.msra.mxu0 0.0
    %1045 = vmatprep.subr.mxu0 0.0
    %1046 = vmatpush1.msra.mxu0 0.0
    %1047 = vmatprep.subr.mxu0 0.0
    %1048 = vmatpush1.msra.mxu0 0.0
    %1049 = vmatprep.subr.mxu0 0.0
    %1050 = vmatpush1.msra.mxu0 0.0
    %1051 = vmatprep.subr.mxu0 0.0
    %1052 = vmatpush1.msra.mxu0 0.0
    %1053 = vmatprep.subr.mxu0 0.0
    %1054 = vmatpush1.msra.mxu0 0.0
    %1055 = vmatprep.subr.mxu0 0.0
    %1056 = vmatpush1.msra.mxu0 0.0
    %1057 = vmatprep.mubr.f32.mxu0 0.0
    %1058 = vmatmul.mubr.f32.gmra.mrb[0].mxu0 %v991
    %v1059 = vpop.f32.mrb[0].mxu0
    %v1060 = vadd.f32 %v987, %v1059
    %v1061 = vpop.f32.mrb[0].mxu0
    %1062 = vdwg.mxu0
    %v1063 = vadd.f32 %v1060, %v342
    %v1064 = vxor.u32 %v1063, 2147483648
    %v1065 = vmul.f32 %v1064, 1.442695
    %v1066 = vpow.pop %v1065
    %v1067 = vadd.f32 %v1066, 1.0
    %v1068 = vrcp.pop %v1067
    %v1069 = vmul.f32 1.0, %v1068
    %v1070 = vtanh.pop %v1063
    %v1071 = vmul.f32 %v1069, %v725
    %1073 = vrot.lane.b32.xlu0 %v1070, 64
    %v1074 = vpop.permute.xlu0 %1073
    %v1076 = vmul.f32 %v1069, %v1074
    %1078 = vrot.lane.b32.xlu0 %v1076, 32
    %v1079 = vpop.permute.xlu0 %1078
    %v1081 = vadd.f32 %v1071, %v1079
    %v1082 = vtanh.pop %v1081
    %1084 = vrot.lane.b32.xlu0 %v1082, 64
    %v1085 = vpop.permute.xlu0 %1084
    %v1087 = vmul.f32 %v1069, %v1085
    %s1088 = scalar_lea.vmem %s0, 10
    %v1089 = vld [vmem:[%s1088] sm:$0x3]
    %v1090 = vsel %vm186, %v912, 0
    %1092 = vmatprep.subr.mxu0 0.0
    %1093 = vmatpush1.msra.mxu0 %v180
    %1094 = vmatprep.subr.mxu0 0.0
    %1095 = vmatpush1.msra.mxu0 %v181
    %1096 = vmatprep.subr.mxu0 0.0
    %1097 = vmatpush1.msra.mxu0 %v182
    %1098 = vmatprep.subr.mxu0 0.0
    %1099 = vmatpush1.msra.mxu0 %v183
    %1100 = vmatprep.subr.mxu0 0.0
    %1101 = vmatpush1.msra.mxu0 0.0
    %1102 = vmatprep.subr.mxu0 0.0
    %1103 = vmatpush1.msra.mxu0 0.0
    %1104 = vmatprep.subr.mxu0 0.0
    %1105 = vmatpush1.msra.mxu0 0.0
    %1106 = vmatprep.subr.mxu0 0.0
    %1107 = vmatpush1.msra.mxu0 0.0
    %1108 = vmatprep.subr.mxu0 0.0
    %1109 = vmatpush1.msra.mxu0 0.0
    %1110 = vmatprep.subr.mxu0 0.0
    %1111 = vmatpush1.msra.mxu0 0.0
    %1112 = vmatprep.subr.mxu0 0.0
    %1113 = vmatpush1.msra.mxu0 0.0
    %1114 = vmatprep.subr.mxu0 0.0
    %1115 = vmatpush1.msra.mxu0 0.0
    %1116 = vmatprep.subr.mxu0 0.0
    %1117 = vmatpush1.msra.mxu0 0.0
    %1118 = vmatprep.subr.mxu0 0.0
    %1119 = vmatpush1.msra.mxu0 0.0
    %1120 = vmatprep.subr.mxu0 0.0
    %1121 = vmatpush1.msra.mxu0 0.0
    %1122 = vmatprep.subr.mxu0 0.0
    %1123 = vmatpush1.msra.mxu0 0.0
    %1124 = vmatprep.subr.mxu0 0.0
    %1125 = vmatpush1.msra.mxu0 0.0
    %1126 = vmatprep.subr.mxu0 0.0
    %1127 = vmatpush1.msra.mxu0 0.0
    %1128 = vmatprep.subr.mxu0 0.0
    %1129 = vmatpush1.msra.mxu0 0.0
    %1130 = vmatprep.subr.mxu0 0.0
    %1131 = vmatpush1.msra.mxu0 0.0
    %1132 = vmatprep.subr.mxu0 0.0
    %1133 = vmatpush1.msra.mxu0 0.0
    %1134 = vmatprep.subr.mxu0 0.0
    %1135 = vmatpush1.msra.mxu0 0.0
    %1136 = vmatprep.subr.mxu0 0.0
    %1137 = vmatpush1.msra.mxu0 0.0
    %1138 = vmatprep.subr.mxu0 0.0
    %1139 = vmatpush1.msra.mxu0 0.0
    %1140 = vmatprep.subr.mxu0 0.0
    %1141 = vmatpush1.msra.mxu0 0.0
    %1142 = vmatprep.subr.mxu0 0.0
    %1143 = vmatpush1.msra.mxu0 0.0
    %1144 = vmatprep.subr.mxu0 0.0
    %1145 = vmatpush1.msra.mxu0 0.0
    %1146 = vmatprep.subr.mxu0 0.0
    %1147 = vmatpush1.msra.mxu0 0.0
    %1148 = vmatprep.subr.mxu0 0.0
    %1149 = vmatpush1.msra.mxu0 0.0
    %1150 = vmatprep.subr.mxu0 0.0
    %1151 = vmatpush1.msra.mxu0 0.0
    %1152 = vmatprep.subr.mxu0 0.0
    %1153 = vmatpush1.msra.mxu0 0.0
    %1154 = vmatprep.subr.mxu0 0.0
    %1155 = vmatpush1.msra.mxu0 0.0
    %1156 = vmatprep.mubr.f32.mxu0 0.0
    %1157 = vmatmul.mubr.f32.gmra.mrb[0].mxu0 %v1090
    %v1158 = vpop.f32.mrb[0].mxu0
    %v1159 = vadd.f32 0.0, %v1158
    %v1160 = vpop.f32.mrb[0].mxu0
    %1161 = vdwg.mxu0
    %v1163 = vsel %vm260, %v1089, 0
    %1165 = vmatprep.subr.mxu0 0.0
    %1166 = vmatpush1.msra.mxu0 %v445
    %1167 = vmatprep.subr.mxu0 0.0
    %1168 = vmatpush1.msra.mxu0 0.0
    %1169 = vmatprep.subr.mxu0 0.0
    %1170 = vmatpush1.msra.mxu0 0.0
    %1171 = vmatprep.subr.mxu0 0.0
    %1172 = vmatpush1.msra.mxu0 0.0
    %1173 = vmatprep.subr.mxu0 0.0
    %1174 = vmatpush1.msra.mxu0 0.0
    %1175 = vmatprep.subr.mxu0 0.0
    %1176 = vmatpush1.msra.mxu0 0.0
    %1177 = vmatprep.subr.mxu0 0.0
    %1178 = vmatpush1.msra.mxu0 0.0
    %1179 = vmatprep.subr.mxu0 0.0
    %1180 = vmatpush1.msra.mxu0 0.0
    %1181 = vmatprep.subr.mxu0 0.0
    %1182 = vmatpush1.msra.mxu0 0.0
    %1183 = vmatprep.subr.mxu0 0.0
    %1184 = vmatpush1.msra.mxu0 0.0
    %1185 = vmatprep.subr.mxu0 0.0
    %1186 = vmatpush1.msra.mxu0 0.0
    %1187 = vmatprep.subr.mxu0 0.0
    %1188 = vmatpush1.msra.mxu0 0.0
    %1189 = vmatprep.subr.mxu0 0.0
    %1190 = vmatpush1.msra.mxu0 0.0
    %1191 = vmatprep.subr.mxu0 0.0
    %1192 = vmatpush1.msra.mxu0 0.0
    %1193 = vmatprep.subr.mxu0 0.0
    %1194 = vmatpush1.msra.mxu0 0.0
    %1195 = vmatprep.subr.mxu0 0.0
    %1196 = vmatpush1.msra.mxu0 0.0
    %1197 = vmatprep.subr.mxu0 0.0
    %1198 = vmatpush1.msra.mxu0 0.0
    %1199 = vmatprep.subr.mxu0 0.0
    %1200 = vmatpush1.msra.mxu0 0.0
    %1201 = vmatprep.subr.mxu0 0.0
    %1202 = vmatpush1.msra.mxu0 0.0
    %1203 = vmatprep.subr.mxu0 0.0
    %1204 = vmatpush1.msra.mxu0 0.0
    %1205 = vmatprep.subr.mxu0 0.0
    %1206 = vmatpush1.msra.mxu0 0.0
    %1207 = vmatprep.subr.mxu0 0.0
    %1208 = vmatpush1.msra.mxu0 0.0
    %1209 = vmatprep.subr.mxu0 0.0
    %1210 = vmatpush1.msra.mxu0 0.0
    %1211 = vmatprep.subr.mxu0 0.0
    %1212 = vmatpush1.msra.mxu0 0.0
    %1213 = vmatprep.subr.mxu0 0.0
    %1214 = vmatpush1.msra.mxu0 0.0
    %1215 = vmatprep.subr.mxu0 0.0
    %1216 = vmatpush1.msra.mxu0 0.0
    %1217 = vmatprep.subr.mxu0 0.0
    %1218 = vmatpush1.msra.mxu0 0.0
    %1219 = vmatprep.subr.mxu0 0.0
    %1220 = vmatpush1.msra.mxu0 0.0
    %1221 = vmatprep.subr.mxu0 0.0
    %1222 = vmatpush1.msra.mxu0 0.0
    %1223 = vmatprep.subr.mxu0 0.0
    %1224 = vmatpush1.msra.mxu0 0.0
    %1225 = vmatprep.subr.mxu0 0.0
    %1226 = vmatpush1.msra.mxu0 0.0
    %1227 = vmatprep.subr.mxu0 0.0
    %1228 = vmatpush1.msra.mxu0 0.0
    %1229 = vmatprep.mubr.f32.mxu0 0.0
    %1230 = vmatmul.mubr.f32.gmra.mrb[0].mxu0 %v1163
    %v1231 = vpop.f32.mrb[0].mxu0
    %v1232 = vadd.f32 %v1159, %v1231
    %v1233 = vpop.f32.mrb[0].mxu0
    %1234 = vdwg.mxu0
    %v1235 = vadd.f32 %v1232, %v521
    %v1236 = vxor.u32 %v1235, 2147483648
    %v1237 = vmul.f32 %v1236, 1.442695
    %v1238 = vpow.pop %v1237
    %v1239 = vadd.f32 %v1238, 1.0
    %v1240 = vrcp.pop %v1239
    %v1241 = vmul.f32 1.0, %v1240
    %v1242 = vtanh.pop %v1235
    %v1243 = vmul.f32 %v1241, %v897
    %1245 = vrot.lane.b32.xlu0 %v1242, 64
    %v1246 = vpop.permute.xlu0 %1245
    %v1248 = vmul.f32 %v1241, %v1246
    %1250 = vrot.lane.b32.xlu0 %v1248, 32
    %v1251 = vpop.permute.xlu0 %1250
    %v1253 = vadd.f32 %v1243, %v1251
    %v1254 = vtanh.pop %v1253
    %1256 = vrot.lane.b32.xlu0 %v1254, 64
    %v1257 = vpop.permute.xlu0 %1256
    %v1259 = vmul.f32 %v1241, %v1257
    %1261 = vrot.lane.b32.xlu0 %v1087, 32
    %v1262 = vpop.permute.xlu0 %1261
    %s1264 = scalar_lea.vmem [#allocation2], 4
    %1265 = vst.msk [vmem:[%s1264] sm:$0x3] %vm552, %v1262
    %1267 = vrot.lane.b32.xlu0 %v1259, 32
    %v1268 = vpop.permute.xlu0 %1267
    %s1270 = scalar_lea.vmem [#allocation3], 10
    %1271 = vst.msk [vmem:[%s1270] sm:$0x3] %vm552, %v1268
    %s1272 = scalar_lea.vmem %s0, 6
    %v1273 = vld [vmem:[%s1272] sm:$0x3]
    %v1274 = vsel %vm186, %v1262, 0
    %1276 = vmatprep.subr.mxu0 0.0
    %1277 = vmatpush1.msra.mxu0 %v174
    %1278 = vmatprep.subr.mxu0 0.0
    %1279 = vmatpush1.msra.mxu0 %v175
    %1280 = vmatprep.subr.mxu0 0.0
    %1281 = vmatpush1.msra.mxu0 %v176
    %1282 = vmatprep.subr.mxu0 0.0
    %1283 = vmatpush1.msra.mxu0 %v177
    %1284 = vmatprep.subr.mxu0 0.0
    %1285 = vmatpush1.msra.mxu0 0.0
    %1286 = vmatprep.subr.mxu0 0.0
    %1287 = vmatpush1.msra.mxu0 0.0
    %1288 = vmatprep.subr.mxu0 0.0
    %1289 = vmatpush1.msra.mxu0 0.0
    %1290 = vmatprep.subr.mxu0 0.0
    %1291 = vmatpush1.msra.mxu0 0.0
    %1292 = vmatprep.subr.mxu0 0.0
    %1293 = vmatpush1.msra.mxu0 0.0
    %1294 = vmatprep.subr.mxu0 0.0
    %1295 = vmatpush1.msra.mxu0 0.0
    %1296 = vmatprep.subr.mxu0 0.0
    %1297 = vmatpush1.msra.mxu0 0.0
    %1298 = vmatprep.subr.mxu0 0.0
    %1299 = vmatpush1.msra.mxu0 0.0
    %1300 = vmatprep.subr.mxu0 0.0
    %1301 = vmatpush1.msra.mxu0 0.0
    %1302 = vmatprep.subr.mxu0 0.0
    %1303 = vmatpush1.msra.mxu0 0.0
    %1304 = vmatprep.subr.mxu0 0.0
    %1305 = vmatpush1.msra.mxu0 0.0
    %1306 = vmatprep.subr.mxu0 0.0
    %1307 = vmatpush1.msra.mxu0 0.0
    %1308 = vmatprep.subr.mxu0 0.0
    %1309 = vmatpush1.msra.mxu0 0.0
    %1310 = vmatprep.subr.mxu0 0.0
    %1311 = vmatpush1.msra.mxu0 0.0
    %1312 = vmatprep.subr.mxu0 0.0
    %1313 = vmatpush1.msra.mxu0 0.0
    %1314 = vmatprep.subr.mxu0 0.0
    %1315 = vmatpush1.msra.mxu0 0.0
    %1316 = vmatprep.subr.mxu0 0.0
    %1317 = vmatpush1.msra.mxu0 0.0
    %1318 = vmatprep.subr.mxu0 0.0
    %1319 = vmatpush1.msra.mxu0 0.0
    %1320 = vmatprep.subr.mxu0 0.0
    %1321 = vmatpush1.msra.mxu0 0.0
    %1322 = vmatprep.subr.mxu0 0.0
    %1323 = vmatpush1.msra.mxu0 0.0
    %1324 = vmatprep.subr.mxu0 0.0
    %1325 = vmatpush1.msra.mxu0 0.0
    %1326 = vmatprep.subr.mxu0 0.0
    %1327 = vmatpush1.msra.mxu0 0.0
    %1328 = vmatprep.subr.mxu0 0.0
    %1329 = vmatpush1.msra.mxu0 0.0
    %1330 = vmatprep.subr.mxu0 0.0
    %1331 = vmatpush1.msra.mxu0 0.0
    %1332 = vmatprep.subr.mxu0 0.0
    %1333 = vmatpush1.msra.mxu0 0.0
    %1334 = vmatprep.subr.mxu0 0.0
    %1335 = vmatpush1.msra.mxu0 0.0
    %1336 = vmatprep.subr.mxu0 0.0
    %1337 = vmatpush1.msra.mxu0 0.0
    %1338 = vmatprep.subr.mxu0 0.0
    %1339 = vmatpush1.msra.mxu0 0.0
    %1340 = vmatprep.mubr.f32.mxu0 0.0
    %1341 = vmatmul.mubr.f32.gmra.mrb[0].mxu0 %v1274
    %v1342 = vpop.f32.mrb[0].mxu0
    %v1343 = vadd.f32 0.0, %v1342
    %v1344 = vpop.f32.mrb[0].mxu0
    %1345 = vdwg.mxu0
    %v1347 = vsel %vm260, %v1273, 0
    %1349 = vmatprep.subr.mxu0 0.0
    %1350 = vmatpush1.msra.mxu0 %v266
    %1351 = vmatprep.subr.mxu0 0.0
    %1352 = vmatpush1.msra.mxu0 0.0
    %1353 = vmatprep.subr.mxu0 0.0
    %1354 = vmatpush1.msra.mxu0 0.0
    %1355 = vmatprep.subr.mxu0 0.0
    %1356 = vmatpush1.msra.mxu0 0.0
    %1357 = vmatprep.subr.mxu0 0.0
    %1358 = vmatpush1.msra.mxu0 0.0
    %1359 = vmatprep.subr.mxu0 0.0
    %1360 = vmatpush1.msra.mxu0 0.0
    %1361 = vmatprep.subr.mxu0 0.0
    %1362 = vmatpush1.msra.mxu0 0.0
    %1363 = vmatprep.subr.mxu0 0.0
    %1364 = vmatpush1.msra.mxu0 0.0
    %1365 = vmatprep.subr.mxu0 0.0
    %1366 = vmatpush1.msra.mxu0 0.0
    %1367 = vmatprep.subr.mxu0 0.0
    %1368 = vmatpush1.msra.mxu0 0.0
    %1369 = vmatprep.subr.mxu0 0.0
    %1370 = vmatpush1.msra.mxu0 0.0
    %1371 = vmatprep.subr.mxu0 0.0
    %1372 = vmatpush1.msra.mxu0 0.0
    %1373 = vmatprep.subr.mxu0 0.0
    %1374 = vmatpush1.msra.mxu0 0.0
    %1375 = vmatprep.subr.mxu0 0.0
    %1376 = vmatpush1.msra.mxu0 0.0
    %1377 = vmatprep.subr.mxu0 0.0
    %1378 = vmatpush1.msra.mxu0 0.0
    %1379 = vmatprep.subr.mxu0 0.0
    %1380 = vmatpush1.msra.mxu0 0.0
    %1381 = vmatprep.subr.mxu0 0.0
    %1382 = vmatpush1.msra.mxu0 0.0
    %1383 = vmatprep.subr.mxu0 0.0
    %1384 = vmatpush1.msra.mxu0 0.0
    %1385 = vmatprep.subr.mxu0 0.0
    %1386 = vmatpush1.msra.mxu0 0.0
    %1387 = vmatprep.subr.mxu0 0.0
    %1388 = vmatpush1.msra.mxu0 0.0
    %1389 = vmatprep.subr.mxu0 0.0
    %1390 = vmatpush1.msra.mxu0 0.0
    %1391 = vmatprep.subr.mxu0 0.0
    %1392 = vmatpush1.msra.mxu0 0.0
    %1393 = vmatprep.subr.mxu0 0.0
    %1394 = vmatpush1.msra.mxu0 0.0
    %1395 = vmatprep.subr.mxu0 0.0
    %1396 = vmatpush1.msra.mxu0 0.0
    %1397 = vmatprep.subr.mxu0 0.0
    %1398 = vmatpush1.msra.mxu0 0.0
    %1399 = vmatprep.subr.mxu0 0.0
    %1400 = vmatpush1.msra.mxu0 0.0
    %1401 = vmatprep.subr.mxu0 0.0
    %1402 = vmatpush1.msra.mxu0 0.0
    %1403 = vmatprep.subr.mxu0 0.0
    %1404 = vmatpush1.msra.mxu0 0.0
    %1405 = vmatprep.subr.mxu0 0.0
    %1406 = vmatpush1.msra.mxu0 0.0
    %1407 = vmatprep.subr.mxu0 0.0
    %1408 = vmatpush1.msra.mxu0 0.0
    %1409 = vmatprep.subr.mxu0 0.0
    %1410 = vmatpush1.msra.mxu0 0.0
    %1411 = vmatprep.subr.mxu0 0.0
    %1412 = vmatpush1.msra.mxu0 0.0
    %1413 = vmatprep.mubr.f32.mxu0 0.0
    %1414 = vmatmul.mubr.f32.gmra.mrb[0].mxu0 %v1347
    %v1415 = vpop.f32.mrb[0].mxu0
    %v1416 = vadd.f32 %v1343, %v1415
    %v1417 = vpop.f32.mrb[0].mxu0
    %1418 = vdwg.mxu0
    %v1419 = vadd.f32 %v1416, %v342
    %v1420 = vxor.u32 %v1419, 2147483648
    %v1421 = vmul.f32 %v1420, 1.442695
    %v1422 = vpow.pop %v1421
    %v1423 = vadd.f32 %v1422, 1.0
    %v1424 = vrcp.pop %v1423
    %v1425 = vmul.f32 1.0, %v1424
    %v1426 = vtanh.pop %v1419
    %v1427 = vmul.f32 %v1425, %v1081
    %1429 = vrot.lane.b32.xlu0 %v1426, 64
    %v1430 = vpop.permute.xlu0 %1429
    %v1432 = vmul.f32 %v1425, %v1430
    %1434 = vrot.lane.b32.xlu0 %v1432, 32
    %v1435 = vpop.permute.xlu0 %1434
    %v1437 = vadd.f32 %v1427, %v1435
    %v1438 = vtanh.pop %v1437
    %1440 = vrot.lane.b32.xlu0 %v1438, 64
    %v1441 = vpop.permute.xlu0 %1440
    %v1443 = vmul.f32 %v1425, %v1441
    %s1444 = scalar_lea.vmem %s0, 8
    %v1445 = vld [vmem:[%s1444] sm:$0x3]
    %v1446 = vsel %vm186, %v1268, 0
    %1448 = vmatprep.subr.mxu0 0.0
    %1449 = vmatpush1.msra.mxu0 %v180
    %1450 = vmatprep.subr.mxu0 0.0
    %1451 = vmatpush1.msra.mxu0 %v181
    %1452 = vmatprep.subr.mxu0 0.0
    %1453 = vmatpush1.msra.mxu0 %v182
    %1454 = vmatprep.subr.mxu0 0.0
    %1455 = vmatpush1.msra.mxu0 %v183
    %1456 = vmatprep.subr.mxu0 0.0
    %1457 = vmatpush1.msra.mxu0 0.0
    %1458 = vmatprep.subr.mxu0 0.0
    %1459 = vmatpush1.msra.mxu0 0.0
    %1460 = vmatprep.subr.mxu0 0.0
    %1461 = vmatpush1.msra.mxu0 0.0
    %1462 = vmatprep.subr.mxu0 0.0
    %1463 = vmatpush1.msra.mxu0 0.0
    %1464 = vmatprep.subr.mxu0 0.0
    %1465 = vmatpush1.msra.mxu0 0.0
    %1466 = vmatprep.subr.mxu0 0.0
    %1467 = vmatpush1.msra.mxu0 0.0
    %1468 = vmatprep.subr.mxu0 0.0
    %1469 = vmatpush1.msra.mxu0 0.0
    %1470 = vmatprep.subr.mxu0 0.0
    %1471 = vmatpush1.msra.mxu0 0.0
    %1472 = vmatprep.subr.mxu0 0.0
    %1473 = vmatpush1.msra.mxu0 0.0
    %1474 = vmatprep.subr.mxu0 0.0
    %1475 = vmatpush1.msra.mxu0 0.0
    %1476 = vmatprep.subr.mxu0 0.0
    %1477 = vmatpush1.msra.mxu0 0.0
    %1478 = vmatprep.subr.mxu0 0.0
    %1479 = vmatpush1.msra.mxu0 0.0
    %1480 = vmatprep.subr.mxu0 0.0
    %1481 = vmatpush1.msra.mxu0 0.0
    %1482 = vmatprep.subr.mxu0 0.0
    %1483 = vmatpush1.msra.mxu0 0.0
    %1484 = vmatprep.subr.mxu0 0.0
    %1485 = vmatpush1.msra.mxu0 0.0
    %1486 = vmatprep.subr.mxu0 0.0
    %1487 = vmatpush1.msra.mxu0 0.0
    %1488 = vmatprep.subr.mxu0 0.0
    %1489 = vmatpush1.msra.mxu0 0.0
    %1490 = vmatprep.subr.mxu0 0.0
    %1491 = vmatpush1.msra.mxu0 0.0
    %1492 = vmatprep.subr.mxu0 0.0
    %1493 = vmatpush1.msra.mxu0 0.0
    %1494 = vmatprep.subr.mxu0 0.0
    %1495 = vmatpush1.msra.mxu0 0.0
    %1496 = vmatprep.subr.mxu0 0.0
    %1497 = vmatpush1.msra.mxu0 0.0
    %1498 = vmatprep.subr.mxu0 0.0
    %1499 = vmatpush1.msra.mxu0 0.0
    %1500 = vmatprep.subr.mxu0 0.0
    %1501 = vmatpush1.msra.mxu0 0.0
    %1502 = vmatprep.subr.mxu0 0.0
    %1503 = vmatpush1.msra.mxu0 0.0
    %1504 = vmatprep.subr.mxu0 0.0
    %1505 = vmatpush1.msra.mxu0 0.0
    %1506 = vmatprep.subr.mxu0 0.0
    %1507 = vmatpush1.msra.mxu0 0.0
    %1508 = vmatprep.subr.mxu0 0.0
    %1509 = vmatpush1.msra.mxu0 0.0
    %1510 = vmatprep.subr.mxu0 0.0
    %1511 = vmatpush1.msra.mxu0 0.0
    %1512 = vmatprep.mubr.f32.mxu0 0.0
    %1513 = vmatmul.mubr.f32.gmra.mrb[0].mxu0 %v1446
    %v1514 = vpop.f32.mrb[0].mxu0
    %v1515 = vadd.f32 0.0, %v1514
    %v1516 = vpop.f32.mrb[0].mxu0
    %1517 = vdwg.mxu0
    %v1519 = vsel %vm260, %v1445, 0
    %1521 = vmatprep.subr.mxu0 0.0
    %1522 = vmatpush1.msra.mxu0 %v445
    %1523 = vmatprep.subr.mxu0 0.0
    %1524 = vmatpush1.msra.mxu0 0.0
    %1525 = vmatprep.subr.mxu0 0.0
    %1526 = vmatpush1.msra.mxu0 0.0
    %1527 = vmatprep.subr.mxu0 0.0
    %1528 = vmatpush1.msra.mxu0 0.0
    %1529 = vmatprep.subr.mxu0 0.0
    %1530 = vmatpush1.msra.mxu0 0.0
    %1531 = vmatprep.subr.mxu0 0.0
    %1532 = vmatpush1.msra.mxu0 0.0
    %1533 = vmatprep.subr.mxu0 0.0
    %1534 = vmatpush1.msra.mxu0 0.0
    %1535 = vmatprep.subr.mxu0 0.0
    %1536 = vmatpush1.msra.mxu0 0.0
    %1537 = vmatprep.subr.mxu0 0.0
    %1538 = vmatpush1.msra.mxu0 0.0
    %1539 = vmatprep.subr.mxu0 0.0
    %1540 = vmatpush1.msra.mxu0 0.0
    %1541 = vmatprep.subr.mxu0 0.0
    %1542 = vmatpush1.msra.mxu0 0.0
    %1543 = vmatprep.subr.mxu0 0.0
    %1544 = vmatpush1.msra.mxu0 0.0
    %1545 = vmatprep.subr.mxu0 0.0
    %1546 = vmatpush1.msra.mxu0 0.0
    %1547 = vmatprep.subr.mxu0 0.0
    %1548 = vmatpush1.msra.mxu0 0.0
    %1549 = vmatprep.subr.mxu0 0.0
    %1550 = vmatpush1.msra.mxu0 0.0
    %1551 = vmatprep.subr.mxu0 0.0
    %1552 = vmatpush1.msra.mxu0 0.0
    %1553 = vmatprep.subr.mxu0 0.0
    %1554 = vmatpush1.msra.mxu0 0.0
    %1555 = vmatprep.subr.mxu0 0.0
    %1556 = vmatpush1.msra.mxu0 0.0
    %1557 = vmatprep.subr.mxu0 0.0
    %1558 = vmatpush1.msra.mxu0 0.0
    %1559 = vmatprep.subr.mxu0 0.0
    %1560 = vmatpush1.msra.mxu0 0.0
    %1561 = vmatprep.subr.mxu0 0.0
    %1562 = vmatpush1.msra.mxu0 0.0
    %1563 = vmatprep.subr.mxu0 0.0
    %1564 = vmatpush1.msra.mxu0 0.0
    %1565 = vmatprep.subr.mxu0 0.0
    %1566 = vmatpush1.msra.mxu0 0.0
    %1567 = vmatprep.subr.mxu0 0.0
    %1568 = vmatpush1.msra.mxu0 0.0
    %1569 = vmatprep.subr.mxu0 0.0
    %1570 = vmatpush1.msra.mxu0 0.0
    %1571 = vmatprep.subr.mxu0 0.0
    %1572 = vmatpush1.msra.mxu0 0.0
    %1573 = vmatprep.subr.mxu0 0.0
    %1574 = vmatpush1.msra.mxu0 0.0
    %1575 = vmatprep.subr.mxu0 0.0
    %1576 = vmatpush1.msra.mxu0 0.0
    %1577 = vmatprep.subr.mxu0 0.0
    %1578 = vmatpush1.msra.mxu0 0.0
    %1579 = vmatprep.subr.mxu0 0.0
    %1580 = vmatpush1.msra.mxu0 0.0
    %1581 = vmatprep.subr.mxu0 0.0
    %1582 = vmatpush1.msra.mxu0 0.0
    %1583 = vmatprep.subr.mxu0 0.0
    %1584 = vmatpush1.msra.mxu0 0.0
    %1585 = vmatprep.mubr.f32.mxu0 0.0
    %1586 = vmatmul.mubr.f32.gmra.mrb[0].mxu0 %v1519
    %v1587 = vpop.f32.mrb[0].mxu0
    %v1588 = vadd.f32 %v1515, %v1587
    %v1589 = vpop.f32.mrb[0].mxu0
    %1590 = vdwg.mxu0
    %v1591 = vadd.f32 %v1588, %v521
    %v1592 = vxor.u32 %v1591, 2147483648
    %v1593 = vmul.f32 %v1592, 1.442695
    %v1594 = vpow.pop %v1593
    %v1595 = vadd.f32 %v1594, 1.0
    %v1596 = vrcp.pop %v1595
    %v1597 = vmul.f32 1.0, %v1596
    %v1598 = vtanh.pop %v1591
    %v1599 = vmul.f32 %v1597, %v1253
    %1601 = vrot.lane.b32.xlu0 %v1598, 64
    %v1602 = vpop.permute.xlu0 %1601
    %v1604 = vmul.f32 %v1597, %v1602
    %1606 = vrot.lane.b32.xlu0 %v1604, 32
    %v1607 = vpop.permute.xlu0 %1606
    %v1609 = vadd.f32 %v1599, %v1607
    %v1610 = vtanh.pop %v1609
    %1612 = vrot.lane.b32.xlu0 %v1610, 64
    %v1613 = vpop.permute.xlu0 %1612
    %v1615 = vmul.f32 %v1597, %v1613
    %1617 = vrot.lane.b32.xlu0 %v1443, 32
    %v1618 = vpop.permute.xlu0 %1617
    %s1620 = scalar_lea.vmem [#allocation2], 6
    %1621 = vst.msk [vmem:[%s1620] sm:$0x3] %vm552, %v1618
    %1623 = vrot.lane.b32.xlu0 %v1615, 32
    %v1624 = vpop.permute.xlu0 %1623
    %s1626 = scalar_lea.vmem [#allocation3], 8
    %1627 = vst.msk [vmem:[%s1626] sm:$0x3] %vm552, %v1624
    %v1628 = vld [vmem:[%s1444] sm:$0x3]
    %v1629 = vsel %vm186, %v1618, 0
    %1631 = vmatprep.subr.mxu0 0.0
    %1632 = vmatpush1.msra.mxu0 %v174
    %1633 = vmatprep.subr.mxu0 0.0
    %1634 = vmatpush1.msra.mxu0 %v175
    %1635 = vmatprep.subr.mxu0 0.0
    %1636 = vmatpush1.msra.mxu0 %v176
    %1637 = vmatprep.subr.mxu0 0.0
    %1638 = vmatpush1.msra.mxu0 %v177
    %1639 = vmatprep.subr.mxu0 0.0
    %1640 = vmatpush1.msra.mxu0 0.0
    %1641 = vmatprep.subr.mxu0 0.0
    %1642 = vmatpush1.msra.mxu0 0.0
    %1643 = vmatprep.subr.mxu0 0.0
    %1644 = vmatpush1.msra.mxu0 0.0
    %1645 = vmatprep.subr.mxu0 0.0
    %1646 = vmatpush1.msra.mxu0 0.0
    %1647 = vmatprep.subr.mxu0 0.0
    %1648 = vmatpush1.msra.mxu0 0.0
    %1649 = vmatprep.subr.mxu0 0.0
    %1650 = vmatpush1.msra.mxu0 0.0
    %1651 = vmatprep.subr.mxu0 0.0
    %1652 = vmatpush1.msra.mxu0 0.0
    %1653 = vmatprep.subr.mxu0 0.0
    %1654 = vmatpush1.msra.mxu0 0.0
    %1655 = vmatprep.subr.mxu0 0.0
    %1656 = vmatpush1.msra.mxu0 0.0
    %1657 = vmatprep.subr.mxu0 0.0
    %1658 = vmatpush1.msra.mxu0 0.0
    %1659 = vmatprep.subr.mxu0 0.0
    %1660 = vmatpush1.msra.mxu0 0.0
    %1661 = vmatprep.subr.mxu0 0.0
    %1662 = vmatpush1.msra.mxu0 0.0
    %1663 = vmatprep.subr.mxu0 0.0
    %1664 = vmatpush1.msra.mxu0 0.0
    %1665 = vmatprep.subr.mxu0 0.0
    %1666 = vmatpush1.msra.mxu0 0.0
    %1667 = vmatprep.subr.mxu0 0.0
    %1668 = vmatpush1.msra.mxu0 0.0
    %1669 = vmatprep.subr.mxu0 0.0
    %1670 = vmatpush1.msra.mxu0 0.0
    %1671 = vmatprep.subr.mxu0 0.0
    %1672 = vmatpush1.msra.mxu0 0.0
    %1673 = vmatprep.subr.mxu0 0.0
    %1674 = vmatpush1.msra.mxu0 0.0
    %1675 = vmatprep.subr.mxu0 0.0
    %1676 = vmatpush1.msra.mxu0 0.0
    %1677 = vmatprep.subr.mxu0 0.0
    %1678 = vmatpush1.msra.mxu0 0.0
    %1679 = vmatprep.subr.mxu0 0.0
    %1680 = vmatpush1.msra.mxu0 0.0
    %1681 = vmatprep.subr.mxu0 0.0
    %1682 = vmatpush1.msra.mxu0 0.0
    %1683 = vmatprep.subr.mxu0 0.0
    %1684 = vmatpush1.msra.mxu0 0.0
    %1685 = vmatprep.subr.mxu0 0.0
    %1686 = vmatpush1.msra.mxu0 0.0
    %1687 = vmatprep.subr.mxu0 0.0
    %1688 = vmatpush1.msra.mxu0 0.0
    %1689 = vmatprep.subr.mxu0 0.0
    %1690 = vmatpush1.msra.mxu0 0.0
    %1691 = vmatprep.subr.mxu0 0.0
    %1692 = vmatpush1.msra.mxu0 0.0
    %1693 = vmatprep.subr.mxu0 0.0
    %1694 = vmatpush1.msra.mxu0 0.0
    %1695 = vmatprep.mubr.f32.mxu0 0.0
    %1696 = vmatmul.mubr.f32.gmra.mrb[0].mxu0 %v1629
    %v1697 = vpop.f32.mrb[0].mxu0
    %v1698 = vadd.f32 0.0, %v1697
    %v1699 = vpop.f32.mrb[0].mxu0
    %1700 = vdwg.mxu0
    %v1702 = vsel %vm260, %v1628, 0
    %1704 = vmatprep.subr.mxu0 0.0
    %1705 = vmatpush1.msra.mxu0 %v266
    %1706 = vmatprep.subr.mxu0 0.0
    %1707 = vmatpush1.msra.mxu0 0.0
    %1708 = vmatprep.subr.mxu0 0.0
    %1709 = vmatpush1.msra.mxu0 0.0
    %1710 = vmatprep.subr.mxu0 0.0
    %1711 = vmatpush1.msra.mxu0 0.0
    %1712 = vmatprep.subr.mxu0 0.0
    %1713 = vmatpush1.msra.mxu0 0.0
    %1714 = vmatprep.subr.mxu0 0.0
    %1715 = vmatpush1.msra.mxu0 0.0
    %1716 = vmatprep.subr.mxu0 0.0
    %1717 = vmatpush1.msra.mxu0 0.0
    %1718 = vmatprep.subr.mxu0 0.0
    %1719 = vmatpush1.msra.mxu0 0.0
    %1720 = vmatprep.subr.mxu0 0.0
    %1721 = vmatpush1.msra.mxu0 0.0
    %1722 = vmatprep.subr.mxu0 0.0
    %1723 = vmatpush1.msra.mxu0 0.0
    %1724 = vmatprep.subr.mxu0 0.0
    %1725 = vmatpush1.msra.mxu0 0.0
    %1726 = vmatprep.subr.mxu0 0.0
    %1727 = vmatpush1.msra.mxu0 0.0
    %1728 = vmatprep.subr.mxu0 0.0
    %1729 = vmatpush1.msra.mxu0 0.0
    %1730 = vmatprep.subr.mxu0 0.0
    %1731 = vmatpush1.msra.mxu0 0.0
    %1732 = vmatprep.subr.mxu0 0.0
    %1733 = vmatpush1.msra.mxu0 0.0
    %1734 = vmatprep.subr.mxu0 0.0
    %1735 = vmatpush1.msra.mxu0 0.0
    %1736 = vmatprep.subr.mxu0 0.0
    %1737 = vmatpush1.msra.mxu0 0.0
    %1738 = vmatprep.subr.mxu0 0.0
    %1739 = vmatpush1.msra.mxu0 0.0
    %1740 = vmatprep.subr.mxu0 0.0
    %1741 = vmatpush1.msra.mxu0 0.0
    %1742 = vmatprep.subr.mxu0 0.0
    %1743 = vmatpush1.msra.mxu0 0.0
    %1744 = vmatprep.subr.mxu0 0.0
    %1745 = vmatpush1.msra.mxu0 0.0
    %1746 = vmatprep.subr.mxu0 0.0
    %1747 = vmatpush1.msra.mxu0 0.0
    %1748 = vmatprep.subr.mxu0 0.0
    %1749 = vmatpush1.msra.mxu0 0.0
    %1750 = vmatprep.subr.mxu0 0.0
    %1751 = vmatpush1.msra.mxu0 0.0
    %1752 = vmatprep.subr.mxu0 0.0
    %1753 = vmatpush1.msra.mxu0 0.0
    %1754 = vmatprep.subr.mxu0 0.0
    %1755 = vmatpush1.msra.mxu0 0.0
    %1756 = vmatprep.subr.mxu0 0.0
    %1757 = vmatpush1.msra.mxu0 0.0
    %1758 = vmatprep.subr.mxu0 0.0
    %1759 = vmatpush1.msra.mxu0 0.0
    %1760 = vmatprep.subr.mxu0 0.0
    %1761 = vmatpush1.msra.mxu0 0.0
    %1762 = vmatprep.subr.mxu0 0.0
    %1763 = vmatpush1.msra.mxu0 0.0
    %1764 = vmatprep.subr.mxu0 0.0
    %1765 = vmatpush1.msra.mxu0 0.0
    %1766 = vmatprep.subr.mxu0 0.0
    %1767 = vmatpush1.msra.mxu0 0.0
    %1768 = vmatprep.mubr.f32.mxu0 0.0
    %1769 = vmatmul.mubr.f32.gmra.mrb[0].mxu0 %v1702
    %v1770 = vpop.f32.mrb[0].mxu0
    %v1771 = vadd.f32 %v1698, %v1770
    %v1772 = vpop.f32.mrb[0].mxu0
    %1773 = vdwg.mxu0
    %v1774 = vadd.f32 %v1771, %v342
    %v1775 = vxor.u32 %v1774, 2147483648
    %v1776 = vmul.f32 %v1775, 1.442695
    %v1777 = vpow.pop %v1776
    %v1778 = vadd.f32 %v1777, 1.0
    %v1779 = vrcp.pop %v1778
    %v1780 = vmul.f32 1.0, %v1779
    %v1781 = vtanh.pop %v1774
    %v1782 = vmul.f32 %v1780, %v1437
    %1784 = vrot.lane.b32.xlu0 %v1781, 64
    %v1785 = vpop.permute.xlu0 %1784
    %v1787 = vmul.f32 %v1780, %v1785
    %1789 = vrot.lane.b32.xlu0 %v1787, 32
    %v1790 = vpop.permute.xlu0 %1789
    %v1792 = vadd.f32 %v1782, %v1790
    %v1793 = vtanh.pop %v1792
    %1795 = vrot.lane.b32.xlu0 %v1793, 64
    %v1796 = vpop.permute.xlu0 %1795
    %v1798 = vmul.f32 %v1780, %v1796
    %v1799 = vld [vmem:[%s1272] sm:$0x3]
    %v1800 = vsel %vm186, %v1624, 0
    %1802 = vmatprep.subr.mxu0 0.0
    %1803 = vmatpush1.msra.mxu0 %v180
    %1804 = vmatprep.subr.mxu0 0.0
    %1805 = vmatpush1.msra.mxu0 %v181
    %1806 = vmatprep.subr.mxu0 0.0
    %1807 = vmatpush1.msra.mxu0 %v182
    %1808 = vmatprep.subr.mxu0 0.0
    %1809 = vmatpush1.msra.mxu0 %v183
    %1810 = vmatprep.subr.mxu0 0.0
    %1811 = vmatpush1.msra.mxu0 0.0
    %1812 = vmatprep.subr.mxu0 0.0
    %1813 = vmatpush1.msra.mxu0 0.0
    %1814 = vmatprep.subr.mxu0 0.0
    %1815 = vmatpush1.msra.mxu0 0.0
    %1816 = vmatprep.subr.mxu0 0.0
    %1817 = vmatpush1.msra.mxu0 0.0
    %1818 = vmatprep.subr.mxu0 0.0
    %1819 = vmatpush1.msra.mxu0 0.0
    %1820 = vmatprep.subr.mxu0 0.0
    %1821 = vmatpush1.msra.mxu0 0.0
    %1822 = vmatprep.subr.mxu0 0.0
    %1823 = vmatpush1.msra.mxu0 0.0
    %1824 = vmatprep.subr.mxu0 0.0
    %1825 = vmatpush1.msra.mxu0 0.0
    %1826 = vmatprep.subr.mxu0 0.0
    %1827 = vmatpush1.msra.mxu0 0.0
    %1828 = vmatprep.subr.mxu0 0.0
    %1829 = vmatpush1.msra.mxu0 0.0
    %1830 = vmatprep.subr.mxu0 0.0
    %1831 = vmatpush1.msra.mxu0 0.0
    %1832 = vmatprep.subr.mxu0 0.0
    %1833 = vmatpush1.msra.mxu0 0.0
    %1834 = vmatprep.subr.mxu0 0.0
    %1835 = vmatpush1.msra.mxu0 0.0
    %1836 = vmatprep.subr.mxu0 0.0
    %1837 = vmatpush1.msra.mxu0 0.0
    %1838 = vmatprep.subr.mxu0 0.0
    %1839 = vmatpush1.msra.mxu0 0.0
    %1840 = vmatprep.subr.mxu0 0.0
    %1841 = vmatpush1.msra.mxu0 0.0
    %1842 = vmatprep.subr.mxu0 0.0
    %1843 = vmatpush1.msra.mxu0 0.0
    %1844 = vmatprep.subr.mxu0 0.0
    %1845 = vmatpush1.msra.mxu0 0.0
    %1846 = vmatprep.subr.mxu0 0.0
    %1847 = vmatpush1.msra.mxu0 0.0
    %1848 = vmatprep.subr.mxu0 0.0
    %1849 = vmatpush1.msra.mxu0 0.0
    %1850 = vmatprep.subr.mxu0 0.0
    %1851 = vmatpush1.msra.mxu0 0.0
    %1852 = vmatprep.subr.mxu0 0.0
    %1853 = vmatpush1.msra.mxu0 0.0
    %1854 = vmatprep.subr.mxu0 0.0
    %1855 = vmatpush1.msra.mxu0 0.0
    %1856 = vmatprep.subr.mxu0 0.0
    %1857 = vmatpush1.msra.mxu0 0.0
    %1858 = vmatprep.subr.mxu0 0.0
    %1859 = vmatpush1.msra.mxu0 0.0
    %1860 = vmatprep.subr.mxu0 0.0
    %1861 = vmatpush1.msra.mxu0 0.0
    %1862 = vmatprep.subr.mxu0 0.0
    %1863 = vmatpush1.msra.mxu0 0.0
    %1864 = vmatprep.subr.mxu0 0.0
    %1865 = vmatpush1.msra.mxu0 0.0
    %1866 = vmatprep.mubr.f32.mxu0 0.0
    %1867 = vmatmul.mubr.f32.gmra.mrb[0].mxu0 %v1800
    %v1868 = vpop.f32.mrb[0].mxu0
    %v1869 = vadd.f32 0.0, %v1868
    %v1870 = vpop.f32.mrb[0].mxu0
    %1871 = vdwg.mxu0
    %v1873 = vsel %vm260, %v1799, 0
    %1875 = vmatprep.subr.mxu0 0.0
    %1876 = vmatpush1.msra.mxu0 %v445
    %1877 = vmatprep.subr.mxu0 0.0
    %1878 = vmatpush1.msra.mxu0 0.0
    %1879 = vmatprep.subr.mxu0 0.0
    %1880 = vmatpush1.msra.mxu0 0.0
    %1881 = vmatprep.subr.mxu0 0.0
    %1882 = vmatpush1.msra.mxu0 0.0
    %1883 = vmatprep.subr.mxu0 0.0
    %1884 = vmatpush1.msra.mxu0 0.0
    %1885 = vmatprep.subr.mxu0 0.0
    %1886 = vmatpush1.msra.mxu0 0.0
    %1887 = vmatprep.subr.mxu0 0.0
    %1888 = vmatpush1.msra.mxu0 0.0
    %1889 = vmatprep.subr.mxu0 0.0
    %1890 = vmatpush1.msra.mxu0 0.0
    %1891 = vmatprep.subr.mxu0 0.0
    %1892 = vmatpush1.msra.mxu0 0.0
    %1893 = vmatprep.subr.mxu0 0.0
    %1894 = vmatpush1.msra.mxu0 0.0
    %1895 = vmatprep.subr.mxu0 0.0
    %1896 = vmatpush1.msra.mxu0 0.0
    %1897 = vmatprep.subr.mxu0 0.0
    %1898 = vmatpush1.msra.mxu0 0.0
    %1899 = vmatprep.subr.mxu0 0.0
    %1900 = vmatpush1.msra.mxu0 0.0
    %1901 = vmatprep.subr.mxu0 0.0
    %1902 = vmatpush1.msra.mxu0 0.0
    %1903 = vmatprep.subr.mxu0 0.0
    %1904 = vmatpush1.msra.mxu0 0.0
    %1905 = vmatprep.subr.mxu0 0.0
    %1906 = vmatpush1.msra.mxu0 0.0
    %1907 = vmatprep.subr.mxu0 0.0
    %1908 = vmatpush1.msra.mxu0 0.0
    %1909 = vmatprep.subr.mxu0 0.0
    %1910 = vmatpush1.msra.mxu0 0.0
    %1911 = vmatprep.subr.mxu0 0.0
    %1912 = vmatpush1.msra.mxu0 0.0
    %1913 = vmatprep.subr.mxu0 0.0
    %1914 = vmatpush1.msra.mxu0 0.0
    %1915 = vmatprep.subr.mxu0 0.0
    %1916 = vmatpush1.msra.mxu0 0.0
    %1917 = vmatprep.subr.mxu0 0.0
    %1918 = vmatpush1.msra.mxu0 0.0
    %1919 = vmatprep.subr.mxu0 0.0
    %1920 = vmatpush1.msra.mxu0 0.0
    %1921 = vmatprep.subr.mxu0 0.0
    %1922 = vmatpush1.msra.mxu0 0.0
    %1923 = vmatprep.subr.mxu0 0.0
    %1924 = vmatpush1.msra.mxu0 0.0
    %1925 = vmatprep.subr.mxu0 0.0
    %1926 = vmatpush1.msra.mxu0 0.0
    %1927 = vmatprep.subr.mxu0 0.0
    %1928 = vmatpush1.msra.mxu0 0.0
    %1929 = vmatprep.subr.mxu0 0.0
    %1930 = vmatpush1.msra.mxu0 0.0
    %1931 = vmatprep.subr.mxu0 0.0
    %1932 = vmatpush1.msra.mxu0 0.0
    %1933 = vmatprep.subr.mxu0 0.0
    %1934 = vmatpush1.msra.mxu0 0.0
    %1935 = vmatprep.subr.mxu0 0.0
    %1936 = vmatpush1.msra.mxu0 0.0
    %1937 = vmatprep.subr.mxu0 0.0
    %1938 = vmatpush1.msra.mxu0 0.0
    %1939 = vmatprep.mubr.f32.mxu0 0.0
    %1940 = vmatmul.mubr.f32.gmra.mrb[0].mxu0 %v1873
    %v1941 = vpop.f32.mrb[0].mxu0
    %v1942 = vadd.f32 %v1869, %v1941
    %v1943 = vpop.f32.mrb[0].mxu0
    %1944 = vdwg.mxu0
    %v1945 = vadd.f32 %v1942, %v521
    %v1946 = vxor.u32 %v1945, 2147483648
    %v1947 = vmul.f32 %v1946, 1.442695
    %v1948 = vpow.pop %v1947
    %v1949 = vadd.f32 %v1948, 1.0
    %v1950 = vrcp.pop %v1949
    %v1951 = vmul.f32 1.0, %v1950
    %v1952 = vtanh.pop %v1945
    %v1953 = vmul.f32 %v1951, %v1609
    %1955 = vrot.lane.b32.xlu0 %v1952, 64
    %v1956 = vpop.permute.xlu0 %1955
    %v1958 = vmul.f32 %v1951, %v1956
    %1960 = vrot.lane.b32.xlu0 %v1958, 32
    %v1961 = vpop.permute.xlu0 %1960
    %v1963 = vadd.f32 %v1953, %v1961
    %v1964 = vtanh.pop %v1963
    %1966 = vrot.lane.b32.xlu0 %v1964, 64
    %v1967 = vpop.permute.xlu0 %1966
    %v1969 = vmul.f32 %v1951, %v1967
    %1971 = vrot.lane.b32.xlu0 %v1798, 32
    %v1972 = vpop.permute.xlu0 %1971
    %s1974 = scalar_lea.vmem [#allocation2], 8
    %1975 = vst.msk [vmem:[%s1974] sm:$0x3] %vm552, %v1972
    %1977 = vrot.lane.b32.xlu0 %v1969, 32
    %v1978 = vpop.permute.xlu0 %1977
    %s1980 = scalar_lea.vmem [#allocation3], 6
    %1981 = vst.msk [vmem:[%s1980] sm:$0x3] %vm552, %v1978
    %v1982 = vld [vmem:[%s1088] sm:$0x3]
    %v1983 = vsel %vm186, %v1972, 0
    %1985 = vmatprep.subr.mxu0 0.0
    %1986 = vmatpush1.msra.mxu0 %v174
    %1987 = vmatprep.subr.mxu0 0.0
    %1988 = vmatpush1.msra.mxu0 %v175
    %1989 = vmatprep.subr.mxu0 0.0
    %1990 = vmatpush1.msra.mxu0 %v176
    %1991 = vmatprep.subr.mxu0 0.0
    %1992 = vmatpush1.msra.mxu0 %v177
    %1993 = vmatprep.subr.mxu0 0.0
    %1994 = vmatpush1.msra.mxu0 0.0
    %1995 = vmatprep.subr.mxu0 0.0
    %1996 = vmatpush1.msra.mxu0 0.0
    %1997 = vmatprep.subr.mxu0 0.0
    %1998 = vmatpush1.msra.mxu0 0.0
    %1999 = vmatprep.subr.mxu0 0.0
    %2000 = vmatpush1.msra.mxu0 0.0
    %2001 = vmatprep.subr.mxu0 0.0
    %2002 = vmatpush1.msra.mxu0 0.0
    %2003 = vmatprep.subr.mxu0 0.0
    %2004 = vmatpush1.msra.mxu0 0.0
    %2005 = vmatprep.subr.mxu0 0.0
    %2006 = vmatpush1.msra.mxu0 0.0
    %2007 = vmatprep.subr.mxu0 0.0
    %2008 = vmatpush1.msra.mxu0 0.0
    %2009 = vmatprep.subr.mxu0 0.0
    %2010 = vmatpush1.msra.mxu0 0.0
    %2011 = vmatprep.subr.mxu0 0.0
    %2012 = vmatpush1.msra.mxu0 0.0
    %2013 = vmatprep.subr.mxu0 0.0
    %2014 = vmatpush1.msra.mxu0 0.0
    %2015 = vmatprep.subr.mxu0 0.0
    %2016 = vmatpush1.msra.mxu0 0.0
    %2017 = vmatprep.subr.mxu0 0.0
    %2018 = vmatpush1.msra.mxu0 0.0
    %2019 = vmatprep.subr.mxu0 0.0
    %2020 = vmatpush1.msra.mxu0 0.0
    %2021 = vmatprep.subr.mxu0 0.0
    %2022 = vmatpush1.msra.mxu0 0.0
    %2023 = vmatprep.subr.mxu0 0.0
    %2024 = vmatpush1.msra.mxu0 0.0
    %2025 = vmatprep.subr.mxu0 0.0
    %2026 = vmatpush1.msra.mxu0 0.0
    %2027 = vmatprep.subr.mxu0 0.0
    %2028 = vmatpush1.msra.mxu0 0.0
    %2029 = vmatprep.subr.mxu0 0.0
    %2030 = vmatpush1.msra.mxu0 0.0
    %2031 = vmatprep.subr.mxu0 0.0
    %2032 = vmatpush1.msra.mxu0 0.0
    %2033 = vmatprep.subr.mxu0 0.0
    %2034 = vmatpush1.msra.mxu0 0.0
    %2035 = vmatprep.subr.mxu0 0.0
    %2036 = vmatpush1.msra.mxu0 0.0
    %2037 = vmatprep.subr.mxu0 0.0
    %2038 = vmatpush1.msra.mxu0 0.0
    %2039 = vmatprep.subr.mxu0 0.0
    %2040 = vmatpush1.msra.mxu0 0.0
    %2041 = vmatprep.subr.mxu0 0.0
    %2042 = vmatpush1.msra.mxu0 0.0
    %2043 = vmatprep.subr.mxu0 0.0
    %2044 = vmatpush1.msra.mxu0 0.0
    %2045 = vmatprep.subr.mxu0 0.0
    %2046 = vmatpush1.msra.mxu0 0.0
    %2047 = vmatprep.subr.mxu0 0.0
    %2048 = vmatpush1.msra.mxu0 0.0
    %2049 = vmatprep.mubr.f32.mxu0 0.0
    %2050 = vmatmul.mubr.f32.gmra.mrb[0].mxu0 %v1983
    %v2051 = vpop.f32.mrb[0].mxu0
    %v2052 = vadd.f32 0.0, %v2051
    %v2053 = vpop.f32.mrb[0].mxu0
    %2054 = vdwg.mxu0
    %v2056 = vsel %vm260, %v1982, 0
    %2058 = vmatprep.subr.mxu0 0.0
    %2059 = vmatpush1.msra.mxu0 %v266
    %2060 = vmatprep.subr.mxu0 0.0
    %2061 = vmatpush1.msra.mxu0 0.0
    %2062 = vmatprep.subr.mxu0 0.0
    %2063 = vmatpush1.msra.mxu0 0.0
    %2064 = vmatprep.subr.mxu0 0.0
    %2065 = vmatpush1.msra.mxu0 0.0
    %2066 = vmatprep.subr.mxu0 0.0
    %2067 = vmatpush1.msra.mxu0 0.0
    %2068 = vmatprep.subr.mxu0 0.0
    %2069 = vmatpush1.msra.mxu0 0.0
    %2070 = vmatprep.subr.mxu0 0.0
    %2071 = vmatpush1.msra.mxu0 0.0
    %2072 = vmatprep.subr.mxu0 0.0
    %2073 = vmatpush1.msra.mxu0 0.0
    %2074 = vmatprep.subr.mxu0 0.0
    %2075 = vmatpush1.msra.mxu0 0.0
    %2076 = vmatprep.subr.mxu0 0.0
    %2077 = vmatpush1.msra.mxu0 0.0
    %2078 = vmatprep.subr.mxu0 0.0
    %2079 = vmatpush1.msra.mxu0 0.0
    %2080 = vmatprep.subr.mxu0 0.0
    %2081 = vmatpush1.msra.mxu0 0.0
    %2082 = vmatprep.subr.mxu0 0.0
    %2083 = vmatpush1.msra.mxu0 0.0
    %2084 = vmatprep.subr.mxu0 0.0
    %2085 = vmatpush1.msra.mxu0 0.0
    %2086 = vmatprep.subr.mxu0 0.0
    %2087 = vmatpush1.msra.mxu0 0.0
    %2088 = vmatprep.subr.mxu0 0.0
    %2089 = vmatpush1.msra.mxu0 0.0
    %2090 = vmatprep.subr.mxu0 0.0
    %2091 = vmatpush1.msra.mxu0 0.0
    %2092 = vmatprep.subr.mxu0 0.0
    %2093 = vmatpush1.msra.mxu0 0.0
    %2094 = vmatprep.subr.mxu0 0.0
    %2095 = vmatpush1.msra.mxu0 0.0
    %2096 = vmatprep.subr.mxu0 0.0
    %2097 = vmatpush1.msra.mxu0 0.0
    %2098 = vmatprep.subr.mxu0 0.0
    %2099 = vmatpush1.msra.mxu0 0.0
    %2100 = vmatprep.subr.mxu0 0.0
    %2101 = vmatpush1.msra.mxu0 0.0
    %2102 = vmatprep.subr.mxu0 0.0
    %2103 = vmatpush1.msra.mxu0 0.0
    %2104 = vmatprep.subr.mxu0 0.0
    %2105 = vmatpush1.msra.mxu0 0.0
    %2106 = vmatprep.subr.mxu0 0.0
    %2107 = vmatpush1.msra.mxu0 0.0
    %2108 = vmatprep.subr.mxu0 0.0
    %2109 = vmatpush1.msra.mxu0 0.0
    %2110 = vmatprep.subr.mxu0 0.0
    %2111 = vmatpush1.msra.mxu0 0.0
    %2112 = vmatprep.subr.mxu0 0.0
    %2113 = vmatpush1.msra.mxu0 0.0
    %2114 = vmatprep.subr.mxu0 0.0
    %2115 = vmatpush1.msra.mxu0 0.0
    %2116 = vmatprep.subr.mxu0 0.0
    %2117 = vmatpush1.msra.mxu0 0.0
    %2118 = vmatprep.subr.mxu0 0.0
    %2119 = vmatpush1.msra.mxu0 0.0
    %2120 = vmatprep.subr.mxu0 0.0
    %2121 = vmatpush1.msra.mxu0 0.0
    %2122 = vmatprep.mubr.f32.mxu0 0.0
    %2123 = vmatmul.mubr.f32.gmra.mrb[0].mxu0 %v2056
    %v2124 = vpop.f32.mrb[0].mxu0
    %v2125 = vadd.f32 %v2052, %v2124
    %v2126 = vpop.f32.mrb[0].mxu0
    %2127 = vdwg.mxu0
    %v2128 = vadd.f32 %v2125, %v342
    %v2129 = vxor.u32 %v2128, 2147483648
    %v2130 = vmul.f32 %v2129, 1.442695
    %v2131 = vpow.pop %v2130
    %v2132 = vadd.f32 %v2131, 1.0
    %v2133 = vrcp.pop %v2132
    %v2134 = vmul.f32 1.0, %v2133
    %v2135 = vtanh.pop %v2128
    %v2136 = vmul.f32 %v2134, %v1792
    %2138 = vrot.lane.b32.xlu0 %v2135, 64
    %v2139 = vpop.permute.xlu0 %2138
    %v2141 = vmul.f32 %v2134, %v2139
    %2143 = vrot.lane.b32.xlu0 %v2141, 32
    %v2144 = vpop.permute.xlu0 %2143
    %v2146 = vadd.f32 %v2136, %v2144
    %v2147 = vtanh.pop %v2146
    %2149 = vrot.lane.b32.xlu0 %v2147, 64
    %v2150 = vpop.permute.xlu0 %2149
    %v2152 = vmul.f32 %v2134, %v2150
    %v2153 = vld [vmem:[%s916] sm:$0x3]
    %v2154 = vsel %vm186, %v1978, 0
    %2156 = vmatprep.subr.mxu0 0.0
    %2157 = vmatpush1.msra.mxu0 %v180
    %2158 = vmatprep.subr.mxu0 0.0
    %2159 = vmatpush1.msra.mxu0 %v181
    %2160 = vmatprep.subr.mxu0 0.0
    %2161 = vmatpush1.msra.mxu0 %v182
    %2162 = vmatprep.subr.mxu0 0.0
    %2163 = vmatpush1.msra.mxu0 %v183
    %2164 = vmatprep.subr.mxu0 0.0
    %2165 = vmatpush1.msra.mxu0 0.0
    %2166 = vmatprep.subr.mxu0 0.0
    %2167 = vmatpush1.msra.mxu0 0.0
    %2168 = vmatprep.subr.mxu0 0.0
    %2169 = vmatpush1.msra.mxu0 0.0
    %2170 = vmatprep.subr.mxu0 0.0
    %2171 = vmatpush1.msra.mxu0 0.0
    %2172 = vmatprep.subr.mxu0 0.0
    %2173 = vmatpush1.msra.mxu0 0.0
    %2174 = vmatprep.subr.mxu0 0.0
    %2175 = vmatpush1.msra.mxu0 0.0
    %2176 = vmatprep.subr.mxu0 0.0
    %2177 = vmatpush1.msra.mxu0 0.0
    %2178 = vmatprep.subr.mxu0 0.0
    %2179 = vmatpush1.msra.mxu0 0.0
    %2180 = vmatprep.subr.mxu0 0.0
    %2181 = vmatpush1.msra.mxu0 0.0
    %2182 = vmatprep.subr.mxu0 0.0
    %2183 = vmatpush1.msra.mxu0 0.0
    %2184 = vmatprep.subr.mxu0 0.0
    %2185 = vmatpush1.msra.mxu0 0.0
    %2186 = vmatprep.subr.mxu0 0.0
    %2187 = vmatpush1.msra.mxu0 0.0
    %2188 = vmatprep.subr.mxu0 0.0
    %2189 = vmatpush1.msra.mxu0 0.0
    %2190 = vmatprep.subr.mxu0 0.0
    %2191 = vmatpush1.msra.mxu0 0.0
    %2192 = vmatprep.subr.mxu0 0.0
    %2193 = vmatpush1.msra.mxu0 0.0
    %2194 = vmatprep.subr.mxu0 0.0
    %2195 = vmatpush1.msra.mxu0 0.0
    %2196 = vmatprep.subr.mxu0 0.0
    %2197 = vmatpush1.msra.mxu0 0.0
    %2198 = vmatprep.subr.mxu0 0.0
    %2199 = vmatpush1.msra.mxu0 0.0
    %2200 = vmatprep.subr.mxu0 0.0
    %2201 = vmatpush1.msra.mxu0 0.0
    %2202 = vmatprep.subr.mxu0 0.0
    %2203 = vmatpush1.msra.mxu0 0.0
    %2204 = vmatprep.subr.mxu0 0.0
    %2205 = vmatpush1.msra.mxu0 0.0
    %2206 = vmatprep.subr.mxu0 0.0
    %2207 = vmatpush1.msra.mxu0 0.0
    %2208 = vmatprep.subr.mxu0 0.0
    %2209 = vmatpush1.msra.mxu0 0.0
    %2210 = vmatprep.subr.mxu0 0.0
    %2211 = vmatpush1.msra.mxu0 0.0
    %2212 = vmatprep.subr.mxu0 0.0
    %2213 = vmatpush1.msra.mxu0 0.0
    %2214 = vmatprep.subr.mxu0 0.0
    %2215 = vmatpush1.msra.mxu0 0.0
    %2216 = vmatprep.subr.mxu0 0.0
    %2217 = vmatpush1.msra.mxu0 0.0
    %2218 = vmatprep.subr.mxu0 0.0
    %2219 = vmatpush1.msra.mxu0 0.0
    %2220 = vmatprep.mubr.f32.mxu0 0.0
    %2221 = vmatmul.mubr.f32.gmra.mrb[0].mxu0 %v2154
    %v2222 = vpop.f32.mrb[0].mxu0
    %v2223 = vadd.f32 0.0, %v2222
    %v2224 = vpop.f32.mrb[0].mxu0
    %2225 = vdwg.mxu0
    %v2227 = vsel %vm260, %v2153, 0
    %2229 = vmatprep.subr.mxu0 0.0
    %2230 = vmatpush1.msra.mxu0 %v445
    %2231 = vmatprep.subr.mxu0 0.0
    %2232 = vmatpush1.msra.mxu0 0.0
    %2233 = vmatprep.subr.mxu0 0.0
    %2234 = vmatpush1.msra.mxu0 0.0
    %2235 = vmatprep.subr.mxu0 0.0
    %2236 = vmatpush1.msra.mxu0 0.0
    %2237 = vmatprep.subr.mxu0 0.0
    %2238 = vmatpush1.msra.mxu0 0.0
    %2239 = vmatprep.subr.mxu0 0.0
    %2240 = vmatpush1.msra.mxu0 0.0
    %2241 = vmatprep.subr.mxu0 0.0
    %2242 = vmatpush1.msra.mxu0 0.0
    %2243 = vmatprep.subr.mxu0 0.0
    %2244 = vmatpush1.msra.mxu0 0.0
    %2245 = vmatprep.subr.mxu0 0.0
    %2246 = vmatpush1.msra.mxu0 0.0
    %2247 = vmatprep.subr.mxu0 0.0
    %2248 = vmatpush1.msra.mxu0 0.0
    %2249 = vmatprep.subr.mxu0 0.0
    %2250 = vmatpush1.msra.mxu0 0.0
    %2251 = vmatprep.subr.mxu0 0.0
    %2252 = vmatpush1.msra.mxu0 0.0
    %2253 = vmatprep.subr.mxu0 0.0
    %2254 = vmatpush1.msra.mxu0 0.0
    %2255 = vmatprep.subr.mxu0 0.0
    %2256 = vmatpush1.msra.mxu0 0.0
    %2257 = vmatprep.subr.mxu0 0.0
    %2258 = vmatpush1.msra.mxu0 0.0
    %2259 = vmatprep.subr.mxu0 0.0
    %2260 = vmatpush1.msra.mxu0 0.0
    %2261 = vmatprep.subr.mxu0 0.0
    %2262 = vmatpush1.msra.mxu0 0.0
    %2263 = vmatprep.subr.mxu0 0.0
    %2264 = vmatpush1.msra.mxu0 0.0
    %2265 = vmatprep.subr.mxu0 0.0
    %2266 = vmatpush1.msra.mxu0 0.0
    %2267 = vmatprep.subr.mxu0 0.0
    %2268 = vmatpush1.msra.mxu0 0.0
    %2269 = vmatprep.subr.mxu0 0.0
    %2270 = vmatpush1.msra.mxu0 0.0
    %2271 = vmatprep.subr.mxu0 0.0
    %2272 = vmatpush1.msra.mxu0 0.0
    %2273 = vmatprep.subr.mxu0 0.0
    %2274 = vmatpush1.msra.mxu0 0.0
    %2275 = vmatprep.subr.mxu0 0.0
    %2276 = vmatpush1.msra.mxu0 0.0
    %2277 = vmatprep.subr.mxu0 0.0
    %2278 = vmatpush1.msra.mxu0 0.0
    %2279 = vmatprep.subr.mxu0 0.0
    %2280 = vmatpush1.msra.mxu0 0.0
    %2281 = vmatprep.subr.mxu0 0.0
    %2282 = vmatpush1.msra.mxu0 0.0
    %2283 = vmatprep.subr.mxu0 0.0
    %2284 = vmatpush1.msra.mxu0 0.0
    %2285 = vmatprep.subr.mxu0 0.0
    %2286 = vmatpush1.msra.mxu0 0.0
    %2287 = vmatprep.subr.mxu0 0.0
    %2288 = vmatpush1.msra.mxu0 0.0
    %2289 = vmatprep.subr.mxu0 0.0
    %2290 = vmatpush1.msra.mxu0 0.0
    %2291 = vmatprep.subr.mxu0 0.0
    %2292 = vmatpush1.msra.mxu0 0.0
    %2293 = vmatprep.mubr.f32.mxu0 0.0
    %2294 = vmatmul.mubr.f32.gmra.mrb[0].mxu0 %v2227
    %v2295 = vpop.f32.mrb[0].mxu0
    %v2296 = vadd.f32 %v2223, %v2295
    %v2297 = vpop.f32.mrb[0].mxu0
    %2298 = vdwg.mxu0
    %v2299 = vadd.f32 %v2296, %v521
    %v2300 = vxor.u32 %v2299, 2147483648
    %v2301 = vmul.f32 %v2300, 1.442695
    %v2302 = vpow.pop %v2301
    %v2303 = vadd.f32 %v2302, 1.0
    %v2304 = vrcp.pop %v2303
    %v2305 = vmul.f32 1.0, %v2304
    %v2306 = vtanh.pop %v2299
    %v2307 = vmul.f32 %v2305, %v1963
    %2309 = vrot.lane.b32.xlu0 %v2306, 64
    %v2310 = vpop.permute.xlu0 %2309
    %v2312 = vmul.f32 %v2305, %v2310
    %2314 = vrot.lane.b32.xlu0 %v2312, 32
    %v2315 = vpop.permute.xlu0 %2314
    %v2317 = vadd.f32 %v2307, %v2315
    %v2318 = vtanh.pop %v2317
    %2320 = vrot.lane.b32.xlu0 %v2318, 64
    %v2321 = vpop.permute.xlu0 %2320
    %v2323 = vmul.f32 %v2305, %v2321
    %2325 = vrot.lane.b32.xlu0 %v2152, 32
    %v2326 = vpop.permute.xlu0 %2325
    %s2328 = scalar_lea.vmem [#allocation2], 10
    %2329 = vst.msk [vmem:[%s2328] sm:$0x3] %vm552, %v2326
    %2331 = vrot.lane.b32.xlu0 %v2323, 32
    %v2332 = vpop.permute.xlu0 %2331
    %s2334 = scalar_lea.vmem [#allocation3], 4
    %2335 = vst.msk [vmem:[%s2334] sm:$0x3] %vm552, %v2332
    %v2336 = vld [vmem:[%s732] sm:$0x3]
    %v2337 = vsel %vm186, %v2326, 0
    %2339 = vmatprep.subr.mxu0 0.0
    %2340 = vmatpush1.msra.mxu0 %v174
    %2341 = vmatprep.subr.mxu0 0.0
    %2342 = vmatpush1.msra.mxu0 %v175
    %2343 = vmatprep.subr.mxu0 0.0
    %2344 = vmatpush1.msra.mxu0 %v176
    %2345 = vmatprep.subr.mxu0 0.0
    %2346 = vmatpush1.msra.mxu0 %v177
    %2347 = vmatprep.subr.mxu0 0.0
    %2348 = vmatpush1.msra.mxu0 0.0
    %2349 = vmatprep.subr.mxu0 0.0
    %2350 = vmatpush1.msra.mxu0 0.0
    %2351 = vmatprep.subr.mxu0 0.0
    %2352 = vmatpush1.msra.mxu0 0.0
    %2353 = vmatprep.subr.mxu0 0.0
    %2354 = vmatpush1.msra.mxu0 0.0
    %2355 = vmatprep.subr.mxu0 0.0
    %2356 = vmatpush1.msra.mxu0 0.0
    %2357 = vmatprep.subr.mxu0 0.0
    %2358 = vmatpush1.msra.mxu0 0.0
    %2359 = vmatprep.subr.mxu0 0.0
    %2360 = vmatpush1.msra.mxu0 0.0
    %2361 = vmatprep.subr.mxu0 0.0
    %2362 = vmatpush1.msra.mxu0 0.0
    %2363 = vmatprep.subr.mxu0 0.0
    %2364 = vmatpush1.msra.mxu0 0.0
    %2365 = vmatprep.subr.mxu0 0.0
    %2366 = vmatpush1.msra.mxu0 0.0
    %2367 = vmatprep.subr.mxu0 0.0
    %2368 = vmatpush1.msra.mxu0 0.0
    %2369 = vmatprep.subr.mxu0 0.0
    %2370 = vmatpush1.msra.mxu0 0.0
    %2371 = vmatprep.subr.mxu0 0.0
    %2372 = vmatpush1.msra.mxu0 0.0
    %2373 = vmatprep.subr.mxu0 0.0
    %2374 = vmatpush1.msra.mxu0 0.0
    %2375 = vmatprep.subr.mxu0 0.0
    %2376 = vmatpush1.msra.mxu0 0.0
    %2377 = vmatprep.subr.mxu0 0.0
    %2378 = vmatpush1.msra.mxu0 0.0
    %2379 = vmatprep.subr.mxu0 0.0
    %2380 = vmatpush1.msra.mxu0 0.0
    %2381 = vmatprep.subr.mxu0 0.0
    %2382 = vmatpush1.msra.mxu0 0.0
    %2383 = vmatprep.subr.mxu0 0.0
    %2384 = vmatpush1.msra.mxu0 0.0
    %2385 = vmatprep.subr.mxu0 0.0
    %2386 = vmatpush1.msra.mxu0 0.0
    %2387 = vmatprep.subr.mxu0 0.0
    %2388 = vmatpush1.msra.mxu0 0.0
    %2389 = vmatprep.subr.mxu0 0.0
    %2390 = vmatpush1.msra.mxu0 0.0
    %2391 = vmatprep.subr.mxu0 0.0
    %2392 = vmatpush1.msra.mxu0 0.0
    %2393 = vmatprep.subr.mxu0 0.0
    %2394 = vmatpush1.msra.mxu0 0.0
    %2395 = vmatprep.subr.mxu0 0.0
    %2396 = vmatpush1.msra.mxu0 0.0
    %2397 = vmatprep.subr.mxu0 0.0
    %2398 = vmatpush1.msra.mxu0 0.0
    %2399 = vmatprep.subr.mxu0 0.0
    %2400 = vmatpush1.msra.mxu0 0.0
    %2401 = vmatprep.subr.mxu0 0.0
    %2402 = vmatpush1.msra.mxu0 0.0
    %2403 = vmatprep.mubr.f32.mxu0 0.0
    %2404 = vmatmul.mubr.f32.gmra.mrb[0].mxu0 %v2337
    %v2405 = vpop.f32.mrb[0].mxu0
    %v2406 = vadd.f32 0.0, %v2405
    %v2407 = vpop.f32.mrb[0].mxu0
    %2408 = vdwg.mxu0
    %v2410 = vsel %vm260, %v2336, 0
    %2412 = vmatprep.subr.mxu0 0.0
    %2413 = vmatpush1.msra.mxu0 %v266
    %2414 = vmatprep.subr.mxu0 0.0
    %2415 = vmatpush1.msra.mxu0 0.0
    %2416 = vmatprep.subr.mxu0 0.0
    %2417 = vmatpush1.msra.mxu0 0.0
    %2418 = vmatprep.subr.mxu0 0.0
    %2419 = vmatpush1.msra.mxu0 0.0
    %2420 = vmatprep.subr.mxu0 0.0
    %2421 = vmatpush1.msra.mxu0 0.0
    %2422 = vmatprep.subr.mxu0 0.0
    %2423 = vmatpush1.msra.mxu0 0.0
    %2424 = vmatprep.subr.mxu0 0.0
    %2425 = vmatpush1.msra.mxu0 0.0
    %2426 = vmatprep.subr.mxu0 0.0
    %2427 = vmatpush1.msra.mxu0 0.0
    %2428 = vmatprep.subr.mxu0 0.0
    %2429 = vmatpush1.msra.mxu0 0.0
    %2430 = vmatprep.subr.mxu0 0.0
    %2431 = vmatpush1.msra.mxu0 0.0
    %2432 = vmatprep.subr.mxu0 0.0
    %2433 = vmatpush1.msra.mxu0 0.0
    %2434 = vmatprep.subr.mxu0 0.0
    %2435 = vmatpush1.msra.mxu0 0.0
    %2436 = vmatprep.subr.mxu0 0.0
    %2437 = vmatpush1.msra.mxu0 0.0
    %2438 = vmatprep.subr.mxu0 0.0
    %2439 = vmatpush1.msra.mxu0 0.0
    %2440 = vmatprep.subr.mxu0 0.0
    %2441 = vmatpush1.msra.mxu0 0.0
    %2442 = vmatprep.subr.mxu0 0.0
    %2443 = vmatpush1.msra.mxu0 0.0
    %2444 = vmatprep.subr.mxu0 0.0
    %2445 = vmatpush1.msra.mxu0 0.0
    %2446 = vmatprep.subr.mxu0 0.0
    %2447 = vmatpush1.msra.mxu0 0.0
    %2448 = vmatprep.subr.mxu0 0.0
    %2449 = vmatpush1.msra.mxu0 0.0
    %2450 = vmatprep.subr.mxu0 0.0
    %2451 = vmatpush1.msra.mxu0 0.0
    %2452 = vmatprep.subr.mxu0 0.0
    %2453 = vmatpush1.msra.mxu0 0.0
    %2454 = vmatprep.subr.mxu0 0.0
    %2455 = vmatpush1.msra.mxu0 0.0
    %2456 = vmatprep.subr.mxu0 0.0
    %2457 = vmatpush1.msra.mxu0 0.0
    %2458 = vmatprep.subr.mxu0 0.0
    %2459 = vmatpush1.msra.mxu0 0.0
    %2460 = vmatprep.subr.mxu0 0.0
    %2461 = vmatpush1.msra.mxu0 0.0
    %2462 = vmatprep.subr.mxu0 0.0
    %2463 = vmatpush1.msra.mxu0 0.0
    %2464 = vmatprep.subr.mxu0 0.0
    %2465 = vmatpush1.msra.mxu0 0.0
    %2466 = vmatprep.subr.mxu0 0.0
    %2467 = vmatpush1.msra.mxu0 0.0
    %2468 = vmatprep.subr.mxu0 0.0
    %2469 = vmatpush1.msra.mxu0 0.0
    %2470 = vmatprep.subr.mxu0 0.0
    %2471 = vmatpush1.msra.mxu0 0.0
    %2472 = vmatprep.subr.mxu0 0.0
    %2473 = vmatpush1.msra.mxu0 0.0
    %2474 = vmatprep.subr.mxu0 0.0
    %2475 = vmatpush1.msra.mxu0 0.0
    %2476 = vmatprep.mubr.f32.mxu0 0.0
    %2477 = vmatmul.mubr.f32.gmra.mrb[0].mxu0 %v2410
    %v2478 = vpop.f32.mrb[0].mxu0
    %v2479 = vadd.f32 %v2406, %v2478
    %v2480 = vpop.f32.mrb[0].mxu0
    %2481 = vdwg.mxu0
    %v2482 = vadd.f32 %v2479, %v342
    %v2483 = vxor.u32 %v2482, 2147483648
    %v2484 = vmul.f32 %v2483, 1.442695
    %v2485 = vpow.pop %v2484
    %v2486 = vadd.f32 %v2485, 1.0
    %v2487 = vrcp.pop %v2486
    %v2488 = vmul.f32 1.0, %v2487
    %v2489 = vtanh.pop %v2482
    %v2490 = vmul.f32 %v2488, %v2146
    %2492 = vrot.lane.b32.xlu0 %v2489, 64
    %v2493 = vpop.permute.xlu0 %2492
    %v2495 = vmul.f32 %v2488, %v2493
    %2497 = vrot.lane.b32.xlu0 %v2495, 32
    %v2498 = vpop.permute.xlu0 %2497
    %v2500 = vadd.f32 %v2490, %v2498
    %v2501 = vtanh.pop %v2500
    %2503 = vrot.lane.b32.xlu0 %v2501, 64
    %v2504 = vpop.permute.xlu0 %2503
    %v2506 = vmul.f32 %v2488, %v2504
    %v2507 = vld [vmem:[%s560] sm:$0x3]
    %v2508 = vsel %vm186, %v2332, 0
    %2510 = vmatprep.subr.mxu0 0.0
    %2511 = vmatpush1.msra.mxu0 %v180
    %2512 = vmatprep.subr.mxu0 0.0
    %2513 = vmatpush1.msra.mxu0 %v181
    %2514 = vmatprep.subr.mxu0 0.0
    %2515 = vmatpush1.msra.mxu0 %v182
    %2516 = vmatprep.subr.mxu0 0.0
    %2517 = vmatpush1.msra.mxu0 %v183
    %2518 = vmatprep.subr.mxu0 0.0
    %2519 = vmatpush1.msra.mxu0 0.0
    %2520 = vmatprep.subr.mxu0 0.0
    %2521 = vmatpush1.msra.mxu0 0.0
    %2522 = vmatprep.subr.mxu0 0.0
    %2523 = vmatpush1.msra.mxu0 0.0
    %2524 = vmatprep.subr.mxu0 0.0
    %2525 = vmatpush1.msra.mxu0 0.0
    %2526 = vmatprep.subr.mxu0 0.0
    %2527 = vmatpush1.msra.mxu0 0.0
    %2528 = vmatprep.subr.mxu0 0.0
    %2529 = vmatpush1.msra.mxu0 0.0
    %2530 = vmatprep.subr.mxu0 0.0
    %2531 = vmatpush1.msra.mxu0 0.0
    %2532 = vmatprep.subr.mxu0 0.0
    %2533 = vmatpush1.msra.mxu0 0.0
    %2534 = vmatprep.subr.mxu0 0.0
    %2535 = vmatpush1.msra.mxu0 0.0
    %2536 = vmatprep.subr.mxu0 0.0
    %2537 = vmatpush1.msra.mxu0 0.0
    %2538 = vmatprep.subr.mxu0 0.0
    %2539 = vmatpush1.msra.mxu0 0.0
    %2540 = vmatprep.subr.mxu0 0.0
    %2541 = vmatpush1.msra.mxu0 0.0
    %2542 = vmatprep.subr.mxu0 0.0
    %2543 = vmatpush1.msra.mxu0 0.0
    %2544 = vmatprep.subr.mxu0 0.0
    %2545 = vmatpush1.msra.mxu0 0.0
    %2546 = vmatprep.subr.mxu0 0.0
    %2547 = vmatpush1.msra.mxu0 0.0
    %2548 = vmatprep.subr.mxu0 0.0
    %2549 = vmatpush1.msra.mxu0 0.0
    %2550 = vmatprep.subr.mxu0 0.0
    %2551 = vmatpush1.msra.mxu0 0.0
    %2552 = vmatprep.subr.mxu0 0.0
    %2553 = vmatpush1.msra.mxu0 0.0
    %2554 = vmatprep.subr.mxu0 0.0
    %2555 = vmatpush1.msra.mxu0 0.0
    %2556 = vmatprep.subr.mxu0 0.0
    %2557 = vmatpush1.msra.mxu0 0.0
    %2558 = vmatprep.subr.mxu0 0.0
    %2559 = vmatpush1.msra.mxu0 0.0
    %2560 = vmatprep.subr.mxu0 0.0
    %2561 = vmatpush1.msra.mxu0 0.0
    %2562 = vmatprep.subr.mxu0 0.0
    %2563 = vmatpush1.msra.mxu0 0.0
    %2564 = vmatprep.subr.mxu0 0.0
    %2565 = vmatpush1.msra.mxu0 0.0
    %2566 = vmatprep.subr.mxu0 0.0
    %2567 = vmatpush1.msra.mxu0 0.0
    %2568 = vmatprep.subr.mxu0 0.0
    %2569 = vmatpush1.msra.mxu0 0.0
    %2570 = vmatprep.subr.mxu0 0.0
    %2571 = vmatpush1.msra.mxu0 0.0
    %2572 = vmatprep.subr.mxu0 0.0
    %2573 = vmatpush1.msra.mxu0 0.0
    %2574 = vmatprep.mubr.f32.mxu0 0.0
    %2575 = vmatmul.mubr.f32.gmra.mrb[0].mxu0 %v2508
    %v2576 = vpop.f32.mrb[0].mxu0
    %v2577 = vadd.f32 0.0, %v2576
    %v2578 = vpop.f32.mrb[0].mxu0
    %2579 = vdwg.mxu0
    %v2581 = vsel %vm260, %v2507, 0
    %2583 = vmatprep.subr.mxu0 0.0
    %2584 = vmatpush1.msra.mxu0 %v445
    %2585 = vmatprep.subr.mxu0 0.0
    %2586 = vmatpush1.msra.mxu0 0.0
    %2587 = vmatprep.subr.mxu0 0.0
    %2588 = vmatpush1.msra.mxu0 0.0
    %2589 = vmatprep.subr.mxu0 0.0
    %2590 = vmatpush1.msra.mxu0 0.0
    %2591 = vmatprep.subr.mxu0 0.0
    %2592 = vmatpush1.msra.mxu0 0.0
    %2593 = vmatprep.subr.mxu0 0.0
    %2594 = vmatpush1.msra.mxu0 0.0
    %2595 = vmatprep.subr.mxu0 0.0
    %2596 = vmatpush1.msra.mxu0 0.0
    %2597 = vmatprep.subr.mxu0 0.0
    %2598 = vmatpush1.msra.mxu0 0.0
    %2599 = vmatprep.subr.mxu0 0.0
    %2600 = vmatpush1.msra.mxu0 0.0
    %2601 = vmatprep.subr.mxu0 0.0
    %2602 = vmatpush1.msra.mxu0 0.0
    %2603 = vmatprep.subr.mxu0 0.0
    %2604 = vmatpush1.msra.mxu0 0.0
    %2605 = vmatprep.subr.mxu0 0.0
    %2606 = vmatpush1.msra.mxu0 0.0
    %2607 = vmatprep.subr.mxu0 0.0
    %2608 = vmatpush1.msra.mxu0 0.0
    %2609 = vmatprep.subr.mxu0 0.0
    %2610 = vmatpush1.msra.mxu0 0.0
    %2611 = vmatprep.subr.mxu0 0.0
    %2612 = vmatpush1.msra.mxu0 0.0
    %2613 = vmatprep.subr.mxu0 0.0
    %2614 = vmatpush1.msra.mxu0 0.0
    %2615 = vmatprep.subr.mxu0 0.0
    %2616 = vmatpush1.msra.mxu0 0.0
    %2617 = vmatprep.subr.mxu0 0.0
    %2618 = vmatpush1.msra.mxu0 0.0
    %2619 = vmatprep.subr.mxu0 0.0
    %2620 = vmatpush1.msra.mxu0 0.0
    %2621 = vmatprep.subr.mxu0 0.0
    %2622 = vmatpush1.msra.mxu0 0.0
    %2623 = vmatprep.subr.mxu0 0.0
    %2624 = vmatpush1.msra.mxu0 0.0
    %2625 = vmatprep.subr.mxu0 0.0
    %2626 = vmatpush1.msra.mxu0 0.0
    %2627 = vmatprep.subr.mxu0 0.0
    %2628 = vmatpush1.msra.mxu0 0.0
    %2629 = vmatprep.subr.mxu0 0.0
    %2630 = vmatpush1.msra.mxu0 0.0
    %2631 = vmatprep.subr.mxu0 0.0
    %2632 = vmatpush1.msra.mxu0 0.0
    %2633 = vmatprep.subr.mxu0 0.0
    %2634 = vmatpush1.msra.mxu0 0.0
    %2635 = vmatprep.subr.mxu0 0.0
    %2636 = vmatpush1.msra.mxu0 0.0
    %2637 = vmatprep.subr.mxu0 0.0
    %2638 = vmatpush1.msra.mxu0 0.0
    %2639 = vmatprep.subr.mxu0 0.0
    %2640 = vmatpush1.msra.mxu0 0.0
    %2641 = vmatprep.subr.mxu0 0.0
    %2642 = vmatpush1.msra.mxu0 0.0
    %2643 = vmatprep.subr.mxu0 0.0
    %2644 = vmatpush1.msra.mxu0 0.0
    %2645 = vmatprep.subr.mxu0 0.0
    %2646 = vmatpush1.msra.mxu0 0.0
    %2647 = vmatprep.mubr.f32.mxu0 0.0
    %2648 = vmatmul.mubr.f32.gmra.mrb[0].mxu0 %v2581
    %v2649 = vpop.f32.mrb[0].mxu0
    %v2650 = vadd.f32 %v2577, %v2649
    %v2651 = vpop.f32.mrb[0].mxu0
    %2652 = vdwg.mxu0
    %v2653 = vadd.f32 %v2650, %v521
    %v2654 = vxor.u32 %v2653, 2147483648
    %v2655 = vmul.f32 %v2654, 1.442695
    %v2656 = vpow.pop %v2655
    %v2657 = vadd.f32 %v2656, 1.0
    %v2658 = vrcp.pop %v2657
    %v2659 = vmul.f32 1.0, %v2658
    %v2660 = vtanh.pop %v2653
    %v2661 = vmul.f32 %v2659, %v2317
    %2663 = vrot.lane.b32.xlu0 %v2660, 64
    %v2664 = vpop.permute.xlu0 %2663
    %v2666 = vmul.f32 %v2659, %v2664
    %2668 = vrot.lane.b32.xlu0 %v2666, 32
    %v2669 = vpop.permute.xlu0 %2668
    %v2671 = vadd.f32 %v2661, %v2669
    %v2672 = vtanh.pop %v2671
    %2674 = vrot.lane.b32.xlu0 %v2672, 64
    %v2675 = vpop.permute.xlu0 %2674
    %v2677 = vmul.f32 %v2659, %v2675
    %2679 = vrot.lane.b32.xlu0 %v2506, 32
    %v2680 = vpop.permute.xlu0 %2679
    %s2682 = scalar_lea.vmem [#allocation2], 12
    %2683 = vst.msk [vmem:[%s2682] sm:$0x3] %vm552, %v2680
    %2685 = vrot.lane.b32.xlu0 %v2677, 32
    %v2686 = vpop.permute.xlu0 %2685
    %s2688 = scalar_lea.vmem [#allocation3], 2
    %2689 = vst.msk [vmem:[%s2688] sm:$0x3] %vm552, %v2686
    %v2690 = vld [vmem:[%s369] sm:$0x3]
    %v2691 = vsel %vm186, %v2680, 0
    %2693 = vmatprep.subr.mxu0 0.0
    %2694 = vmatpush1.msra.mxu0 %v174
    %2695 = vmatprep.subr.mxu0 0.0
    %2696 = vmatpush1.msra.mxu0 %v175
    %2697 = vmatprep.subr.mxu0 0.0
    %2698 = vmatpush1.msra.mxu0 %v176
    %2699 = vmatprep.subr.mxu0 0.0
    %2700 = vmatpush1.msra.mxu0 %v177
    %2701 = vmatprep.subr.mxu0 0.0
    %2702 = vmatpush1.msra.mxu0 0.0
    %2703 = vmatprep.subr.mxu0 0.0
    %2704 = vmatpush1.msra.mxu0 0.0
    %2705 = vmatprep.subr.mxu0 0.0
    %2706 = vmatpush1.msra.mxu0 0.0
    %2707 = vmatprep.subr.mxu0 0.0
    %2708 = vmatpush1.msra.mxu0 0.0
    %2709 = vmatprep.subr.mxu0 0.0
    %2710 = vmatpush1.msra.mxu0 0.0
    %2711 = vmatprep.subr.mxu0 0.0
    %2712 = vmatpush1.msra.mxu0 0.0
    %2713 = vmatprep.subr.mxu0 0.0
    %2714 = vmatpush1.msra.mxu0 0.0
    %2715 = vmatprep.subr.mxu0 0.0
    %2716 = vmatpush1.msra.mxu0 0.0
    %2717 = vmatprep.subr.mxu0 0.0
    %2718 = vmatpush1.msra.mxu0 0.0
    %2719 = vmatprep.subr.mxu0 0.0
    %2720 = vmatpush1.msra.mxu0 0.0
    %2721 = vmatprep.subr.mxu0 0.0
    %2722 = vmatpush1.msra.mxu0 0.0
    %2723 = vmatprep.subr.mxu0 0.0
    %2724 = vmatpush1.msra.mxu0 0.0
    %2725 = vmatprep.subr.mxu0 0.0
    %2726 = vmatpush1.msra.mxu0 0.0
    %2727 = vmatprep.subr.mxu0 0.0
    %2728 = vmatpush1.msra.mxu0 0.0
    %2729 = vmatprep.subr.mxu0 0.0
    %2730 = vmatpush1.msra.mxu0 0.0
    %2731 = vmatprep.subr.mxu0 0.0
    %2732 = vmatpush1.msra.mxu0 0.0
    %2733 = vmatprep.subr.mxu0 0.0
    %2734 = vmatpush1.msra.mxu0 0.0
    %2735 = vmatprep.subr.mxu0 0.0
    %2736 = vmatpush1.msra.mxu0 0.0
    %2737 = vmatprep.subr.mxu0 0.0
    %2738 = vmatpush1.msra.mxu0 0.0
    %2739 = vmatprep.subr.mxu0 0.0
    %2740 = vmatpush1.msra.mxu0 0.0
    %2741 = vmatprep.subr.mxu0 0.0
    %2742 = vmatpush1.msra.mxu0 0.0
    %2743 = vmatprep.subr.mxu0 0.0
    %2744 = vmatpush1.msra.mxu0 0.0
    %2745 = vmatprep.subr.mxu0 0.0
    %2746 = vmatpush1.msra.mxu0 0.0
    %2747 = vmatprep.subr.mxu0 0.0
    %2748 = vmatpush1.msra.mxu0 0.0
    %2749 = vmatprep.subr.mxu0 0.0
    %2750 = vmatpush1.msra.mxu0 0.0
    %2751 = vmatprep.subr.mxu0 0.0
    %2752 = vmatpush1.msra.mxu0 0.0
    %2753 = vmatprep.subr.mxu0 0.0
    %2754 = vmatpush1.msra.mxu0 0.0
    %2755 = vmatprep.subr.mxu0 0.0
    %2756 = vmatpush1.msra.mxu0 0.0
    %2757 = vmatprep.mubr.f32.mxu0 0.0
    %2758 = vmatmul.mubr.f32.gmra.mrb[0].mxu0 %v2691
    %v2759 = vpop.f32.mrb[0].mxu0
    %v2760 = vadd.f32 0.0, %v2759
    %v2761 = vpop.f32.mrb[0].mxu0
    %2762 = vdwg.mxu0
    %v2764 = vsel %vm260, %v2690, 0
    %2766 = vmatprep.subr.mxu0 0.0
    %2767 = vmatpush1.msra.mxu0 %v266
    %2768 = vmatprep.subr.mxu0 0.0
    %2769 = vmatpush1.msra.mxu0 0.0
    %2770 = vmatprep.subr.mxu0 0.0
    %2771 = vmatpush1.msra.mxu0 0.0
    %2772 = vmatprep.subr.mxu0 0.0
    %2773 = vmatpush1.msra.mxu0 0.0
    %2774 = vmatprep.subr.mxu0 0.0
    %2775 = vmatpush1.msra.mxu0 0.0
    %2776 = vmatprep.subr.mxu0 0.0
    %2777 = vmatpush1.msra.mxu0 0.0
    %2778 = vmatprep.subr.mxu0 0.0
    %2779 = vmatpush1.msra.mxu0 0.0
    %2780 = vmatprep.subr.mxu0 0.0
    %2781 = vmatpush1.msra.mxu0 0.0
    %2782 = vmatprep.subr.mxu0 0.0
    %2783 = vmatpush1.msra.mxu0 0.0
    %2784 = vmatprep.subr.mxu0 0.0
    %2785 = vmatpush1.msra.mxu0 0.0
    %2786 = vmatprep.subr.mxu0 0.0
    %2787 = vmatpush1.msra.mxu0 0.0
    %2788 = vmatprep.subr.mxu0 0.0
    %2789 = vmatpush1.msra.mxu0 0.0
    %2790 = vmatprep.subr.mxu0 0.0
    %2791 = vmatpush1.msra.mxu0 0.0
    %2792 = vmatprep.subr.mxu0 0.0
    %2793 = vmatpush1.msra.mxu0 0.0
    %2794 = vmatprep.subr.mxu0 0.0
    %2795 = vmatpush1.msra.mxu0 0.0
    %2796 = vmatprep.subr.mxu0 0.0
    %2797 = vmatpush1.msra.mxu0 0.0
    %2798 = vmatprep.subr.mxu0 0.0
    %2799 = vmatpush1.msra.mxu0 0.0
    %2800 = vmatprep.subr.mxu0 0.0
    %2801 = vmatpush1.msra.mxu0 0.0
    %2802 = vmatprep.subr.mxu0 0.0
    %2803 = vmatpush1.msra.mxu0 0.0
    %2804 = vmatprep.subr.mxu0 0.0
    %2805 = vmatpush1.msra.mxu0 0.0
    %2806 = vmatprep.subr.mxu0 0.0
    %2807 = vmatpush1.msra.mxu0 0.0
    %2808 = vmatprep.subr.mxu0 0.0
    %2809 = vmatpush1.msra.mxu0 0.0
    %2810 = vmatprep.subr.mxu0 0.0
    %2811 = vmatpush1.msra.mxu0 0.0
    %2812 = vmatprep.subr.mxu0 0.0
    %2813 = vmatpush1.msra.mxu0 0.0
    %2814 = vmatprep.subr.mxu0 0.0
    %2815 = vmatpush1.msra.mxu0 0.0
    %2816 = vmatprep.subr.mxu0 0.0
    %2817 = vmatpush1.msra.mxu0 0.0
    %2818 = vmatprep.subr.mxu0 0.0
    %2819 = vmatpush1.msra.mxu0 0.0
    %2820 = vmatprep.subr.mxu0 0.0
    %2821 = vmatpush1.msra.mxu0 0.0
    %2822 = vmatprep.subr.mxu0 0.0
    %2823 = vmatpush1.msra.mxu0 0.0
    %2824 = vmatprep.subr.mxu0 0.0
    %2825 = vmatpush1.msra.mxu0 0.0
    %2826 = vmatprep.subr.mxu0 0.0
    %2827 = vmatpush1.msra.mxu0 0.0
    %2828 = vmatprep.subr.mxu0 0.0
    %2829 = vmatpush1.msra.mxu0 0.0
    %2830 = vmatprep.mubr.f32.mxu0 0.0
    %2831 = vmatmul.mubr.f32.gmra.mrb[0].mxu0 %v2764
    %v2832 = vpop.f32.mrb[0].mxu0
    %v2833 = vadd.f32 %v2760, %v2832
    %v2834 = vpop.f32.mrb[0].mxu0
    %2835 = vdwg.mxu0
    %v2836 = vadd.f32 %v2833, %v342
    %v2837 = vxor.u32 %v2836, 2147483648
    %v2838 = vmul.f32 %v2837, 1.442695
    %v2839 = vpow.pop %v2838
    %v2840 = vadd.f32 %v2839, 1.0
    %v2841 = vrcp.pop %v2840
    %v2842 = vmul.f32 1.0, %v2841
    %v2843 = vtanh.pop %v2836
    %v2844 = vmul.f32 %v2842, %v2500
    %2846 = vrot.lane.b32.xlu0 %v2843, 64
    %v2847 = vpop.permute.xlu0 %2846
    %v2849 = vmul.f32 %v2842, %v2847
    %2851 = vrot.lane.b32.xlu0 %v2849, 32
    %v2852 = vpop.permute.xlu0 %2851
    %v2854 = vadd.f32 %v2844, %v2852
    %v2855 = vtanh.pop %v2854
    %2857 = vrot.lane.b32.xlu0 %v2855, 64
    %v2858 = vpop.permute.xlu0 %2857
    %v2860 = vmul.f32 %v2842, %v2858
    %v2861 = vld [vmem:[%s0] sm:$0x3]
    %v2862 = vsel %vm186, %v2686, 0
    %2864 = vmatprep.subr.mxu0 0.0
    %2865 = vmatpush1.msra.mxu0 %v180
    %2866 = vmatprep.subr.mxu0 0.0
    %2867 = vmatpush1.msra.mxu0 %v181
    %2868 = vmatprep.subr.mxu0 0.0
    %2869 = vmatpush1.msra.mxu0 %v182
    %2870 = vmatprep.subr.mxu0 0.0
    %2871 = vmatpush1.msra.mxu0 %v183
    %2872 = vmatprep.subr.mxu0 0.0
    %2873 = vmatpush1.msra.mxu0 0.0
    %2874 = vmatprep.subr.mxu0 0.0
    %2875 = vmatpush1.msra.mxu0 0.0
    %2876 = vmatprep.subr.mxu0 0.0
    %2877 = vmatpush1.msra.mxu0 0.0
    %2878 = vmatprep.subr.mxu0 0.0
    %2879 = vmatpush1.msra.mxu0 0.0
    %2880 = vmatprep.subr.mxu0 0.0
    %2881 = vmatpush1.msra.mxu0 0.0
    %2882 = vmatprep.subr.mxu0 0.0
    %2883 = vmatpush1.msra.mxu0 0.0
    %2884 = vmatprep.subr.mxu0 0.0
    %2885 = vmatpush1.msra.mxu0 0.0
    %2886 = vmatprep.subr.mxu0 0.0
    %2887 = vmatpush1.msra.mxu0 0.0
    %2888 = vmatprep.subr.mxu0 0.0
    %2889 = vmatpush1.msra.mxu0 0.0
    %2890 = vmatprep.subr.mxu0 0.0
    %2891 = vmatpush1.msra.mxu0 0.0
    %2892 = vmatprep.subr.mxu0 0.0
    %2893 = vmatpush1.msra.mxu0 0.0
    %2894 = vmatprep.subr.mxu0 0.0
    %2895 = vmatpush1.msra.mxu0 0.0
    %2896 = vmatprep.subr.mxu0 0.0
    %2897 = vmatpush1.msra.mxu0 0.0
    %2898 = vmatprep.subr.mxu0 0.0
    %2899 = vmatpush1.msra.mxu0 0.0
    %2900 = vmatprep.subr.mxu0 0.0
    %2901 = vmatpush1.msra.mxu0 0.0
    %2902 = vmatprep.subr.mxu0 0.0
    %2903 = vmatpush1.msra.mxu0 0.0
    %2904 = vmatprep.subr.mxu0 0.0
    %2905 = vmatpush1.msra.mxu0 0.0
    %2906 = vmatprep.subr.mxu0 0.0
    %2907 = vmatpush1.msra.mxu0 0.0
    %2908 = vmatprep.subr.mxu0 0.0
    %2909 = vmatpush1.msra.mxu0 0.0
    %2910 = vmatprep.subr.mxu0 0.0
    %2911 = vmatpush1.msra.mxu0 0.0
    %2912 = vmatprep.subr.mxu0 0.0
    %2913 = vmatpush1.msra.mxu0 0.0
    %2914 = vmatprep.subr.mxu0 0.0
    %2915 = vmatpush1.msra.mxu0 0.0
    %2916 = vmatprep.subr.mxu0 0.0
    %2917 = vmatpush1.msra.mxu0 0.0
    %2918 = vmatprep.subr.mxu0 0.0
    %2919 = vmatpush1.msra.mxu0 0.0
    %2920 = vmatprep.subr.mxu0 0.0
    %2921 = vmatpush1.msra.mxu0 0.0
    %2922 = vmatprep.subr.mxu0 0.0
    %2923 = vmatpush1.msra.mxu0 0.0
    %2924 = vmatprep.subr.mxu0 0.0
    %2925 = vmatpush1.msra.mxu0 0.0
    %2926 = vmatprep.subr.mxu0 0.0
    %2927 = vmatpush1.msra.mxu0 0.0
    %2928 = vmatprep.mubr.f32.mxu0 0.0
    %2929 = vmatmul.mubr.f32.gmra.mrb[0].mxu0 %v2862
    %v2930 = vpop.f32.mrb[0].mxu0
    %v2931 = vadd.f32 0.0, %v2930
    %v2932 = vpop.f32.mrb[0].mxu0
    %2933 = vdwg.mxu0
    %v2935 = vsel %vm260, %v2861, 0
    %2937 = vmatprep.subr.mxu0 0.0
    %2938 = vmatpush1.msra.mxu0 %v445
    %2939 = vmatprep.subr.mxu0 0.0
    %2940 = vmatpush1.msra.mxu0 0.0
    %2941 = vmatprep.subr.mxu0 0.0
    %2942 = vmatpush1.msra.mxu0 0.0
    %2943 = vmatprep.subr.mxu0 0.0
    %2944 = vmatpush1.msra.mxu0 0.0
    %2945 = vmatprep.subr.mxu0 0.0
    %2946 = vmatpush1.msra.mxu0 0.0
    %2947 = vmatprep.subr.mxu0 0.0
    %2948 = vmatpush1.msra.mxu0 0.0
    %2949 = vmatprep.subr.mxu0 0.0
    %2950 = vmatpush1.msra.mxu0 0.0
    %2951 = vmatprep.subr.mxu0 0.0
    %2952 = vmatpush1.msra.mxu0 0.0
    %2953 = vmatprep.subr.mxu0 0.0
    %2954 = vmatpush1.msra.mxu0 0.0
    %2955 = vmatprep.subr.mxu0 0.0
    %2956 = vmatpush1.msra.mxu0 0.0
    %2957 = vmatprep.subr.mxu0 0.0
    %2958 = vmatpush1.msra.mxu0 0.0
    %2959 = vmatprep.subr.mxu0 0.0
    %2960 = vmatpush1.msra.mxu0 0.0
    %2961 = vmatprep.subr.mxu0 0.0
    %2962 = vmatpush1.msra.mxu0 0.0
    %2963 = vmatprep.subr.mxu0 0.0
    %2964 = vmatpush1.msra.mxu0 0.0
    %2965 = vmatprep.subr.mxu0 0.0
    %2966 = vmatpush1.msra.mxu0 0.0
    %2967 = vmatprep.subr.mxu0 0.0
    %2968 = vmatpush1.msra.mxu0 0.0
    %2969 = vmatprep.subr.mxu0 0.0
    %2970 = vmatpush1.msra.mxu0 0.0
    %2971 = vmatprep.subr.mxu0 0.0
    %2972 = vmatpush1.msra.mxu0 0.0
    %2973 = vmatprep.subr.mxu0 0.0
    %2974 = vmatpush1.msra.mxu0 0.0
    %2975 = vmatprep.subr.mxu0 0.0
    %2976 = vmatpush1.msra.mxu0 0.0
    %2977 = vmatprep.subr.mxu0 0.0
    %2978 = vmatpush1.msra.mxu0 0.0
    %2979 = vmatprep.subr.mxu0 0.0
    %2980 = vmatpush1.msra.mxu0 0.0
    %2981 = vmatprep.subr.mxu0 0.0
    %2982 = vmatpush1.msra.mxu0 0.0
    %2983 = vmatprep.subr.mxu0 0.0
    %2984 = vmatpush1.msra.mxu0 0.0
    %2985 = vmatprep.subr.mxu0 0.0
    %2986 = vmatpush1.msra.mxu0 0.0
    %2987 = vmatprep.subr.mxu0 0.0
    %2988 = vmatpush1.msra.mxu0 0.0
    %2989 = vmatprep.subr.mxu0 0.0
    %2990 = vmatpush1.msra.mxu0 0.0
    %2991 = vmatprep.subr.mxu0 0.0
    %2992 = vmatpush1.msra.mxu0 0.0
    %2993 = vmatprep.subr.mxu0 0.0
    %2994 = vmatpush1.msra.mxu0 0.0
    %2995 = vmatprep.subr.mxu0 0.0
    %2996 = vmatpush1.msra.mxu0 0.0
    %2997 = vmatprep.subr.mxu0 0.0
    %2998 = vmatpush1.msra.mxu0 0.0
    %2999 = vmatprep.subr.mxu0 0.0
    %3000 = vmatpush1.msra.mxu0 0.0
    %3001 = vmatprep.mubr.f32.mxu0 0.0
    %3002 = vmatmul.mubr.f32.gmra.mrb[0].mxu0 %v2935
    %v3003 = vpop.f32.mrb[0].mxu0
    %v3004 = vadd.f32 %v2931, %v3003
    %v3005 = vpop.f32.mrb[0].mxu0
    %3006 = vdwg.mxu0
    %v3007 = vadd.f32 %v3004, %v521
    %v3008 = vxor.u32 %v3007, 2147483648
    %v3009 = vmul.f32 %v3008, 1.442695
    %v3010 = vpow.pop %v3009
    %v3011 = vadd.f32 %v3010, 1.0
    %v3012 = vrcp.pop %v3011
    %v3013 = vmul.f32 1.0, %v3012
    %v3014 = vtanh.pop %v3007
    %v3015 = vmul.f32 %v3013, %v2671
    %3017 = vrot.lane.b32.xlu0 %v3014, 64
    %v3018 = vpop.permute.xlu0 %3017
    %v3020 = vmul.f32 %v3013, %v3018
    %3022 = vrot.lane.b32.xlu0 %v3020, 32
    %v3023 = vpop.permute.xlu0 %3022
    %v3025 = vadd.f32 %v3015, %v3023
    %v3026 = vtanh.pop %v3025
    %3028 = vrot.lane.b32.xlu0 %v3026, 64
    %v3029 = vpop.permute.xlu0 %3028
    %v3031 = vmul.f32 %v3013, %v3029
    %3033 = vrot.lane.b32.xlu0 %v2860, 32
    %v3034 = vpop.permute.xlu0 %3033
    %s3036 = scalar_lea.vmem [#allocation2], 14
    %3037 = vst.msk [vmem:[%s3036] sm:$0x3] %vm552, %v3034
    %3039 = vrot.lane.b32.xlu0 %v3031, 32
    %v3040 = vpop.permute.xlu0 %3039
    %3042 = vst.msk [vmem:[#allocation3] sm:$0x3] %vm552, %v3040
    %v3043 = vld [vmem:[#allocation9] sm:$0xff]
    %v3044 = vld [vmem:[#allocation9 + $0x8] sm:$0xff]
    %v3045 = vld [vmem:[#allocation9 + $0x10] sm:$0xff]
    %v3046 = vld [vmem:[#allocation9 + $0x18] sm:$0xff]
    %v3047 = vld [vmem:[#allocation9 + $0x20] sm:$0xff]
    %v3048 = vld [vmem:[#allocation9 + $0x28] sm:$0xff]
    %v3049 = vld [vmem:[#allocation9 + $0x30] sm:$0xff]
    %v3050 = vld [vmem:[#allocation9 + $0x38] sm:$0xff]
    %v3051 = vld [vmem:[#allocation10] sm:$0xff]
    %v3052 = vld [vmem:[#allocation10 + $0x8] sm:$0xff]
    %v3053 = vld [vmem:[#allocation10 + $0x10] sm:$0xff]
    %v3054 = vld [vmem:[#allocation10 + $0x18] sm:$0xff]
    %v3055 = vld [vmem:[%s9] sm:$0x1]
    %v3056 = vld [vmem:[#allocation2] sm:$0x3]
    %v3057 = vld [vmem:[#allocation3] sm:$0x3]
    %3059 = vrot.lane.b32.xlu0 %v3057, 32
    %v3060 = vpop.permute.xlu0 %3059
    %v3062 = vsel %vm186, %v3056, %v3060
    %3063 = vmatprep.subr.mxu0 0.0
    %3064 = vmatpush1.msra.mxu0 %v3051
    %3065 = vmatprep.subr.mxu0 0.0
    %3066 = vmatpush1.msra.mxu0 %v3052
    %3067 = vmatprep.subr.mxu0 0.0
    %3068 = vmatpush1.msra.mxu0 %v3053
    %3069 = vmatprep.subr.mxu0 0.0
    %3070 = vmatpush1.msra.mxu0 %v3054
    %3071 = vmatprep.subr.mxu0 0.0
    %3072 = vmatpush1.msra.mxu0 0.0
    %3073 = vmatprep.subr.mxu0 0.0
    %3074 = vmatpush1.msra.mxu0 0.0
    %3075 = vmatprep.subr.mxu0 0.0
    %3076 = vmatpush1.msra.mxu0 0.0
    %3077 = vmatprep.subr.mxu0 0.0
    %3078 = vmatpush1.msra.mxu0 0.0
    %3079 = vmatprep.subr.mxu0 0.0
    %3080 = vmatpush1.msra.mxu0 0.0
    %3081 = vmatprep.subr.mxu0 0.0
    %3082 = vmatpush1.msra.mxu0 0.0
    %3083 = vmatprep.subr.mxu0 0.0
    %3084 = vmatpush1.msra.mxu0 0.0
    %3085 = vmatprep.subr.mxu0 0.0
    %3086 = vmatpush1.msra.mxu0 0.0
    %3087 = vmatprep.subr.mxu0 0.0
    %3088 = vmatpush1.msra.mxu0 0.0
    %3089 = vmatprep.subr.mxu0 0.0
    %3090 = vmatpush1.msra.mxu0 0.0
    %3091 = vmatprep.subr.mxu0 0.0
    %3092 = vmatpush1.msra.mxu0 0.0
    %3093 = vmatprep.subr.mxu0 0.0
    %3094 = vmatpush1.msra.mxu0 0.0
    %3095 = vmatprep.subr.mxu0 0.0
    %3096 = vmatpush1.msra.mxu0 0.0
    %3097 = vmatprep.subr.mxu0 0.0
    %3098 = vmatpush1.msra.mxu0 0.0
    %3099 = vmatprep.subr.mxu0 0.0
    %3100 = vmatpush1.msra.mxu0 0.0
    %3101 = vmatprep.subr.mxu0 0.0
    %3102 = vmatpush1.msra.mxu0 0.0
    %3103 = vmatprep.subr.mxu0 0.0
    %3104 = vmatpush1.msra.mxu0 0.0
    %3105 = vmatprep.subr.mxu0 0.0
    %3106 = vmatpush1.msra.mxu0 0.0
    %3107 = vmatprep.subr.mxu0 0.0
    %3108 = vmatpush1.msra.mxu0 0.0
    %3109 = vmatprep.subr.mxu0 0.0
    %3110 = vmatpush1.msra.mxu0 0.0
    %3111 = vmatprep.subr.mxu0 0.0
    %3112 = vmatpush1.msra.mxu0 0.0
    %3113 = vmatprep.subr.mxu0 0.0
    %3114 = vmatpush1.msra.mxu0 0.0
    %3115 = vmatprep.subr.mxu0 0.0
    %3116 = vmatpush1.msra.mxu0 0.0
    %3117 = vmatprep.subr.mxu0 0.0
    %3118 = vmatpush1.msra.mxu0 0.0
    %3119 = vmatprep.subr.mxu0 0.0
    %3120 = vmatpush1.msra.mxu0 0.0
    %3121 = vmatprep.subr.mxu0 0.0
    %3122 = vmatpush1.msra.mxu0 0.0
    %3123 = vmatprep.subr.mxu0 0.0
    %3124 = vmatpush1.msra.mxu0 0.0
    %3125 = vmatprep.subr.mxu0 0.0
    %3126 = vmatpush1.msra.mxu0 0.0
    %3127 = vmatprep.mubr.f32.mxu0 0.0
    %3128 = vmatmul.mubr.f32.gmra.mrb[0].mxu0 %v188
    %v3129 = vpop.f32.mrb[0].mxu0
    %v3130 = vadd.f32 0.0, %v3129
    %v3131 = vpop.f32.mrb[0].mxu0
    %3132 = vdwg.mxu0
    %vm3133 = vcmask 523264
    %v3135 = vsel %vm3133, %v3062, 0
    %3137 = vmatprep.subr.mxu0 0.0
    %3138 = vmatpush1.msra.mxu0 %v3043
    %3139 = vmatprep.subr.mxu0 0.0
    %3140 = vmatpush1.msra.mxu0 %v3044
    %3141 = vmatprep.subr.mxu0 0.0
    %3142 = vmatpush1.msra.mxu0 %v3045
    %3143 = vmatprep.subr.mxu0 0.0
    %3144 = vmatpush1.msra.mxu0 %v3046
    %3145 = vmatprep.subr.mxu0 0.0
    %3146 = vmatpush1.msra.mxu0 %v3047
    %3147 = vmatprep.subr.mxu0 0.0
    %3148 = vmatpush1.msra.mxu0 %v3048
    %3149 = vmatprep.subr.mxu0 0.0
    %3150 = vmatpush1.msra.mxu0 %v3049
    %3151 = vmatprep.subr.mxu0 0.0
    %3152 = vmatpush1.msra.mxu0 %v3050
    %3153 = vmatprep.subr.mxu0 0.0
    %3154 = vmatpush1.msra.mxu0 0.0
    %3155 = vmatprep.subr.mxu0 0.0
    %3156 = vmatpush1.msra.mxu0 0.0
    %3157 = vmatprep.subr.mxu0 0.0
    %3158 = vmatpush1.msra.mxu0 0.0
    %3159 = vmatprep.subr.mxu0 0.0
    %3160 = vmatpush1.msra.mxu0 0.0
    %3161 = vmatprep.subr.mxu0 0.0
    %3162 = vmatpush1.msra.mxu0 0.0
    %3163 = vmatprep.subr.mxu0 0.0
    %3164 = vmatpush1.msra.mxu0 0.0
    %3165 = vmatprep.subr.mxu0 0.0
    %3166 = vmatpush1.msra.mxu0 0.0
    %3167 = vmatprep.subr.mxu0 0.0
    %3168 = vmatpush1.msra.mxu0 0.0
    %3169 = vmatprep.subr.mxu0 0.0
    %3170 = vmatpush1.msra.mxu0 0.0
    %3171 = vmatprep.subr.mxu0 0.0
    %3172 = vmatpush1.msra.mxu0 0.0
    %3173 = vmatprep.subr.mxu0 0.0
    %3174 = vmatpush1.msra.mxu0 0.0
    %3175 = vmatprep.subr.mxu0 0.0
    %3176 = vmatpush1.msra.mxu0 0.0
    %3177 = vmatprep.subr.mxu0 0.0
    %3178 = vmatpush1.msra.mxu0 0.0
    %3179 = vmatprep.subr.mxu0 0.0
    %3180 = vmatpush1.msra.mxu0 0.0
    %3181 = vmatprep.subr.mxu0 0.0
    %3182 = vmatpush1.msra.mxu0 0.0
    %3183 = vmatprep.subr.mxu0 0.0
    %3184 = vmatpush1.msra.mxu0 0.0
    %3185 = vmatprep.subr.mxu0 0.0
    %3186 = vmatpush1.msra.mxu0 0.0
    %3187 = vmatprep.subr.mxu0 0.0
    %3188 = vmatpush1.msra.mxu0 0.0
    %3189 = vmatprep.subr.mxu0 0.0
    %3190 = vmatpush1.msra.mxu0 0.0
    %3191 = vmatprep.subr.mxu0 0.0
    %3192 = vmatpush1.msra.mxu0 0.0
    %3193 = vmatprep.subr.mxu0 0.0
    %3194 = vmatpush1.msra.mxu0 0.0
    %3195 = vmatprep.subr.mxu0 0.0
    %3196 = vmatpush1.msra.mxu0 0.0
    %3197 = vmatprep.subr.mxu0 0.0
    %3198 = vmatpush1.msra.mxu0 0.0
    %3199 = vmatprep.subr.mxu0 0.0
    %3200 = vmatpush1.msra.mxu0 0.0
    %3201 = vmatprep.mubr.f32.mxu0 0.0
    %3202 = vmatmul.mubr.f32.gmra.mrb[0].mxu0 %v3135
    %v3203 = vpop.f32.mrb[0].mxu0
    %v3204 = vadd.f32 %v3130, %v3203
    %v3205 = vpop.f32.mrb[0].mxu0
    %3206 = vdwg.mxu0
    %v3208 = vlaneseq
    %v3209 = vshrl.u32 %v3208, 7
    %v3210 = vsub.s32 0, %v3209
    %v3211 = vrot.slane %v3055, %v3210
    %v3213 = vadd.f32 %v3204, %v3211
    %v3214 = vxor.u32 %v3213, 2147483648
    %v3215 = vmul.f32 %v3214, 1.442695
    %v3216 = vpow.pop %v3215
    %v3217 = vadd.f32 %v3216, 1.0
    %v3218 = vrcp.pop %v3217
    %v3219 = vmul.f32 1.0, %v3218
    %v3220 = vtanh.pop %v3213
    %v3221 = vmul.f32 %v3219, 0.0
    %3223 = vrot.lane.b32.xlu0 %v3220, 64
    %v3224 = vpop.permute.xlu0 %3223
    %v3226 = vmul.f32 %v3219, %v3224
    %3228 = vrot.lane.b32.xlu0 %v3226, 32
    %v3229 = vpop.permute.xlu0 %3228
    %v3231 = vadd.f32 %v3221, %v3229
    %v3232 = vtanh.pop %v3231
    %3234 = vrot.lane.b32.xlu0 %v3232, 64
    %v3235 = vpop.permute.xlu0 %3234
    %v3237 = vmul.f32 %v3219, %v3235
    %v3238 = vld [vmem:[%s908] sm:$0x3]
    %v3239 = vld [vmem:[%s2688] sm:$0x3]
    %3241 = vrot.lane.b32.xlu0 %v3239, 32
    %v3242 = vpop.permute.xlu0 %3241
    %v3244 = vsel %vm186, %v3238, %v3242
    %3246 = vrot.lane.b32.xlu0 %v3237, 32
    %v3247 = vpop.permute.xlu0 %3246
    %v3248 = vsel %vm186, %v3247, 0
    %3250 = vmatprep.subr.mxu0 0.0
    %3251 = vmatpush1.msra.mxu0 %v3051
    %3252 = vmatprep.subr.mxu0 0.0
    %3253 = vmatpush1.msra.mxu0 %v3052
    %3254 = vmatprep.subr.mxu0 0.0
    %3255 = vmatpush1.msra.mxu0 %v3053
    %3256 = vmatprep.subr.mxu0 0.0
    %3257 = vmatpush1.msra.mxu0 %v3054
    %3258 = vmatprep.subr.mxu0 0.0
    %3259 = vmatpush1.msra.mxu0 0.0
    %3260 = vmatprep.subr.mxu0 0.0
    %3261 = vmatpush1.msra.mxu0 0.0
    %3262 = vmatprep.subr.mxu0 0.0
    %3263 = vmatpush1.msra.mxu0 0.0
    %3264 = vmatprep.subr.mxu0 0.0
    %3265 = vmatpush1.msra.mxu0 0.0
    %3266 = vmatprep.subr.mxu0 0.0
    %3267 = vmatpush1.msra.mxu0 0.0
    %3268 = vmatprep.subr.mxu0 0.0
    %3269 = vmatpush1.msra.mxu0 0.0
    %3270 = vmatprep.subr.mxu0 0.0
    %3271 = vmatpush1.msra.mxu0 0.0
    %3272 = vmatprep.subr.mxu0 0.0
    %3273 = vmatpush1.msra.mxu0 0.0
    %3274 = vmatprep.subr.mxu0 0.0
    %3275 = vmatpush1.msra.mxu0 0.0
    %3276 = vmatprep.subr.mxu0 0.0
    %3277 = vmatpush1.msra.mxu0 0.0
    %3278 = vmatprep.subr.mxu0 0.0
    %3279 = vmatpush1.msra.mxu0 0.0
    %3280 = vmatprep.subr.mxu0 0.0
    %3281 = vmatpush1.msra.mxu0 0.0
    %3282 = vmatprep.subr.mxu0 0.0
    %3283 = vmatpush1.msra.mxu0 0.0
    %3284 = vmatprep.subr.mxu0 0.0
    %3285 = vmatpush1.msra.mxu0 0.0
    %3286 = vmatprep.subr.mxu0 0.0
    %3287 = vmatpush1.msra.mxu0 0.0
    %3288 = vmatprep.subr.mxu0 0.0
    %3289 = vmatpush1.msra.mxu0 0.0
    %3290 = vmatprep.subr.mxu0 0.0
    %3291 = vmatpush1.msra.mxu0 0.0
    %3292 = vmatprep.subr.mxu0 0.0
    %3293 = vmatpush1.msra.mxu0 0.0
    %3294 = vmatprep.subr.mxu0 0.0
    %3295 = vmatpush1.msra.mxu0 0.0
    %3296 = vmatprep.subr.mxu0 0.0
    %3297 = vmatpush1.msra.mxu0 0.0
    %3298 = vmatprep.subr.mxu0 0.0
    %3299 = vmatpush1.msra.mxu0 0.0
    %3300 = vmatprep.subr.mxu0 0.0
    %3301 = vmatpush1.msra.mxu0 0.0
    %3302 = vmatprep.subr.mxu0 0.0
    %3303 = vmatpush1.msra.mxu0 0.0
    %3304 = vmatprep.subr.mxu0 0.0
    %3305 = vmatpush1.msra.mxu0 0.0
    %3306 = vmatprep.subr.mxu0 0.0
    %3307 = vmatpush1.msra.mxu0 0.0
    %3308 = vmatprep.subr.mxu0 0.0
    %3309 = vmatpush1.msra.mxu0 0.0
    %3310 = vmatprep.subr.mxu0 0.0
    %3311 = vmatpush1.msra.mxu0 0.0
    %3312 = vmatprep.subr.mxu0 0.0
    %3313 = vmatpush1.msra.mxu0 0.0
    %3314 = vmatprep.mubr.f32.mxu0 0.0
    %3315 = vmatmul.mubr.f32.gmra.mrb[0].mxu0 %v3248
    %v3316 = vpop.f32.mrb[0].mxu0
    %v3317 = vadd.f32 0.0, %v3316
    %v3318 = vpop.f32.mrb[0].mxu0
    %3319 = vdwg.mxu0
    %v3321 = vsel %vm3133, %v3244, 0
    %3323 = vmatprep.subr.mxu0 0.0
    %3324 = vmatpush1.msra.mxu0 %v3043
    %3325 = vmatprep.subr.mxu0 0.0
    %3326 = vmatpush1.msra.mxu0 %v3044
    %3327 = vmatprep.subr.mxu0 0.0
    %3328 = vmatpush1.msra.mxu0 %v3045
    %3329 = vmatprep.subr.mxu0 0.0
    %3330 = vmatpush1.msra.mxu0 %v3046
    %3331 = vmatprep.subr.mxu0 0.0
    %3332 = vmatpush1.msra.mxu0 %v3047
    %3333 = vmatprep.subr.mxu0 0.0
    %3334 = vmatpush1.msra.mxu0 %v3048
    %3335 = vmatprep.subr.mxu0 0.0
    %3336 = vmatpush1.msra.mxu0 %v3049
    %3337 = vmatprep.subr.mxu0 0.0
    %3338 = vmatpush1.msra.mxu0 %v3050
    %3339 = vmatprep.subr.mxu0 0.0
    %3340 = vmatpush1.msra.mxu0 0.0
    %3341 = vmatprep.subr.mxu0 0.0
    %3342 = vmatpush1.msra.mxu0 0.0
    %3343 = vmatprep.subr.mxu0 0.0
    %3344 = vmatpush1.msra.mxu0 0.0
    %3345 = vmatprep.subr.mxu0 0.0
    %3346 = vmatpush1.msra.mxu0 0.0
    %3347 = vmatprep.subr.mxu0 0.0
    %3348 = vmatpush1.msra.mxu0 0.0
    %3349 = vmatprep.subr.mxu0 0.0
    %3350 = vmatpush1.msra.mxu0 0.0
    %3351 = vmatprep.subr.mxu0 0.0
    %3352 = vmatpush1.msra.mxu0 0.0
    %3353 = vmatprep.subr.mxu0 0.0
    %3354 = vmatpush1.msra.mxu0 0.0
    %3355 = vmatprep.subr.mxu0 0.0
    %3356 = vmatpush1.msra.mxu0 0.0
    %3357 = vmatprep.subr.mxu0 0.0
    %3358 = vmatpush1.msra.mxu0 0.0
    %3359 = vmatprep.subr.mxu0 0.0
    %3360 = vmatpush1.msra.mxu0 0.0
    %3361 = vmatprep.subr.mxu0 0.0
    %3362 = vmatpush1.msra.mxu0 0.0
    %3363 = vmatprep.subr.mxu0 0.0
    %3364 = vmatpush1.msra.mxu0 0.0
    %3365 = vmatprep.subr.mxu0 0.0
    %3366 = vmatpush1.msra.mxu0 0.0
    %3367 = vmatprep.subr.mxu0 0.0
    %3368 = vmatpush1.msra.mxu0 0.0
    %3369 = vmatprep.subr.mxu0 0.0
    %3370 = vmatpush1.msra.mxu0 0.0
    %3371 = vmatprep.subr.mxu0 0.0
    %3372 = vmatpush1.msra.mxu0 0.0
    %3373 = vmatprep.subr.mxu0 0.0
    %3374 = vmatpush1.msra.mxu0 0.0
    %3375 = vmatprep.subr.mxu0 0.0
    %3376 = vmatpush1.msra.mxu0 0.0
    %3377 = vmatprep.subr.mxu0 0.0
    %3378 = vmatpush1.msra.mxu0 0.0
    %3379 = vmatprep.subr.mxu0 0.0
    %3380 = vmatpush1.msra.mxu0 0.0
    %3381 = vmatprep.subr.mxu0 0.0
    %3382 = vmatpush1.msra.mxu0 0.0
    %3383 = vmatprep.subr.mxu0 0.0
    %3384 = vmatpush1.msra.mxu0 0.0
    %3385 = vmatprep.subr.mxu0 0.0
    %3386 = vmatpush1.msra.mxu0 0.0
    %3387 = vmatprep.mubr.f32.mxu0 0.0
    %3388 = vmatmul.mubr.f32.gmra.mrb[0].mxu0 %v3321
    %v3389 = vpop.f32.mrb[0].mxu0
    %v3390 = vadd.f32 %v3317, %v3389
    %v3391 = vpop.f32.mrb[0].mxu0
    %3392 = vdwg.mxu0
    %v3393 = vadd.f32 %v3390, %v3211
    %v3394 = vxor.u32 %v3393, 2147483648
    %v3395 = vmul.f32 %v3394, 1.442695
    %v3396 = vpow.pop %v3395
    %v3397 = vadd.f32 %v3396, 1.0
    %v3398 = vrcp.pop %v3397
    %v3399 = vmul.f32 1.0, %v3398
    %v3400 = vtanh.pop %v3393
    %v3401 = vmul.f32 %v3399, %v3231
    %3403 = vrot.lane.b32.xlu0 %v3400, 64
    %v3404 = vpop.permute.xlu0 %3403
    %v3406 = vmul.f32 %v3399, %v3404
    %3408 = vrot.lane.b32.xlu0 %v3406, 32
    %v3409 = vpop.permute.xlu0 %3408
    %v3411 = vadd.f32 %v3401, %v3409
    %v3412 = vtanh.pop %v3411
    %3414 = vrot.lane.b32.xlu0 %v3412, 64
    %v3415 = vpop.permute.xlu0 %3414
    %v3417 = vmul.f32 %v3399, %v3415
    %v3418 = vld [vmem:[%s1264] sm:$0x3]
    %v3419 = vld [vmem:[%s2334] sm:$0x3]
    %3421 = vrot.lane.b32.xlu0 %v3419, 32
    %v3422 = vpop.permute.xlu0 %3421
    %v3424 = vsel %vm186, %v3418, %v3422
    %3426 = vrot.lane.b32.xlu0 %v3417, 32
    %v3427 = vpop.permute.xlu0 %3426
    %v3428 = vsel %vm186, %v3427, 0
    %3430 = vmatprep.subr.mxu0 0.0
    %3431 = vmatpush1.msra.mxu0 %v3051
    %3432 = vmatprep.subr.mxu0 0.0
    %3433 = vmatpush1.msra.mxu0 %v3052
    %3434 = vmatprep.subr.mxu0 0.0
    %3435 = vmatpush1.msra.mxu0 %v3053
    %3436 = vmatprep.subr.mxu0 0.0
    %3437 = vmatpush1.msra.mxu0 %v3054
    %3438 = vmatprep.subr.mxu0 0.0
    %3439 = vmatpush1.msra.mxu0 0.0
    %3440 = vmatprep.subr.mxu0 0.0
    %3441 = vmatpush1.msra.mxu0 0.0
    %3442 = vmatprep.subr.mxu0 0.0
    %3443 = vmatpush1.msra.mxu0 0.0
    %3444 = vmatprep.subr.mxu0 0.0
    %3445 = vmatpush1.msra.mxu0 0.0
    %3446 = vmatprep.subr.mxu0 0.0
    %3447 = vmatpush1.msra.mxu0 0.0
    %3448 = vmatprep.subr.mxu0 0.0
    %3449 = vmatpush1.msra.mxu0 0.0
    %3450 = vmatprep.subr.mxu0 0.0
    %3451 = vmatpush1.msra.mxu0 0.0
    %3452 = vmatprep.subr.mxu0 0.0
    %3453 = vmatpush1.msra.mxu0 0.0
    %3454 = vmatprep.subr.mxu0 0.0
    %3455 = vmatpush1.msra.mxu0 0.0
    %3456 = vmatprep.subr.mxu0 0.0
    %3457 = vmatpush1.msra.mxu0 0.0
    %3458 = vmatprep.subr.mxu0 0.0
    %3459 = vmatpush1.msra.mxu0 0.0
    %3460 = vmatprep.subr.mxu0 0.0
    %3461 = vmatpush1.msra.mxu0 0.0
    %3462 = vmatprep.subr.mxu0 0.0
    %3463 = vmatpush1.msra.mxu0 0.0
    %3464 = vmatprep.subr.mxu0 0.0
    %3465 = vmatpush1.msra.mxu0 0.0
    %3466 = vmatprep.subr.mxu0 0.0
    %3467 = vmatpush1.msra.mxu0 0.0
    %3468 = vmatprep.subr.mxu0 0.0
    %3469 = vmatpush1.msra.mxu0 0.0
    %3470 = vmatprep.subr.mxu0 0.0
    %3471 = vmatpush1.msra.mxu0 0.0
    %3472 = vmatprep.subr.mxu0 0.0
    %3473 = vmatpush1.msra.mxu0 0.0
    %3474 = vmatprep.subr.mxu0 0.0
    %3475 = vmatpush1.msra.mxu0 0.0
    %3476 = vmatprep.subr.mxu0 0.0
    %3477 = vmatpush1.msra.mxu0 0.0
    %3478 = vmatprep.subr.mxu0 0.0
    %3479 = vmatpush1.msra.mxu0 0.0
    %3480 = vmatprep.subr.mxu0 0.0
    %3481 = vmatpush1.msra.mxu0 0.0
    %3482 = vmatprep.subr.mxu0 0.0
    %3483 = vmatpush1.msra.mxu0 0.0
    %3484 = vmatprep.subr.mxu0 0.0
    %3485 = vmatpush1.msra.mxu0 0.0
    %3486 = vmatprep.subr.mxu0 0.0
    %3487 = vmatpush1.msra.mxu0 0.0
    %3488 = vmatprep.subr.mxu0 0.0
    %3489 = vmatpush1.msra.mxu0 0.0
    %3490 = vmatprep.subr.mxu0 0.0
    %3491 = vmatpush1.msra.mxu0 0.0
    %3492 = vmatprep.subr.mxu0 0.0
    %3493 = vmatpush1.msra.mxu0 0.0
    %3494 = vmatprep.mubr.f32.mxu0 0.0
    %3495 = vmatmul.mubr.f32.gmra.mrb[0].mxu0 %v3428
    %v3496 = vpop.f32.mrb[0].mxu0
    %v3497 = vadd.f32 0.0, %v3496
    %v3498 = vpop.f32.mrb[0].mxu0
    %3499 = vdwg.mxu0
    %v3501 = vsel %vm3133, %v3424, 0
    %3503 = vmatprep.subr.mxu0 0.0
    %3504 = vmatpush1.msra.mxu0 %v3043
    %3505 = vmatprep.subr.mxu0 0.0
    %3506 = vmatpush1.msra.mxu0 %v3044
    %3507 = vmatprep.subr.mxu0 0.0
    %3508 = vmatpush1.msra.mxu0 %v3045
    %3509 = vmatprep.subr.mxu0 0.0
    %3510 = vmatpush1.msra.mxu0 %v3046
    %3511 = vmatprep.subr.mxu0 0.0
    %3512 = vmatpush1.msra.mxu0 %v3047
    %3513 = vmatprep.subr.mxu0 0.0
    %3514 = vmatpush1.msra.mxu0 %v3048
    %3515 = vmatprep.subr.mxu0 0.0
    %3516 = vmatpush1.msra.mxu0 %v3049
    %3517 = vmatprep.subr.mxu0 0.0
    %3518 = vmatpush1.msra.mxu0 %v3050
    %3519 = vmatprep.subr.mxu0 0.0
    %3520 = vmatpush1.msra.mxu0 0.0
    %3521 = vmatprep.subr.mxu0 0.0
    %3522 = vmatpush1.msra.mxu0 0.0
    %3523 = vmatprep.subr.mxu0 0.0
    %3524 = vmatpush1.msra.mxu0 0.0
    %3525 = vmatprep.subr.mxu0 0.0
    %3526 = vmatpush1.msra.mxu0 0.0
    %3527 = vmatprep.subr.mxu0 0.0
    %3528 = vmatpush1.msra.mxu0 0.0
    %3529 = vmatprep.subr.mxu0 0.0
    %3530 = vmatpush1.msra.mxu0 0.0
    %3531 = vmatprep.subr.mxu0 0.0
    %3532 = vmatpush1.msra.mxu0 0.0
    %3533 = vmatprep.subr.mxu0 0.0
    %3534 = vmatpush1.msra.mxu0 0.0
    %3535 = vmatprep.subr.mxu0 0.0
    %3536 = vmatpush1.msra.mxu0 0.0
    %3537 = vmatprep.subr.mxu0 0.0
    %3538 = vmatpush1.msra.mxu0 0.0
    %3539 = vmatprep.subr.mxu0 0.0
    %3540 = vmatpush1.msra.mxu0 0.0
    %3541 = vmatprep.subr.mxu0 0.0
    %3542 = vmatpush1.msra.mxu0 0.0
    %3543 = vmatprep.subr.mxu0 0.0
    %3544 = vmatpush1.msra.mxu0 0.0
    %3545 = vmatprep.subr.mxu0 0.0
    %3546 = vmatpush1.msra.mxu0 0.0
    %3547 = vmatprep.subr.mxu0 0.0
    %3548 = vmatpush1.msra.mxu0 0.0
    %3549 = vmatprep.subr.mxu0 0.0
    %3550 = vmatpush1.msra.mxu0 0.0
    %3551 = vmatprep.subr.mxu0 0.0
    %3552 = vmatpush1.msra.mxu0 0.0
    %3553 = vmatprep.subr.mxu0 0.0
    %3554 = vmatpush1.msra.mxu0 0.0
    %3555 = vmatprep.subr.mxu0 0.0
    %3556 = vmatpush1.msra.mxu0 0.0
    %3557 = vmatprep.subr.mxu0 0.0
    %3558 = vmatpush1.msra.mxu0 0.0
    %3559 = vmatprep.subr.mxu0 0.0
    %3560 = vmatpush1.msra.mxu0 0.0
    %3561 = vmatprep.subr.mxu0 0.0
    %3562 = vmatpush1.msra.mxu0 0.0
    %3563 = vmatprep.subr.mxu0 0.0
    %3564 = vmatpush1.msra.mxu0 0.0
    %3565 = vmatprep.subr.mxu0 0.0
    %3566 = vmatpush1.msra.mxu0 0.0
    %3567 = vmatprep.mubr.f32.mxu0 0.0
    %3568 = vmatmul.mubr.f32.gmra.mrb[0].mxu0 %v3501
    %v3569 = vpop.f32.mrb[0].mxu0
    %v3570 = vadd.f32 %v3497, %v3569
    %v3571 = vpop.f32.mrb[0].mxu0
    %3572 = vdwg.mxu0
    %v3573 = vadd.f32 %v3570, %v3211
    %v3574 = vxor.u32 %v3573, 2147483648
    %v3575 = vmul.f32 %v3574, 1.442695
    %v3576 = vpow.pop %v3575
    %v3577 = vadd.f32 %v3576, 1.0
    %v3578 = vrcp.pop %v3577
    %v3579 = vmul.f32 1.0, %v3578
    %v3580 = vtanh.pop %v3573
    %v3581 = vmul.f32 %v3579, %v3411
    %3583 = vrot.lane.b32.xlu0 %v3580, 64
    %v3584 = vpop.permute.xlu0 %3583
    %v3586 = vmul.f32 %v3579, %v3584
    %3588 = vrot.lane.b32.xlu0 %v3586, 32
    %v3589 = vpop.permute.xlu0 %3588
    %v3591 = vadd.f32 %v3581, %v3589
    %v3592 = vtanh.pop %v3591
    %3594 = vrot.lane.b32.xlu0 %v3592, 64
    %v3595 = vpop.permute.xlu0 %3594
    %v3597 = vmul.f32 %v3579, %v3595
    %v3598 = vld [vmem:[%s1620] sm:$0x3]
    %v3599 = vld [vmem:[%s1980] sm:$0x3]
    %3601 = vrot.lane.b32.xlu0 %v3599, 32
    %v3602 = vpop.permute.xlu0 %3601
    %v3604 = vsel %vm186, %v3598, %v3602
    %3606 = vrot.lane.b32.xlu0 %v3597, 32
    %v3607 = vpop.permute.xlu0 %3606
    %v3608 = vsel %vm186, %v3607, 0
    %3610 = vmatprep.subr.mxu0 0.0
    %3611 = vmatpush1.msra.mxu0 %v3051
    %3612 = vmatprep.subr.mxu0 0.0
    %3613 = vmatpush1.msra.mxu0 %v3052
    %3614 = vmatprep.subr.mxu0 0.0
    %3615 = vmatpush1.msra.mxu0 %v3053
    %3616 = vmatprep.subr.mxu0 0.0
    %3617 = vmatpush1.msra.mxu0 %v3054
    %3618 = vmatprep.subr.mxu0 0.0
    %3619 = vmatpush1.msra.mxu0 0.0
    %3620 = vmatprep.subr.mxu0 0.0
    %3621 = vmatpush1.msra.mxu0 0.0
    %3622 = vmatprep.subr.mxu0 0.0
    %3623 = vmatpush1.msra.mxu0 0.0
    %3624 = vmatprep.subr.mxu0 0.0
    %3625 = vmatpush1.msra.mxu0 0.0
    %3626 = vmatprep.subr.mxu0 0.0
    %3627 = vmatpush1.msra.mxu0 0.0
    %3628 = vmatprep.subr.mxu0 0.0
    %3629 = vmatpush1.msra.mxu0 0.0
    %3630 = vmatprep.subr.mxu0 0.0
    %3631 = vmatpush1.msra.mxu0 0.0
    %3632 = vmatprep.subr.mxu0 0.0
    %3633 = vmatpush1.msra.mxu0 0.0
    %3634 = vmatprep.subr.mxu0 0.0
    %3635 = vmatpush1.msra.mxu0 0.0
    %3636 = vmatprep.subr.mxu0 0.0
    %3637 = vmatpush1.msra.mxu0 0.0
    %3638 = vmatprep.subr.mxu0 0.0
    %3639 = vmatpush1.msra.mxu0 0.0
    %3640 = vmatprep.subr.mxu0 0.0
    %3641 = vmatpush1.msra.mxu0 0.0
    %3642 = vmatprep.subr.mxu0 0.0
    %3643 = vmatpush1.msra.mxu0 0.0
    %3644 = vmatprep.subr.mxu0 0.0
    %3645 = vmatpush1.msra.mxu0 0.0
    %3646 = vmatprep.subr.mxu0 0.0
    %3647 = vmatpush1.msra.mxu0 0.0
    %3648 = vmatprep.subr.mxu0 0.0
    %3649 = vmatpush1.msra.mxu0 0.0
    %3650 = vmatprep.subr.mxu0 0.0
    %3651 = vmatpush1.msra.mxu0 0.0
    %3652 = vmatprep.subr.mxu0 0.0
    %3653 = vmatpush1.msra.mxu0 0.0
    %3654 = vmatprep.subr.mxu0 0.0
    %3655 = vmatpush1.msra.mxu0 0.0
    %3656 = vmatprep.subr.mxu0 0.0
    %3657 = vmatpush1.msra.mxu0 0.0
    %3658 = vmatprep.subr.mxu0 0.0
    %3659 = vmatpush1.msra.mxu0 0.0
    %3660 = vmatprep.subr.mxu0 0.0
    %3661 = vmatpush1.msra.mxu0 0.0
    %3662 = vmatprep.subr.mxu0 0.0
    %3663 = vmatpush1.msra.mxu0 0.0
    %3664 = vmatprep.subr.mxu0 0.0
    %3665 = vmatpush1.msra.mxu0 0.0
    %3666 = vmatprep.subr.mxu0 0.0
    %3667 = vmatpush1.msra.mxu0 0.0
    %3668 = vmatprep.subr.mxu0 0.0
    %3669 = vmatpush1.msra.mxu0 0.0
    %3670 = vmatprep.subr.mxu0 0.0
    %3671 = vmatpush1.msra.mxu0 0.0
    %3672 = vmatprep.subr.mxu0 0.0
    %3673 = vmatpush1.msra.mxu0 0.0
    %3674 = vmatprep.mubr.f32.mxu0 0.0
    %3675 = vmatmul.mubr.f32.gmra.mrb[0].mxu0 %v3608
    %v3676 = vpop.f32.mrb[0].mxu0
    %v3677 = vadd.f32 0.0, %v3676
    %v3678 = vpop.f32.mrb[0].mxu0
    %3679 = vdwg.mxu0
    %v3681 = vsel %vm3133, %v3604, 0
    %3683 = vmatprep.subr.mxu0 0.0
    %3684 = vmatpush1.msra.mxu0 %v3043
    %3685 = vmatprep.subr.mxu0 0.0
    %3686 = vmatpush1.msra.mxu0 %v3044
    %3687 = vmatprep.subr.mxu0 0.0
    %3688 = vmatpush1.msra.mxu0 %v3045
    %3689 = vmatprep.subr.mxu0 0.0
    %3690 = vmatpush1.msra.mxu0 %v3046
    %3691 = vmatprep.subr.mxu0 0.0
    %3692 = vmatpush1.msra.mxu0 %v3047
    %3693 = vmatprep.subr.mxu0 0.0
    %3694 = vmatpush1.msra.mxu0 %v3048
    %3695 = vmatprep.subr.mxu0 0.0
    %3696 = vmatpush1.msra.mxu0 %v3049
    %3697 = vmatprep.subr.mxu0 0.0
    %3698 = vmatpush1.msra.mxu0 %v3050
    %3699 = vmatprep.subr.mxu0 0.0
    %3700 = vmatpush1.msra.mxu0 0.0
    %3701 = vmatprep.subr.mxu0 0.0
    %3702 = vmatpush1.msra.mxu0 0.0
    %3703 = vmatprep.subr.mxu0 0.0
    %3704 = vmatpush1.msra.mxu0 0.0
    %3705 = vmatprep.subr.mxu0 0.0
    %3706 = vmatpush1.msra.mxu0 0.0
    %3707 = vmatprep.subr.mxu0 0.0
    %3708 = vmatpush1.msra.mxu0 0.0
    %3709 = vmatprep.subr.mxu0 0.0
    %3710 = vmatpush1.msra.mxu0 0.0
    %3711 = vmatprep.subr.mxu0 0.0
    %3712 = vmatpush1.msra.mxu0 0.0
    %3713 = vmatprep.subr.mxu0 0.0
    %3714 = vmatpush1.msra.mxu0 0.0
    %3715 = vmatprep.subr.mxu0 0.0
    %3716 = vmatpush1.msra.mxu0 0.0
    %3717 = vmatprep.subr.mxu0 0.0
    %3718 = vmatpush1.msra.mxu0 0.0
    %3719 = vmatprep.subr.mxu0 0.0
    %3720 = vmatpush1.msra.mxu0 0.0
    %3721 = vmatprep.subr.mxu0 0.0
    %3722 = vmatpush1.msra.mxu0 0.0
    %3723 = vmatprep.subr.mxu0 0.0
    %3724 = vmatpush1.msra.mxu0 0.0
    %3725 = vmatprep.subr.mxu0 0.0
    %3726 = vmatpush1.msra.mxu0 0.0
    %3727 = vmatprep.subr.mxu0 0.0
    %3728 = vmatpush1.msra.mxu0 0.0
    %3729 = vmatprep.subr.mxu0 0.0
    %3730 = vmatpush1.msra.mxu0 0.0
    %3731 = vmatprep.subr.mxu0 0.0
    %3732 = vmatpush1.msra.mxu0 0.0
    %3733 = vmatprep.subr.mxu0 0.0
    %3734 = vmatpush1.msra.mxu0 0.0
    %3735 = vmatprep.subr.mxu0 0.0
    %3736 = vmatpush1.msra.mxu0 0.0
    %3737 = vmatprep.subr.mxu0 0.0
    %3738 = vmatpush1.msra.mxu0 0.0
    %3739 = vmatprep.subr.mxu0 0.0
    %3740 = vmatpush1.msra.mxu0 0.0
    %3741 = vmatprep.subr.mxu0 0.0
    %3742 = vmatpush1.msra.mxu0 0.0
    %3743 = vmatprep.subr.mxu0 0.0
    %3744 = vmatpush1.msra.mxu0 0.0
    %3745 = vmatprep.subr.mxu0 0.0
    %3746 = vmatpush1.msra.mxu0 0.0
    %3747 = vmatprep.mubr.f32.mxu0 0.0
    %3748 = vmatmul.mubr.f32.gmra.mrb[0].mxu0 %v3681
    %v3749 = vpop.f32.mrb[0].mxu0
    %v3750 = vadd.f32 %v3677, %v3749
    %v3751 = vpop.f32.mrb[0].mxu0
    %3752 = vdwg.mxu0
    %v3753 = vadd.f32 %v3750, %v3211
    %v3754 = vxor.u32 %v3753, 2147483648
    %v3755 = vmul.f32 %v3754, 1.442695
    %v3756 = vpow.pop %v3755
    %v3757 = vadd.f32 %v3756, 1.0
    %v3758 = vrcp.pop %v3757
    %v3759 = vmul.f32 1.0, %v3758
    %v3760 = vtanh.pop %v3753
    %v3761 = vmul.f32 %v3759, %v3591
    %3763 = vrot.lane.b32.xlu0 %v3760, 64
    %v3764 = vpop.permute.xlu0 %3763
    %v3766 = vmul.f32 %v3759, %v3764
    %3768 = vrot.lane.b32.xlu0 %v3766, 32
    %v3769 = vpop.permute.xlu0 %3768
    %v3771 = vadd.f32 %v3761, %v3769
    %v3772 = vtanh.pop %v3771
    %3774 = vrot.lane.b32.xlu0 %v3772, 64
    %v3775 = vpop.permute.xlu0 %3774
    %v3777 = vmul.f32 %v3759, %v3775
    %v3778 = vld [vmem:[%s1974] sm:$0x3]
    %v3779 = vld [vmem:[%s1626] sm:$0x3]
    %3781 = vrot.lane.b32.xlu0 %v3779, 32
    %v3782 = vpop.permute.xlu0 %3781
    %v3784 = vsel %vm186, %v3778, %v3782
    %3786 = vrot.lane.b32.xlu0 %v3777, 32
    %v3787 = vpop.permute.xlu0 %3786
    %v3788 = vsel %vm186, %v3787, 0
    %3790 = vmatprep.subr.mxu0 0.0
    %3791 = vmatpush1.msra.mxu0 %v3051
    %3792 = vmatprep.subr.mxu0 0.0
    %3793 = vmatpush1.msra.mxu0 %v3052
    %3794 = vmatprep.subr.mxu0 0.0
    %3795 = vmatpush1.msra.mxu0 %v3053
    %3796 = vmatprep.subr.mxu0 0.0
    %3797 = vmatpush1.msra.mxu0 %v3054
    %3798 = vmatprep.subr.mxu0 0.0
    %3799 = vmatpush1.msra.mxu0 0.0
    %3800 = vmatprep.subr.mxu0 0.0
    %3801 = vmatpush1.msra.mxu0 0.0
    %3802 = vmatprep.subr.mxu0 0.0
    %3803 = vmatpush1.msra.mxu0 0.0
    %3804 = vmatprep.subr.mxu0 0.0
    %3805 = vmatpush1.msra.mxu0 0.0
    %3806 = vmatprep.subr.mxu0 0.0
    %3807 = vmatpush1.msra.mxu0 0.0
    %3808 = vmatprep.subr.mxu0 0.0
    %3809 = vmatpush1.msra.mxu0 0.0
    %3810 = vmatprep.subr.mxu0 0.0
    %3811 = vmatpush1.msra.mxu0 0.0
    %3812 = vmatprep.subr.mxu0 0.0
    %3813 = vmatpush1.msra.mxu0 0.0
    %3814 = vmatprep.subr.mxu0 0.0
    %3815 = vmatpush1.msra.mxu0 0.0
    %3816 = vmatprep.subr.mxu0 0.0
    %3817 = vmatpush1.msra.mxu0 0.0
    %3818 = vmatprep.subr.mxu0 0.0
    %3819 = vmatpush1.msra.mxu0 0.0
    %3820 = vmatprep.subr.mxu0 0.0
    %3821 = vmatpush1.msra.mxu0 0.0
    %3822 = vmatprep.subr.mxu0 0.0
    %3823 = vmatpush1.msra.mxu0 0.0
    %3824 = vmatprep.subr.mxu0 0.0
    %3825 = vmatpush1.msra.mxu0 0.0
    %3826 = vmatprep.subr.mxu0 0.0
    %3827 = vmatpush1.msra.mxu0 0.0
    %3828 = vmatprep.subr.mxu0 0.0
    %3829 = vmatpush1.msra.mxu0 0.0
    %3830 = vmatprep.subr.mxu0 0.0
    %3831 = vmatpush1.msra.mxu0 0.0
    %3832 = vmatprep.subr.mxu0 0.0
    %3833 = vmatpush1.msra.mxu0 0.0
    %3834 = vmatprep.subr.mxu0 0.0
    %3835 = vmatpush1.msra.mxu0 0.0
    %3836 = vmatprep.subr.mxu0 0.0
    %3837 = vmatpush1.msra.mxu0 0.0
    %3838 = vmatprep.subr.mxu0 0.0
    %3839 = vmatpush1.msra.mxu0 0.0
    %3840 = vmatprep.subr.mxu0 0.0
    %3841 = vmatpush1.msra.mxu0 0.0
    %3842 = vmatprep.subr.mxu0 0.0
    %3843 = vmatpush1.msra.mxu0 0.0
    %3844 = vmatprep.subr.mxu0 0.0
    %3845 = vmatpush1.msra.mxu0 0.0
    %3846 = vmatprep.subr.mxu0 0.0
    %3847 = vmatpush1.msra.mxu0 0.0
    %3848 = vmatprep.subr.mxu0 0.0
    %3849 = vmatpush1.msra.mxu0 0.0
    %3850 = vmatprep.subr.mxu0 0.0
    %3851 = vmatpush1.msra.mxu0 0.0
    %3852 = vmatprep.subr.mxu0 0.0
    %3853 = vmatpush1.msra.mxu0 0.0
    %3854 = vmatprep.mubr.f32.mxu0 0.0
    %3855 = vmatmul.mubr.f32.gmra.mrb[0].mxu0 %v3788
    %v3856 = vpop.f32.mrb[0].mxu0
    %v3857 = vadd.f32 0.0, %v3856
    %v3858 = vpop.f32.mrb[0].mxu0
    %3859 = vdwg.mxu0
    %v3861 = vsel %vm3133, %v3784, 0
    %3863 = vmatprep.subr.mxu0 0.0
    %3864 = vmatpush1.msra.mxu0 %v3043
    %3865 = vmatprep.subr.mxu0 0.0
    %3866 = vmatpush1.msra.mxu0 %v3044
    %3867 = vmatprep.subr.mxu0 0.0
    %3868 = vmatpush1.msra.mxu0 %v3045
    %3869 = vmatprep.subr.mxu0 0.0
    %3870 = vmatpush1.msra.mxu0 %v3046
    %3871 = vmatprep.subr.mxu0 0.0
    %3872 = vmatpush1.msra.mxu0 %v3047
    %3873 = vmatprep.subr.mxu0 0.0
    %3874 = vmatpush1.msra.mxu0 %v3048
    %3875 = vmatprep.subr.mxu0 0.0
    %3876 = vmatpush1.msra.mxu0 %v3049
    %3877 = vmatprep.subr.mxu0 0.0
    %3878 = vmatpush1.msra.mxu0 %v3050
    %3879 = vmatprep.subr.mxu0 0.0
    %3880 = vmatpush1.msra.mxu0 0.0
    %3881 = vmatprep.subr.mxu0 0.0
    %3882 = vmatpush1.msra.mxu0 0.0
    %3883 = vmatprep.subr.mxu0 0.0
    %3884 = vmatpush1.msra.mxu0 0.0
    %3885 = vmatprep.subr.mxu0 0.0
    %3886 = vmatpush1.msra.mxu0 0.0
    %3887 = vmatprep.subr.mxu0 0.0
    %3888 = vmatpush1.msra.mxu0 0.0
    %3889 = vmatprep.subr.mxu0 0.0
    %3890 = vmatpush1.msra.mxu0 0.0
    %3891 = vmatprep.subr.mxu0 0.0
    %3892 = vmatpush1.msra.mxu0 0.0
    %3893 = vmatprep.subr.mxu0 0.0
    %3894 = vmatpush1.msra.mxu0 0.0
    %3895 = vmatprep.subr.mxu0 0.0
    %3896 = vmatpush1.msra.mxu0 0.0
    %3897 = vmatprep.subr.mxu0 0.0
    %3898 = vmatpush1.msra.mxu0 0.0
    %3899 = vmatprep.subr.mxu0 0.0
    %3900 = vmatpush1.msra.mxu0 0.0
    %3901 = vmatprep.subr.mxu0 0.0
    %3902 = vmatpush1.msra.mxu0 0.0
    %3903 = vmatprep.subr.mxu0 0.0
    %3904 = vmatpush1.msra.mxu0 0.0
    %3905 = vmatprep.subr.mxu0 0.0
    %3906 = vmatpush1.msra.mxu0 0.0
    %3907 = vmatprep.subr.mxu0 0.0
    %3908 = vmatpush1.msra.mxu0 0.0
    %3909 = vmatprep.subr.mxu0 0.0
    %3910 = vmatpush1.msra.mxu0 0.0
    %3911 = vmatprep.subr.mxu0 0.0
    %3912 = vmatpush1.msra.mxu0 0.0
    %3913 = vmatprep.subr.mxu0 0.0
    %3914 = vmatpush1.msra.mxu0 0.0
    %3915 = vmatprep.subr.mxu0 0.0
    %3916 = vmatpush1.msra.mxu0 0.0
    %3917 = vmatprep.subr.mxu0 0.0
    %3918 = vmatpush1.msra.mxu0 0.0
    %3919 = vmatprep.subr.mxu0 0.0
    %3920 = vmatpush1.msra.mxu0 0.0
    %3921 = vmatprep.subr.mxu0 0.0
    %3922 = vmatpush1.msra.mxu0 0.0
    %3923 = vmatprep.subr.mxu0 0.0
    %3924 = vmatpush1.msra.mxu0 0.0
    %3925 = vmatprep.subr.mxu0 0.0
    %3926 = vmatpush1.msra.mxu0 0.0
    %3927 = vmatprep.mubr.f32.mxu0 0.0
    %3928 = vmatmul.mubr.f32.gmra.mrb[0].mxu0 %v3861
    %v3929 = vpop.f32.mrb[0].mxu0
    %v3930 = vadd.f32 %v3857, %v3929
    %v3931 = vpop.f32.mrb[0].mxu0
    %3932 = vdwg.mxu0
    %v3933 = vadd.f32 %v3930, %v3211
    %v3934 = vxor.u32 %v3933, 2147483648
    %v3935 = vmul.f32 %v3934, 1.442695
    %v3936 = vpow.pop %v3935
    %v3937 = vadd.f32 %v3936, 1.0
    %v3938 = vrcp.pop %v3937
    %v3939 = vmul.f32 1.0, %v3938
    %v3940 = vtanh.pop %v3933
    %v3941 = vmul.f32 %v3939, %v3771
    %3943 = vrot.lane.b32.xlu0 %v3940, 64
    %v3944 = vpop.permute.xlu0 %3943
    %v3946 = vmul.f32 %v3939, %v3944
    %3948 = vrot.lane.b32.xlu0 %v3946, 32
    %v3949 = vpop.permute.xlu0 %3948
    %v3951 = vadd.f32 %v3941, %v3949
    %v3952 = vtanh.pop %v3951
    %3954 = vrot.lane.b32.xlu0 %v3952, 64
    %v3955 = vpop.permute.xlu0 %3954
    %v3957 = vmul.f32 %v3939, %v3955
    %v3958 = vld [vmem:[%s2328] sm:$0x3]
    %v3959 = vld [vmem:[%s1270] sm:$0x3]
    %3961 = vrot.lane.b32.xlu0 %v3959, 32
    %v3962 = vpop.permute.xlu0 %3961
    %v3964 = vsel %vm186, %v3958, %v3962
    %3966 = vrot.lane.b32.xlu0 %v3957, 32
    %v3967 = vpop.permute.xlu0 %3966
    %v3968 = vsel %vm186, %v3967, 0
    %3970 = vmatprep.subr.mxu0 0.0
    %3971 = vmatpush1.msra.mxu0 %v3051
    %3972 = vmatprep.subr.mxu0 0.0
    %3973 = vmatpush1.msra.mxu0 %v3052
    %3974 = vmatprep.subr.mxu0 0.0
    %3975 = vmatpush1.msra.mxu0 %v3053
    %3976 = vmatprep.subr.mxu0 0.0
    %3977 = vmatpush1.msra.mxu0 %v3054
    %3978 = vmatprep.subr.mxu0 0.0
    %3979 = vmatpush1.msra.mxu0 0.0
    %3980 = vmatprep.subr.mxu0 0.0
    %3981 = vmatpush1.msra.mxu0 0.0
    %3982 = vmatprep.subr.mxu0 0.0
    %3983 = vmatpush1.msra.mxu0 0.0
    %3984 = vmatprep.subr.mxu0 0.0
    %3985 = vmatpush1.msra.mxu0 0.0
    %3986 = vmatprep.subr.mxu0 0.0
    %3987 = vmatpush1.msra.mxu0 0.0
    %3988 = vmatprep.subr.mxu0 0.0
    %3989 = vmatpush1.msra.mxu0 0.0
    %3990 = vmatprep.subr.mxu0 0.0
    %3991 = vmatpush1.msra.mxu0 0.0
    %3992 = vmatprep.subr.mxu0 0.0
    %3993 = vmatpush1.msra.mxu0 0.0
    %3994 = vmatprep.subr.mxu0 0.0
    %3995 = vmatpush1.msra.mxu0 0.0
    %3996 = vmatprep.subr.mxu0 0.0
    %3997 = vmatpush1.msra.mxu0 0.0
    %3998 = vmatprep.subr.mxu0 0.0
    %3999 = vmatpush1.msra.mxu0 0.0
    %4000 = vmatprep.subr.mxu0 0.0
    %4001 = vmatpush1.msra.mxu0 0.0
    %4002 = vmatprep.subr.mxu0 0.0
    %4003 = vmatpush1.msra.mxu0 0.0
    %4004 = vmatprep.subr.mxu0 0.0
    %4005 = vmatpush1.msra.mxu0 0.0
    %4006 = vmatprep.subr.mxu0 0.0
    %4007 = vmatpush1.msra.mxu0 0.0
    %4008 = vmatprep.subr.mxu0 0.0
    %4009 = vmatpush1.msra.mxu0 0.0
    %4010 = vmatprep.subr.mxu0 0.0
    %4011 = vmatpush1.msra.mxu0 0.0
    %4012 = vmatprep.subr.mxu0 0.0
    %4013 = vmatpush1.msra.mxu0 0.0
    %4014 = vmatprep.subr.mxu0 0.0
    %4015 = vmatpush1.msra.mxu0 0.0
    %4016 = vmatprep.subr.mxu0 0.0
    %4017 = vmatpush1.msra.mxu0 0.0
    %4018 = vmatprep.subr.mxu0 0.0
    %4019 = vmatpush1.msra.mxu0 0.0
    %4020 = vmatprep.subr.mxu0 0.0
    %4021 = vmatpush1.msra.mxu0 0.0
    %4022 = vmatprep.subr.mxu0 0.0
    %4023 = vmatpush1.msra.mxu0 0.0
    %4024 = vmatprep.subr.mxu0 0.0
    %4025 = vmatpush1.msra.mxu0 0.0
    %4026 = vmatprep.subr.mxu0 0.0
    %4027 = vmatpush1.msra.mxu0 0.0
    %4028 = vmatprep.subr.mxu0 0.0
    %4029 = vmatpush1.msra.mxu0 0.0
    %4030 = vmatprep.subr.mxu0 0.0
    %4031 = vmatpush1.msra.mxu0 0.0
    %4032 = vmatprep.subr.mxu0 0.0
    %4033 = vmatpush1.msra.mxu0 0.0
    %4034 = vmatprep.mubr.f32.mxu0 0.0
    %4035 = vmatmul.mubr.f32.gmra.mrb[0].mxu0 %v3968
    %v4036 = vpop.f32.mrb[0].mxu0
    %v4037 = vadd.f32 0.0, %v4036
    %v4038 = vpop.f32.mrb[0].mxu0
    %4039 = vdwg.mxu0
    %v4041 = vsel %vm3133, %v3964, 0
    %4043 = vmatprep.subr.mxu0 0.0
    %4044 = vmatpush1.msra.mxu0 %v3043
    %4045 = vmatprep.subr.mxu0 0.0
    %4046 = vmatpush1.msra.mxu0 %v3044
    %4047 = vmatprep.subr.mxu0 0.0
    %4048 = vmatpush1.msra.mxu0 %v3045
    %4049 = vmatprep.subr.mxu0 0.0
    %4050 = vmatpush1.msra.mxu0 %v3046
    %4051 = vmatprep.subr.mxu0 0.0
    %4052 = vmatpush1.msra.mxu0 %v3047
    %4053 = vmatprep.subr.mxu0 0.0
    %4054 = vmatpush1.msra.mxu0 %v3048
    %4055 = vmatprep.subr.mxu0 0.0
    %4056 = vmatpush1.msra.mxu0 %v3049
    %4057 = vmatprep.subr.mxu0 0.0
    %4058 = vmatpush1.msra.mxu0 %v3050
    %4059 = vmatprep.subr.mxu0 0.0
    %4060 = vmatpush1.msra.mxu0 0.0
    %4061 = vmatprep.subr.mxu0 0.0
    %4062 = vmatpush1.msra.mxu0 0.0
    %4063 = vmatprep.subr.mxu0 0.0
    %4064 = vmatpush1.msra.mxu0 0.0
    %4065 = vmatprep.subr.mxu0 0.0
    %4066 = vmatpush1.msra.mxu0 0.0
    %4067 = vmatprep.subr.mxu0 0.0
    %4068 = vmatpush1.msra.mxu0 0.0
    %4069 = vmatprep.subr.mxu0 0.0
    %4070 = vmatpush1.msra.mxu0 0.0
    %4071 = vmatprep.subr.mxu0 0.0
    %4072 = vmatpush1.msra.mxu0 0.0
    %4073 = vmatprep.subr.mxu0 0.0
    %4074 = vmatpush1.msra.mxu0 0.0
    %4075 = vmatprep.subr.mxu0 0.0
    %4076 = vmatpush1.msra.mxu0 0.0
    %4077 = vmatprep.subr.mxu0 0.0
    %4078 = vmatpush1.msra.mxu0 0.0
    %4079 = vmatprep.subr.mxu0 0.0
    %4080 = vmatpush1.msra.mxu0 0.0
    %4081 = vmatprep.subr.mxu0 0.0
    %4082 = vmatpush1.msra.mxu0 0.0
    %4083 = vmatprep.subr.mxu0 0.0
    %4084 = vmatpush1.msra.mxu0 0.0
    %4085 = vmatprep.subr.mxu0 0.0
    %4086 = vmatpush1.msra.mxu0 0.0
    %4087 = vmatprep.subr.mxu0 0.0
    %4088 = vmatpush1.msra.mxu0 0.0
    %4089 = vmatprep.subr.mxu0 0.0
    %4090 = vmatpush1.msra.mxu0 0.0
    %4091 = vmatprep.subr.mxu0 0.0
    %4092 = vmatpush1.msra.mxu0 0.0
    %4093 = vmatprep.subr.mxu0 0.0
    %4094 = vmatpush1.msra.mxu0 0.0
    %4095 = vmatprep.subr.mxu0 0.0
    %4096 = vmatpush1.msra.mxu0 0.0
    %4097 = vmatprep.subr.mxu0 0.0
    %4098 = vmatpush1.msra.mxu0 0.0
    %4099 = vmatprep.subr.mxu0 0.0
    %4100 = vmatpush1.msra.mxu0 0.0
    %4101 = vmatprep.subr.mxu0 0.0
    %4102 = vmatpush1.msra.mxu0 0.0
    %4103 = vmatprep.subr.mxu0 0.0
    %4104 = vmatpush1.msra.mxu0 0.0
    %4105 = vmatprep.subr.mxu0 0.0
    %4106 = vmatpush1.msra.mxu0 0.0
    %4107 = vmatprep.mubr.f32.mxu0 0.0
    %4108 = vmatmul.mubr.f32.gmra.mrb[0].mxu0 %v4041
    %v4109 = vpop.f32.mrb[0].mxu0
    %v4110 = vadd.f32 %v4037, %v4109
    %v4111 = vpop.f32.mrb[0].mxu0
    %4112 = vdwg.mxu0
    %v4113 = vadd.f32 %v4110, %v3211
    %v4114 = vxor.u32 %v4113, 2147483648
    %v4115 = vmul.f32 %v4114, 1.442695
    %v4116 = vpow.pop %v4115
    %v4117 = vadd.f32 %v4116, 1.0
    %v4118 = vrcp.pop %v4117
    %v4119 = vmul.f32 1.0, %v4118
    %v4120 = vtanh.pop %v4113
    %v4121 = vmul.f32 %v4119, %v3951
    %4123 = vrot.lane.b32.xlu0 %v4120, 64
    %v4124 = vpop.permute.xlu0 %4123
    %v4126 = vmul.f32 %v4119, %v4124
    %4128 = vrot.lane.b32.xlu0 %v4126, 32
    %v4129 = vpop.permute.xlu0 %4128
    %v4131 = vadd.f32 %v4121, %v4129
    %v4132 = vtanh.pop %v4131
    %4134 = vrot.lane.b32.xlu0 %v4132, 64
    %v4135 = vpop.permute.xlu0 %4134
    %v4137 = vmul.f32 %v4119, %v4135
    %v4138 = vld [vmem:[%s2682] sm:$0x3]
    %v4139 = vld [vmem:[%s914] sm:$0x3]
    %4141 = vrot.lane.b32.xlu0 %v4139, 32
    %v4142 = vpop.permute.xlu0 %4141
    %v4144 = vsel %vm186, %v4138, %v4142
    %4146 = vrot.lane.b32.xlu0 %v4137, 32
    %v4147 = vpop.permute.xlu0 %4146
    %v4148 = vsel %vm186, %v4147, 0
    %4150 = vmatprep.subr.mxu0 0.0
    %4151 = vmatpush1.msra.mxu0 %v3051
    %4152 = vmatprep.subr.mxu0 0.0
    %4153 = vmatpush1.msra.mxu0 %v3052
    %4154 = vmatprep.subr.mxu0 0.0
    %4155 = vmatpush1.msra.mxu0 %v3053
    %4156 = vmatprep.subr.mxu0 0.0
    %4157 = vmatpush1.msra.mxu0 %v3054
    %4158 = vmatprep.subr.mxu0 0.0
    %4159 = vmatpush1.msra.mxu0 0.0
    %4160 = vmatprep.subr.mxu0 0.0
    %4161 = vmatpush1.msra.mxu0 0.0
    %4162 = vmatprep.subr.mxu0 0.0
    %4163 = vmatpush1.msra.mxu0 0.0
    %4164 = vmatprep.subr.mxu0 0.0
    %4165 = vmatpush1.msra.mxu0 0.0
    %4166 = vmatprep.subr.mxu0 0.0
    %4167 = vmatpush1.msra.mxu0 0.0
    %4168 = vmatprep.subr.mxu0 0.0
    %4169 = vmatpush1.msra.mxu0 0.0
    %4170 = vmatprep.subr.mxu0 0.0
    %4171 = vmatpush1.msra.mxu0 0.0
    %4172 = vmatprep.subr.mxu0 0.0
    %4173 = vmatpush1.msra.mxu0 0.0
    %4174 = vmatprep.subr.mxu0 0.0
    %4175 = vmatpush1.msra.mxu0 0.0
    %4176 = vmatprep.subr.mxu0 0.0
    %4177 = vmatpush1.msra.mxu0 0.0
    %4178 = vmatprep.subr.mxu0 0.0
    %4179 = vmatpush1.msra.mxu0 0.0
    %4180 = vmatprep.subr.mxu0 0.0
    %4181 = vmatpush1.msra.mxu0 0.0
    %4182 = vmatprep.subr.mxu0 0.0
    %4183 = vmatpush1.msra.mxu0 0.0
    %4184 = vmatprep.subr.mxu0 0.0
    %4185 = vmatpush1.msra.mxu0 0.0
    %4186 = vmatprep.subr.mxu0 0.0
    %4187 = vmatpush1.msra.mxu0 0.0
    %4188 = vmatprep.subr.mxu0 0.0
    %4189 = vmatpush1.msra.mxu0 0.0
    %4190 = vmatprep.subr.mxu0 0.0
    %4191 = vmatpush1.msra.mxu0 0.0
    %4192 = vmatprep.subr.mxu0 0.0
    %4193 = vmatpush1.msra.mxu0 0.0
    %4194 = vmatprep.subr.mxu0 0.0
    %4195 = vmatpush1.msra.mxu0 0.0
    %4196 = vmatprep.subr.mxu0 0.0
    %4197 = vmatpush1.msra.mxu0 0.0
    %4198 = vmatprep.subr.mxu0 0.0
    %4199 = vmatpush1.msra.mxu0 0.0
    %4200 = vmatprep.subr.mxu0 0.0
    %4201 = vmatpush1.msra.mxu0 0.0
    %4202 = vmatprep.subr.mxu0 0.0
    %4203 = vmatpush1.msra.mxu0 0.0
    %4204 = vmatprep.subr.mxu0 0.0
    %4205 = vmatpush1.msra.mxu0 0.0
    %4206 = vmatprep.subr.mxu0 0.0
    %4207 = vmatpush1.msra.mxu0 0.0
    %4208 = vmatprep.subr.mxu0 0.0
    %4209 = vmatpush1.msra.mxu0 0.0
    %4210 = vmatprep.subr.mxu0 0.0
    %4211 = vmatpush1.msra.mxu0 0.0
    %4212 = vmatprep.subr.mxu0 0.0
    %4213 = vmatpush1.msra.mxu0 0.0
    %4214 = vmatprep.mubr.f32.mxu0 0.0
    %4215 = vmatmul.mubr.f32.gmra.mrb[0].mxu0 %v4148
    %v4216 = vpop.f32.mrb[0].mxu0
    %v4217 = vadd.f32 0.0, %v4216
    %v4218 = vpop.f32.mrb[0].mxu0
    %4219 = vdwg.mxu0
    %v4221 = vsel %vm3133, %v4144, 0
    %4223 = vmatprep.subr.mxu0 0.0
    %4224 = vmatpush1.msra.mxu0 %v3043
    %4225 = vmatprep.subr.mxu0 0.0
    %4226 = vmatpush1.msra.mxu0 %v3044
    %4227 = vmatprep.subr.mxu0 0.0
    %4228 = vmatpush1.msra.mxu0 %v3045
    %4229 = vmatprep.subr.mxu0 0.0
    %4230 = vmatpush1.msra.mxu0 %v3046
    %4231 = vmatprep.subr.mxu0 0.0
    %4232 = vmatpush1.msra.mxu0 %v3047
    %4233 = vmatprep.subr.mxu0 0.0
    %4234 = vmatpush1.msra.mxu0 %v3048
    %4235 = vmatprep.subr.mxu0 0.0
    %4236 = vmatpush1.msra.mxu0 %v3049
    %4237 = vmatprep.subr.mxu0 0.0
    %4238 = vmatpush1.msra.mxu0 %v3050
    %4239 = vmatprep.subr.mxu0 0.0
    %4240 = vmatpush1.msra.mxu0 0.0
    %4241 = vmatprep.subr.mxu0 0.0
    %4242 = vmatpush1.msra.mxu0 0.0
    %4243 = vmatprep.subr.mxu0 0.0
    %4244 = vmatpush1.msra.mxu0 0.0
    %4245 = vmatprep.subr.mxu0 0.0
    %4246 = vmatpush1.msra.mxu0 0.0
    %4247 = vmatprep.subr.mxu0 0.0
    %4248 = vmatpush1.msra.mxu0 0.0
    %4249 = vmatprep.subr.mxu0 0.0
    %4250 = vmatpush1.msra.mxu0 0.0
    %4251 = vmatprep.subr.mxu0 0.0
    %4252 = vmatpush1.msra.mxu0 0.0
    %4253 = vmatprep.subr.mxu0 0.0
    %4254 = vmatpush1.msra.mxu0 0.0
    %4255 = vmatprep.subr.mxu0 0.0
    %4256 = vmatpush1.msra.mxu0 0.0
    %4257 = vmatprep.subr.mxu0 0.0
    %4258 = vmatpush1.msra.mxu0 0.0
    %4259 = vmatprep.subr.mxu0 0.0
    %4260 = vmatpush1.msra.mxu0 0.0
    %4261 = vmatprep.subr.mxu0 0.0
    %4262 = vmatpush1.msra.mxu0 0.0
    %4263 = vmatprep.subr.mxu0 0.0
    %4264 = vmatpush1.msra.mxu0 0.0
    %4265 = vmatprep.subr.mxu0 0.0
    %4266 = vmatpush1.msra.mxu0 0.0
    %4267 = vmatprep.subr.mxu0 0.0
    %4268 = vmatpush1.msra.mxu0 0.0
    %4269 = vmatprep.subr.mxu0 0.0
    %4270 = vmatpush1.msra.mxu0 0.0
    %4271 = vmatprep.subr.mxu0 0.0
    %4272 = vmatpush1.msra.mxu0 0.0
    %4273 = vmatprep.subr.mxu0 0.0
    %4274 = vmatpush1.msra.mxu0 0.0
    %4275 = vmatprep.subr.mxu0 0.0
    %4276 = vmatpush1.msra.mxu0 0.0
    %4277 = vmatprep.subr.mxu0 0.0
    %4278 = vmatpush1.msra.mxu0 0.0
    %4279 = vmatprep.subr.mxu0 0.0
    %4280 = vmatpush1.msra.mxu0 0.0
    %4281 = vmatprep.subr.mxu0 0.0
    %4282 = vmatpush1.msra.mxu0 0.0
    %4283 = vmatprep.subr.mxu0 0.0
    %4284 = vmatpush1.msra.mxu0 0.0
    %4285 = vmatprep.subr.mxu0 0.0
    %4286 = vmatpush1.msra.mxu0 0.0
    %4287 = vmatprep.mubr.f32.mxu0 0.0
    %4288 = vmatmul.mubr.f32.gmra.mrb[0].mxu0 %v4221
    %v4289 = vpop.f32.mrb[0].mxu0
    %v4290 = vadd.f32 %v4217, %v4289
    %v4291 = vpop.f32.mrb[0].mxu0
    %4292 = vdwg.mxu0
    %v4293 = vadd.f32 %v4290, %v3211
    %v4294 = vxor.u32 %v4293, 2147483648
    %v4295 = vmul.f32 %v4294, 1.442695
    %v4296 = vpow.pop %v4295
    %v4297 = vadd.f32 %v4296, 1.0
    %v4298 = vrcp.pop %v4297
    %v4299 = vmul.f32 1.0, %v4298
    %v4300 = vtanh.pop %v4293
    %v4301 = vmul.f32 %v4299, %v4131
    %4303 = vrot.lane.b32.xlu0 %v4300, 64
    %v4304 = vpop.permute.xlu0 %4303
    %v4306 = vmul.f32 %v4299, %v4304
    %4308 = vrot.lane.b32.xlu0 %v4306, 32
    %v4309 = vpop.permute.xlu0 %4308
    %v4311 = vadd.f32 %v4301, %v4309
    %v4312 = vtanh.pop %v4311
    %4314 = vrot.lane.b32.xlu0 %v4312, 64
    %v4315 = vpop.permute.xlu0 %4314
    %v4317 = vmul.f32 %v4299, %v4315
    %v4318 = vld [vmem:[%s3036] sm:$0x3]
    %v4319 = vld [vmem:[%s558] sm:$0x3]
    %4321 = vrot.lane.b32.xlu0 %v4319, 32
    %v4322 = vpop.permute.xlu0 %4321
    %v4324 = vsel %vm186, %v4318, %v4322
    %4326 = vrot.lane.b32.xlu0 %v4317, 32
    %v4327 = vpop.permute.xlu0 %4326
    %v4328 = vsel %vm186, %v4327, 0
    %4330 = vmatprep.subr.mxu0 0.0
    %4331 = vmatpush1.msra.mxu0 %v3051
    %4332 = vmatprep.subr.mxu0 0.0
    %4333 = vmatpush1.msra.mxu0 %v3052
    %4334 = vmatprep.subr.mxu0 0.0
    %4335 = vmatpush1.msra.mxu0 %v3053
    %4336 = vmatprep.subr.mxu0 0.0
    %4337 = vmatpush1.msra.mxu0 %v3054
    %4338 = vmatprep.subr.mxu0 0.0
    %4339 = vmatpush1.msra.mxu0 0.0
    %4340 = vmatprep.subr.mxu0 0.0
    %4341 = vmatpush1.msra.mxu0 0.0
    %4342 = vmatprep.subr.mxu0 0.0
    %4343 = vmatpush1.msra.mxu0 0.0
    %4344 = vmatprep.subr.mxu0 0.0
    %4345 = vmatpush1.msra.mxu0 0.0
    %4346 = vmatprep.subr.mxu0 0.0
    %4347 = vmatpush1.msra.mxu0 0.0
    %4348 = vmatprep.subr.mxu0 0.0
    %4349 = vmatpush1.msra.mxu0 0.0
    %4350 = vmatprep.subr.mxu0 0.0
    %4351 = vmatpush1.msra.mxu0 0.0
    %4352 = vmatprep.subr.mxu0 0.0
    %4353 = vmatpush1.msra.mxu0 0.0
    %4354 = vmatprep.subr.mxu0 0.0
    %4355 = vmatpush1.msra.mxu0 0.0
    %4356 = vmatprep.subr.mxu0 0.0
    %4357 = vmatpush1.msra.mxu0 0.0
    %4358 = vmatprep.subr.mxu0 0.0
    %4359 = vmatpush1.msra.mxu0 0.0
    %4360 = vmatprep.subr.mxu0 0.0
    %4361 = vmatpush1.msra.mxu0 0.0
    %4362 = vmatprep.subr.mxu0 0.0
    %4363 = vmatpush1.msra.mxu0 0.0
    %4364 = vmatprep.subr.mxu0 0.0
    %4365 = vmatpush1.msra.mxu0 0.0
    %4366 = vmatprep.subr.mxu0 0.0
    %4367 = vmatpush1.msra.mxu0 0.0
    %4368 = vmatprep.subr.mxu0 0.0
    %4369 = vmatpush1.msra.mxu0 0.0
    %4370 = vmatprep.subr.mxu0 0.0
    %4371 = vmatpush1.msra.mxu0 0.0
    %4372 = vmatprep.subr.mxu0 0.0
    %4373 = vmatpush1.msra.mxu0 0.0
    %4374 = vmatprep.subr.mxu0 0.0
    %4375 = vmatpush1.msra.mxu0 0.0
    %4376 = vmatprep.subr.mxu0 0.0
    %4377 = vmatpush1.msra.mxu0 0.0
    %4378 = vmatprep.subr.mxu0 0.0
    %4379 = vmatpush1.msra.mxu0 0.0
    %4380 = vmatprep.subr.mxu0 0.0
    %4381 = vmatpush1.msra.mxu0 0.0
    %4382 = vmatprep.subr.mxu0 0.0
    %4383 = vmatpush1.msra.mxu0 0.0
    %4384 = vmatprep.subr.mxu0 0.0
    %4385 = vmatpush1.msra.mxu0 0.0
    %4386 = vmatprep.subr.mxu0 0.0
    %4387 = vmatpush1.msra.mxu0 0.0
    %4388 = vmatprep.subr.mxu0 0.0
    %4389 = vmatpush1.msra.mxu0 0.0
    %4390 = vmatprep.subr.mxu0 0.0
    %4391 = vmatpush1.msra.mxu0 0.0
    %4392 = vmatprep.subr.mxu0 0.0
    %4393 = vmatpush1.msra.mxu0 0.0
    %4394 = vmatprep.mubr.f32.mxu0 0.0
    %4395 = vmatmul.mubr.f32.gmra.mrb[0].mxu0 %v4328
    %v4396 = vpop.f32.mrb[0].mxu0
    %v4397 = vadd.f32 0.0, %v4396
    %v4398 = vpop.f32.mrb[0].mxu0
    %4399 = vdwg.mxu0
    %v4401 = vsel %vm3133, %v4324, 0
    %4403 = vmatprep.subr.mxu0 0.0
    %4404 = vmatpush1.msra.mxu0 %v3043
    %4405 = vmatprep.subr.mxu0 0.0
    %4406 = vmatpush1.msra.mxu0 %v3044
    %4407 = vmatprep.subr.mxu0 0.0
    %4408 = vmatpush1.msra.mxu0 %v3045
    %4409 = vmatprep.subr.mxu0 0.0
    %4410 = vmatpush1.msra.mxu0 %v3046
    %4411 = vmatprep.subr.mxu0 0.0
    %4412 = vmatpush1.msra.mxu0 %v3047
    %4413 = vmatprep.subr.mxu0 0.0
    %4414 = vmatpush1.msra.mxu0 %v3048
    %4415 = vmatprep.subr.mxu0 0.0
    %4416 = vmatpush1.msra.mxu0 %v3049
    %4417 = vmatprep.subr.mxu0 0.0
    %4418 = vmatpush1.msra.mxu0 %v3050
    %4419 = vmatprep.subr.mxu0 0.0
    %4420 = vmatpush1.msra.mxu0 0.0
    %4421 = vmatprep.subr.mxu0 0.0
    %4422 = vmatpush1.msra.mxu0 0.0
    %4423 = vmatprep.subr.mxu0 0.0
    %4424 = vmatpush1.msra.mxu0 0.0
    %4425 = vmatprep.subr.mxu0 0.0
    %4426 = vmatpush1.msra.mxu0 0.0
    %4427 = vmatprep.subr.mxu0 0.0
    %4428 = vmatpush1.msra.mxu0 0.0
    %4429 = vmatprep.subr.mxu0 0.0
    %4430 = vmatpush1.msra.mxu0 0.0
    %4431 = vmatprep.subr.mxu0 0.0
    %4432 = vmatpush1.msra.mxu0 0.0
    %4433 = vmatprep.subr.mxu0 0.0
    %4434 = vmatpush1.msra.mxu0 0.0
    %4435 = vmatprep.subr.mxu0 0.0
    %4436 = vmatpush1.msra.mxu0 0.0
    %4437 = vmatprep.subr.mxu0 0.0
    %4438 = vmatpush1.msra.mxu0 0.0
    %4439 = vmatprep.subr.mxu0 0.0
    %4440 = vmatpush1.msra.mxu0 0.0
    %4441 = vmatprep.subr.mxu0 0.0
    %4442 = vmatpush1.msra.mxu0 0.0
    %4443 = vmatprep.subr.mxu0 0.0
    %4444 = vmatpush1.msra.mxu0 0.0
    %4445 = vmatprep.subr.mxu0 0.0
    %4446 = vmatpush1.msra.mxu0 0.0
    %4447 = vmatprep.subr.mxu0 0.0
    %4448 = vmatpush1.msra.mxu0 0.0
    %4449 = vmatprep.subr.mxu0 0.0
    %4450 = vmatpush1.msra.mxu0 0.0
    %4451 = vmatprep.subr.mxu0 0.0
    %4452 = vmatpush1.msra.mxu0 0.0
    %4453 = vmatprep.subr.mxu0 0.0
    %4454 = vmatpush1.msra.mxu0 0.0
    %4455 = vmatprep.subr.mxu0 0.0
    %4456 = vmatpush1.msra.mxu0 0.0
    %4457 = vmatprep.subr.mxu0 0.0
    %4458 = vmatpush1.msra.mxu0 0.0
    %4459 = vmatprep.subr.mxu0 0.0
    %4460 = vmatpush1.msra.mxu0 0.0
    %4461 = vmatprep.subr.mxu0 0.0
    %4462 = vmatpush1.msra.mxu0 0.0
    %4463 = vmatprep.subr.mxu0 0.0
    %4464 = vmatpush1.msra.mxu0 0.0
    %4465 = vmatprep.subr.mxu0 0.0
    %4466 = vmatpush1.msra.mxu0 0.0
    %4467 = vmatprep.mubr.f32.mxu0 0.0
    %4468 = vmatmul.mubr.f32.gmra.mrb[0].mxu0 %v4401
    %v4469 = vpop.f32.mrb[0].mxu0
    %v4470 = vadd.f32 %v4397, %v4469
    %v4471 = vpop.f32.mrb[0].mxu0
    %4472 = vdwg.mxu0
    %v4473 = vadd.f32 %v4470, %v3211
    %v4474 = vxor.u32 %v4473, 2147483648
    %v4475 = vmul.f32 %v4474, 1.442695
    %v4476 = vpow.pop %v4475
    %v4477 = vadd.f32 %v4476, 1.0
    %v4478 = vrcp.pop %v4477
    %v4479 = vmul.f32 1.0, %v4478
    %v4480 = vtanh.pop %v4473
    %v4481 = vmul.f32 %v4479, %v4311
    %4483 = vrot.lane.b32.xlu0 %v4480, 64
    %v4484 = vpop.permute.xlu0 %4483
    %v4486 = vmul.f32 %v4479, %v4484
    %4488 = vrot.lane.b32.xlu0 %v4486, 32
    %v4489 = vpop.permute.xlu0 %4488
    %v4491 = vadd.f32 %v4481, %v4489
    %v4492 = vtanh.pop %v4491
    %4494 = vrot.lane.b32.xlu0 %v4492, 64
    %v4495 = vpop.permute.xlu0 %4494
    %v4497 = vmul.f32 %v4479, %v4495
    %v4498 = vld [vmem:[#allocation12] sm:$0xff]
    %v4499 = vld [vmem:[#allocation12 + $0x8] sm:$0xff]
    %v4500 = vld [vmem:[#allocation12 + $0x10] sm:$0xff]
    %v4501 = vld [vmem:[#allocation12 + $0x18] sm:$0xff]
    %v4502 = vld [vmem:[#allocation12 + $0x20] sm:$0xff]
    %v4503 = vld [vmem:[#allocation12 + $0x28] sm:$0xff]
    %v4504 = vld [vmem:[#allocation12 + $0x30] sm:$0xff]
    %v4505 = vld [vmem:[#allocation12 + $0x38] sm:$0xff]
    %v4506 = vld [vmem:[#allocation13] sm:$0xff]
    %v4507 = vld [vmem:[#allocation13 + $0x8] sm:$0xff]
    %v4508 = vld [vmem:[#allocation13 + $0x10] sm:$0xff]
    %v4509 = vld [vmem:[#allocation13 + $0x18] sm:$0xff]
    %v4510 = vld [vmem:[%s12] sm:$0x1]
    %4511 = vmatprep.subr.mxu0 0.0
    %4512 = vmatpush1.msra.mxu0 %v4506
    %4513 = vmatprep.subr.mxu0 0.0
    %4514 = vmatpush1.msra.mxu0 %v4507
    %4515 = vmatprep.subr.mxu0 0.0
    %4516 = vmatpush1.msra.mxu0 %v4508
    %4517 = vmatprep.subr.mxu0 0.0
    %4518 = vmatpush1.msra.mxu0 %v4509
    %4519 = vmatprep.subr.mxu0 0.0
    %4520 = vmatpush1.msra.mxu0 0.0
    %4521 = vmatprep.subr.mxu0 0.0
    %4522 = vmatpush1.msra.mxu0 0.0
    %4523 = vmatprep.subr.mxu0 0.0
    %4524 = vmatpush1.msra.mxu0 0.0
    %4525 = vmatprep.subr.mxu0 0.0
    %4526 = vmatpush1.msra.mxu0 0.0
    %4527 = vmatprep.subr.mxu0 0.0
    %4528 = vmatpush1.msra.mxu0 0.0
    %4529 = vmatprep.subr.mxu0 0.0
    %4530 = vmatpush1.msra.mxu0 0.0
    %4531 = vmatprep.subr.mxu0 0.0
    %4532 = vmatpush1.msra.mxu0 0.0
    %4533 = vmatprep.subr.mxu0 0.0
    %4534 = vmatpush1.msra.mxu0 0.0
    %4535 = vmatprep.subr.mxu0 0.0
    %4536 = vmatpush1.msra.mxu0 0.0
    %4537 = vmatprep.subr.mxu0 0.0
    %4538 = vmatpush1.msra.mxu0 0.0
    %4539 = vmatprep.subr.mxu0 0.0
    %4540 = vmatpush1.msra.mxu0 0.0
    %4541 = vmatprep.subr.mxu0 0.0
    %4542 = vmatpush1.msra.mxu0 0.0
    %4543 = vmatprep.subr.mxu0 0.0
    %4544 = vmatpush1.msra.mxu0 0.0
    %4545 = vmatprep.subr.mxu0 0.0
    %4546 = vmatpush1.msra.mxu0 0.0
    %4547 = vmatprep.subr.mxu0 0.0
    %4548 = vmatpush1.msra.mxu0 0.0
    %4549 = vmatprep.subr.mxu0 0.0
    %4550 = vmatpush1.msra.mxu0 0.0
    %4551 = vmatprep.subr.mxu0 0.0
    %4552 = vmatpush1.msra.mxu0 0.0
    %4553 = vmatprep.subr.mxu0 0.0
    %4554 = vmatpush1.msra.mxu0 0.0
    %4555 = vmatprep.subr.mxu0 0.0
    %4556 = vmatpush1.msra.mxu0 0.0
    %4557 = vmatprep.subr.mxu0 0.0
    %4558 = vmatpush1.msra.mxu0 0.0
    %4559 = vmatprep.subr.mxu0 0.0
    %4560 = vmatpush1.msra.mxu0 0.0
    %4561 = vmatprep.subr.mxu0 0.0
    %4562 = vmatpush1.msra.mxu0 0.0
    %4563 = vmatprep.subr.mxu0 0.0
    %4564 = vmatpush1.msra.mxu0 0.0
    %4565 = vmatprep.subr.mxu0 0.0
    %4566 = vmatpush1.msra.mxu0 0.0
    %4567 = vmatprep.subr.mxu0 0.0
    %4568 = vmatpush1.msra.mxu0 0.0
    %4569 = vmatprep.subr.mxu0 0.0
    %4570 = vmatpush1.msra.mxu0 0.0
    %4571 = vmatprep.subr.mxu0 0.0
    %4572 = vmatpush1.msra.mxu0 0.0
    %4573 = vmatprep.subr.mxu0 0.0
    %4574 = vmatpush1.msra.mxu0 0.0
    %4575 = vmatprep.mubr.f32.mxu0 0.0
    %4576 = vmatmul.mubr.f32.gmra.mrb[0].mxu0 %v188
    %v4577 = vpop.f32.mrb[0].mxu0
    %v4578 = vadd.f32 0.0, %v4577
    %v4579 = vpop.f32.mrb[0].mxu0
    %4580 = vdwg.mxu0
    %4581 = vmatprep.subr.mxu0 0.0
    %4582 = vmatpush1.msra.mxu0 %v4498
    %4583 = vmatprep.subr.mxu0 0.0
    %4584 = vmatpush1.msra.mxu0 %v4499
    %4585 = vmatprep.subr.mxu0 0.0
    %4586 = vmatpush1.msra.mxu0 %v4500
    %4587 = vmatprep.subr.mxu0 0.0
    %4588 = vmatpush1.msra.mxu0 %v4501
    %4589 = vmatprep.subr.mxu0 0.0
    %4590 = vmatpush1.msra.mxu0 %v4502
    %4591 = vmatprep.subr.mxu0 0.0
    %4592 = vmatpush1.msra.mxu0 %v4503
    %4593 = vmatprep.subr.mxu0 0.0
    %4594 = vmatpush1.msra.mxu0 %v4504
    %4595 = vmatprep.subr.mxu0 0.0
    %4596 = vmatpush1.msra.mxu0 %v4505
    %4597 = vmatprep.subr.mxu0 0.0
    %4598 = vmatpush1.msra.mxu0 0.0
    %4599 = vmatprep.subr.mxu0 0.0
    %4600 = vmatpush1.msra.mxu0 0.0
    %4601 = vmatprep.subr.mxu0 0.0
    %4602 = vmatpush1.msra.mxu0 0.0
    %4603 = vmatprep.subr.mxu0 0.0
    %4604 = vmatpush1.msra.mxu0 0.0
    %4605 = vmatprep.subr.mxu0 0.0
    %4606 = vmatpush1.msra.mxu0 0.0
    %4607 = vmatprep.subr.mxu0 0.0
    %4608 = vmatpush1.msra.mxu0 0.0
    %4609 = vmatprep.subr.mxu0 0.0
    %4610 = vmatpush1.msra.mxu0 0.0
    %4611 = vmatprep.subr.mxu0 0.0
    %4612 = vmatpush1.msra.mxu0 0.0
    %4613 = vmatprep.subr.mxu0 0.0
    %4614 = vmatpush1.msra.mxu0 0.0
    %4615 = vmatprep.subr.mxu0 0.0
    %4616 = vmatpush1.msra.mxu0 0.0
    %4617 = vmatprep.subr.mxu0 0.0
    %4618 = vmatpush1.msra.mxu0 0.0
    %4619 = vmatprep.subr.mxu0 0.0
    %4620 = vmatpush1.msra.mxu0 0.0
    %4621 = vmatprep.subr.mxu0 0.0
    %4622 = vmatpush1.msra.mxu0 0.0
    %4623 = vmatprep.subr.mxu0 0.0
    %4624 = vmatpush1.msra.mxu0 0.0
    %4625 = vmatprep.subr.mxu0 0.0
    %4626 = vmatpush1.msra.mxu0 0.0
    %4627 = vmatprep.subr.mxu0 0.0
    %4628 = vmatpush1.msra.mxu0 0.0
    %4629 = vmatprep.subr.mxu0 0.0
    %4630 = vmatpush1.msra.mxu0 0.0
    %4631 = vmatprep.subr.mxu0 0.0
    %4632 = vmatpush1.msra.mxu0 0.0
    %4633 = vmatprep.subr.mxu0 0.0
    %4634 = vmatpush1.msra.mxu0 0.0
    %4635 = vmatprep.subr.mxu0 0.0
    %4636 = vmatpush1.msra.mxu0 0.0
    %4637 = vmatprep.subr.mxu0 0.0
    %4638 = vmatpush1.msra.mxu0 0.0
    %4639 = vmatprep.subr.mxu0 0.0
    %4640 = vmatpush1.msra.mxu0 0.0
    %4641 = vmatprep.subr.mxu0 0.0
    %4642 = vmatpush1.msra.mxu0 0.0
    %4643 = vmatprep.subr.mxu0 0.0
    %4644 = vmatpush1.msra.mxu0 0.0
    %4645 = vmatprep.mubr.f32.mxu0 0.0
    %4646 = vmatmul.mubr.f32.gmra.mrb[0].mxu0 %v4401
    %v4647 = vpop.f32.mrb[0].mxu0
    %v4648 = vadd.f32 %v4578, %v4647
    %v4649 = vpop.f32.mrb[0].mxu0
    %4650 = vdwg.mxu0
    %v4652 = vlaneseq
    %v4653 = vshrl.u32 %v4652, 7
    %v4654 = vsub.s32 0, %v4653
    %v4655 = vrot.slane %v4510, %v4654
    %v4657 = vadd.f32 %v4648, %v4655
    %v4658 = vxor.u32 %v4657, 2147483648
    %v4659 = vmul.f32 %v4658, 1.442695
    %v4660 = vpow.pop %v4659
    %v4661 = vadd.f32 %v4660, 1.0
    %v4662 = vrcp.pop %v4661
    %v4663 = vmul.f32 1.0, %v4662
    %v4664 = vtanh.pop %v4657
    %v4665 = vmul.f32 %v4663, 0.0
    %4667 = vrot.lane.b32.xlu0 %v4664, 64
    %v4668 = vpop.permute.xlu0 %4667
    %v4670 = vmul.f32 %v4663, %v4668
    %4672 = vrot.lane.b32.xlu0 %v4670, 32
    %v4673 = vpop.permute.xlu0 %4672
    %v4675 = vadd.f32 %v4665, %v4673
    %v4676 = vtanh.pop %v4675
    %4678 = vrot.lane.b32.xlu0 %v4676, 64
    %v4679 = vpop.permute.xlu0 %4678
    %v4681 = vmul.f32 %v4663, %v4679
    %4683 = vrot.lane.b32.xlu0 %v4497, 32
    %v4684 = vpop.permute.xlu0 %4683
    %4687 = vrot.lane.b32.xlu0 %v4681, 64
    %v4688 = vpop.permute.xlu0 %4687
    %v4690 = vsel %vm186, %v4684, %v4688
    %v4691 = vld [vmem:[#allocation15] sm:$0xff]
    %v4692 = vld [vmem:[#allocation15 + $0x8] sm:$0xff]
    %v4693 = vld [vmem:[#allocation15 + $0x10] sm:$0xff]
    %v4694 = vld [vmem:[#allocation15 + $0x18] sm:$0xff]
    %v4695 = vld [vmem:[#allocation15 + $0x20] sm:$0xff]
    %v4696 = vld [vmem:[#allocation15 + $0x28] sm:$0xff]
    %v4697 = vld [vmem:[#allocation15 + $0x30] sm:$0xff]
    %v4698 = vld [vmem:[#allocation15 + $0x38] sm:$0xff]
    %v4699 = vld [vmem:[%s14] sm:$0x1]
    %v4701 = vlaneseq
    %v4702 = vshrl.u32 %v4701, 7
    %v4703 = vsub.s32 0, %v4702
    %v4704 = vrot.slane %v4699, %v4703
    %v4707 = vsel %vm3133, %v4690, 0
    %4709 = vmatprep.subr.mxu0 0.0
    %4710 = vmatpush1.msra.mxu0 %v4691
    %4711 = vmatprep.subr.mxu0 0.0
    %4712 = vmatpush1.msra.mxu0 %v4692
    %4713 = vmatprep.subr.mxu0 0.0
    %4714 = vmatpush1.msra.mxu0 %v4693
    %4715 = vmatprep.subr.mxu0 0.0
    %4716 = vmatpush1.msra.mxu0 %v4694
    %4717 = vmatprep.subr.mxu0 0.0
    %4718 = vmatpush1.msra.mxu0 %v4695
    %4719 = vmatprep.subr.mxu0 0.0
    %4720 = vmatpush1.msra.mxu0 %v4696
    %4721 = vmatprep.subr.mxu0 0.0
    %4722 = vmatpush1.msra.mxu0 %v4697
    %4723 = vmatprep.subr.mxu0 0.0
    %4724 = vmatpush1.msra.mxu0 %v4698
    %4725 = vmatprep.subr.mxu0 0.0
    %4726 = vmatpush1.msra.mxu0 0.0
    %4727 = vmatprep.subr.mxu0 0.0
    %4728 = vmatpush1.msra.mxu0 0.0
    %4729 = vmatprep.subr.mxu0 0.0
    %4730 = vmatpush1.msra.mxu0 0.0
    %4731 = vmatprep.subr.mxu0 0.0
    %4732 = vmatpush1.msra.mxu0 0.0
    %4733 = vmatprep.subr.mxu0 0.0
    %4734 = vmatpush1.msra.mxu0 0.0
    %4735 = vmatprep.subr.mxu0 0.0
    %4736 = vmatpush1.msra.mxu0 0.0
    %4737 = vmatprep.subr.mxu0 0.0
    %4738 = vmatpush1.msra.mxu0 0.0
    %4739 = vmatprep.subr.mxu0 0.0
    %4740 = vmatpush1.msra.mxu0 0.0
    %4741 = vmatprep.subr.mxu0 0.0
    %4742 = vmatpush1.msra.mxu0 0.0
    %4743 = vmatprep.subr.mxu0 0.0
    %4744 = vmatpush1.msra.mxu0 0.0
    %4745 = vmatprep.subr.mxu0 0.0
    %4746 = vmatpush1.msra.mxu0 0.0
    %4747 = vmatprep.subr.mxu0 0.0
    %4748 = vmatpush1.msra.mxu0 0.0
    %4749 = vmatprep.subr.mxu0 0.0
    %4750 = vmatpush1.msra.mxu0 0.0
    %4751 = vmatprep.subr.mxu0 0.0
    %4752 = vmatpush1.msra.mxu0 0.0
    %4753 = vmatprep.subr.mxu0 0.0
    %4754 = vmatpush1.msra.mxu0 0.0
    %4755 = vmatprep.subr.mxu0 0.0
    %4756 = vmatpush1.msra.mxu0 0.0
    %4757 = vmatprep.subr.mxu0 0.0
    %4758 = vmatpush1.msra.mxu0 0.0
    %4759 = vmatprep.subr.mxu0 0.0
    %4760 = vmatpush1.msra.mxu0 0.0
    %4761 = vmatprep.subr.mxu0 0.0
    %4762 = vmatpush1.msra.mxu0 0.0
    %4763 = vmatprep.subr.mxu0 0.0
    %4764 = vmatpush1.msra.mxu0 0.0
    %4765 = vmatprep.subr.mxu0 0.0
    %4766 = vmatpush1.msra.mxu0 0.0
    %4767 = vmatprep.subr.mxu0 0.0
    %4768 = vmatpush1.msra.mxu0 0.0
    %4769 = vmatprep.subr.mxu0 0.0
    %4770 = vmatpush1.msra.mxu0 0.0
    %4771 = vmatprep.subr.mxu0 0.0
    %4772 = vmatpush1.msra.mxu0 0.0
    %4773 = vmatprep.mubr.f32.mxu0 0.0
    %4774 = vmatmul.mubr.f32.gmra.mrb[0].mxu0 %v4707
    %v4775 = vpop.f32.mrb[0].mxu0
    %v4776 = vadd.f32 %v4704, %v4775
    %v4777 = vpop.f32.mrb[0].mxu0
    %4778 = vdwg.mxu0
    %v4779 = vmax.f32 %v4776, 0.0
    %v4780 = vld [vmem:[%s15] sm:$0xff]
    %v4781 = vld [vmem:[%s15 + $0x8] sm:$0xff]
    %v4782 = vld [vmem:[%s15 + $0x10] sm:$0xff]
    %v4783 = vld [vmem:[%s15 + $0x18] sm:$0xff]
    %v4784 = vld [vmem:[%s15 + $0x20] sm:$0xff]
    %v4785 = vld [vmem:[%s15 + $0x28] sm:$0xff]
    %v4786 = vld [vmem:[%s15 + $0x30] sm:$0xff]
    %v4787 = vld [vmem:[%s15 + $0x38] sm:$0xff]
    %v4788 = vld [vmem:[%s16] sm:$0x1]
    %v4790 = vlaneseq
    %v4791 = vshrl.u32 %v4790, 7
    %v4792 = vsub.s32 0, %v4791
    %v4793 = vrot.slane %v4788, %v4792
    %v4796 = vsel %vm3133, %v4779, 0
    %4798 = vmatprep.subr.mxu0 0.0
    %4799 = vmatpush1.msra.mxu0 %v4780
    %4800 = vmatprep.subr.mxu0 0.0
    %4801 = vmatpush1.msra.mxu0 %v4781
    %4802 = vmatprep.subr.mxu0 0.0
    %4803 = vmatpush1.msra.mxu0 %v4782
    %4804 = vmatprep.subr.mxu0 0.0
    %4805 = vmatpush1.msra.mxu0 %v4783
    %4806 = vmatprep.subr.mxu0 0.0
    %4807 = vmatpush1.msra.mxu0 %v4784
    %4808 = vmatprep.subr.mxu0 0.0
    %4809 = vmatpush1.msra.mxu0 %v4785
    %4810 = vmatprep.subr.mxu0 0.0
    %4811 = vmatpush1.msra.mxu0 %v4786
    %4812 = vmatprep.subr.mxu0 0.0
    %4813 = vmatpush1.msra.mxu0 %v4787
    %4814 = vmatprep.subr.mxu0 0.0
    %4815 = vmatpush1.msra.mxu0 0.0
    %4816 = vmatprep.subr.mxu0 0.0
    %4817 = vmatpush1.msra.mxu0 0.0
    %4818 = vmatprep.subr.mxu0 0.0
    %4819 = vmatpush1.msra.mxu0 0.0
    %4820 = vmatprep.subr.mxu0 0.0
    %4821 = vmatpush1.msra.mxu0 0.0
    %4822 = vmatprep.subr.mxu0 0.0
    %4823 = vmatpush1.msra.mxu0 0.0
    %4824 = vmatprep.subr.mxu0 0.0
    %4825 = vmatpush1.msra.mxu0 0.0
    %4826 = vmatprep.subr.mxu0 0.0
    %4827 = vmatpush1.msra.mxu0 0.0
    %4828 = vmatprep.subr.mxu0 0.0
    %4829 = vmatpush1.msra.mxu0 0.0
    %4830 = vmatprep.subr.mxu0 0.0
    %4831 = vmatpush1.msra.mxu0 0.0
    %4832 = vmatprep.subr.mxu0 0.0
    %4833 = vmatpush1.msra.mxu0 0.0
    %4834 = vmatprep.subr.mxu0 0.0
    %4835 = vmatpush1.msra.mxu0 0.0
    %4836 = vmatprep.subr.mxu0 0.0
    %4837 = vmatpush1.msra.mxu0 0.0
    %4838 = vmatprep.subr.mxu0 0.0
    %4839 = vmatpush1.msra.mxu0 0.0
    %4840 = vmatprep.subr.mxu0 0.0
    %4841 = vmatpush1.msra.mxu0 0.0
    %4842 = vmatprep.subr.mxu0 0.0
    %4843 = vmatpush1.msra.mxu0 0.0
    %4844 = vmatprep.subr.mxu0 0.0
    %4845 = vmatpush1.msra.mxu0 0.0
    %4846 = vmatprep.subr.mxu0 0.0
    %4847 = vmatpush1.msra.mxu0 0.0
    %4848 = vmatprep.subr.mxu0 0.0
    %4849 = vmatpush1.msra.mxu0 0.0
    %4850 = vmatprep.subr.mxu0 0.0
    %4851 = vmatpush1.msra.mxu0 0.0
    %4852 = vmatprep.subr.mxu0 0.0
    %4853 = vmatpush1.msra.mxu0 0.0
    %4854 = vmatprep.subr.mxu0 0.0
    %4855 = vmatpush1.msra.mxu0 0.0
    %4856 = vmatprep.subr.mxu0 0.0
    %4857 = vmatpush1.msra.mxu0 0.0
    %4858 = vmatprep.subr.mxu0 0.0
    %4859 = vmatpush1.msra.mxu0 0.0
    %4860 = vmatprep.subr.mxu0 0.0
    %4861 = vmatpush1.msra.mxu0 0.0
    %4862 = vmatprep.mubr.f32.mxu0 0.0
    %4863 = vmatmul.mubr.f32.gmra.mrb[0].mxu0 %v4796
    %v4864 = vpop.f32.mrb[0].mxu0
    %v4865 = vadd.f32 %v4793, %v4864
    %v4866 = vpop.f32.mrb[0].mxu0
    %4867 = vdwg.mxu0
    %v4868 = vmax.f32 %v4865, 0.0
    %v4869 = vld [vmem:[#allocation16] sm:$0xff]
    %v4870 = vld [vmem:[#allocation16 + $0x8] sm:$0xff]
    %v4871 = vld [vmem:[#allocation16 + $0x10] sm:$0xff]
    %v4872 = vld [vmem:[#allocation16 + $0x18] sm:$0xff]
    %v4873 = vld [vmem:[#allocation4] sm:$0x1]
    %v4875 = vlaneseq
    %v4876 = vshrl.u32 %v4875, 7
    %v4877 = vsub.s32 0, %v4876
    %v4878 = vrot.slane %v4873, %v4877
    %v4881 = vsel %vm186, %v4868, 0
    %4883 = vmatprep.subr.mxu0 0.0
    %4884 = vmatpush1.msra.mxu0 %v4869
    %4885 = vmatprep.subr.mxu0 0.0
    %4886 = vmatpush1.msra.mxu0 %v4870
    %4887 = vmatprep.subr.mxu0 0.0
    %4888 = vmatpush1.msra.mxu0 %v4871
    %4889 = vmatprep.subr.mxu0 0.0
    %4890 = vmatpush1.msra.mxu0 %v4872
    %4891 = vmatprep.subr.mxu0 0.0
    %4892 = vmatpush1.msra.mxu0 0.0
    %4893 = vmatprep.subr.mxu0 0.0
    %4894 = vmatpush1.msra.mxu0 0.0
    %4895 = vmatprep.subr.mxu0 0.0
    %4896 = vmatpush1.msra.mxu0 0.0
    %4897 = vmatprep.subr.mxu0 0.0
    %4898 = vmatpush1.msra.mxu0 0.0
    %4899 = vmatprep.subr.mxu0 0.0
    %4900 = vmatpush1.msra.mxu0 0.0
    %4901 = vmatprep.subr.mxu0 0.0
    %4902 = vmatpush1.msra.mxu0 0.0
    %4903 = vmatprep.subr.mxu0 0.0
    %4904 = vmatpush1.msra.mxu0 0.0
    %4905 = vmatprep.subr.mxu0 0.0
    %4906 = vmatpush1.msra.mxu0 0.0
    %4907 = vmatprep.subr.mxu0 0.0
    %4908 = vmatpush1.msra.mxu0 0.0
    %4909 = vmatprep.subr.mxu0 0.0
    %4910 = vmatpush1.msra.mxu0 0.0
    %4911 = vmatprep.subr.mxu0 0.0
    %4912 = vmatpush1.msra.mxu0 0.0
    %4913 = vmatprep.subr.mxu0 0.0
    %4914 = vmatpush1.msra.mxu0 0.0
    %4915 = vmatprep.subr.mxu0 0.0
    %4916 = vmatpush1.msra.mxu0 0.0
    %4917 = vmatprep.subr.mxu0 0.0
    %4918 = vmatpush1.msra.mxu0 0.0
    %4919 = vmatprep.subr.mxu0 0.0
    %4920 = vmatpush1.msra.mxu0 0.0
    %4921 = vmatprep.subr.mxu0 0.0
    %4922 = vmatpush1.msra.mxu0 0.0
    %4923 = vmatprep.subr.mxu0 0.0
    %4924 = vmatpush1.msra.mxu0 0.0
    %4925 = vmatprep.subr.mxu0 0.0
    %4926 = vmatpush1.msra.mxu0 0.0
    %4927 = vmatprep.subr.mxu0 0.0
    %4928 = vmatpush1.msra.mxu0 0.0
    %4929 = vmatprep.subr.mxu0 0.0
    %4930 = vmatpush1.msra.mxu0 0.0
    %4931 = vmatprep.subr.mxu0 0.0
    %4932 = vmatpush1.msra.mxu0 0.0
    %4933 = vmatprep.subr.mxu0 0.0
    %4934 = vmatpush1.msra.mxu0 0.0
    %4935 = vmatprep.subr.mxu0 0.0
    %4936 = vmatpush1.msra.mxu0 0.0
    %4937 = vmatprep.subr.mxu0 0.0
    %4938 = vmatpush1.msra.mxu0 0.0
    %4939 = vmatprep.subr.mxu0 0.0
    %4940 = vmatpush1.msra.mxu0 0.0
    %4941 = vmatprep.subr.mxu0 0.0
    %4942 = vmatpush1.msra.mxu0 0.0
    %4943 = vmatprep.subr.mxu0 0.0
    %4944 = vmatpush1.msra.mxu0 0.0
    %4945 = vmatprep.subr.mxu0 0.0
    %4946 = vmatpush1.msra.mxu0 0.0
    %4947 = vmatprep.mubr.f32.mxu0 0.0
    %4948 = vmatmul.mubr.f32.gmra.mrb[0].mxu0 %v4881
    %v4949 = vpop.f32.mrb[0].mxu0
    %v4950 = vadd.f32 %v4878, %v4949
    %v4951 = vpop.f32.mrb[0].mxu0
    %4952 = vdwg.mxu0
    %vm4953 = vcmask 1024
    %4954 = vst.msk [vmem:[%s19] sm:$0x3] %vm4953, %v4950
    // Predicated region
    $region110: #{_lambda_.1} parent=1 // pred_check
      _
    $region111: #{_lambda_.1} parent=1 // pred_check_branch
      %4956 = sbr.rel (0) target = $region113
    $region112: #{_lambda_.1} parent=1 // pred_region
      _
    $region113: #{_lambda_.1} parent=1 // pred_fallthru
      _
    // Predicated region
    $region114: #{_lambda_.1} parent=1 // pred_check
      _
    $region115: #{_lambda_.1} parent=1 // pred_check_branch
      %4958 = sbr.rel (0) target = $region117
    $region116: #{_lambda_.1} parent=1 // pred_region
      _
    $region117: #{_lambda_.1} parent=1 // pred_fallthru
      _
    %4959 = vsyncpa [#allocation6], 1
    %4960 = vsyncpa [#allocation8], 1
    %4961 = vsyncpa [#allocation11], 1
    %4962 = vsyncpa [#allocation14], 1
    %4963 = vsyncpa [#allocation17], 1

</llo_original>
